<compile_context>
chip_gen: v7x
topology: tpu7x:2x2x1
jax: 0.10.0
libtpu: 0.0.40
codegen_flags: <defaults>
</compile_context>

<pallas_src>
import functools

import numpy as np
import jax
import jax.numpy as jnp
from jax.experimental import pallas as pl
from jax.experimental.pallas import tpu as pltpu

_BN_EPS = 1e-5


# ----------------------------------------------------------------------------
# Host-side construction of the exact pooling / bilinear weight matrices
# ----------------------------------------------------------------------------
def _pool_matrix(out_size: int, in_size: int) -> np.ndarray:
    """AdaptiveAvgPool2d along one axis: row i averages in[start:end)."""
    m = np.zeros((out_size, in_size), np.float32)
    for i in range(out_size):
        start = (i * in_size) // out_size
        end = -((-(i + 1) * in_size) // out_size)  # ceil((i+1)*in/out)
        m[i, start:end] = 1.0 / (end - start)
    return m


def _upsample_matrix(out_size: int, in_size: int) -> np.ndarray:
    """F.interpolate(mode='bilinear', align_corners=False) along one axis."""
    m = np.zeros((out_size, in_size), np.float32)
    scale = in_size / out_size
    for i in range(out_size):
        src = scale * (i + 0.5) - 0.5
        if src < 0.0:
            src = 0.0
        i0 = min(int(np.floor(src)), in_size - 1)
        i1 = min(i0 + 1, in_size - 1)
        l1 = src - i0
        m[i, i0] += 1.0 - l1
        m[i, i1] += l1
    return m


# ----------------------------------------------------------------------------
# Fused Pallas kernel (one batch element per grid step)
# ----------------------------------------------------------------------------
def _ppm_kernel(x_ref, k_ref, w1_ref, b1_ref, m_ref, u9_ref, wx_ref, wu_ref,
                cmask_ref, bo_ref, o_ref, xpad_ref, *, H, W, cin, cout, top_pad):
    """
    x_ref     : (1, H*W, cin)        flattened-spatial input (channels on lanes)
    k_ref     : (SS_pad, H*W)        stacked adaptive-avg-pool matrices (zero pad rows)
    w1_ref    : (cin, NB*inner)      column-stacked 1x1 conv weights (BN scale folded)
    b1_ref    : (1, NB*inner)        column-stacked folded BN bias
    m_ref     : (SS_pad, NB*inner)   block mask: 1 where row-branch == column-branch
    u9_ref    : (9, H*W, SS_pad)     per-tap shifted bilinear upsample matrices
    wx_ref    : (9, cin, cout)       3x3 conv taps, x channels (BN scale folded)
    wu_ref    : (9, NB*inner, cout)  3x3 conv taps, branch channels (BN scale folded)
    cmask_ref : (3, H*W, 1)          column-edge masks for dw = -1, 0, +1
    bo_ref    : (1, cout)            folded output BN bias
    o_ref     : (1, H*W, cout)       output (flattened spatial, channels on lanes)
    xpad_ref  : (2*top_pad+H*W, cin) VMEM scratch: row-padded flat image
    """
    HW = H * W
    x = x_ref[0]                                                            # (HW, cin)

    # ---- Stage 1: all pyramid branches (adaptive avg-pool -> 1x1 conv -> BN -> ReLU)
    pooled = jnp.dot(k_ref[...], x, preferred_element_type=jnp.float32)     # (SS, cin)
    z = jnp.dot(pooled, w1_ref[...], preferred_element_type=jnp.float32)    # (SS, NBI)
    z = jnp.maximum(z + b1_ref[...], 0.0) * m_ref[...]                      # bias+ReLU+mask

    # ---- Stage 2: 3x3 conv (pad=1) over [x ; upsampled branches] + BN + ReLU
    # Row-padded flat copy of x lives only in VMEM (never hits HBM).
    xpad_ref[pl.ds(0, top_pad), :] = jnp.zeros((top_pad, cin), jnp.float32)
    xpad_ref[pl.ds(top_pad + HW, top_pad), :] = jnp.zeros((top_pad, cin), jnp.float32)
    xpad_ref[pl.ds(top_pad, HW), :] = x

    acc = jnp.zeros((HW, cout), jnp.float32)
    for t in range(9):                       # 3x3 taps, statically unrolled
        dh, dw = t // 3 - 1, t % 3 - 1
        # x-channel tap: statically shifted window of the row-padded flat image;
        # horizontal shifts additionally need the column-edge mask.
        patch = xpad_ref[pl.ds(top_pad + dh * W + dw, HW), :]               # (HW, cin)
        if dw != 0:
            patch = patch * cmask_ref[dw + 1]                               # (HW,1) bcast
        acc = acc + jnp.dot(patch, wx_ref[t], preferred_element_type=jnp.float32)
        # Branch-channel tap factored through the tiny pooled features:
        #   conv_tap(upsample(z)) == U9[tap] @ (z @ Wu[tap])
        y = jnp.dot(z, wu_ref[t], preferred_element_type=jnp.float32)       # (SS, cout)
        acc = acc + jnp.dot(u9_ref[t], y, preferred_element_type=jnp.float32)

    o_ref[0] = jnp.maximum(acc + bo_ref[...], 0.0).astype(o_ref.dtype)


def _ppm_stage(x_flat, fused, H, W):
    n, HW, cin = x_flat.shape
    ss_pad = fused["k_all"].shape[0]
    nbi = fused["w1_cat"].shape[1]
    cout = fused["w9x"].shape[-1]
    top_pad = fused["top_pad"]
    hwp = 2 * top_pad + HW
    kern = functools.partial(_ppm_kernel, H=H, W=W, cin=cin, cout=cout, top_pad=top_pad)
    return pl.pallas_call(
        kern,
        out_shape=jax.ShapeDtypeStruct((n, HW, cout), jnp.float32),
        grid=(n,),
        in_specs=[
            pl.BlockSpec((1, HW, cin), lambda i: (i, 0, 0)),
            pl.BlockSpec((ss_pad, HW), lambda i: (0, 0)),
            pl.BlockSpec((cin, nbi), lambda i: (0, 0)),
            pl.BlockSpec((1, nbi), lambda i: (0, 0)),
            pl.BlockSpec((ss_pad, nbi), lambda i: (0, 0)),
            pl.BlockSpec((9, HW, ss_pad), lambda i: (0, 0, 0)),
            pl.BlockSpec((9, cin, cout), lambda i: (0, 0, 0)),
            pl.BlockSpec((9, nbi, cout), lambda i: (0, 0, 0)),
            pl.BlockSpec((3, HW, 1), lambda i: (0, 0, 0)),
            pl.BlockSpec((1, cout), lambda i: (0, 0)),
        ],
        out_specs=pl.BlockSpec((1, HW, cout), lambda i: (i, 0, 0)),
        scratch_shapes=[pltpu.VMEM((hwp, cin), jnp.float32)],
        compiler_params=pltpu.CompilerParams(dimension_semantics=("parallel",)),
    )(x_flat, fused["k_all"], fused["w1_cat"], fused["bias_cat"], fused["mask"],
      fused["u9"], fused["w9x"], fused["w9u"], fused["cmask"], fused["bias_out"])


# ----------------------------------------------------------------------------
# Module parameters (PyTorch-equivalent), host-side fusion, forward
# ----------------------------------------------------------------------------
def build_params(key, pool_scales, input_dim, inner_dim, H, W):
    params = {"branches": []}
    for s in pool_scales:
        key, kw, kg, kb, km, kv = jax.random.split(key, 6)
        w1 = 0.1 * jax.random.normal(kw, (input_dim, inner_dim), jnp.float32)
        gamma = 1.0 + 0.1 * jax.random.normal(kg, (inner_dim,), jnp.float32)
        beta = 0.1 * jax.random.normal(kb, (inner_dim,), jnp.float32)
        rmean = 0.1 * jax.random.normal(km, (inner_dim,), jnp.float32)
        rvar = jax.random.uniform(kv, (inner_dim,), jnp.float32, 0.5, 1.5)
        scale = gamma / jnp.sqrt(rvar + _BN_EPS)
        bias = beta - rmean * scale
        k_mat = np.kron(_pool_matrix(s, H), _pool_matrix(s, W))            # (s*s, H*W)
        u_mat = np.kron(_upsample_matrix(H, s), _upsample_matrix(W, s))    # (H*W, s*s)
        params["branches"].append({
            "pool": jnp.asarray(k_mat),
            "w": w1,
            "scale": scale.reshape(1, inner_dim),
            "bias": bias.reshape(1, inner_dim),
            "up": jnp.asarray(u_mat),
        })
    c_tot = input_dim + len(pool_scales) * inner_dim
    c_out = input_dim
    key, kw, kg, kb, km, kv = jax.random.split(key, 6)
    w_out = 0.1 * jax.random.normal(kw, (3, 3, c_tot, c_out), jnp.float32)
    gamma = 1.0 + 0.1 * jax.random.normal(kg, (c_out,), jnp.float32)
    beta = 0.1 * jax.random.normal(kb, (c_out,), jnp.float32)
    rmean = 0.1 * jax.random.normal(km, (c_out,), jnp.float32)
    rvar = jax.random.uniform(kv, (c_out,), jnp.float32, 0.5, 1.5)
    scale = gamma / jnp.sqrt(rvar + _BN_EPS)
    params["w_out"] = w_out
    params["scale_out"] = scale.reshape(1, c_out)
    params["bias_out"] = (beta - rmean * scale).reshape(1, c_out)
    return params


def fuse_params(params, pool_scales, H, W):
    """Host-side: stack branches, fold BN into weights, build shifted upsample mats."""
    branches = params["branches"]
    nb = len(branches)
    cin, inner = branches[0]["w"].shape
    HW = H * W
    ss_list = [s * s for s in pool_scales]
    ss_total = sum(ss_list)
    ss_pad = -(-ss_total // 8) * 8                       # sublane-align stacked rows

    k_all = np.zeros((ss_pad, HW), np.float32)
    u_cat = np.zeros((HW, ss_pad), np.float32)
    mask = np.zeros((ss_pad, nb * inner), np.float32)
    w1_cols, bias_cols = [], []
    off = 0
    for bidx, (ss, p) in enumerate(zip(ss_list, branches)):
        k_all[off:off + ss, :] = np.asarray(p["pool"])
        u_cat[:, off:off + ss] = np.asarray(p["up"])
        mask[off:off + ss, bidx * inner:(bidx + 1) * inner] = 1.0
        w1_cols.append(p["w"] * p["scale"])              # fold BN scale into 1x1 weights
        bias_cols.append(p["bias"])
        off += ss
    w1_cat = jnp.concatenate(w1_cols, axis=1)            # (cin, nb*inner)
    bias_cat = jnp.concatenate(bias_cols, axis=1)        # (1, nb*inner)

    # 9 shifted (zero at borders) upsample matrices, one per 3x3 conv tap.
    u3 = u_cat.reshape(H, W, ss_pad)
    u9 = np.zeros((9, HW, ss_pad), np.float32)
    for di in range(3):
        for dj in range(3):
            dh, dw = di - 1, dj - 1
            hlo, hhi = max(0, -dh), H - max(0, dh)
            wlo, whi = max(0, -dw), W - max(0, dw)
            blk = np.zeros((H, W, ss_pad), np.float32)
            blk[hlo:hhi, wlo:whi, :] = u3[hlo + dh:hhi + dh, wlo + dw:whi + dw, :]
            u9[di * 3 + dj] = blk.reshape(HW, ss_pad)

    cout = params["w_out"].shape[-1]
    w_out_f = params["w_out"] * params["scale_out"].reshape(1, 1, 1, cout)  # fold BN scale
    w9x = w_out_f[:, :, :cin, :].reshape(9, cin, cout)
    w9u = w_out_f[:, :, cin:, :].reshape(9, nb * inner, cout)

    # Column-edge masks for the horizontally shifted conv taps (dw = -1, 0, +1).
    col = np.arange(HW) % W
    cmask = np.ones((3, HW, 1), np.float32)
    cmask[0, col == 0, 0] = 0.0
    cmask[2, col == W - 1, 0] = 0.0

    top_pad = -(-(W + 1) // 8) * 8   # sublane-aligned row padding of the flat image

    return {
        "k_all": jnp.asarray(k_all),
        "w1_cat": w1_cat,
        "bias_cat": bias_cat,
        "mask": jnp.asarray(mask),
        "u9": jnp.asarray(u9),
        "w9x": w9x,
        "w9u": w9u,
        "cmask": jnp.asarray(cmask),
        "bias_out": params["bias_out"],
        "top_pad": int(top_pad),
    }


def pyramid_pooling_module(x_nchw, fused):
    """Forward pass.  x_nchw: (N, C, H, W) like PyTorch; returns (N, C, H, W)."""
    x = jnp.transpose(x_nchw, (0, 2, 3, 1)).astype(jnp.float32)   # NCHW -> NHWC
    n, H, W, cin = x.shape
    x_flat = x.reshape(n, H * W, cin)
    out_flat = _ppm_stage(x_flat, fused, H, W)                    # (N, H*W, cout)
    out = out_flat.reshape(n, H, W, -1)
    return jnp.transpose(out, (0, 3, 1, 2))                       # NHWC -> NCHW


# ----------------------------------------------------------------------------
# Pure-JAX reference (straightforward math, no Pallas) for a numerical check
# ----------------------------------------------------------------------------
def _reference(x_nchw, params):
    x = jnp.transpose(x_nchw, (0, 2, 3, 1)).astype(jnp.float32)
    n, H, W, cin = x.shape
    xf = x.reshape(n, H * W, cin)
    feats = [x]
    for p in params["branches"]:
        pooled = jnp.einsum("sp,npc->nsc", p["pool"], xf)
        z = jnp.maximum(jnp.einsum("nsc,ci->nsi", pooled, p["w"]) * p["scale"] + p["bias"], 0.0)
        up = jnp.einsum("ps,nsi->npi", p["up"], z).reshape(n, H, W, -1)
        feats.append(up)
    cat = jnp.concatenate(feats, axis=-1)
    catp = jnp.pad(cat, ((0, 0), (1, 1), (1, 1), (0, 0)))
    acc = jnp.zeros((n, H, W, params["w_out"].shape[-1]), jnp.float32)
    for di in range(3):
        for dj in range(3):
            acc = acc + jnp.einsum("nhwc,co->nhwo",
                                   catp[:, di:di + H, dj:dj + W, :],
                                   params["w_out"][di, dj])
    out = jnp.maximum(acc * params["scale_out"] + params["bias_out"], 0.0)
    return jnp.transpose(out, (0, 3, 1, 2))


# ----------------------------------------------------------------------------
if __name__ == "__main__":
    pool_scales = [1, 2, 3, 6]
    input_dim, inner_dim = 4, 8
    N, H, W = 2, 16, 16

    key = jax.random.PRNGKey(0)
    key, kx = jax.random.split(key)
    x = jax.random.normal(kx, (N, input_dim, H, W), jnp.float32)   # NCHW, like PyTorch

    params = build_params(key, pool_scales, input_dim, inner_dim, H, W)
    fused = fuse_params(params, pool_scales, H, W)

    out = pyramid_pooling_module(x, fused)
    out = jax.block_until_ready(out)

    assert out.shape == (N, input_dim, H, W), out.shape
    ref = jax.block_until_ready(_reference(x, params))
    np.testing.assert_allclose(np.asarray(out), np.asarray(ref), rtol=1e-2, atol=1e-2)

    print("KERNEL_OK")
</pallas_src>

<mosaic_0001>
module attributes {stable_mosaic.version = 11 : i64} {
  func.func @_ppm_kernel(%arg0: i32, %arg1: memref<1x256x4xf32, #tpu.memory_space<vmem>>, %arg2: memref<56x256xf32, #tpu.memory_space<vmem>>, %arg3: memref<4x32xf32, #tpu.memory_space<vmem>>, %arg4: memref<1x32xf32, #tpu.memory_space<vmem>>, %arg5: memref<56x32xf32, #tpu.memory_space<vmem>>, %arg6: memref<9x256x56xf32, #tpu.memory_space<vmem>>, %arg7: memref<9x4x4xf32, #tpu.memory_space<vmem>>, %arg8: memref<9x32x4xf32, #tpu.memory_space<vmem>>, %arg9: memref<3x256x1xf32, #tpu.memory_space<vmem>>, %arg10: memref<1x4xf32, #tpu.memory_space<vmem>>, %arg11: memref<1x256x4xf32, #tpu.memory_space<vmem>>, %arg12: memref<304x4xf32, #tpu.memory_space<vmem>>) attributes {dimension_semantics = [#tpu.dimension_semantics<parallel>], iteration_bounds = array<i64: 2>, scalar_prefetch = 0 : i64, scratch_operands = 1 : i64, tpu.core_type = #tpu.core_type<tc>, window_params = [{transform_indices = @transform_0, window_bounds = array<i64: 1, 256, 4>}, {pipeline_mode = #tpu.pipeline_mode<synchronous>, transform_indices = @transform_1, window_bounds = array<i64: 56, 256>}, {pipeline_mode = #tpu.pipeline_mode<synchronous>, transform_indices = @transform_2, window_bounds = array<i64: 4, 32>}, {pipeline_mode = #tpu.pipeline_mode<synchronous>, transform_indices = @transform_3, window_bounds = array<i64: 1, 32>}, {pipeline_mode = #tpu.pipeline_mode<synchronous>, transform_indices = @transform_4, window_bounds = array<i64: 56, 32>}, {pipeline_mode = #tpu.pipeline_mode<synchronous>, transform_indices = @transform_5, window_bounds = array<i64: 9, 256, 56>}, {pipeline_mode = #tpu.pipeline_mode<synchronous>, transform_indices = @transform_6, window_bounds = array<i64: 9, 4, 4>}, {pipeline_mode = #tpu.pipeline_mode<synchronous>, transform_indices = @transform_7, window_bounds = array<i64: 9, 32, 4>}, {pipeline_mode = #tpu.pipeline_mode<synchronous>, transform_indices = @transform_8, window_bounds = array<i64: 3, 256, 1>}, {pipeline_mode = #tpu.pipeline_mode<synchronous>, transform_indices = @transform_9, window_bounds = array<i64: 1, 4>}, {transform_indices = @transform_10, window_bounds = array<i64: 1, 256, 4>}]} {
    %c0 = arith.constant 0 : index
    %c0_0 = arith.constant 0 : index
    %c0_1 = arith.constant 0 : index
    %0 = vector.load %arg1[%c0, %c0_0, %c0_1] : memref<1x256x4xf32, #tpu.memory_space<vmem>>, vector<1x256x4xf32>
    %1 = vector.shape_cast %0 : vector<1x256x4xf32> to vector<256x4xf32>
    %c0_2 = arith.constant 0 : index
    %c0_3 = arith.constant 0 : index
    %2 = vector.load %arg2[%c0_2, %c0_3] : memref<56x256xf32, #tpu.memory_space<vmem>>, vector<56x256xf32>
    %cst = arith.constant dense<0.000000e+00> : vector<56x4xf32>
    %3 = tpu.matmul %2, %1, %cst {dimension_numbers = #tpu.dot_dimension_numbers<[1], [0], [0], [1], [0, 0, 1, 1], [], []>} : vector<56x256xf32>, vector<256x4xf32>, vector<56x4xf32> -> vector<56x4xf32>
    %c0_4 = arith.constant 0 : index
    %c0_5 = arith.constant 0 : index
    %4 = vector.load %arg3[%c0_4, %c0_5] : memref<4x32xf32, #tpu.memory_space<vmem>>, vector<4x32xf32>
    %cst_6 = arith.constant dense<0.000000e+00> : vector<56x32xf32>
    %5 = tpu.matmul %3, %4, %cst_6 {dimension_numbers = #tpu.dot_dimension_numbers<[1], [0], [0], [1], [0, 0, 1, 1], [], []>} : vector<56x4xf32>, vector<4x32xf32>, vector<56x32xf32> -> vector<56x32xf32>
    %c0_7 = arith.constant 0 : index
    %c0_8 = arith.constant 0 : index
    %6 = vector.load %arg4[%c0_7, %c0_8] : memref<1x32xf32, #tpu.memory_space<vmem>>, vector<1x32xf32>
    %7 = vector.broadcast %6 : vector<1x32xf32> to vector<56x32xf32>
    %8 = arith.addf %5, %7 : vector<56x32xf32>
    %cst_9 = arith.constant 0.000000e+00 : f32
    %9 = vector.broadcast %cst_9 : f32 to vector<56x32xf32>
    %10 = arith.maximumf %8, %9 : vector<56x32xf32>
    %c0_10 = arith.constant 0 : index
    %c0_11 = arith.constant 0 : index
    %11 = vector.load %arg5[%c0_10, %c0_11] : memref<56x32xf32, #tpu.memory_space<vmem>>, vector<56x32xf32>
    %12 = arith.mulf %10, %11 : vector<56x32xf32>
    %cst_12 = arith.constant 0.000000e+00 : f32
    %13 = vector.broadcast %cst_12 : f32 to vector<24x4xf32>
    %c0_13 = arith.constant 0 : index
    %c0_14 = arith.constant 0 : index
    %14 = vector.load %arg12[%c0_13, %c0_14] : memref<304x4xf32, #tpu.memory_space<vmem>>, vector<24x4xf32>
    tpu.vector_store %arg12[%c0_13, %c0_14], %13 {strides = array<i32>} : memref<304x4xf32, #tpu.memory_space<vmem>>, vector<24x4xf32>,
    %cst_15 = arith.constant 0.000000e+00 : f32
    %15 = vector.broadcast %cst_15 : f32 to vector<24x4xf32>
    %c280 = arith.constant 280 : index
    %c0_16 = arith.constant 0 : index
    %16 = vector.load %arg12[%c280, %c0_16] : memref<304x4xf32, #tpu.memory_space<vmem>>, vector<24x4xf32>
    tpu.vector_store %arg12[%c280, %c0_16], %15 {strides = array<i32>} : memref<304x4xf32, #tpu.memory_space<vmem>>, vector<24x4xf32>,
    %c24 = arith.constant 24 : index
    %c0_17 = arith.constant 0 : index
    %17 = vector.load %arg12[%c24, %c0_17] : memref<304x4xf32, #tpu.memory_space<vmem>>, vector<256x4xf32>
    tpu.vector_store %arg12[%c24, %c0_17], %1 {strides = array<i32>} : memref<304x4xf32, #tpu.memory_space<vmem>>, vector<256x4xf32>,
    %cst_18 = arith.constant 0.000000e+00 : f32
    %18 = vector.broadcast %cst_18 : f32 to vector<256x4xf32>
    %c7 = arith.constant 7 : index
    %c0_19 = arith.constant 0 : index
    %19 = vector.load %arg12[%c7, %c0_19] : memref<304x4xf32, #tpu.memory_space<vmem>>, vector<256x4xf32>
    %c0_20 = arith.constant 0 : index
    %c0_21 = arith.constant 0 : index
    %c0_22 = arith.constant 0 : index
    %20 = vector.load %arg9[%c0_20, %c0_21, %c0_22] : memref<3x256x1xf32, #tpu.memory_space<vmem>>, vector<1x256x1xf32>
    %21 = vector.shape_cast %20 : vector<1x256x1xf32> to vector<256x1xf32>
    %22 = vector.broadcast %21 : vector<256x1xf32> to vector<256x4xf32>
    %23 = arith.mulf %19, %22 : vector<256x4xf32>
    %c0_23 = arith.constant 0 : index
    %c0_24 = arith.constant 0 : index
    %c0_25 = arith.constant 0 : index
    %24 = vector.load %arg7[%c0_23, %c0_24, %c0_25] : memref<9x4x4xf32, #tpu.memory_space<vmem>>, vector<1x4x4xf32>
    %25 = vector.shape_cast %24 : vector<1x4x4xf32> to vector<4x4xf32>
    %cst_26 = arith.constant dense<0.000000e+00> : vector<256x4xf32>
    %26 = tpu.matmul %23, %25, %cst_26 {dimension_numbers = #tpu.dot_dimension_numbers<[1], [0], [0], [1], [0, 0, 1, 1], [], []>} : vector<256x4xf32>, vector<4x4xf32>, vector<256x4xf32> -> vector<256x4xf32>
    %27 = arith.addf %18, %26 : vector<256x4xf32>
    %c0_27 = arith.constant 0 : index
    %c0_28 = arith.constant 0 : index
    %c0_29 = arith.constant 0 : index
    %28 = vector.load %arg8[%c0_27, %c0_28, %c0_29] : memref<9x32x4xf32, #tpu.memory_space<vmem>>, vector<1x32x4xf32>
    %29 = vector.shape_cast %28 : vector<1x32x4xf32> to vector<32x4xf32>
    %cst_30 = arith.constant dense<0.000000e+00> : vector<56x4xf32>
    %30 = tpu.matmul %12, %29, %cst_30 {dimension_numbers = #tpu.dot_dimension_numbers<[1], [0], [0], [1], [0, 0, 1, 1], [], []>} : vector<56x32xf32>, vector<32x4xf32>, vector<56x4xf32> -> vector<56x4xf32>
    %c0_31 = arith.constant 0 : index
    %c0_32 = arith.constant 0 : index
    %c0_33 = arith.constant 0 : index
    %31 = vector.load %arg6[%c0_31, %c0_32, %c0_33] : memref<9x256x56xf32, #tpu.memory_space<vmem>>, vector<1x256x56xf32>
    %32 = vector.shape_cast %31 : vector<1x256x56xf32> to vector<256x56xf32>
    %cst_34 = arith.constant dense<0.000000e+00> : vector<256x4xf32>
    %33 = tpu.matmul %32, %30, %cst_34 {dimension_numbers = #tpu.dot_dimension_numbers<[1], [0], [0], [1], [0, 0, 1, 1], [], []>} : vector<256x56xf32>, vector<56x4xf32>, vector<256x4xf32> -> vector<256x4xf32>
    %34 = arith.addf %27, %33 : vector<256x4xf32>
    %c8 = arith.constant 8 : index
    %c0_35 = arith.constant 0 : index
    %35 = vector.load %arg12[%c8, %c0_35] : memref<304x4xf32, #tpu.memory_space<vmem>>, vector<256x4xf32>
    %c1 = arith.constant 1 : index
    %c0_36 = arith.constant 0 : index
    %c0_37 = arith.constant 0 : index
    %36 = vector.load %arg7[%c1, %c0_36, %c0_37] : memref<9x4x4xf32, #tpu.memory_space<vmem>>, vector<1x4x4xf32>
    %37 = vector.shape_cast %36 : vector<1x4x4xf32> to vector<4x4xf32>
    %cst_38 = arith.constant dense<0.000000e+00> : vector<256x4xf32>
    %38 = tpu.matmul %35, %37, %cst_38 {dimension_numbers = #tpu.dot_dimension_numbers<[1], [0], [0], [1], [0, 0, 1, 1], [], []>} : vector<256x4xf32>, vector<4x4xf32>, vector<256x4xf32> -> vector<256x4xf32>
    %39 = arith.addf %34, %38 : vector<256x4xf32>
    %c1_39 = arith.constant 1 : index
    %c0_40 = arith.constant 0 : index
    %c0_41 = arith.constant 0 : index
    %40 = vector.load %arg8[%c1_39, %c0_40, %c0_41] : memref<9x32x4xf32, #tpu.memory_space<vmem>>, vector<1x32x4xf32>
    %41 = vector.shape_cast %40 : vector<1x32x4xf32> to vector<32x4xf32>
    %cst_42 = arith.constant dense<0.000000e+00> : vector<56x4xf32>
    %42 = tpu.matmul %12, %41, %cst_42 {dimension_numbers = #tpu.dot_dimension_numbers<[1], [0], [0], [1], [0, 0, 1, 1], [], []>} : vector<56x32xf32>, vector<32x4xf32>, vector<56x4xf32> -> vector<56x4xf32>
    %c1_43 = arith.constant 1 : index
    %c0_44 = arith.constant 0 : index
    %c0_45 = arith.constant 0 : index
    %43 = vector.load %arg6[%c1_43, %c0_44, %c0_45] : memref<9x256x56xf32, #tpu.memory_space<vmem>>, vector<1x256x56xf32>
    %44 = vector.shape_cast %43 : vector<1x256x56xf32> to vector<256x56xf32>
    %cst_46 = arith.constant dense<0.000000e+00> : vector<256x4xf32>
    %45 = tpu.matmul %44, %42, %cst_46 {dimension_numbers = #tpu.dot_dimension_numbers<[1], [0], [0], [1], [0, 0, 1, 1], [], []>} : vector<256x56xf32>, vector<56x4xf32>, vector<256x4xf32> -> vector<256x4xf32>
    %46 = arith.addf %39, %45 : vector<256x4xf32>
    %c9 = arith.constant 9 : index
    %c0_47 = arith.constant 0 : index
    %47 = vector.load %arg12[%c9, %c0_47] : memref<304x4xf32, #tpu.memory_space<vmem>>, vector<256x4xf32>
    %c2 = arith.constant 2 : index
    %c0_48 = arith.constant 0 : index
    %c0_49 = arith.constant 0 : index
    %48 = vector.load %arg9[%c2, %c0_48, %c0_49] : memref<3x256x1xf32, #tpu.memory_space<vmem>>, vector<1x256x1xf32>
    %49 = vector.shape_cast %48 : vector<1x256x1xf32> to vector<256x1xf32>
    %50 = vector.broadcast %49 : vector<256x1xf32> to vector<256x4xf32>
    %51 = arith.mulf %47, %50 : vector<256x4xf32>
    %c2_50 = arith.constant 2 : index
    %c0_51 = arith.constant 0 : index
    %c0_52 = arith.constant 0 : index
    %52 = vector.load %arg7[%c2_50, %c0_51, %c0_52] : memref<9x4x4xf32, #tpu.memory_space<vmem>>, vector<1x4x4xf32>
    %53 = vector.shape_cast %52 : vector<1x4x4xf32> to vector<4x4xf32>
    %cst_53 = arith.constant dense<0.000000e+00> : vector<256x4xf32>
    %54 = tpu.matmul %51, %53, %cst_53 {dimension_numbers = #tpu.dot_dimension_numbers<[1], [0], [0], [1], [0, 0, 1, 1], [], []>} : vector<256x4xf32>, vector<4x4xf32>, vector<256x4xf32> -> vector<256x4xf32>
    %55 = arith.addf %46, %54 : vector<256x4xf32>
    %c2_54 = arith.constant 2 : index
    %c0_55 = arith.constant 0 : index
    %c0_56 = arith.constant 0 : index
    %56 = vector.load %arg8[%c2_54, %c0_55, %c0_56] : memref<9x32x4xf32, #tpu.memory_space<vmem>>, vector<1x32x4xf32>
    %57 = vector.shape_cast %56 : vector<1x32x4xf32> to vector<32x4xf32>
    %cst_57 = arith.constant dense<0.000000e+00> : vector<56x4xf32>
    %58 = tpu.matmul %12, %57, %cst_57 {dimension_numbers = #tpu.dot_dimension_numbers<[1], [0], [0], [1], [0, 0, 1, 1], [], []>} : vector<56x32xf32>, vector<32x4xf32>, vector<56x4xf32> -> vector<56x4xf32>
    %c2_58 = arith.constant 2 : index
    %c0_59 = arith.constant 0 : index
    %c0_60 = arith.constant 0 : index
    %59 = vector.load %arg6[%c2_58, %c0_59, %c0_60] : memref<9x256x56xf32, #tpu.memory_space<vmem>>, vector<1x256x56xf32>
    %60 = vector.shape_cast %59 : vector<1x256x56xf32> to vector<256x56xf32>
    %cst_61 = arith.constant dense<0.000000e+00> : vector<256x4xf32>
    %61 = tpu.matmul %60, %58, %cst_61 {dimension_numbers = #tpu.dot_dimension_numbers<[1], [0], [0], [1], [0, 0, 1, 1], [], []>} : vector<256x56xf32>, vector<56x4xf32>, vector<256x4xf32> -> vector<256x4xf32>
    %62 = arith.addf %55, %61 : vector<256x4xf32>
    %c23 = arith.constant 23 : index
    %c0_62 = arith.constant 0 : index
    %63 = vector.load %arg12[%c23, %c0_62] : memref<304x4xf32, #tpu.memory_space<vmem>>, vector<256x4xf32>
    %c0_63 = arith.constant 0 : index
    %c0_64 = arith.constant 0 : index
    %c0_65 = arith.constant 0 : index
    %64 = vector.load %arg9[%c0_63, %c0_64, %c0_65] : memref<3x256x1xf32, #tpu.memory_space<vmem>>, vector<1x256x1xf32>
    %65 = vector.shape_cast %64 : vector<1x256x1xf32> to vector<256x1xf32>
    %66 = vector.broadcast %65 : vector<256x1xf32> to vector<256x4xf32>
    %67 = arith.mulf %63, %66 : vector<256x4xf32>
    %c3 = arith.constant 3 : index
    %c0_66 = arith.constant 0 : index
    %c0_67 = arith.constant 0 : index
    %68 = vector.load %arg7[%c3, %c0_66, %c0_67] : memref<9x4x4xf32, #tpu.memory_space<vmem>>, vector<1x4x4xf32>
    %69 = vector.shape_cast %68 : vector<1x4x4xf32> to vector<4x4xf32>
    %cst_68 = arith.constant dense<0.000000e+00> : vector<256x4xf32>
    %70 = tpu.matmul %67, %69, %cst_68 {dimension_numbers = #tpu.dot_dimension_numbers<[1], [0], [0], [1], [0, 0, 1, 1], [], []>} : vector<256x4xf32>, vector<4x4xf32>, vector<256x4xf32> -> vector<256x4xf32>
    %71 = arith.addf %62, %70 : vector<256x4xf32>
    %c3_69 = arith.constant 3 : index
    %c0_70 = arith.constant 0 : index
    %c0_71 = arith.constant 0 : index
    %72 = vector.load %arg8[%c3_69, %c0_70, %c0_71] : memref<9x32x4xf32, #tpu.memory_space<vmem>>, vector<1x32x4xf32>
    %73 = vector.shape_cast %72 : vector<1x32x4xf32> to vector<32x4xf32>
    %cst_72 = arith.constant dense<0.000000e+00> : vector<56x4xf32>
    %74 = tpu.matmul %12, %73, %cst_72 {dimension_numbers = #tpu.dot_dimension_numbers<[1], [0], [0], [1], [0, 0, 1, 1], [], []>} : vector<56x32xf32>, vector<32x4xf32>, vector<56x4xf32> -> vector<56x4xf32>
    %c3_73 = arith.constant 3 : index
    %c0_74 = arith.constant 0 : index
    %c0_75 = arith.constant 0 : index
    %75 = vector.load %arg6[%c3_73, %c0_74, %c0_75] : memref<9x256x56xf32, #tpu.memory_space<vmem>>, vector<1x256x56xf32>
    %76 = vector.shape_cast %75 : vector<1x256x56xf32> to vector<256x56xf32>
    %cst_76 = arith.constant dense<0.000000e+00> : vector<256x4xf32>
    %77 = tpu.matmul %76, %74, %cst_76 {dimension_numbers = #tpu.dot_dimension_numbers<[1], [0], [0], [1], [0, 0, 1, 1], [], []>} : vector<256x56xf32>, vector<56x4xf32>, vector<256x4xf32> -> vector<256x4xf32>
    %78 = arith.addf %71, %77 : vector<256x4xf32>
    %c24_77 = arith.constant 24 : index
    %c0_78 = arith.constant 0 : index
    %79 = vector.load %arg12[%c24_77, %c0_78] : memref<304x4xf32, #tpu.memory_space<vmem>>, vector<256x4xf32>
    %c4 = arith.constant 4 : index
    %c0_79 = arith.constant 0 : index
    %c0_80 = arith.constant 0 : index
    %80 = vector.load %arg7[%c4, %c0_79, %c0_80] : memref<9x4x4xf32, #tpu.memory_space<vmem>>, vector<1x4x4xf32>
    %81 = vector.shape_cast %80 : vector<1x4x4xf32> to vector<4x4xf32>
    %cst_81 = arith.constant dense<0.000000e+00> : vector<256x4xf32>
    %82 = tpu.matmul %79, %81, %cst_81 {dimension_numbers = #tpu.dot_dimension_numbers<[1], [0], [0], [1], [0, 0, 1, 1], [], []>} : vector<256x4xf32>, vector<4x4xf32>, vector<256x4xf32> -> vector<256x4xf32>
    %83 = arith.addf %78, %82 : vector<256x4xf32>
    %c4_82 = arith.constant 4 : index
    %c0_83 = arith.constant 0 : index
    %c0_84 = arith.constant 0 : index
    %84 = vector.load %arg8[%c4_82, %c0_83, %c0_84] : memref<9x32x4xf32, #tpu.memory_space<vmem>>, vector<1x32x4xf32>
    %85 = vector.shape_cast %84 : vector<1x32x4xf32> to vector<32x4xf32>
    %cst_85 = arith.constant dense<0.000000e+00> : vector<56x4xf32>
    %86 = tpu.matmul %12, %85, %cst_85 {dimension_numbers = #tpu.dot_dimension_numbers<[1], [0], [0], [1], [0, 0, 1, 1], [], []>} : vector<56x32xf32>, vector<32x4xf32>, vector<56x4xf32> -> vector<56x4xf32>
    %c4_86 = arith.constant 4 : index
    %c0_87 = arith.constant 0 : index
    %c0_88 = arith.constant 0 : index
    %87 = vector.load %arg6[%c4_86, %c0_87, %c0_88] : memref<9x256x56xf32, #tpu.memory_space<vmem>>, vector<1x256x56xf32>
    %88 = vector.shape_cast %87 : vector<1x256x56xf32> to vector<256x56xf32>
    %cst_89 = arith.constant dense<0.000000e+00> : vector<256x4xf32>
    %89 = tpu.matmul %88, %86, %cst_89 {dimension_numbers = #tpu.dot_dimension_numbers<[1], [0], [0], [1], [0, 0, 1, 1], [], []>} : vector<256x56xf32>, vector<56x4xf32>, vector<256x4xf32> -> vector<256x4xf32>
    %90 = arith.addf %83, %89 : vector<256x4xf32>
    %c25 = arith.constant 25 : index
    %c0_90 = arith.constant 0 : index
    %91 = vector.load %arg12[%c25, %c0_90] : memref<304x4xf32, #tpu.memory_space<vmem>>, vector<256x4xf32>
    %c2_91 = arith.constant 2 : index
    %c0_92 = arith.constant 0 : index
    %c0_93 = arith.constant 0 : index
    %92 = vector.load %arg9[%c2_91, %c0_92, %c0_93] : memref<3x256x1xf32, #tpu.memory_space<vmem>>, vector<1x256x1xf32>
    %93 = vector.shape_cast %92 : vector<1x256x1xf32> to vector<256x1xf32>
    %94 = vector.broadcast %93 : vector<256x1xf32> to vector<256x4xf32>
    %95 = arith.mulf %91, %94 : vector<256x4xf32>
    %c5 = arith.constant 5 : index
    %c0_94 = arith.constant 0 : index
    %c0_95 = arith.constant 0 : index
    %96 = vector.load %arg7[%c5, %c0_94, %c0_95] : memref<9x4x4xf32, #tpu.memory_space<vmem>>, vector<1x4x4xf32>
    %97 = vector.shape_cast %96 : vector<1x4x4xf32> to vector<4x4xf32>
    %cst_96 = arith.constant dense<0.000000e+00> : vector<256x4xf32>
    %98 = tpu.matmul %95, %97, %cst_96 {dimension_numbers = #tpu.dot_dimension_numbers<[1], [0], [0], [1], [0, 0, 1, 1], [], []>} : vector<256x4xf32>, vector<4x4xf32>, vector<256x4xf32> -> vector<256x4xf32>
    %99 = arith.addf %90, %98 : vector<256x4xf32>
    %c5_97 = arith.constant 5 : index
    %c0_98 = arith.constant 0 : index
    %c0_99 = arith.constant 0 : index
    %100 = vector.load %arg8[%c5_97, %c0_98, %c0_99] : memref<9x32x4xf32, #tpu.memory_space<vmem>>, vector<1x32x4xf32>
    %101 = vector.shape_cast %100 : vector<1x32x4xf32> to vector<32x4xf32>
    %cst_100 = arith.constant dense<0.000000e+00> : vector<56x4xf32>
    %102 = tpu.matmul %12, %101, %cst_100 {dimension_numbers = #tpu.dot_dimension_numbers<[1], [0], [0], [1], [0, 0, 1, 1], [], []>} : vector<56x32xf32>, vector<32x4xf32>, vector<56x4xf32> -> vector<56x4xf32>
    %c5_101 = arith.constant 5 : index
    %c0_102 = arith.constant 0 : index
    %c0_103 = arith.constant 0 : index
    %103 = vector.load %arg6[%c5_101, %c0_102, %c0_103] : memref<9x256x56xf32, #tpu.memory_space<vmem>>, vector<1x256x56xf32>
    %104 = vector.shape_cast %103 : vector<1x256x56xf32> to vector<256x56xf32>
    %cst_104 = arith.constant dense<0.000000e+00> : vector<256x4xf32>
    %105 = tpu.matmul %104, %102, %cst_104 {dimension_numbers = #tpu.dot_dimension_numbers<[1], [0], [0], [1], [0, 0, 1, 1], [], []>} : vector<256x56xf32>, vector<56x4xf32>, vector<256x4xf32> -> vector<256x4xf32>
    %106 = arith.addf %99, %105 : vector<256x4xf32>
    %c39 = arith.constant 39 : index
    %c0_105 = arith.constant 0 : index
    %107 = vector.load %arg12[%c39, %c0_105] : memref<304x4xf32, #tpu.memory_space<vmem>>, vector<256x4xf32>
    %c0_106 = arith.constant 0 : index
    %c0_107 = arith.constant 0 : index
    %c0_108 = arith.constant 0 : index
    %108 = vector.load %arg9[%c0_106, %c0_107, %c0_108] : memref<3x256x1xf32, #tpu.memory_space<vmem>>, vector<1x256x1xf32>
    %109 = vector.shape_cast %108 : vector<1x256x1xf32> to vector<256x1xf32>
    %110 = vector.broadcast %109 : vector<256x1xf32> to vector<256x4xf32>
    %111 = arith.mulf %107, %110 : vector<256x4xf32>
    %c6 = arith.constant 6 : index
    %c0_109 = arith.constant 0 : index
    %c0_110 = arith.constant 0 : index
    %112 = vector.load %arg7[%c6, %c0_109, %c0_110] : memref<9x4x4xf32, #tpu.memory_space<vmem>>, vector<1x4x4xf32>
    %113 = vector.shape_cast %112 : vector<1x4x4xf32> to vector<4x4xf32>
    %cst_111 = arith.constant dense<0.000000e+00> : vector<256x4xf32>
    %114 = tpu.matmul %111, %113, %cst_111 {dimension_numbers = #tpu.dot_dimension_numbers<[1], [0], [0], [1], [0, 0, 1, 1], [], []>} : vector<256x4xf32>, vector<4x4xf32>, vector<256x4xf32> -> vector<256x4xf32>
    %115 = arith.addf %106, %114 : vector<256x4xf32>
    %c6_112 = arith.constant 6 : index
    %c0_113 = arith.constant 0 : index
    %c0_114 = arith.constant 0 : index
    %116 = vector.load %arg8[%c6_112, %c0_113, %c0_114] : memref<9x32x4xf32, #tpu.memory_space<vmem>>, vector<1x32x4xf32>
    %117 = vector.shape_cast %116 : vector<1x32x4xf32> to vector<32x4xf32>
    %cst_115 = arith.constant dense<0.000000e+00> : vector<56x4xf32>
    %118 = tpu.matmul %12, %117, %cst_115 {dimension_numbers = #tpu.dot_dimension_numbers<[1], [0], [0], [1], [0, 0, 1, 1], [], []>} : vector<56x32xf32>, vector<32x4xf32>, vector<56x4xf32> -> vector<56x4xf32>
    %c6_116 = arith.constant 6 : index
    %c0_117 = arith.constant 0 : index
    %c0_118 = arith.constant 0 : index
    %119 = vector.load %arg6[%c6_116, %c0_117, %c0_118] : memref<9x256x56xf32, #tpu.memory_space<vmem>>, vector<1x256x56xf32>
    %120 = vector.shape_cast %119 : vector<1x256x56xf32> to vector<256x56xf32>
    %cst_119 = arith.constant dense<0.000000e+00> : vector<256x4xf32>
    %121 = tpu.matmul %120, %118, %cst_119 {dimension_numbers = #tpu.dot_dimension_numbers<[1], [0], [0], [1], [0, 0, 1, 1], [], []>} : vector<256x56xf32>, vector<56x4xf32>, vector<256x4xf32> -> vector<256x4xf32>
    %122 = arith.addf %115, %121 : vector<256x4xf32>
    %c40 = arith.constant 40 : index
    %c0_120 = arith.constant 0 : index
    %123 = vector.load %arg12[%c40, %c0_120] : memref<304x4xf32, #tpu.memory_space<vmem>>, vector<256x4xf32>
    %c7_121 = arith.constant 7 : index
    %c0_122 = arith.constant 0 : index
    %c0_123 = arith.constant 0 : index
    %124 = vector.load %arg7[%c7_121, %c0_122, %c0_123] : memref<9x4x4xf32, #tpu.memory_space<vmem>>, vector<1x4x4xf32>
    %125 = vector.shape_cast %124 : vector<1x4x4xf32> to vector<4x4xf32>
    %cst_124 = arith.constant dense<0.000000e+00> : vector<256x4xf32>
    %126 = tpu.matmul %123, %125, %cst_124 {dimension_numbers = #tpu.dot_dimension_numbers<[1], [0], [0], [1], [0, 0, 1, 1], [], []>} : vector<256x4xf32>, vector<4x4xf32>, vector<256x4xf32> -> vector<256x4xf32>
    %127 = arith.addf %122, %126 : vector<256x4xf32>
    %c7_125 = arith.constant 7 : index
    %c0_126 = arith.constant 0 : index
    %c0_127 = arith.constant 0 : index
    %128 = vector.load %arg8[%c7_125, %c0_126, %c0_127] : memref<9x32x4xf32, #tpu.memory_space<vmem>>, vector<1x32x4xf32>
    %129 = vector.shape_cast %128 : vector<1x32x4xf32> to vector<32x4xf32>
    %cst_128 = arith.constant dense<0.000000e+00> : vector<56x4xf32>
    %130 = tpu.matmul %12, %129, %cst_128 {dimension_numbers = #tpu.dot_dimension_numbers<[1], [0], [0], [1], [0, 0, 1, 1], [], []>} : vector<56x32xf32>, vector<32x4xf32>, vector<56x4xf32> -> vector<56x4xf32>
    %c7_129 = arith.constant 7 : index
    %c0_130 = arith.constant 0 : index
    %c0_131 = arith.constant 0 : index
    %131 = vector.load %arg6[%c7_129, %c0_130, %c0_131] : memref<9x256x56xf32, #tpu.memory_space<vmem>>, vector<1x256x56xf32>
    %132 = vector.shape_cast %131 : vector<1x256x56xf32> to vector<256x56xf32>
    %cst_132 = arith.constant dense<0.000000e+00> : vector<256x4xf32>
    %133 = tpu.matmul %132, %130, %cst_132 {dimension_numbers = #tpu.dot_dimension_numbers<[1], [0], [0], [1], [0, 0, 1, 1], [], []>} : vector<256x56xf32>, vector<56x4xf32>, vector<256x4xf32> -> vector<256x4xf32>
    %134 = arith.addf %127, %133 : vector<256x4xf32>
    %c41 = arith.constant 41 : index
    %c0_133 = arith.constant 0 : index
    %135 = vector.load %arg12[%c41, %c0_133] : memref<304x4xf32, #tpu.memory_space<vmem>>, vector<256x4xf32>
    %c2_134 = arith.constant 2 : index
    %c0_135 = arith.constant 0 : index
    %c0_136 = arith.constant 0 : index
    %136 = vector.load %arg9[%c2_134, %c0_135, %c0_136] : memref<3x256x1xf32, #tpu.memory_space<vmem>>, vector<1x256x1xf32>
    %137 = vector.shape_cast %136 : vector<1x256x1xf32> to vector<256x1xf32>
    %138 = vector.broadcast %137 : vector<256x1xf32> to vector<256x4xf32>
    %139 = arith.mulf %135, %138 : vector<256x4xf32>
    %c8_137 = arith.constant 8 : index
    %c0_138 = arith.constant 0 : index
    %c0_139 = arith.constant 0 : index
    %140 = vector.load %arg7[%c8_137, %c0_138, %c0_139] : memref<9x4x4xf32, #tpu.memory_space<vmem>>, vector<1x4x4xf32>
    %141 = vector.shape_cast %140 : vector<1x4x4xf32> to vector<4x4xf32>
    %cst_140 = arith.constant dense<0.000000e+00> : vector<256x4xf32>
    %142 = tpu.matmul %139, %141, %cst_140 {dimension_numbers = #tpu.dot_dimension_numbers<[1], [0], [0], [1], [0, 0, 1, 1], [], []>} : vector<256x4xf32>, vector<4x4xf32>, vector<256x4xf32> -> vector<256x4xf32>
    %143 = arith.addf %134, %142 : vector<256x4xf32>
    %c8_141 = arith.constant 8 : index
    %c0_142 = arith.constant 0 : index
    %c0_143 = arith.constant 0 : index
    %144 = vector.load %arg8[%c8_141, %c0_142, %c0_143] : memref<9x32x4xf32, #tpu.memory_space<vmem>>, vector<1x32x4xf32>
    %145 = vector.shape_cast %144 : vector<1x32x4xf32> to vector<32x4xf32>
    %cst_144 = arith.constant dense<0.000000e+00> : vector<56x4xf32>
    %146 = tpu.matmul %12, %145, %cst_144 {dimension_numbers = #tpu.dot_dimension_numbers<[1], [0], [0], [1], [0, 0, 1, 1], [], []>} : vector<56x32xf32>, vector<32x4xf32>, vector<56x4xf32> -> vector<56x4xf32>
    %c8_145 = arith.constant 8 : index
    %c0_146 = arith.constant 0 : index
    %c0_147 = arith.constant 0 : index
    %147 = vector.load %arg6[%c8_145, %c0_146, %c0_147] : memref<9x256x56xf32, #tpu.memory_space<vmem>>, vector<1x256x56xf32>
    %148 = vector.shape_cast %147 : vector<1x256x56xf32> to vector<256x56xf32>
    %cst_148 = arith.constant dense<0.000000e+00> : vector<256x4xf32>
    %149 = tpu.matmul %148, %146, %cst_148 {dimension_numbers = #tpu.dot_dimension_numbers<[1], [0], [0], [1], [0, 0, 1, 1], [], []>} : vector<256x56xf32>, vector<56x4xf32>, vector<256x4xf32> -> vector<256x4xf32>
    %150 = arith.addf %143, %149 : vector<256x4xf32>
    %c0_149 = arith.constant 0 : index
    %c0_150 = arith.constant 0 : index
    %151 = vector.load %arg10[%c0_149, %c0_150] : memref<1x4xf32, #tpu.memory_space<vmem>>, vector<1x4xf32>
    %152 = vector.broadcast %151 : vector<1x4xf32> to vector<256x4xf32>
    %153 = arith.addf %150, %152 : vector<256x4xf32>
    %cst_151 = arith.constant 0.000000e+00 : f32
    %154 = vector.broadcast %cst_151 : f32 to vector<256x4xf32>
    %155 = arith.maximumf %153, %154 : vector<256x4xf32>
    %c0_152 = arith.constant 0 : index
    %c0_153 = arith.constant 0 : index
    %c0_154 = arith.constant 0 : index
    %156 = vector.load %arg11[%c0_152, %c0_153, %c0_154] : memref<1x256x4xf32, #tpu.memory_space<vmem>>, vector<1x256x4xf32>
    %157 = vector.shape_cast %156 : vector<1x256x4xf32> to vector<256x4xf32>
    %158 = vector.shape_cast %155 : vector<256x4xf32> to vector<1x256x4xf32>
    tpu.vector_store %arg11[%c0_152, %c0_153, %c0_154], %158 {strides = array<i32>} : memref<1x256x4xf32, #tpu.memory_space<vmem>>, vector<1x256x4xf32>,
    return
  }
  func.func @transform_0(%arg0: i32) -> (i32, i32, i32) {
    %c0_i32 = arith.constant 0 : i32
    %c0_i32_0 = arith.constant 0 : i32
    %c0_i32_1 = arith.constant 0 : i32
    return %arg0, %c0_i32, %c0_i32_0 : i32, i32, i32
  }
  func.func @transform_1(%arg0: i32) -> (i32, i32) {
    %c0_i32 = arith.constant 0 : i32
    %c0_i32_0 = arith.constant 0 : i32
    %c0_i32_1 = arith.constant 0 : i32
    return %c0_i32, %c0_i32_0 : i32, i32
  }
  func.func @transform_2(%arg0: i32) -> (i32, i32) {
    %c0_i32 = arith.constant 0 : i32
    %c0_i32_0 = arith.constant 0 : i32
    %c0_i32_1 = arith.constant 0 : i32
    return %c0_i32, %c0_i32_0 : i32, i32
  }
  func.func @transform_3(%arg0: i32) -> (i32, i32) {
    %c0_i32 = arith.constant 0 : i32
    %c0_i32_0 = arith.constant 0 : i32
    %c0_i32_1 = arith.constant 0 : i32
    return %c0_i32, %c0_i32_0 : i32, i32
  }
  func.func @transform_4(%arg0: i32) -> (i32, i32) {
    %c0_i32 = arith.constant 0 : i32
    %c0_i32_0 = arith.constant 0 : i32
    %c0_i32_1 = arith.constant 0 : i32
    return %c0_i32, %c0_i32_0 : i32, i32
  }
  func.func @transform_5(%arg0: i32) -> (i32, i32, i32) {
    %c0_i32 = arith.constant 0 : i32
    %c0_i32_0 = arith.constant 0 : i32
    %c0_i32_1 = arith.constant 0 : i32
    %c0_i32_2 = arith.constant 0 : i32
    return %c0_i32, %c0_i32_0, %c0_i32_1 : i32, i32, i32
  }
  func.func @transform_6(%arg0: i32) -> (i32, i32, i32) {
    %c0_i32 = arith.constant 0 : i32
    %c0_i32_0 = arith.constant 0 : i32
    %c0_i32_1 = arith.constant 0 : i32
    %c0_i32_2 = arith.constant 0 : i32
    return %c0_i32, %c0_i32_0, %c0_i32_1 : i32, i32, i32
  }
  func.func @transform_7(%arg0: i32) -> (i32, i32, i32) {
    %c0_i32 = arith.constant 0 : i32
    %c0_i32_0 = arith.constant 0 : i32
    %c0_i32_1 = arith.constant 0 : i32
    %c0_i32_2 = arith.constant 0 : i32
    return %c0_i32, %c0_i32_0, %c0_i32_1 : i32, i32, i32
  }
  func.func @transform_8(%arg0: i32) -> (i32, i32, i32) {
    %c0_i32 = arith.constant 0 : i32
    %c0_i32_0 = arith.constant 0 : i32
    %c0_i32_1 = arith.constant 0 : i32
    %c0_i32_2 = arith.constant 0 : i32
    return %c0_i32, %c0_i32_0, %c0_i32_1 : i32, i32, i32
  }
  func.func @transform_9(%arg0: i32) -> (i32, i32) {
    %c0_i32 = arith.constant 0 : i32
    %c0_i32_0 = arith.constant 0 : i32
    %c0_i32_1 = arith.constant 0 : i32
    return %c0_i32, %c0_i32_0 : i32, i32
  }
  func.func @transform_10(%arg0: i32) -> (i32, i32, i32) {
    %c0_i32 = arith.constant 0 : i32
    %c0_i32_0 = arith.constant 0 : i32
    %c0_i32_1 = arith.constant 0 : i32
    return %arg0, %c0_i32, %c0_i32_0 : i32, i32, i32
  }
}

</mosaic_0001>

<llo_original>
// kernel: tpu_custom_call.1
$region0: #{tpu_custom_call.1}
  #allocation0 [shape = 'u32[]', space=smem, size = 0x4, offset = 0x4, fixed_abs, tag = 'smem constant byte address 0x4 - core index']
  #allocation1 [shape = 'u32[144,128]{1,0:T(1,128)}', space=vmem, size = 0x12000, scoped, tag = 'internal scratch']
  #allocation2 [shape = 'f32[304,4]{1,0:T(8,128)}', space=vmem, size = 0x26000, scoped, tag = 'scratch operand']
  %s0 = inlined_call_operand.vmem [shape: f32[2,256,4], index: 0, kind: input, shape index: {}]
  %s1 = inlined_call_operand.vmem [shape: f32[56,256], index: 1, kind: input, shape index: {}]
  %s2 = inlined_call_operand.vmem [shape: f32[4,32], index: 2, kind: input, shape index: {}]
  %s3 = inlined_call_operand.vmem [shape: f32[1,32], index: 3, kind: input, shape index: {}]
  %s4 = inlined_call_operand.vmem [shape: f32[56,32], index: 4, kind: input, shape index: {}]
  %s5 = inlined_call_operand.vmem [shape: f32[9,256,56], index: 5, kind: input, shape index: {}]
  %s6 = inlined_call_operand.vmem [shape: f32[9,4,4], index: 6, kind: input, shape index: {}]
  %s7 = inlined_call_operand.vmem [shape: f32[9,32,4], index: 7, kind: input, shape index: {}]
  %s8 = inlined_call_operand.vmem [shape: f32[3,256,1], index: 8, kind: input, shape index: {}]
  %s9 = inlined_call_operand.vmem [shape: f32[1,4], index: 9, kind: input, shape index: {}]
  %s10 = inlined_call_operand.vmem [shape: f32[2,256,4], index: 10, kind: output, shape index: {}]
  %s11 = sld [smem:[#allocation0]]
  $region73: #{tpu_custom_call.1} parent=0
    _
  %s13 = ssub.s32 1, %s11
  %s14 = scalar_select 0, %s13, %s11
  loop: start=0, step=1, limit=4
  $region2: #{tpu_custom_call.1} parent=0 // loop_pre_header
    _
  $region3: #{tpu_custom_call.1} parent=0 // loop_header
    %s16 = sphi 0, %s20
    %p17 = scmp.ge.s32.totalorder %s16, 4
    %s26 = sphi 0, %s28
    %s29 = sphi 0, %s26
    %s30 = sphi 0, %s29
    %s46 = sphi 0, %s30
    %s50 = sphi 0, %s50
    %s52 = sphi 0, %s50
    %s53 = sphi 0, %s52
    %s67 = sphi 0, %s53
    %s71 = sphi 0, %s71
    %s73 = sphi 0, %s71
    %s74 = sphi 0, %s73
    %s88 = sphi 0, %s74
    %s92 = sphi 0, %s92
    %s94 = sphi 0, %s92
    %s95 = sphi 0, %s94
    %s109 = sphi 0, %s95
    %s113 = sphi 0, %s113
    %s115 = sphi 0, %s113
    %s116 = sphi 0, %s115
    %s130 = sphi 0, %s116
    %s134 = sphi 0, %s134
    %s136 = sphi 0, %s134
    %s137 = sphi 0, %s136
    %s151 = sphi 0, %s137
    %s155 = sphi 0, %s155
    %s157 = sphi 0, %s155
    %s158 = sphi 0, %s157
    %s172 = sphi 0, %s158
    %s176 = sphi 0, %s176
    %s178 = sphi 0, %s176
    %s179 = sphi 0, %s178
    %s193 = sphi 0, %s179
    %s197 = sphi 0, %s197
    %s199 = sphi 0, %s197
    %s200 = sphi 0, %s199
    %s214 = sphi 0, %s200
    %s218 = sphi 0, %s218
    %s220 = sphi 0, %s218
    %s221 = sphi 0, %s220
    %s235 = sphi 0, %s221
    %s241 = sphi 0, %s243
    %s244 = sphi 0, %s241
    %s245 = sphi 0, %s244
    %s261 = sphi 0, %s245
  $region4: #{tpu_custom_call.1} parent=0 // loop_header_branch
    %19 = sbr.rel (%p17) target = $region8
  $region5: #{tpu_custom_call.1} parent=0 // loop_body
    %s21 = ssub.s32 %s16, 1
    %s22 = ssub.s32 %s16, 2
    %s23 = sadd.s32 %s16, 1
    %s24 = ssub.s32 %s16, %s23
    %p25 = scmp.eq.s32.totalorder %s24, 0
    %s27 = sadd.s32 %s26, 1
    %s28 = scalar_select %p25, %s26, %s27
    %p31 = pneg %p25
    %p32 = scmp.eq.s32.totalorder %s16, 1
    %p33 = por %p31, %p32
    %p34 = scmp.ne.s32.totalorder %s26, %s29
    %p35 = scmp.eq.s32.totalorder %s16, 0
    %p36 = por %p34, %p35
    %p37 = scmp.ne.s32.totalorder %s26, %s29
    %p38 = scmp.eq.s32.totalorder %s21, 1
    %p39 = por %p37, %p38
    %p40 = scmp.ne.s32.totalorder %s29, %s30
    %p41 = scmp.eq.s32.totalorder %s21, 0
    %p42 = por %p40, %p41
    %p43 = scmp.ne.s32.totalorder %s29, %s30
    %p44 = scmp.eq.s32.totalorder %s22, 1
    %p45 = por %p43, %p44
    %p47 = scmp.ne.s32.totalorder %s30, %s46
    %p48 = scmp.eq.s32.totalorder %s22, 0
    %p49 = por %p47, %p48
    %s51 = sadd.s32 %s50, 1
    %p54 = scmp.eq.s32.totalorder %s16, 1
    %p55 = scmp.ne.s32.totalorder %s50, %s52
    %p56 = scmp.eq.s32.totalorder %s16, 0
    %p57 = por %p55, %p56
    %p58 = scmp.ne.s32.totalorder %s50, %s52
    %p59 = scmp.eq.s32.totalorder %s21, 1
    %p60 = por %p58, %p59
    %p61 = scmp.ne.s32.totalorder %s52, %s53
    %p62 = scmp.eq.s32.totalorder %s21, 0
    %p63 = por %p61, %p62
    %p64 = scmp.ne.s32.totalorder %s52, %s53
    %p65 = scmp.eq.s32.totalorder %s22, 1
    %p66 = por %p64, %p65
    %p68 = scmp.ne.s32.totalorder %s53, %s67
    %p69 = scmp.eq.s32.totalorder %s22, 0
    %p70 = por %p68, %p69
    %s72 = sadd.s32 %s71, 1
    %p75 = scmp.eq.s32.totalorder %s16, 1
    %p76 = scmp.ne.s32.totalorder %s71, %s73
    %p77 = scmp.eq.s32.totalorder %s16, 0
    %p78 = por %p76, %p77
    %p79 = scmp.ne.s32.totalorder %s71, %s73
    %p80 = scmp.eq.s32.totalorder %s21, 1
    %p81 = por %p79, %p80
    %p82 = scmp.ne.s32.totalorder %s73, %s74
    %p83 = scmp.eq.s32.totalorder %s21, 0
    %p84 = por %p82, %p83
    %p85 = scmp.ne.s32.totalorder %s73, %s74
    %p86 = scmp.eq.s32.totalorder %s22, 1
    %p87 = por %p85, %p86
    %p89 = scmp.ne.s32.totalorder %s74, %s88
    %p90 = scmp.eq.s32.totalorder %s22, 0
    %p91 = por %p89, %p90
    %s93 = sadd.s32 %s92, 1
    %p96 = scmp.eq.s32.totalorder %s16, 1
    %p97 = scmp.ne.s32.totalorder %s92, %s94
    %p98 = scmp.eq.s32.totalorder %s16, 0
    %p99 = por %p97, %p98
    %p100 = scmp.ne.s32.totalorder %s92, %s94
    %p101 = scmp.eq.s32.totalorder %s21, 1
    %p102 = por %p100, %p101
    %p103 = scmp.ne.s32.totalorder %s94, %s95
    %p104 = scmp.eq.s32.totalorder %s21, 0
    %p105 = por %p103, %p104
    %p106 = scmp.ne.s32.totalorder %s94, %s95
    %p107 = scmp.eq.s32.totalorder %s22, 1
    %p108 = por %p106, %p107
    %p110 = scmp.ne.s32.totalorder %s95, %s109
    %p111 = scmp.eq.s32.totalorder %s22, 0
    %p112 = por %p110, %p111
    %s114 = sadd.s32 %s113, 1
    %p117 = scmp.eq.s32.totalorder %s16, 1
    %p118 = scmp.ne.s32.totalorder %s113, %s115
    %p119 = scmp.eq.s32.totalorder %s16, 0
    %p120 = por %p118, %p119
    %p121 = scmp.ne.s32.totalorder %s113, %s115
    %p122 = scmp.eq.s32.totalorder %s21, 1
    %p123 = por %p121, %p122
    %p124 = scmp.ne.s32.totalorder %s115, %s116
    %p125 = scmp.eq.s32.totalorder %s21, 0
    %p126 = por %p124, %p125
    %p127 = scmp.ne.s32.totalorder %s115, %s116
    %p128 = scmp.eq.s32.totalorder %s22, 1
    %p129 = por %p127, %p128
    %p131 = scmp.ne.s32.totalorder %s116, %s130
    %p132 = scmp.eq.s32.totalorder %s22, 0
    %p133 = por %p131, %p132
    %s135 = sadd.s32 %s134, 1
    %p138 = scmp.eq.s32.totalorder %s16, 1
    %p139 = scmp.ne.s32.totalorder %s134, %s136
    %p140 = scmp.eq.s32.totalorder %s16, 0
    %p141 = por %p139, %p140
    %p142 = scmp.ne.s32.totalorder %s134, %s136
    %p143 = scmp.eq.s32.totalorder %s21, 1
    %p144 = por %p142, %p143
    %p145 = scmp.ne.s32.totalorder %s136, %s137
    %p146 = scmp.eq.s32.totalorder %s21, 0
    %p147 = por %p145, %p146
    %p148 = scmp.ne.s32.totalorder %s136, %s137
    %p149 = scmp.eq.s32.totalorder %s22, 1
    %p150 = por %p148, %p149
    %p152 = scmp.ne.s32.totalorder %s137, %s151
    %p153 = scmp.eq.s32.totalorder %s22, 0
    %p154 = por %p152, %p153
    %s156 = sadd.s32 %s155, 1
    %p159 = scmp.eq.s32.totalorder %s16, 1
    %p160 = scmp.ne.s32.totalorder %s155, %s157
    %p161 = scmp.eq.s32.totalorder %s16, 0
    %p162 = por %p160, %p161
    %p163 = scmp.ne.s32.totalorder %s155, %s157
    %p164 = scmp.eq.s32.totalorder %s21, 1
    %p165 = por %p163, %p164
    %p166 = scmp.ne.s32.totalorder %s157, %s158
    %p167 = scmp.eq.s32.totalorder %s21, 0
    %p168 = por %p166, %p167
    %p169 = scmp.ne.s32.totalorder %s157, %s158
    %p170 = scmp.eq.s32.totalorder %s22, 1
    %p171 = por %p169, %p170
    %p173 = scmp.ne.s32.totalorder %s158, %s172
    %p174 = scmp.eq.s32.totalorder %s22, 0
    %p175 = por %p173, %p174
    %s177 = sadd.s32 %s176, 1
    %p180 = scmp.eq.s32.totalorder %s16, 1
    %p181 = scmp.ne.s32.totalorder %s176, %s178
    %p182 = scmp.eq.s32.totalorder %s16, 0
    %p183 = por %p181, %p182
    %p184 = scmp.ne.s32.totalorder %s176, %s178
    %p185 = scmp.eq.s32.totalorder %s21, 1
    %p186 = por %p184, %p185
    %p187 = scmp.ne.s32.totalorder %s178, %s179
    %p188 = scmp.eq.s32.totalorder %s21, 0
    %p189 = por %p187, %p188
    %p190 = scmp.ne.s32.totalorder %s178, %s179
    %p191 = scmp.eq.s32.totalorder %s22, 1
    %p192 = por %p190, %p191
    %p194 = scmp.ne.s32.totalorder %s179, %s193
    %p195 = scmp.eq.s32.totalorder %s22, 0
    %p196 = por %p194, %p195
    %s198 = sadd.s32 %s197, 1
    %p201 = scmp.eq.s32.totalorder %s16, 1
    %p202 = scmp.ne.s32.totalorder %s197, %s199
    %p203 = scmp.eq.s32.totalorder %s16, 0
    %p204 = por %p202, %p203
    %p205 = scmp.ne.s32.totalorder %s197, %s199
    %p206 = scmp.eq.s32.totalorder %s21, 1
    %p207 = por %p205, %p206
    %p208 = scmp.ne.s32.totalorder %s199, %s200
    %p209 = scmp.eq.s32.totalorder %s21, 0
    %p210 = por %p208, %p209
    %p211 = scmp.ne.s32.totalorder %s199, %s200
    %p212 = scmp.eq.s32.totalorder %s22, 1
    %p213 = por %p211, %p212
    %p215 = scmp.ne.s32.totalorder %s200, %s214
    %p216 = scmp.eq.s32.totalorder %s22, 0
    %p217 = por %p215, %p216
    %s219 = sadd.s32 %s218, 1
    %p222 = scmp.eq.s32.totalorder %s16, 1
    %p223 = scmp.ne.s32.totalorder %s218, %s220
    %p224 = scmp.eq.s32.totalorder %s16, 0
    %p225 = por %p223, %p224
    %p226 = scmp.ne.s32.totalorder %s218, %s220
    %p227 = scmp.eq.s32.totalorder %s21, 1
    %p228 = por %p226, %p227
    %p229 = scmp.ne.s32.totalorder %s220, %s221
    %p230 = scmp.eq.s32.totalorder %s21, 0
    %p231 = por %p229, %p230
    %p232 = scmp.ne.s32.totalorder %s220, %s221
    %p233 = scmp.eq.s32.totalorder %s22, 1
    %p234 = por %p232, %p233
    %p236 = scmp.ne.s32.totalorder %s221, %s235
    %p237 = scmp.eq.s32.totalorder %s22, 0
    %p238 = por %p236, %p237
    %s239 = ssub.s32 %s16, %s23
    %p240 = scmp.eq.s32.totalorder %s239, 0
    %s242 = sadd.s32 %s241, 1
    %s243 = scalar_select %p240, %s241, %s242
    %p246 = pneg %p240
    %p247 = scmp.eq.s32.totalorder %s16, 1
    %p248 = por %p246, %p247
    %p249 = scmp.ne.s32.totalorder %s241, %s244
    %p250 = scmp.eq.s32.totalorder %s16, 0
    %p251 = por %p249, %p250
    %p252 = scmp.ne.s32.totalorder %s241, %s244
    %p253 = scmp.eq.s32.totalorder %s21, 1
    %p254 = por %p252, %p253
    %p255 = scmp.ne.s32.totalorder %s244, %s245
    %p256 = scmp.eq.s32.totalorder %s21, 0
    %p257 = por %p255, %p256
    %p258 = scmp.ne.s32.totalorder %s244, %s245
    %p259 = scmp.eq.s32.totalorder %s22, 1
    %p260 = por %p258, %p259
    %p262 = scmp.ne.s32.totalorder %s245, %s261
    %p263 = scmp.eq.s32.totalorder %s22, 0
    %p264 = por %p262, %p263
    %p265 = scmp.le.s32.totalorder 1, %s16
    %p266 = scmp.lt.s32.totalorder %s16, 3
    %p267 = pnand %p265, %p266
    %p268 = pneg %p267
    // Predicated region
    $region9: #{tpu_custom_call.1} parent=5 // pred_check
      _
    $region10: #{tpu_custom_call.1} parent=5 // pred_check_branch
      %270 = sbr.rel (%p267) target = $region12
    $region11: #{tpu_custom_call.1} parent=5 // pred_region
      %s271 = ssub.s32 %s16, 1
      // Predicated region
      $region13: #{tpu_custom_call.1} parent=11 // pred_check
        %p272 = pneg %p63
      $region14: #{tpu_custom_call.1} parent=11 // pred_check_branch
        %274 = sbr.rel (%p272) target = $region16
      $region15: #{tpu_custom_call.1} parent=11 // pred_region
        _
      $region16: #{tpu_custom_call.1} parent=11 // pred_fallthru
        _
      // Predicated region
      $region17: #{tpu_custom_call.1} parent=11 // pred_check
        %p275 = pneg %p84
      $region18: #{tpu_custom_call.1} parent=11 // pred_check_branch
        %277 = sbr.rel (%p275) target = $region20
      $region19: #{tpu_custom_call.1} parent=11 // pred_region
        _
      $region20: #{tpu_custom_call.1} parent=11 // pred_fallthru
        _
      // Predicated region
      $region21: #{tpu_custom_call.1} parent=11 // pred_check
        %p278 = pneg %p105
      $region22: #{tpu_custom_call.1} parent=11 // pred_check_branch
        %280 = sbr.rel (%p278) target = $region24
      $region23: #{tpu_custom_call.1} parent=11 // pred_region
        _
      $region24: #{tpu_custom_call.1} parent=11 // pred_fallthru
        _
      // Predicated region
      $region25: #{tpu_custom_call.1} parent=11 // pred_check
        %p281 = pneg %p126
      $region26: #{tpu_custom_call.1} parent=11 // pred_check_branch
        %283 = sbr.rel (%p281) target = $region28
      $region27: #{tpu_custom_call.1} parent=11 // pred_region
        _
      $region28: #{tpu_custom_call.1} parent=11 // pred_fallthru
        _
      // Predicated region
      $region29: #{tpu_custom_call.1} parent=11 // pred_check
        %p284 = pneg %p147
      $region30: #{tpu_custom_call.1} parent=11 // pred_check_branch
        %286 = sbr.rel (%p284) target = $region32
      $region31: #{tpu_custom_call.1} parent=11 // pred_region
        _
      $region32: #{tpu_custom_call.1} parent=11 // pred_fallthru
        _
      // Predicated region
      $region33: #{tpu_custom_call.1} parent=11 // pred_check
        %p287 = pneg %p168
      $region34: #{tpu_custom_call.1} parent=11 // pred_check_branch
        %289 = sbr.rel (%p287) target = $region36
      $region35: #{tpu_custom_call.1} parent=11 // pred_region
        _
      $region36: #{tpu_custom_call.1} parent=11 // pred_fallthru
        _
      // Predicated region
      $region37: #{tpu_custom_call.1} parent=11 // pred_check
        %p290 = pneg %p189
      $region38: #{tpu_custom_call.1} parent=11 // pred_check_branch
        %292 = sbr.rel (%p290) target = $region40
      $region39: #{tpu_custom_call.1} parent=11 // pred_region
        _
      $region40: #{tpu_custom_call.1} parent=11 // pred_fallthru
        _
      // Predicated region
      $region41: #{tpu_custom_call.1} parent=11 // pred_check
        %p293 = pneg %p210
      $region42: #{tpu_custom_call.1} parent=11 // pred_check_branch
        %295 = sbr.rel (%p293) target = $region44
      $region43: #{tpu_custom_call.1} parent=11 // pred_region
        _
      $region44: #{tpu_custom_call.1} parent=11 // pred_fallthru
        _
      // Predicated region
      $region45: #{tpu_custom_call.1} parent=11 // pred_check
        %p296 = pneg %p231
      $region46: #{tpu_custom_call.1} parent=11 // pred_check_branch
        %298 = sbr.rel (%p296) target = $region48
      $region47: #{tpu_custom_call.1} parent=11 // pred_region
        _
      $region48: #{tpu_custom_call.1} parent=11 // pred_fallthru
        _
    $region12: #{tpu_custom_call.1} parent=5 // pred_fallthru
      _
    %p299 = scmp.lt.s32.totalorder %s16, 2
    // Predicated region
    $region49: #{tpu_custom_call.1} parent=5 // pred_check
      %p300 = pneg %p299
    $region50: #{tpu_custom_call.1} parent=5 // pred_check_branch
      %302 = sbr.rel (%p300) target = $region52
    $region51: #{tpu_custom_call.1} parent=5 // pred_region
      // Predicated region
      $region53: #{tpu_custom_call.1} parent=51 // pred_check
        %p303 = pneg %p36
      $region54: #{tpu_custom_call.1} parent=51 // pred_check_branch
        %305 = sbr.rel (%p303) target = $region56
      $region55: #{tpu_custom_call.1} parent=51 // pred_region
        %p306 = scmp.lt.s32.totalorder %s16, 1
        %s307 = scalar_select %p306, %s16, 1
        %s308 = smul.addr %s307, 32
        %s309 = smul.addr %s308, 8
        %s310 = scalar_lea.vmem %s0, %s309
      $region56: #{tpu_custom_call.1} parent=51 // pred_fallthru
        _
    $region52: #{tpu_custom_call.1} parent=5 // pred_fallthru
      _
    %p311 = scmp.le.s32.totalorder 1, %s16
    %p312 = scmp.lt.s32.totalorder %s16, 3
    %p313 = pnand %p311, %p312
    %p314 = pneg %p313
    // Predicated region
    $region57: #{tpu_custom_call.1} parent=5 // pred_check
      _
    $region58: #{tpu_custom_call.1} parent=5 // pred_check_branch
      %316 = sbr.rel (%p313) target = $region60
    $region59: #{tpu_custom_call.1} parent=5 // pred_region
      %s317 = ssub.s32 %s16, 1
      %p318 = scmp.lt.s32.totalorder %s21, 1
      %s319 = scalar_select %p318, %s21, 1
      %s320 = smul.addr %s319, 32
      %s321 = smul.addr %s320, 8
      %s322 = scalar_lea.vmem %s0, %s321
      %p323 = pneg %p42
      %p324 = pneg %p39
      %p325 = pneg %p63
      %p326 = pneg %p60
      %p327 = pneg %p84
      %p328 = pneg %p81
      %p329 = pneg %p105
      %p330 = pneg %p102
      %p331 = pneg %p126
      %p332 = pneg %p123
      %p333 = pneg %p147
      %p334 = pneg %p144
      %p335 = pneg %p168
      %p336 = pneg %p165
      %p337 = pneg %p189
      %p338 = pneg %p186
      %p339 = pneg %p210
      %p340 = pneg %p207
      %p341 = pneg %p231
      %p342 = pneg %p228
      %p343 = pneg %p257
      %p344 = pneg %p254
      %p345 = scmp.lt.s32.totalorder %s21, 1
      %s346 = scalar_select %p345, %s21, 1
      %s347 = smul.addr %s346, 32
      %s348 = smul.addr %s347, 8
      %s349 = scalar_lea.vmem %s10, %s348
      %p350 = scmp.lt.s32.totalorder %s21, 1
      %s351 = scalar_select %p350, %s21, 1
      %s352 = smul.addr %s351, 32
      %s353 = smul.addr %s352, 8
      %s354 = scalar_lea.vmem %s0, %s353
      %p355 = scmp.lt.s32.totalorder %s21, 1
      %s356 = scalar_select %p355, %s21, 1
      %s357 = smul.addr %s356, 32
      %s358 = smul.addr %s357, 8
      %s359 = scalar_lea.vmem %s10, %s358
      %v360 = vld [vmem:[%s354] sm:$0xff]
      %v361 = vld [vmem:[%s354 + $0x8] sm:$0xff]
      %v362 = vld [vmem:[%s354 + $0x10] sm:$0xff]
      %v363 = vld [vmem:[%s354 + $0x18] sm:$0xff]
      %v364 = vld [vmem:[%s354 + $0x20] sm:$0xff]
      %v365 = vld [vmem:[%s354 + $0x28] sm:$0xff]
      %v366 = vld [vmem:[%s354 + $0x30] sm:$0xff]
      %v367 = vld [vmem:[%s354 + $0x38] sm:$0xff]
      %v368 = vld [vmem:[%s354 + $0x40] sm:$0xff]
      %v369 = vld [vmem:[%s354 + $0x48] sm:$0xff]
      %v370 = vld [vmem:[%s354 + $0x50] sm:$0xff]
      %v371 = vld [vmem:[%s354 + $0x58] sm:$0xff]
      %v372 = vld [vmem:[%s354 + $0x60] sm:$0xff]
      %v373 = vld [vmem:[%s354 + $0x68] sm:$0xff]
      %v374 = vld [vmem:[%s354 + $0x70] sm:$0xff]
      %v375 = vld [vmem:[%s354 + $0x78] sm:$0xff]
      %v376 = vld [vmem:[%s354 + $0x80] sm:$0xff]
      %v377 = vld [vmem:[%s354 + $0x88] sm:$0xff]
      %v378 = vld [vmem:[%s354 + $0x90] sm:$0xff]
      %v379 = vld [vmem:[%s354 + $0x98] sm:$0xff]
      %v380 = vld [vmem:[%s354 + $0xa0] sm:$0xff]
      %v381 = vld [vmem:[%s354 + $0xa8] sm:$0xff]
      %v382 = vld [vmem:[%s354 + $0xb0] sm:$0xff]
      %v383 = vld [vmem:[%s354 + $0xb8] sm:$0xff]
      %v384 = vld [vmem:[%s354 + $0xc0] sm:$0xff]
      %v385 = vld [vmem:[%s354 + $0xc8] sm:$0xff]
      %v386 = vld [vmem:[%s354 + $0xd0] sm:$0xff]
      %v387 = vld [vmem:[%s354 + $0xd8] sm:$0xff]
      %v388 = vld [vmem:[%s354 + $0xe0] sm:$0xff]
      %v389 = vld [vmem:[%s354 + $0xe8] sm:$0xff]
      %v390 = vld [vmem:[%s354 + $0xf0] sm:$0xff]
      %v391 = vld [vmem:[%s354 + $0xf8] sm:$0xff]
      %v392 = vld [vmem:[%s1] sm:$0xff]
      %v393 = vld [vmem:[%s1 + $0x8] sm:$0xff]
      %v394 = vld [vmem:[%s1 + $0x10] sm:$0xff]
      %v395 = vld [vmem:[%s1 + $0x18] sm:$0xff]
      %v396 = vld [vmem:[%s1 + $0x20] sm:$0xff]
      %v397 = vld [vmem:[%s1 + $0x28] sm:$0xff]
      %v398 = vld [vmem:[%s1 + $0x30] sm:$0xff]
      %v399 = vld [vmem:[%s1 + $0x38] sm:$0xff]
      %v400 = vld [vmem:[%s1 + $0x40] sm:$0xff]
      %v401 = vld [vmem:[%s1 + $0x48] sm:$0xff]
      %v402 = vld [vmem:[%s1 + $0x50] sm:$0xff]
      %v403 = vld [vmem:[%s1 + $0x58] sm:$0xff]
      %v404 = vld [vmem:[%s1 + $0x60] sm:$0xff]
      %v405 = vld [vmem:[%s1 + $0x68] sm:$0xff]
      %406 = vmatprep.subr.mxu0 0.0
      %407 = vmatpush1.msra.mxu0 %v360
      %408 = vmatprep.subr.mxu0 0.0
      %409 = vmatpush1.msra.mxu0 %v361
      %410 = vmatprep.subr.mxu0 0.0
      %411 = vmatpush1.msra.mxu0 %v362
      %412 = vmatprep.subr.mxu0 0.0
      %413 = vmatpush1.msra.mxu0 %v363
      %414 = vmatprep.subr.mxu0 0.0
      %415 = vmatpush1.msra.mxu0 %v364
      %416 = vmatprep.subr.mxu0 0.0
      %417 = vmatpush1.msra.mxu0 %v365
      %418 = vmatprep.subr.mxu0 0.0
      %419 = vmatpush1.msra.mxu0 %v366
      %420 = vmatprep.subr.mxu0 0.0
      %421 = vmatpush1.msra.mxu0 %v367
      %422 = vmatprep.subr.mxu0 0.0
      %423 = vmatpush1.msra.mxu0 %v368
      %424 = vmatprep.subr.mxu0 0.0
      %425 = vmatpush1.msra.mxu0 %v369
      %426 = vmatprep.subr.mxu0 0.0
      %427 = vmatpush1.msra.mxu0 %v370
      %428 = vmatprep.subr.mxu0 0.0
      %429 = vmatpush1.msra.mxu0 %v371
      %430 = vmatprep.subr.mxu0 0.0
      %431 = vmatpush1.msra.mxu0 %v372
      %432 = vmatprep.subr.mxu0 0.0
      %433 = vmatpush1.msra.mxu0 %v373
      %434 = vmatprep.subr.mxu0 0.0
      %435 = vmatpush1.msra.mxu0 %v374
      %436 = vmatprep.subr.mxu0 0.0
      %437 = vmatpush1.msra.mxu0 %v375
      %438 = vmatprep.subr.mxu0 0.0
      %439 = vmatpush1.msra.mxu0 %v376
      %440 = vmatprep.subr.mxu0 0.0
      %441 = vmatpush1.msra.mxu0 %v377
      %442 = vmatprep.subr.mxu0 0.0
      %443 = vmatpush1.msra.mxu0 %v378
      %444 = vmatprep.subr.mxu0 0.0
      %445 = vmatpush1.msra.mxu0 %v379
      %446 = vmatprep.subr.mxu0 0.0
      %447 = vmatpush1.msra.mxu0 %v380
      %448 = vmatprep.subr.mxu0 0.0
      %449 = vmatpush1.msra.mxu0 %v381
      %450 = vmatprep.subr.mxu0 0.0
      %451 = vmatpush1.msra.mxu0 %v382
      %452 = vmatprep.subr.mxu0 0.0
      %453 = vmatpush1.msra.mxu0 %v383
      %454 = vmatprep.subr.mxu0 0.0
      %455 = vmatpush1.msra.mxu0 %v384
      %456 = vmatprep.subr.mxu0 0.0
      %457 = vmatpush1.msra.mxu0 %v385
      %458 = vmatprep.subr.mxu0 0.0
      %459 = vmatpush1.msra.mxu0 %v386
      %460 = vmatprep.subr.mxu0 0.0
      %461 = vmatpush1.msra.mxu0 %v387
      %462 = vmatprep.subr.mxu0 0.0
      %463 = vmatpush1.msra.mxu0 %v388
      %464 = vmatprep.subr.mxu0 0.0
      %465 = vmatpush1.msra.mxu0 %v389
      %466 = vmatprep.subr.mxu0 0.0
      %467 = vmatpush1.msra.mxu0 %v390
      %468 = vmatprep.subr.mxu0 0.0
      %469 = vmatpush1.msra.mxu0 %v391
      %470 = vmatprep.mubr.f32.mxu0 %v393
      %471 = vmatmul.mubr.f32.gmra.mrb[0].mxu0 %v392
      %v472 = vpop.f32.mrb[0].mxu0
      %v473 = vadd.f32 0.0, %v472
      %v474 = vpop.f32.mrb[0].mxu0
      %475 = vmatprep.mubr.f32.mxu0 %v395
      %476 = vmatmul.mubr.f32.gmra.mrb[0].mxu0 %v394
      %v477 = vpop.f32.mrb[0].mxu0
      %v478 = vadd.f32 0.0, %v477
      %v479 = vpop.f32.mrb[0].mxu0
      %480 = vmatprep.mubr.f32.mxu0 %v397
      %481 = vmatmul.mubr.f32.gmra.mrb[0].mxu0 %v396
      %v482 = vpop.f32.mrb[0].mxu0
      %v483 = vadd.f32 0.0, %v482
      %v484 = vpop.f32.mrb[0].mxu0
      %485 = vmatprep.mubr.f32.mxu0 %v399
      %486 = vmatmul.mubr.f32.gmra.mrb[0].mxu0 %v398
      %v487 = vpop.f32.mrb[0].mxu0
      %v488 = vadd.f32 0.0, %v487
      %v489 = vpop.f32.mrb[0].mxu0
      %490 = vmatprep.mubr.f32.mxu0 %v401
      %491 = vmatmul.mubr.f32.gmra.mrb[0].mxu0 %v400
      %v492 = vpop.f32.mrb[0].mxu0
      %v493 = vadd.f32 0.0, %v492
      %v494 = vpop.f32.mrb[0].mxu0
      %495 = vmatprep.mubr.f32.mxu0 %v403
      %496 = vmatmul.mubr.f32.gmra.mrb[0].mxu0 %v402
      %v497 = vpop.f32.mrb[0].mxu0
      %v498 = vadd.f32 0.0, %v497
      %v499 = vpop.f32.mrb[0].mxu0
      %500 = vmatprep.mubr.f32.mxu0 %v405
      %501 = vmatmul.mubr.f32.gmra.mrb[0].mxu0 %v404
      %v502 = vpop.f32.mrb[0].mxu0
      %v503 = vadd.f32 0.0, %v502
      %v504 = vpop.f32.mrb[0].mxu0
      %505 = vdwg.mxu0
      %v506 = vld [vmem:[%s2] sm:$0xf]
      %v507 = vld [vmem:[%s3] sm:$0x1]
      %v509 = vlaneseq
      %v510 = vshrl.u32 %v509, 7
      %v511 = vsub.s32 0, %v510
      %v512 = vrot.slane %v507, %v511
      %vm514 = vcmask 31744
      %v516 = vsel %vm514, %v473, 0
      %v519 = vsel %vm514, %v478, 0
      %v522 = vsel %vm514, %v483, 0
      %v525 = vsel %vm514, %v488, 0
      %v528 = vsel %vm514, %v493, 0
      %v531 = vsel %vm514, %v498, 0
      %v534 = vsel %vm514, %v503, 0
      %vm536 = vcmask 1043456
      %v538 = vsel %vm536, %v506, 0
      %540 = vmatprep.subr.mxu0 0.0
      %541 = vmatpush1.msra.mxu0 %v538
      %542 = vmatprep.subr.mxu0 0.0
      %543 = vmatpush1.msra.mxu0 0.0
      %544 = vmatprep.subr.mxu0 0.0
      %545 = vmatpush1.msra.mxu0 0.0
      %546 = vmatprep.subr.mxu0 0.0
      %547 = vmatpush1.msra.mxu0 0.0
      %548 = vmatprep.subr.mxu0 0.0
      %549 = vmatpush1.msra.mxu0 0.0
      %550 = vmatprep.subr.mxu0 0.0
      %551 = vmatpush1.msra.mxu0 0.0
      %552 = vmatprep.subr.mxu0 0.0
      %553 = vmatpush1.msra.mxu0 0.0
      %554 = vmatprep.subr.mxu0 0.0
      %555 = vmatpush1.msra.mxu0 0.0
      %556 = vmatprep.subr.mxu0 0.0
      %557 = vmatpush1.msra.mxu0 0.0
      %558 = vmatprep.subr.mxu0 0.0
      %559 = vmatpush1.msra.mxu0 0.0
      %560 = vmatprep.subr.mxu0 0.0
      %561 = vmatpush1.msra.mxu0 0.0
      %562 = vmatprep.subr.mxu0 0.0
      %563 = vmatpush1.msra.mxu0 0.0
      %564 = vmatprep.subr.mxu0 0.0
      %565 = vmatpush1.msra.mxu0 0.0
      %566 = vmatprep.subr.mxu0 0.0
      %567 = vmatpush1.msra.mxu0 0.0
      %568 = vmatprep.subr.mxu0 0.0
      %569 = vmatpush1.msra.mxu0 0.0
      %570 = vmatprep.subr.mxu0 0.0
      %571 = vmatpush1.msra.mxu0 0.0
      %572 = vmatprep.subr.mxu0 0.0
      %573 = vmatpush1.msra.mxu0 0.0
      %574 = vmatprep.subr.mxu0 0.0
      %575 = vmatpush1.msra.mxu0 0.0
      %576 = vmatprep.subr.mxu0 0.0
      %577 = vmatpush1.msra.mxu0 0.0
      %578 = vmatprep.subr.mxu0 0.0
      %579 = vmatpush1.msra.mxu0 0.0
      %580 = vmatprep.subr.mxu0 0.0
      %581 = vmatpush1.msra.mxu0 0.0
      %582 = vmatprep.subr.mxu0 0.0
      %583 = vmatpush1.msra.mxu0 0.0
      %584 = vmatprep.subr.mxu0 0.0
      %585 = vmatpush1.msra.mxu0 0.0
      %586 = vmatprep.subr.mxu0 0.0
      %587 = vmatpush1.msra.mxu0 0.0
      %588 = vmatprep.subr.mxu0 0.0
      %589 = vmatpush1.msra.mxu0 0.0
      %590 = vmatprep.subr.mxu0 0.0
      %591 = vmatpush1.msra.mxu0 0.0
      %592 = vmatprep.subr.mxu0 0.0
      %593 = vmatpush1.msra.mxu0 0.0
      %594 = vmatprep.subr.mxu0 0.0
      %595 = vmatpush1.msra.mxu0 0.0
      %596 = vmatprep.subr.mxu0 0.0
      %597 = vmatpush1.msra.mxu0 0.0
      %598 = vmatprep.subr.mxu0 0.0
      %599 = vmatpush1.msra.mxu0 0.0
      %600 = vmatprep.subr.mxu0 0.0
      %601 = vmatpush1.msra.mxu0 0.0
      %602 = vmatprep.subr.mxu0 0.0
      %603 = vmatpush1.msra.mxu0 0.0
      %604 = vmatprep.mubr.f32.mxu0 0.0
      %605 = vmatmul.mubr.f32.gmra.mrb[0].mxu0 %v516
      %v606 = vpop.f32.mrb[0].mxu0
      %v607 = vadd.f32 %v512, %v606
      %v608 = vpop.f32.mrb[0].mxu0
      %609 = vmatprep.mubr.f32.mxu0 0.0
      %610 = vmatmul.mubr.f32.gmra.mrb[0].mxu0 %v519
      %v611 = vpop.f32.mrb[0].mxu0
      %v612 = vadd.f32 %v512, %v611
      %v613 = vpop.f32.mrb[0].mxu0
      %614 = vmatprep.mubr.f32.mxu0 0.0
      %615 = vmatmul.mubr.f32.gmra.mrb[0].mxu0 %v522
      %v616 = vpop.f32.mrb[0].mxu0
      %v617 = vadd.f32 %v512, %v616
      %v618 = vpop.f32.mrb[0].mxu0
      %619 = vmatprep.mubr.f32.mxu0 0.0
      %620 = vmatmul.mubr.f32.gmra.mrb[0].mxu0 %v525
      %v621 = vpop.f32.mrb[0].mxu0
      %v622 = vadd.f32 %v512, %v621
      %v623 = vpop.f32.mrb[0].mxu0
      %624 = vmatprep.mubr.f32.mxu0 0.0
      %625 = vmatmul.mubr.f32.gmra.mrb[0].mxu0 %v528
      %v626 = vpop.f32.mrb[0].mxu0
      %v627 = vadd.f32 %v512, %v626
      %v628 = vpop.f32.mrb[0].mxu0
      %629 = vmatprep.mubr.f32.mxu0 0.0
      %630 = vmatmul.mubr.f32.gmra.mrb[0].mxu0 %v531
      %v631 = vpop.f32.mrb[0].mxu0
      %v632 = vadd.f32 %v512, %v631
      %v633 = vpop.f32.mrb[0].mxu0
      %634 = vmatprep.mubr.f32.mxu0 0.0
      %635 = vmatmul.mubr.f32.gmra.mrb[0].mxu0 %v534
      %v636 = vpop.f32.mrb[0].mxu0
      %v637 = vadd.f32 %v512, %v636
      %v638 = vpop.f32.mrb[0].mxu0
      %639 = vdwg.mxu0
      %v640 = vmax.f32 %v607, 0.0
      %v641 = vmax.f32 %v612, 0.0
      %v642 = vmax.f32 %v617, 0.0
      %v643 = vmax.f32 %v622, 0.0
      %v644 = vmax.f32 %v627, 0.0
      %v645 = vmax.f32 %v632, 0.0
      %v646 = vmax.f32 %v637, 0.0
      %v647 = vld [vmem:[%s4] sm:$0xff]
      %v648 = vld [vmem:[%s4 + $0x8] sm:$0xff]
      %v649 = vld [vmem:[%s4 + $0x10] sm:$0xff]
      %v650 = vld [vmem:[%s4 + $0x18] sm:$0xff]
      %v651 = vld [vmem:[%s4 + $0x20] sm:$0xff]
      %v652 = vld [vmem:[%s4 + $0x28] sm:$0xff]
      %v653 = vld [vmem:[%s4 + $0x30] sm:$0xff]
      %v654 = vmul.f32 %v640, %v647
      %v655 = vmul.f32 %v641, %v648
      %v656 = vmul.f32 %v642, %v649
      %v657 = vmul.f32 %v643, %v650
      %v658 = vmul.f32 %v644, %v651
      %v659 = vmul.f32 %v645, %v652
      %v660 = vmul.f32 %v646, %v653
      %661 = vst.msk [vmem:[#allocation2] sm:$0xff] %vm514, 0.0
      %662 = vst.msk [vmem:[#allocation2 + $0x8] sm:$0xff] %vm514, 0.0
      %663 = vst.msk [vmem:[#allocation2 + $0x10] sm:$0xff] %vm514, 0.0
      %664 = vst.msk [vmem:[#allocation2 + $0x118] sm:$0xff] %vm514, 0.0
      %665 = vst.msk [vmem:[#allocation2 + $0x120] sm:$0xff] %vm514, 0.0
      %666 = vst.msk [vmem:[#allocation2 + $0x128] sm:$0xff] %vm514, 0.0
      %667 = vst.msk [vmem:[#allocation2 + $0x18] sm:$0xff] %vm514, %v360
      %668 = vst.msk [vmem:[#allocation2 + $0x20] sm:$0xff] %vm514, %v361
      %669 = vst.msk [vmem:[#allocation2 + $0x28] sm:$0xff] %vm514, %v362
      %670 = vst.msk [vmem:[#allocation2 + $0x30] sm:$0xff] %vm514, %v363
      %671 = vst.msk [vmem:[#allocation2 + $0x38] sm:$0xff] %vm514, %v364
      %672 = vst.msk [vmem:[#allocation2 + $0x40] sm:$0xff] %vm514, %v365
      %673 = vst.msk [vmem:[#allocation2 + $0x48] sm:$0xff] %vm514, %v366
      %674 = vst.msk [vmem:[#allocation2 + $0x50] sm:$0xff] %vm514, %v367
      %675 = vst.msk [vmem:[#allocation2 + $0x58] sm:$0xff] %vm514, %v368
      %676 = vst.msk [vmem:[#allocation2 + $0x60] sm:$0xff] %vm514, %v369
      %677 = vst.msk [vmem:[#allocation2 + $0x68] sm:$0xff] %vm514, %v370
      %678 = vst.msk [vmem:[#allocation2 + $0x70] sm:$0xff] %vm514, %v371
      %679 = vst.msk [vmem:[#allocation2 + $0x78] sm:$0xff] %vm514, %v372
      %680 = vst.msk [vmem:[#allocation2 + $0x80] sm:$0xff] %vm514, %v373
      %681 = vst.msk [vmem:[#allocation2 + $0x88] sm:$0xff] %vm514, %v374
      %682 = vst.msk [vmem:[#allocation2 + $0x90] sm:$0xff] %vm514, %v375
      %683 = vst.msk [vmem:[#allocation2 + $0x98] sm:$0xff] %vm514, %v376
      %684 = vst.msk [vmem:[#allocation2 + $0xa0] sm:$0xff] %vm514, %v377
      %685 = vst.msk [vmem:[#allocation2 + $0xa8] sm:$0xff] %vm514, %v378
      %686 = vst.msk [vmem:[#allocation2 + $0xb0] sm:$0xff] %vm514, %v379
      %687 = vst.msk [vmem:[#allocation2 + $0xb8] sm:$0xff] %vm514, %v380
      %688 = vst.msk [vmem:[#allocation2 + $0xc0] sm:$0xff] %vm514, %v381
      %689 = vst.msk [vmem:[#allocation2 + $0xc8] sm:$0xff] %vm514, %v382
      %690 = vst.msk [vmem:[#allocation2 + $0xd0] sm:$0xff] %vm514, %v383
      %691 = vst.msk [vmem:[#allocation2 + $0xd8] sm:$0xff] %vm514, %v384
      %692 = vst.msk [vmem:[#allocation2 + $0xe0] sm:$0xff] %vm514, %v385
      %693 = vst.msk [vmem:[#allocation2 + $0xe8] sm:$0xff] %vm514, %v386
      %694 = vst.msk [vmem:[#allocation2 + $0xf0] sm:$0xff] %vm514, %v387
      %695 = vst.msk [vmem:[#allocation2 + $0xf8] sm:$0xff] %vm514, %v388
      %696 = vst.msk [vmem:[#allocation2 + $0x100] sm:$0xff] %vm514, %v389
      %697 = vst.msk [vmem:[#allocation2 + $0x108] sm:$0xff] %vm514, %v390
      %698 = vst.msk [vmem:[#allocation2 + $0x110] sm:$0xff] %vm514, %v391
      %v699 = vld [vmem:[#allocation2 + $0x7] sm:$0xff]
      %v700 = vld [vmem:[#allocation2 + $0xf] sm:$0xff]
      %v701 = vld [vmem:[#allocation2 + $0x17] sm:$0xff]
      %v702 = vld [vmem:[#allocation2 + $0x1f] sm:$0xff]
      %v703 = vld [vmem:[#allocation2 + $0x27] sm:$0xff]
      %v704 = vld [vmem:[#allocation2 + $0x2f] sm:$0xff]
      %v705 = vld [vmem:[#allocation2 + $0x37] sm:$0xff]
      %v706 = vld [vmem:[#allocation2 + $0x3f] sm:$0xff]
      %v707 = vld [vmem:[#allocation2 + $0x47] sm:$0xff]
      %v708 = vld [vmem:[#allocation2 + $0x4f] sm:$0xff]
      %v709 = vld [vmem:[#allocation2 + $0x57] sm:$0xff]
      %v710 = vld [vmem:[#allocation2 + $0x5f] sm:$0xff]
      %v711 = vld [vmem:[#allocation2 + $0x67] sm:$0xff]
      %v712 = vld [vmem:[#allocation2 + $0x6f] sm:$0xff]
      %v713 = vld [vmem:[#allocation2 + $0x77] sm:$0xff]
      %v714 = vld [vmem:[#allocation2 + $0x7f] sm:$0xff]
      %v715 = vld [vmem:[#allocation2 + $0x87] sm:$0xff]
      %v716 = vld [vmem:[#allocation2 + $0x8f] sm:$0xff]
      %v717 = vld [vmem:[#allocation2 + $0x97] sm:$0xff]
      %v718 = vld [vmem:[#allocation2 + $0x9f] sm:$0xff]
      %v719 = vld [vmem:[#allocation2 + $0xa7] sm:$0xff]
      %v720 = vld [vmem:[#allocation2 + $0xaf] sm:$0xff]
      %v721 = vld [vmem:[#allocation2 + $0xb7] sm:$0xff]
      %v722 = vld [vmem:[#allocation2 + $0xbf] sm:$0xff]
      %v723 = vld [vmem:[#allocation2 + $0xc7] sm:$0xff]
      %v724 = vld [vmem:[#allocation2 + $0xcf] sm:$0xff]
      %v725 = vld [vmem:[#allocation2 + $0xd7] sm:$0xff]
      %v726 = vld [vmem:[#allocation2 + $0xdf] sm:$0xff]
      %v727 = vld [vmem:[#allocation2 + $0xe7] sm:$0xff]
      %v728 = vld [vmem:[#allocation2 + $0xef] sm:$0xff]
      %v729 = vld [vmem:[#allocation2 + $0xf7] sm:$0xff]
      %v730 = vld [vmem:[#allocation2 + $0xff] sm:$0xff]
      %v731 = vld [vmem:[%s8] sm:$0xff]
      %v732 = vld [vmem:[%s8 + $0x8] sm:$0xff]
      %v733 = vld [vmem:[%s8 + $0x10] sm:$0xff]
      %v734 = vld [vmem:[%s8 + $0x18] sm:$0xff]
      %v735 = vld [vmem:[%s8 + $0x20] sm:$0xff]
      %v736 = vld [vmem:[%s8 + $0x28] sm:$0xff]
      %v737 = vld [vmem:[%s8 + $0x30] sm:$0xff]
      %v738 = vld [vmem:[%s8 + $0x38] sm:$0xff]
      %v739 = vld [vmem:[%s8 + $0x40] sm:$0xff]
      %v740 = vld [vmem:[%s8 + $0x48] sm:$0xff]
      %v741 = vld [vmem:[%s8 + $0x50] sm:$0xff]
      %v742 = vld [vmem:[%s8 + $0x58] sm:$0xff]
      %v743 = vld [vmem:[%s8 + $0x60] sm:$0xff]
      %v744 = vld [vmem:[%s8 + $0x68] sm:$0xff]
      %v745 = vld [vmem:[%s8 + $0x70] sm:$0xff]
      %v746 = vld [vmem:[%s8 + $0x78] sm:$0xff]
      %v747 = vld [vmem:[%s8 + $0x80] sm:$0xff]
      %v748 = vld [vmem:[%s8 + $0x88] sm:$0xff]
      %v749 = vld [vmem:[%s8 + $0x90] sm:$0xff]
      %v750 = vld [vmem:[%s8 + $0x98] sm:$0xff]
      %v751 = vld [vmem:[%s8 + $0xa0] sm:$0xff]
      %v752 = vld [vmem:[%s8 + $0xa8] sm:$0xff]
      %v753 = vld [vmem:[%s8 + $0xb0] sm:$0xff]
      %v754 = vld [vmem:[%s8 + $0xb8] sm:$0xff]
      %v755 = vld [vmem:[%s8 + $0xc0] sm:$0xff]
      %v756 = vld [vmem:[%s8 + $0xc8] sm:$0xff]
      %v757 = vld [vmem:[%s8 + $0xd0] sm:$0xff]
      %v758 = vld [vmem:[%s8 + $0xd8] sm:$0xff]
      %v759 = vld [vmem:[%s8 + $0xe0] sm:$0xff]
      %v760 = vld [vmem:[%s8 + $0xe8] sm:$0xff]
      %v761 = vld [vmem:[%s8 + $0xf0] sm:$0xff]
      %v762 = vld [vmem:[%s8 + $0xf8] sm:$0xff]
      %764 = vset.pattern.permute.xlu0 0
      %765 = vperm.xlu0 %764, %v731
      %v766 = vpop.permute.xlu0 %765
      %769 = vset.pattern.permute.xlu0 0
      %770 = vperm.xlu0 %769, %v732
      %v771 = vpop.permute.xlu0 %770
      %774 = vset.pattern.permute.xlu0 0
      %775 = vperm.xlu0 %774, %v733
      %v776 = vpop.permute.xlu0 %775
      %779 = vset.pattern.permute.xlu0 0
      %780 = vperm.xlu0 %779, %v734
      %v781 = vpop.permute.xlu0 %780
      %784 = vset.pattern.permute.xlu0 0
      %785 = vperm.xlu0 %784, %v735
      %v786 = vpop.permute.xlu0 %785
      %789 = vset.pattern.permute.xlu0 0
      %790 = vperm.xlu0 %789, %v736
      %v791 = vpop.permute.xlu0 %790
      %794 = vset.pattern.permute.xlu0 0
      %795 = vperm.xlu0 %794, %v737
      %v796 = vpop.permute.xlu0 %795
      %799 = vset.pattern.permute.xlu0 0
      %800 = vperm.xlu0 %799, %v738
      %v801 = vpop.permute.xlu0 %800
      %804 = vset.pattern.permute.xlu0 0
      %805 = vperm.xlu0 %804, %v739
      %v806 = vpop.permute.xlu0 %805
      %809 = vset.pattern.permute.xlu0 0
      %810 = vperm.xlu0 %809, %v740
      %v811 = vpop.permute.xlu0 %810
      %814 = vset.pattern.permute.xlu0 0
      %815 = vperm.xlu0 %814, %v741
      %v816 = vpop.permute.xlu0 %815
      %819 = vset.pattern.permute.xlu0 0
      %820 = vperm.xlu0 %819, %v742
      %v821 = vpop.permute.xlu0 %820
      %824 = vset.pattern.permute.xlu0 0
      %825 = vperm.xlu0 %824, %v743
      %v826 = vpop.permute.xlu0 %825
      %829 = vset.pattern.permute.xlu0 0
      %830 = vperm.xlu0 %829, %v744
      %v831 = vpop.permute.xlu0 %830
      %834 = vset.pattern.permute.xlu0 0
      %835 = vperm.xlu0 %834, %v745
      %v836 = vpop.permute.xlu0 %835
      %839 = vset.pattern.permute.xlu0 0
      %840 = vperm.xlu0 %839, %v746
      %v841 = vpop.permute.xlu0 %840
      %844 = vset.pattern.permute.xlu0 0
      %845 = vperm.xlu0 %844, %v747
      %v846 = vpop.permute.xlu0 %845
      %849 = vset.pattern.permute.xlu0 0
      %850 = vperm.xlu0 %849, %v748
      %v851 = vpop.permute.xlu0 %850
      %854 = vset.pattern.permute.xlu0 0
      %855 = vperm.xlu0 %854, %v749
      %v856 = vpop.permute.xlu0 %855
      %859 = vset.pattern.permute.xlu0 0
      %860 = vperm.xlu0 %859, %v750
      %v861 = vpop.permute.xlu0 %860
      %864 = vset.pattern.permute.xlu0 0
      %865 = vperm.xlu0 %864, %v751
      %v866 = vpop.permute.xlu0 %865
      %869 = vset.pattern.permute.xlu0 0
      %870 = vperm.xlu0 %869, %v752
      %v871 = vpop.permute.xlu0 %870
      %874 = vset.pattern.permute.xlu0 0
      %875 = vperm.xlu0 %874, %v753
      %v876 = vpop.permute.xlu0 %875
      %879 = vset.pattern.permute.xlu0 0
      %880 = vperm.xlu0 %879, %v754
      %v881 = vpop.permute.xlu0 %880
      %884 = vset.pattern.permute.xlu0 0
      %885 = vperm.xlu0 %884, %v755
      %v886 = vpop.permute.xlu0 %885
      %889 = vset.pattern.permute.xlu0 0
      %890 = vperm.xlu0 %889, %v756
      %v891 = vpop.permute.xlu0 %890
      %894 = vset.pattern.permute.xlu0 0
      %895 = vperm.xlu0 %894, %v757
      %v896 = vpop.permute.xlu0 %895
      %899 = vset.pattern.permute.xlu0 0
      %900 = vperm.xlu0 %899, %v758
      %v901 = vpop.permute.xlu0 %900
      %904 = vset.pattern.permute.xlu0 0
      %905 = vperm.xlu0 %904, %v759
      %v906 = vpop.permute.xlu0 %905
      %909 = vset.pattern.permute.xlu0 0
      %910 = vperm.xlu0 %909, %v760
      %v911 = vpop.permute.xlu0 %910
      %914 = vset.pattern.permute.xlu0 0
      %915 = vperm.xlu0 %914, %v761
      %v916 = vpop.permute.xlu0 %915
      %919 = vset.pattern.permute.xlu0 0
      %920 = vperm.xlu0 %919, %v762
      %v921 = vpop.permute.xlu0 %920
      %v923 = vmul.f32 %v699, %v766
      %v924 = vmul.f32 %v700, %v771
      %v925 = vmul.f32 %v701, %v776
      %v926 = vmul.f32 %v702, %v781
      %v927 = vmul.f32 %v703, %v786
      %v928 = vmul.f32 %v704, %v791
      %v929 = vmul.f32 %v705, %v796
      %v930 = vmul.f32 %v706, %v801
      %v931 = vmul.f32 %v707, %v806
      %v932 = vmul.f32 %v708, %v811
      %v933 = vmul.f32 %v709, %v816
      %v934 = vmul.f32 %v710, %v821
      %v935 = vmul.f32 %v711, %v826
      %v936 = vmul.f32 %v712, %v831
      %v937 = vmul.f32 %v713, %v836
      %v938 = vmul.f32 %v714, %v841
      %v939 = vmul.f32 %v715, %v846
      %v940 = vmul.f32 %v716, %v851
      %v941 = vmul.f32 %v717, %v856
      %v942 = vmul.f32 %v718, %v861
      %v943 = vmul.f32 %v719, %v866
      %v944 = vmul.f32 %v720, %v871
      %v945 = vmul.f32 %v721, %v876
      %v946 = vmul.f32 %v722, %v881
      %v947 = vmul.f32 %v723, %v886
      %v948 = vmul.f32 %v724, %v891
      %v949 = vmul.f32 %v725, %v896
      %v950 = vmul.f32 %v726, %v901
      %v951 = vmul.f32 %v727, %v906
      %v952 = vmul.f32 %v728, %v911
      %v953 = vmul.f32 %v729, %v916
      %v954 = vmul.f32 %v730, %v921
      %v955 = vld [vmem:[%s6] sm:$0xf]
      %v956 = vld [vmem:[%s7] sm:$0xff]
      %v957 = vld [vmem:[%s7 + $0x8] sm:$0xff]
      %v958 = vld [vmem:[%s7 + $0x10] sm:$0xff]
      %v959 = vld [vmem:[%s7 + $0x18] sm:$0xff]
      %vm960 = vcmask 261120
      %v962 = vsel %vm960, %v654, 0
      %v965 = vsel %vm960, %v655, 0
      %v968 = vsel %vm960, %v656, 0
      %v971 = vsel %vm960, %v657, 0
      %v974 = vsel %vm960, %v658, 0
      %v977 = vsel %vm960, %v659, 0
      %v980 = vsel %vm960, %v660, 0
      %982 = vmatprep.subr.mxu0 0.0
      %983 = vmatpush1.msra.mxu0 %v956
      %984 = vmatprep.subr.mxu0 0.0
      %985 = vmatpush1.msra.mxu0 %v957
      %986 = vmatprep.subr.mxu0 0.0
      %987 = vmatpush1.msra.mxu0 %v958
      %988 = vmatprep.subr.mxu0 0.0
      %989 = vmatpush1.msra.mxu0 %v959
      %990 = vmatprep.subr.mxu0 0.0
      %991 = vmatpush1.msra.mxu0 0.0
      %992 = vmatprep.subr.mxu0 0.0
      %993 = vmatpush1.msra.mxu0 0.0
      %994 = vmatprep.subr.mxu0 0.0
      %995 = vmatpush1.msra.mxu0 0.0
      %996 = vmatprep.subr.mxu0 0.0
      %997 = vmatpush1.msra.mxu0 0.0
      %998 = vmatprep.subr.mxu0 0.0
      %999 = vmatpush1.msra.mxu0 0.0
      %1000 = vmatprep.subr.mxu0 0.0
      %1001 = vmatpush1.msra.mxu0 0.0
      %1002 = vmatprep.subr.mxu0 0.0
      %1003 = vmatpush1.msra.mxu0 0.0
      %1004 = vmatprep.subr.mxu0 0.0
      %1005 = vmatpush1.msra.mxu0 0.0
      %1006 = vmatprep.subr.mxu0 0.0
      %1007 = vmatpush1.msra.mxu0 0.0
      %1008 = vmatprep.subr.mxu0 0.0
      %1009 = vmatpush1.msra.mxu0 0.0
      %1010 = vmatprep.subr.mxu0 0.0
      %1011 = vmatpush1.msra.mxu0 0.0
      %1012 = vmatprep.subr.mxu0 0.0
      %1013 = vmatpush1.msra.mxu0 0.0
      %1014 = vmatprep.subr.mxu0 0.0
      %1015 = vmatpush1.msra.mxu0 0.0
      %1016 = vmatprep.subr.mxu0 0.0
      %1017 = vmatpush1.msra.mxu0 0.0
      %1018 = vmatprep.subr.mxu0 0.0
      %1019 = vmatpush1.msra.mxu0 0.0
      %1020 = vmatprep.subr.mxu0 0.0
      %1021 = vmatpush1.msra.mxu0 0.0
      %1022 = vmatprep.subr.mxu0 0.0
      %1023 = vmatpush1.msra.mxu0 0.0
      %1024 = vmatprep.subr.mxu0 0.0
      %1025 = vmatpush1.msra.mxu0 0.0
      %1026 = vmatprep.subr.mxu0 0.0
      %1027 = vmatpush1.msra.mxu0 0.0
      %1028 = vmatprep.subr.mxu0 0.0
      %1029 = vmatpush1.msra.mxu0 0.0
      %1030 = vmatprep.subr.mxu0 0.0
      %1031 = vmatpush1.msra.mxu0 0.0
      %1032 = vmatprep.subr.mxu0 0.0
      %1033 = vmatpush1.msra.mxu0 0.0
      %1034 = vmatprep.subr.mxu0 0.0
      %1035 = vmatpush1.msra.mxu0 0.0
      %1036 = vmatprep.subr.mxu0 0.0
      %1037 = vmatpush1.msra.mxu0 0.0
      %1038 = vmatprep.subr.mxu0 0.0
      %1039 = vmatpush1.msra.mxu0 0.0
      %1040 = vmatprep.subr.mxu0 0.0
      %1041 = vmatpush1.msra.mxu0 0.0
      %1042 = vmatprep.subr.mxu0 0.0
      %1043 = vmatpush1.msra.mxu0 0.0
      %1044 = vmatprep.subr.mxu0 0.0
      %1045 = vmatpush1.msra.mxu0 0.0
      %1046 = vmatprep.mubr.f32.mxu0 0.0
      %1047 = vmatmul.mubr.f32.gmra.mrb[0].mxu0 %v962
      %v1048 = vpop.f32.mrb[0].mxu0
      %v1049 = vadd.f32 0.0, %v1048
      %v1050 = vpop.f32.mrb[0].mxu0
      %1051 = vmatprep.mubr.f32.mxu0 0.0
      %1052 = vmatmul.mubr.f32.gmra.mrb[0].mxu0 %v965
      %v1053 = vpop.f32.mrb[0].mxu0
      %v1054 = vadd.f32 0.0, %v1053
      %v1055 = vpop.f32.mrb[0].mxu0
      %1056 = vmatprep.mubr.f32.mxu0 0.0
      %1057 = vmatmul.mubr.f32.gmra.mrb[0].mxu0 %v968
      %v1058 = vpop.f32.mrb[0].mxu0
      %v1059 = vadd.f32 0.0, %v1058
      %v1060 = vpop.f32.mrb[0].mxu0
      %1061 = vmatprep.mubr.f32.mxu0 0.0
      %1062 = vmatmul.mubr.f32.gmra.mrb[0].mxu0 %v971
      %v1063 = vpop.f32.mrb[0].mxu0
      %v1064 = vadd.f32 0.0, %v1063
      %v1065 = vpop.f32.mrb[0].mxu0
      %1066 = vmatprep.mubr.f32.mxu0 0.0
      %1067 = vmatmul.mubr.f32.gmra.mrb[0].mxu0 %v974
      %v1068 = vpop.f32.mrb[0].mxu0
      %v1069 = vadd.f32 0.0, %v1068
      %v1070 = vpop.f32.mrb[0].mxu0
      %1071 = vmatprep.mubr.f32.mxu0 0.0
      %1072 = vmatmul.mubr.f32.gmra.mrb[0].mxu0 %v977
      %v1073 = vpop.f32.mrb[0].mxu0
      %v1074 = vadd.f32 0.0, %v1073
      %v1075 = vpop.f32.mrb[0].mxu0
      %1076 = vmatprep.mubr.f32.mxu0 0.0
      %1077 = vmatmul.mubr.f32.gmra.mrb[0].mxu0 %v980
      %v1078 = vpop.f32.mrb[0].mxu0
      %v1079 = vadd.f32 0.0, %v1078
      %v1080 = vpop.f32.mrb[0].mxu0
      %1081 = vdwg.mxu0
      %v1082 = vld [vmem:[%s5] sm:$0xff]
      %v1083 = vld [vmem:[%s5 + $0x8] sm:$0xff]
      %v1084 = vld [vmem:[%s5 + $0x10] sm:$0xff]
      %v1085 = vld [vmem:[%s5 + $0x18] sm:$0xff]
      %v1086 = vld [vmem:[%s5 + $0x20] sm:$0xff]
      %v1087 = vld [vmem:[%s5 + $0x28] sm:$0xff]
      %v1088 = vld [vmem:[%s5 + $0x30] sm:$0xff]
      %v1089 = vld [vmem:[%s5 + $0x38] sm:$0xff]
      %v1090 = vld [vmem:[%s5 + $0x40] sm:$0xff]
      %v1091 = vld [vmem:[%s5 + $0x48] sm:$0xff]
      %v1092 = vld [vmem:[%s5 + $0x50] sm:$0xff]
      %v1093 = vld [vmem:[%s5 + $0x58] sm:$0xff]
      %v1094 = vld [vmem:[%s5 + $0x60] sm:$0xff]
      %v1095 = vld [vmem:[%s5 + $0x68] sm:$0xff]
      %v1096 = vld [vmem:[%s5 + $0x70] sm:$0xff]
      %v1097 = vld [vmem:[%s5 + $0x78] sm:$0xff]
      %v1098 = vld [vmem:[%s5 + $0x80] sm:$0xff]
      %v1099 = vld [vmem:[%s5 + $0x88] sm:$0xff]
      %v1100 = vld [vmem:[%s5 + $0x90] sm:$0xff]
      %v1101 = vld [vmem:[%s5 + $0x98] sm:$0xff]
      %v1102 = vld [vmem:[%s5 + $0xa0] sm:$0xff]
      %v1103 = vld [vmem:[%s5 + $0xa8] sm:$0xff]
      %v1104 = vld [vmem:[%s5 + $0xb0] sm:$0xff]
      %v1105 = vld [vmem:[%s5 + $0xb8] sm:$0xff]
      %v1106 = vld [vmem:[%s5 + $0xc0] sm:$0xff]
      %v1107 = vld [vmem:[%s5 + $0xc8] sm:$0xff]
      %v1108 = vld [vmem:[%s5 + $0xd0] sm:$0xff]
      %v1109 = vld [vmem:[%s5 + $0xd8] sm:$0xff]
      %v1110 = vld [vmem:[%s5 + $0xe0] sm:$0xff]
      %v1111 = vld [vmem:[%s5 + $0xe8] sm:$0xff]
      %v1112 = vld [vmem:[%s5 + $0xf0] sm:$0xff]
      %v1113 = vld [vmem:[%s5 + $0xf8] sm:$0xff]
      %vm1114 = vcmask 457728
      %v1116 = vsel %vm1114, %v1082, 0
      %v1119 = vsel %vm1114, %v1083, 0
      %v1122 = vsel %vm1114, %v1084, 0
      %v1125 = vsel %vm1114, %v1085, 0
      %v1128 = vsel %vm1114, %v1086, 0
      %v1131 = vsel %vm1114, %v1087, 0
      %v1134 = vsel %vm1114, %v1088, 0
      %v1137 = vsel %vm1114, %v1089, 0
      %v1140 = vsel %vm1114, %v1090, 0
      %v1143 = vsel %vm1114, %v1091, 0
      %v1146 = vsel %vm1114, %v1092, 0
      %v1149 = vsel %vm1114, %v1093, 0
      %v1152 = vsel %vm1114, %v1094, 0
      %v1155 = vsel %vm1114, %v1095, 0
      %v1158 = vsel %vm1114, %v1096, 0
      %v1161 = vsel %vm1114, %v1097, 0
      %v1164 = vsel %vm1114, %v1098, 0
      %v1167 = vsel %vm1114, %v1099, 0
      %v1170 = vsel %vm1114, %v1100, 0
      %v1173 = vsel %vm1114, %v1101, 0
      %v1176 = vsel %vm1114, %v1102, 0
      %v1179 = vsel %vm1114, %v1103, 0
      %v1182 = vsel %vm1114, %v1104, 0
      %v1185 = vsel %vm1114, %v1105, 0
      %v1188 = vsel %vm1114, %v1106, 0
      %v1191 = vsel %vm1114, %v1107, 0
      %v1194 = vsel %vm1114, %v1108, 0
      %v1197 = vsel %vm1114, %v1109, 0
      %v1200 = vsel %vm1114, %v1110, 0
      %v1203 = vsel %vm1114, %v1111, 0
      %v1206 = vsel %vm1114, %v1112, 0
      %v1209 = vsel %vm1114, %v1113, 0
      %1211 = vmatprep.subr.mxu0 0.0
      %1212 = vmatpush1.msra.mxu0 %v1049
      %1213 = vmatprep.subr.mxu0 0.0
      %1214 = vmatpush1.msra.mxu0 %v1054
      %1215 = vmatprep.subr.mxu0 0.0
      %1216 = vmatpush1.msra.mxu0 %v1059
      %1217 = vmatprep.subr.mxu0 0.0
      %1218 = vmatpush1.msra.mxu0 %v1064
      %1219 = vmatprep.subr.mxu0 0.0
      %1220 = vmatpush1.msra.mxu0 %v1069
      %1221 = vmatprep.subr.mxu0 0.0
      %1222 = vmatpush1.msra.mxu0 %v1074
      %1223 = vmatprep.subr.mxu0 0.0
      %1224 = vmatpush1.msra.mxu0 %v1079
      %1225 = vmatprep.subr.mxu0 0.0
      %1226 = vmatpush1.msra.mxu0 0.0
      %1227 = vmatprep.subr.mxu0 0.0
      %1228 = vmatpush1.msra.mxu0 0.0
      %1229 = vmatprep.subr.mxu0 0.0
      %1230 = vmatpush1.msra.mxu0 0.0
      %1231 = vmatprep.subr.mxu0 0.0
      %1232 = vmatpush1.msra.mxu0 0.0
      %1233 = vmatprep.subr.mxu0 0.0
      %1234 = vmatpush1.msra.mxu0 0.0
      %1235 = vmatprep.subr.mxu0 0.0
      %1236 = vmatpush1.msra.mxu0 0.0
      %1237 = vmatprep.subr.mxu0 0.0
      %1238 = vmatpush1.msra.mxu0 0.0
      %1239 = vmatprep.subr.mxu0 0.0
      %1240 = vmatpush1.msra.mxu0 0.0
      %1241 = vmatprep.subr.mxu0 0.0
      %1242 = vmatpush1.msra.mxu0 0.0
      %1243 = vmatprep.subr.mxu0 0.0
      %1244 = vmatpush1.msra.mxu0 0.0
      %1245 = vmatprep.subr.mxu0 0.0
      %1246 = vmatpush1.msra.mxu0 0.0
      %1247 = vmatprep.subr.mxu0 0.0
      %1248 = vmatpush1.msra.mxu0 0.0
      %1249 = vmatprep.subr.mxu0 0.0
      %1250 = vmatpush1.msra.mxu0 0.0
      %1251 = vmatprep.subr.mxu0 0.0
      %1252 = vmatpush1.msra.mxu0 0.0
      %1253 = vmatprep.subr.mxu0 0.0
      %1254 = vmatpush1.msra.mxu0 0.0
      %1255 = vmatprep.subr.mxu0 0.0
      %1256 = vmatpush1.msra.mxu0 0.0
      %1257 = vmatprep.subr.mxu0 0.0
      %1258 = vmatpush1.msra.mxu0 0.0
      %1259 = vmatprep.subr.mxu0 0.0
      %1260 = vmatpush1.msra.mxu0 0.0
      %1261 = vmatprep.subr.mxu0 0.0
      %1262 = vmatpush1.msra.mxu0 0.0
      %1263 = vmatprep.subr.mxu0 0.0
      %1264 = vmatpush1.msra.mxu0 0.0
      %1265 = vmatprep.subr.mxu0 0.0
      %1266 = vmatpush1.msra.mxu0 0.0
      %1267 = vmatprep.subr.mxu0 0.0
      %1268 = vmatpush1.msra.mxu0 0.0
      %1269 = vmatprep.subr.mxu0 0.0
      %1270 = vmatpush1.msra.mxu0 0.0
      %1271 = vmatprep.subr.mxu0 0.0
      %1272 = vmatpush1.msra.mxu0 0.0
      %1273 = vmatprep.subr.mxu0 0.0
      %1274 = vmatpush1.msra.mxu0 0.0
      %1275 = vmatprep.mubr.f32.mxu0 0.0
      %1276 = vmatmul.mubr.f32.gmra.mrb[0].mxu0 %v1116
      %v1277 = vpop.f32.mrb[0].mxu0
      %v1278 = vadd.f32 0.0, %v1277
      %v1279 = vpop.f32.mrb[0].mxu0
      %1280 = vmatprep.mubr.f32.mxu0 0.0
      %1281 = vmatmul.mubr.f32.gmra.mrb[0].mxu0 %v1119
      %v1282 = vpop.f32.mrb[0].mxu0
      %v1283 = vadd.f32 0.0, %v1282
      %v1284 = vpop.f32.mrb[0].mxu0
      %1285 = vmatprep.mubr.f32.mxu0 0.0
      %1286 = vmatmul.mubr.f32.gmra.mrb[0].mxu0 %v1122
      %v1287 = vpop.f32.mrb[0].mxu0
      %v1288 = vadd.f32 0.0, %v1287
      %v1289 = vpop.f32.mrb[0].mxu0
      %1290 = vmatprep.mubr.f32.mxu0 0.0
      %1291 = vmatmul.mubr.f32.gmra.mrb[0].mxu0 %v1125
      %v1292 = vpop.f32.mrb[0].mxu0
      %v1293 = vadd.f32 0.0, %v1292
      %v1294 = vpop.f32.mrb[0].mxu0
      %1295 = vmatprep.mubr.f32.mxu0 0.0
      %1296 = vmatmul.mubr.f32.gmra.mrb[0].mxu0 %v1128
      %v1297 = vpop.f32.mrb[0].mxu0
      %v1298 = vadd.f32 0.0, %v1297
      %v1299 = vpop.f32.mrb[0].mxu0
      %1300 = vmatprep.mubr.f32.mxu0 0.0
      %1301 = vmatmul.mubr.f32.gmra.mrb[0].mxu0 %v1131
      %v1302 = vpop.f32.mrb[0].mxu0
      %v1303 = vadd.f32 0.0, %v1302
      %v1304 = vpop.f32.mrb[0].mxu0
      %1305 = vmatprep.mubr.f32.mxu0 0.0
      %1306 = vmatmul.mubr.f32.gmra.mrb[0].mxu0 %v1134
      %v1307 = vpop.f32.mrb[0].mxu0
      %v1308 = vadd.f32 0.0, %v1307
      %v1309 = vpop.f32.mrb[0].mxu0
      %1310 = vmatprep.mubr.f32.mxu0 0.0
      %1311 = vmatmul.mubr.f32.gmra.mrb[0].mxu0 %v1137
      %v1312 = vpop.f32.mrb[0].mxu0
      %v1313 = vadd.f32 0.0, %v1312
      %v1314 = vpop.f32.mrb[0].mxu0
      %1315 = vmatprep.mubr.f32.mxu0 0.0
      %1316 = vmatmul.mubr.f32.gmra.mrb[0].mxu0 %v1140
      %v1317 = vpop.f32.mrb[0].mxu0
      %v1318 = vadd.f32 0.0, %v1317
      %v1319 = vpop.f32.mrb[0].mxu0
      %1320 = vmatprep.mubr.f32.mxu0 0.0
      %1321 = vmatmul.mubr.f32.gmra.mrb[0].mxu0 %v1143
      %v1322 = vpop.f32.mrb[0].mxu0
      %v1323 = vadd.f32 0.0, %v1322
      %v1324 = vpop.f32.mrb[0].mxu0
      %1325 = vmatprep.mubr.f32.mxu0 0.0
      %1326 = vmatmul.mubr.f32.gmra.mrb[0].mxu0 %v1146
      %v1327 = vpop.f32.mrb[0].mxu0
      %v1328 = vadd.f32 0.0, %v1327
      %v1329 = vpop.f32.mrb[0].mxu0
      %1330 = vmatprep.mubr.f32.mxu0 0.0
      %1331 = vmatmul.mubr.f32.gmra.mrb[0].mxu0 %v1149
      %v1332 = vpop.f32.mrb[0].mxu0
      %v1333 = vadd.f32 0.0, %v1332
      %v1334 = vpop.f32.mrb[0].mxu0
      %1335 = vmatprep.mubr.f32.mxu0 0.0
      %1336 = vmatmul.mubr.f32.gmra.mrb[0].mxu0 %v1152
      %v1337 = vpop.f32.mrb[0].mxu0
      %v1338 = vadd.f32 0.0, %v1337
      %v1339 = vpop.f32.mrb[0].mxu0
      %1340 = vmatprep.mubr.f32.mxu0 0.0
      %1341 = vmatmul.mubr.f32.gmra.mrb[0].mxu0 %v1155
      %v1342 = vpop.f32.mrb[0].mxu0
      %v1343 = vadd.f32 0.0, %v1342
      %v1344 = vpop.f32.mrb[0].mxu0
      %1345 = vmatprep.mubr.f32.mxu0 0.0
      %1346 = vmatmul.mubr.f32.gmra.mrb[0].mxu0 %v1158
      %v1347 = vpop.f32.mrb[0].mxu0
      %v1348 = vadd.f32 0.0, %v1347
      %v1349 = vpop.f32.mrb[0].mxu0
      %1350 = vmatprep.mubr.f32.mxu0 0.0
      %1351 = vmatmul.mubr.f32.gmra.mrb[0].mxu0 %v1161
      %v1352 = vpop.f32.mrb[0].mxu0
      %v1353 = vadd.f32 0.0, %v1352
      %v1354 = vpop.f32.mrb[0].mxu0
      %1355 = vmatprep.mubr.f32.mxu0 0.0
      %1356 = vmatmul.mubr.f32.gmra.mrb[0].mxu0 %v1164
      %v1357 = vpop.f32.mrb[0].mxu0
      %v1358 = vadd.f32 0.0, %v1357
      %v1359 = vpop.f32.mrb[0].mxu0
      %1360 = vmatprep.mubr.f32.mxu0 0.0
      %1361 = vmatmul.mubr.f32.gmra.mrb[0].mxu0 %v1167
      %v1362 = vpop.f32.mrb[0].mxu0
      %v1363 = vadd.f32 0.0, %v1362
      %v1364 = vpop.f32.mrb[0].mxu0
      %1365 = vmatprep.mubr.f32.mxu0 0.0
      %1366 = vmatmul.mubr.f32.gmra.mrb[0].mxu0 %v1170
      %v1367 = vpop.f32.mrb[0].mxu0
      %v1368 = vadd.f32 0.0, %v1367
      %v1369 = vpop.f32.mrb[0].mxu0
      %1370 = vmatprep.mubr.f32.mxu0 0.0
      %1371 = vmatmul.mubr.f32.gmra.mrb[0].mxu0 %v1173
      %v1372 = vpop.f32.mrb[0].mxu0
      %v1373 = vadd.f32 0.0, %v1372
      %v1374 = vpop.f32.mrb[0].mxu0
      %1375 = vmatprep.mubr.f32.mxu0 0.0
      %1376 = vmatmul.mubr.f32.gmra.mrb[0].mxu0 %v1176
      %v1377 = vpop.f32.mrb[0].mxu0
      %v1378 = vadd.f32 0.0, %v1377
      %v1379 = vpop.f32.mrb[0].mxu0
      %1380 = vmatprep.mubr.f32.mxu0 0.0
      %1381 = vmatmul.mubr.f32.gmra.mrb[0].mxu0 %v1179
      %v1382 = vpop.f32.mrb[0].mxu0
      %v1383 = vadd.f32 0.0, %v1382
      %v1384 = vpop.f32.mrb[0].mxu0
      %1385 = vmatprep.mubr.f32.mxu0 0.0
      %1386 = vmatmul.mubr.f32.gmra.mrb[0].mxu0 %v1182
      %v1387 = vpop.f32.mrb[0].mxu0
      %v1388 = vadd.f32 0.0, %v1387
      %v1389 = vpop.f32.mrb[0].mxu0
      %1390 = vmatprep.mubr.f32.mxu0 0.0
      %1391 = vmatmul.mubr.f32.gmra.mrb[0].mxu0 %v1185
      %v1392 = vpop.f32.mrb[0].mxu0
      %v1393 = vadd.f32 0.0, %v1392
      %v1394 = vpop.f32.mrb[0].mxu0
      %1395 = vmatprep.mubr.f32.mxu0 0.0
      %1396 = vmatmul.mubr.f32.gmra.mrb[0].mxu0 %v1188
      %v1397 = vpop.f32.mrb[0].mxu0
      %v1398 = vadd.f32 0.0, %v1397
      %v1399 = vpop.f32.mrb[0].mxu0
      %1400 = vmatprep.mubr.f32.mxu0 0.0
      %1401 = vmatmul.mubr.f32.gmra.mrb[0].mxu0 %v1191
      %v1402 = vpop.f32.mrb[0].mxu0
      %v1403 = vadd.f32 0.0, %v1402
      %v1404 = vpop.f32.mrb[0].mxu0
      %1405 = vmatprep.mubr.f32.mxu0 0.0
      %1406 = vmatmul.mubr.f32.gmra.mrb[0].mxu0 %v1194
      %v1407 = vpop.f32.mrb[0].mxu0
      %v1408 = vadd.f32 0.0, %v1407
      %v1409 = vpop.f32.mrb[0].mxu0
      %1410 = vmatprep.mubr.f32.mxu0 0.0
      %1411 = vmatmul.mubr.f32.gmra.mrb[0].mxu0 %v1197
      %v1412 = vpop.f32.mrb[0].mxu0
      %v1413 = vadd.f32 0.0, %v1412
      %v1414 = vpop.f32.mrb[0].mxu0
      %1415 = vmatprep.mubr.f32.mxu0 0.0
      %1416 = vmatmul.mubr.f32.gmra.mrb[0].mxu0 %v1200
      %v1417 = vpop.f32.mrb[0].mxu0
      %v1418 = vadd.f32 0.0, %v1417
      %v1419 = vpop.f32.mrb[0].mxu0
      %1420 = vmatprep.mubr.f32.mxu0 0.0
      %1421 = vmatmul.mubr.f32.gmra.mrb[0].mxu0 %v1203
      %v1422 = vpop.f32.mrb[0].mxu0
      %v1423 = vadd.f32 0.0, %v1422
      %v1424 = vpop.f32.mrb[0].mxu0
      %1425 = vmatprep.mubr.f32.mxu0 0.0
      %1426 = vmatmul.mubr.f32.gmra.mrb[0].mxu0 %v1206
      %v1427 = vpop.f32.mrb[0].mxu0
      %v1428 = vadd.f32 0.0, %v1427
      %v1429 = vpop.f32.mrb[0].mxu0
      %1430 = vmatprep.mubr.f32.mxu0 0.0
      %1431 = vmatmul.mubr.f32.gmra.mrb[0].mxu0 %v1209
      %v1432 = vpop.f32.mrb[0].mxu0
      %v1433 = vadd.f32 0.0, %v1432
      %v1434 = vpop.f32.mrb[0].mxu0
      %1435 = vdwg.mxu0
      %v1437 = vsel %vm514, %v923, 0
      %v1440 = vsel %vm514, %v924, 0
      %v1443 = vsel %vm514, %v925, 0
      %v1446 = vsel %vm514, %v926, 0
      %v1449 = vsel %vm514, %v927, 0
      %v1452 = vsel %vm514, %v928, 0
      %v1455 = vsel %vm514, %v929, 0
      %v1458 = vsel %vm514, %v930, 0
      %v1461 = vsel %vm514, %v931, 0
      %v1464 = vsel %vm514, %v932, 0
      %v1467 = vsel %vm514, %v933, 0
      %v1470 = vsel %vm514, %v934, 0
      %v1473 = vsel %vm514, %v935, 0
      %v1476 = vsel %vm514, %v936, 0
      %v1479 = vsel %vm514, %v937, 0
      %v1482 = vsel %vm514, %v938, 0
      %v1485 = vsel %vm514, %v939, 0
      %v1488 = vsel %vm514, %v940, 0
      %v1491 = vsel %vm514, %v941, 0
      %v1494 = vsel %vm514, %v942, 0
      %v1497 = vsel %vm514, %v943, 0
      %v1500 = vsel %vm514, %v944, 0
      %v1503 = vsel %vm514, %v945, 0
      %v1506 = vsel %vm514, %v946, 0
      %v1509 = vsel %vm514, %v947, 0
      %v1512 = vsel %vm514, %v948, 0
      %v1515 = vsel %vm514, %v949, 0
      %v1518 = vsel %vm514, %v950, 0
      %v1521 = vsel %vm514, %v951, 0
      %v1524 = vsel %vm514, %v952, 0
      %v1527 = vsel %vm514, %v953, 0
      %v1530 = vsel %vm514, %v954, 0
      %v1533 = vsel %vm536, %v955, 0
      %1535 = vmatprep.subr.mxu0 0.0
      %1536 = vmatpush1.msra.mxu0 %v1533
      %1537 = vmatprep.subr.mxu0 0.0
      %1538 = vmatpush1.msra.mxu0 0.0
      %1539 = vmatprep.subr.mxu0 0.0
      %1540 = vmatpush1.msra.mxu0 0.0
      %1541 = vmatprep.subr.mxu0 0.0
      %1542 = vmatpush1.msra.mxu0 0.0
      %1543 = vmatprep.subr.mxu0 0.0
      %1544 = vmatpush1.msra.mxu0 0.0
      %1545 = vmatprep.subr.mxu0 0.0
      %1546 = vmatpush1.msra.mxu0 0.0
      %1547 = vmatprep.subr.mxu0 0.0
      %1548 = vmatpush1.msra.mxu0 0.0
      %1549 = vmatprep.subr.mxu0 0.0
      %1550 = vmatpush1.msra.mxu0 0.0
      %1551 = vmatprep.subr.mxu0 0.0
      %1552 = vmatpush1.msra.mxu0 0.0
      %1553 = vmatprep.subr.mxu0 0.0
      %1554 = vmatpush1.msra.mxu0 0.0
      %1555 = vmatprep.subr.mxu0 0.0
      %1556 = vmatpush1.msra.mxu0 0.0
      %1557 = vmatprep.subr.mxu0 0.0
      %1558 = vmatpush1.msra.mxu0 0.0
      %1559 = vmatprep.subr.mxu0 0.0
      %1560 = vmatpush1.msra.mxu0 0.0
      %1561 = vmatprep.subr.mxu0 0.0
      %1562 = vmatpush1.msra.mxu0 0.0
      %1563 = vmatprep.subr.mxu0 0.0
      %1564 = vmatpush1.msra.mxu0 0.0
      %1565 = vmatprep.subr.mxu0 0.0
      %1566 = vmatpush1.msra.mxu0 0.0
      %1567 = vmatprep.subr.mxu0 0.0
      %1568 = vmatpush1.msra.mxu0 0.0
      %1569 = vmatprep.subr.mxu0 0.0
      %1570 = vmatpush1.msra.mxu0 0.0
      %1571 = vmatprep.subr.mxu0 0.0
      %1572 = vmatpush1.msra.mxu0 0.0
      %1573 = vmatprep.subr.mxu0 0.0
      %1574 = vmatpush1.msra.mxu0 0.0
      %1575 = vmatprep.subr.mxu0 0.0
      %1576 = vmatpush1.msra.mxu0 0.0
      %1577 = vmatprep.subr.mxu0 0.0
      %1578 = vmatpush1.msra.mxu0 0.0
      %1579 = vmatprep.subr.mxu0 0.0
      %1580 = vmatpush1.msra.mxu0 0.0
      %1581 = vmatprep.subr.mxu0 0.0
      %1582 = vmatpush1.msra.mxu0 0.0
      %1583 = vmatprep.subr.mxu0 0.0
      %1584 = vmatpush1.msra.mxu0 0.0
      %1585 = vmatprep.subr.mxu0 0.0
      %1586 = vmatpush1.msra.mxu0 0.0
      %1587 = vmatprep.subr.mxu0 0.0
      %1588 = vmatpush1.msra.mxu0 0.0
      %1589 = vmatprep.subr.mxu0 0.0
      %1590 = vmatpush1.msra.mxu0 0.0
      %1591 = vmatprep.subr.mxu0 0.0
      %1592 = vmatpush1.msra.mxu0 0.0
      %1593 = vmatprep.subr.mxu0 0.0
      %1594 = vmatpush1.msra.mxu0 0.0
      %1595 = vmatprep.subr.mxu0 0.0
      %1596 = vmatpush1.msra.mxu0 0.0
      %1597 = vmatprep.subr.mxu0 0.0
      %1598 = vmatpush1.msra.mxu0 0.0
      %1599 = vmatprep.mubr.f32.mxu0 0.0
      %1600 = vmatmul.mubr.f32.gmra.mrb[0].mxu0 %v1437
      %v1601 = vpop.f32.mrb[0].mxu0
      %v1602 = vadd.f32 %v1278, %v1601
      %v1603 = vpop.f32.mrb[0].mxu0
      %1604 = vmatprep.mubr.f32.mxu0 0.0
      %1605 = vmatmul.mubr.f32.gmra.mrb[0].mxu0 %v1440
      %v1606 = vpop.f32.mrb[0].mxu0
      %v1607 = vadd.f32 %v1283, %v1606
      %v1608 = vpop.f32.mrb[0].mxu0
      %1609 = vmatprep.mubr.f32.mxu0 0.0
      %1610 = vmatmul.mubr.f32.gmra.mrb[0].mxu0 %v1443
      %v1611 = vpop.f32.mrb[0].mxu0
      %v1612 = vadd.f32 %v1288, %v1611
      %v1613 = vpop.f32.mrb[0].mxu0
      %1614 = vmatprep.mubr.f32.mxu0 0.0
      %1615 = vmatmul.mubr.f32.gmra.mrb[0].mxu0 %v1446
      %v1616 = vpop.f32.mrb[0].mxu0
      %v1617 = vadd.f32 %v1293, %v1616
      %v1618 = vpop.f32.mrb[0].mxu0
      %1619 = vmatprep.mubr.f32.mxu0 0.0
      %1620 = vmatmul.mubr.f32.gmra.mrb[0].mxu0 %v1449
      %v1621 = vpop.f32.mrb[0].mxu0
      %v1622 = vadd.f32 %v1298, %v1621
      %v1623 = vpop.f32.mrb[0].mxu0
      %1624 = vmatprep.mubr.f32.mxu0 0.0
      %1625 = vmatmul.mubr.f32.gmra.mrb[0].mxu0 %v1452
      %v1626 = vpop.f32.mrb[0].mxu0
      %v1627 = vadd.f32 %v1303, %v1626
      %v1628 = vpop.f32.mrb[0].mxu0
      %1629 = vmatprep.mubr.f32.mxu0 0.0
      %1630 = vmatmul.mubr.f32.gmra.mrb[0].mxu0 %v1455
      %v1631 = vpop.f32.mrb[0].mxu0
      %v1632 = vadd.f32 %v1308, %v1631
      %v1633 = vpop.f32.mrb[0].mxu0
      %1634 = vmatprep.mubr.f32.mxu0 0.0
      %1635 = vmatmul.mubr.f32.gmra.mrb[0].mxu0 %v1458
      %v1636 = vpop.f32.mrb[0].mxu0
      %v1637 = vadd.f32 %v1313, %v1636
      %v1638 = vpop.f32.mrb[0].mxu0
      %1639 = vmatprep.mubr.f32.mxu0 0.0
      %1640 = vmatmul.mubr.f32.gmra.mrb[0].mxu0 %v1461
      %v1641 = vpop.f32.mrb[0].mxu0
      %v1642 = vadd.f32 %v1318, %v1641
      %v1643 = vpop.f32.mrb[0].mxu0
      %1644 = vmatprep.mubr.f32.mxu0 0.0
      %1645 = vmatmul.mubr.f32.gmra.mrb[0].mxu0 %v1464
      %v1646 = vpop.f32.mrb[0].mxu0
      %v1647 = vadd.f32 %v1323, %v1646
      %v1648 = vpop.f32.mrb[0].mxu0
      %1649 = vmatprep.mubr.f32.mxu0 0.0
      %1650 = vmatmul.mubr.f32.gmra.mrb[0].mxu0 %v1467
      %v1651 = vpop.f32.mrb[0].mxu0
      %v1652 = vadd.f32 %v1328, %v1651
      %v1653 = vpop.f32.mrb[0].mxu0
      %1654 = vmatprep.mubr.f32.mxu0 0.0
      %1655 = vmatmul.mubr.f32.gmra.mrb[0].mxu0 %v1470
      %v1656 = vpop.f32.mrb[0].mxu0
      %v1657 = vadd.f32 %v1333, %v1656
      %v1658 = vpop.f32.mrb[0].mxu0
      %1659 = vmatprep.mubr.f32.mxu0 0.0
      %1660 = vmatmul.mubr.f32.gmra.mrb[0].mxu0 %v1473
      %v1661 = vpop.f32.mrb[0].mxu0
      %v1662 = vadd.f32 %v1338, %v1661
      %v1663 = vpop.f32.mrb[0].mxu0
      %1664 = vmatprep.mubr.f32.mxu0 0.0
      %1665 = vmatmul.mubr.f32.gmra.mrb[0].mxu0 %v1476
      %v1666 = vpop.f32.mrb[0].mxu0
      %v1667 = vadd.f32 %v1343, %v1666
      %v1668 = vpop.f32.mrb[0].mxu0
      %1669 = vmatprep.mubr.f32.mxu0 0.0
      %1670 = vmatmul.mubr.f32.gmra.mrb[0].mxu0 %v1479
      %v1671 = vpop.f32.mrb[0].mxu0
      %v1672 = vadd.f32 %v1348, %v1671
      %v1673 = vpop.f32.mrb[0].mxu0
      %1674 = vmatprep.mubr.f32.mxu0 0.0
      %1675 = vmatmul.mubr.f32.gmra.mrb[0].mxu0 %v1482
      %v1676 = vpop.f32.mrb[0].mxu0
      %v1677 = vadd.f32 %v1353, %v1676
      %v1678 = vpop.f32.mrb[0].mxu0
      %1679 = vmatprep.mubr.f32.mxu0 0.0
      %1680 = vmatmul.mubr.f32.gmra.mrb[0].mxu0 %v1485
      %v1681 = vpop.f32.mrb[0].mxu0
      %v1682 = vadd.f32 %v1358, %v1681
      %v1683 = vpop.f32.mrb[0].mxu0
      %1684 = vmatprep.mubr.f32.mxu0 0.0
      %1685 = vmatmul.mubr.f32.gmra.mrb[0].mxu0 %v1488
      %v1686 = vpop.f32.mrb[0].mxu0
      %v1687 = vadd.f32 %v1363, %v1686
      %v1688 = vpop.f32.mrb[0].mxu0
      %1689 = vmatprep.mubr.f32.mxu0 0.0
      %1690 = vmatmul.mubr.f32.gmra.mrb[0].mxu0 %v1491
      %v1691 = vpop.f32.mrb[0].mxu0
      %v1692 = vadd.f32 %v1368, %v1691
      %v1693 = vpop.f32.mrb[0].mxu0
      %1694 = vmatprep.mubr.f32.mxu0 0.0
      %1695 = vmatmul.mubr.f32.gmra.mrb[0].mxu0 %v1494
      %v1696 = vpop.f32.mrb[0].mxu0
      %v1697 = vadd.f32 %v1373, %v1696
      %v1698 = vpop.f32.mrb[0].mxu0
      %1699 = vmatprep.mubr.f32.mxu0 0.0
      %1700 = vmatmul.mubr.f32.gmra.mrb[0].mxu0 %v1497
      %v1701 = vpop.f32.mrb[0].mxu0
      %v1702 = vadd.f32 %v1378, %v1701
      %v1703 = vpop.f32.mrb[0].mxu0
      %1704 = vmatprep.mubr.f32.mxu0 0.0
      %1705 = vmatmul.mubr.f32.gmra.mrb[0].mxu0 %v1500
      %v1706 = vpop.f32.mrb[0].mxu0
      %v1707 = vadd.f32 %v1383, %v1706
      %v1708 = vpop.f32.mrb[0].mxu0
      %1709 = vmatprep.mubr.f32.mxu0 0.0
      %1710 = vmatmul.mubr.f32.gmra.mrb[0].mxu0 %v1503
      %v1711 = vpop.f32.mrb[0].mxu0
      %v1712 = vadd.f32 %v1388, %v1711
      %v1713 = vpop.f32.mrb[0].mxu0
      %1714 = vmatprep.mubr.f32.mxu0 0.0
      %1715 = vmatmul.mubr.f32.gmra.mrb[0].mxu0 %v1506
      %v1716 = vpop.f32.mrb[0].mxu0
      %v1717 = vadd.f32 %v1393, %v1716
      %v1718 = vpop.f32.mrb[0].mxu0
      %1719 = vmatprep.mubr.f32.mxu0 0.0
      %1720 = vmatmul.mubr.f32.gmra.mrb[0].mxu0 %v1509
      %v1721 = vpop.f32.mrb[0].mxu0
      %v1722 = vadd.f32 %v1398, %v1721
      %v1723 = vpop.f32.mrb[0].mxu0
      %1724 = vmatprep.mubr.f32.mxu0 0.0
      %1725 = vmatmul.mubr.f32.gmra.mrb[0].mxu0 %v1512
      %v1726 = vpop.f32.mrb[0].mxu0
      %v1727 = vadd.f32 %v1403, %v1726
      %v1728 = vpop.f32.mrb[0].mxu0
      %1729 = vmatprep.mubr.f32.mxu0 0.0
      %1730 = vmatmul.mubr.f32.gmra.mrb[0].mxu0 %v1515
      %v1731 = vpop.f32.mrb[0].mxu0
      %v1732 = vadd.f32 %v1408, %v1731
      %v1733 = vpop.f32.mrb[0].mxu0
      %1734 = vmatprep.mubr.f32.mxu0 0.0
      %1735 = vmatmul.mubr.f32.gmra.mrb[0].mxu0 %v1518
      %v1736 = vpop.f32.mrb[0].mxu0
      %v1737 = vadd.f32 %v1413, %v1736
      %v1738 = vpop.f32.mrb[0].mxu0
      %1739 = vmatprep.mubr.f32.mxu0 0.0
      %1740 = vmatmul.mubr.f32.gmra.mrb[0].mxu0 %v1521
      %v1741 = vpop.f32.mrb[0].mxu0
      %v1742 = vadd.f32 %v1418, %v1741
      %v1743 = vpop.f32.mrb[0].mxu0
      %1744 = vmatprep.mubr.f32.mxu0 0.0
      %1745 = vmatmul.mubr.f32.gmra.mrb[0].mxu0 %v1524
      %v1746 = vpop.f32.mrb[0].mxu0
      %v1747 = vadd.f32 %v1423, %v1746
      %v1748 = vpop.f32.mrb[0].mxu0
      %1749 = vmatprep.mubr.f32.mxu0 0.0
      %1750 = vmatmul.mubr.f32.gmra.mrb[0].mxu0 %v1527
      %v1751 = vpop.f32.mrb[0].mxu0
      %v1752 = vadd.f32 %v1428, %v1751
      %v1753 = vpop.f32.mrb[0].mxu0
      %1754 = vmatprep.mubr.f32.mxu0 0.0
      %1755 = vmatmul.mubr.f32.gmra.mrb[0].mxu0 %v1530
      %v1756 = vpop.f32.mrb[0].mxu0
      %v1757 = vadd.f32 %v1433, %v1756
      %v1758 = vpop.f32.mrb[0].mxu0
      %1759 = vdwg.mxu0
      %v1760 = vld [vmem:[#allocation2 + $0x8] sm:$0xff]
      %v1761 = vld [vmem:[#allocation2 + $0x10] sm:$0xff]
      %v1762 = vld [vmem:[#allocation2 + $0x18] sm:$0xff]
      %v1763 = vld [vmem:[#allocation2 + $0x20] sm:$0xff]
      %v1764 = vld [vmem:[#allocation2 + $0x28] sm:$0xff]
      %v1765 = vld [vmem:[#allocation2 + $0x30] sm:$0xff]
      %v1766 = vld [vmem:[#allocation2 + $0x38] sm:$0xff]
      %v1767 = vld [vmem:[#allocation2 + $0x40] sm:$0xff]
      %v1768 = vld [vmem:[#allocation2 + $0x48] sm:$0xff]
      %v1769 = vld [vmem:[#allocation2 + $0x50] sm:$0xff]
      %v1770 = vld [vmem:[#allocation2 + $0x58] sm:$0xff]
      %v1771 = vld [vmem:[#allocation2 + $0x60] sm:$0xff]
      %v1772 = vld [vmem:[#allocation2 + $0x68] sm:$0xff]
      %v1773 = vld [vmem:[#allocation2 + $0x70] sm:$0xff]
      %v1774 = vld [vmem:[#allocation2 + $0x78] sm:$0xff]
      %v1775 = vld [vmem:[#allocation2 + $0x80] sm:$0xff]
      %v1776 = vld [vmem:[#allocation2 + $0x88] sm:$0xff]
      %v1777 = vld [vmem:[#allocation2 + $0x90] sm:$0xff]
      %v1778 = vld [vmem:[#allocation2 + $0x98] sm:$0xff]
      %v1779 = vld [vmem:[#allocation2 + $0xa0] sm:$0xff]
      %v1780 = vld [vmem:[#allocation2 + $0xa8] sm:$0xff]
      %v1781 = vld [vmem:[#allocation2 + $0xb0] sm:$0xff]
      %v1782 = vld [vmem:[#allocation2 + $0xb8] sm:$0xff]
      %v1783 = vld [vmem:[#allocation2 + $0xc0] sm:$0xff]
      %v1784 = vld [vmem:[#allocation2 + $0xc8] sm:$0xff]
      %v1785 = vld [vmem:[#allocation2 + $0xd0] sm:$0xff]
      %v1786 = vld [vmem:[#allocation2 + $0xd8] sm:$0xff]
      %v1787 = vld [vmem:[#allocation2 + $0xe0] sm:$0xff]
      %v1788 = vld [vmem:[#allocation2 + $0xe8] sm:$0xff]
      %v1789 = vld [vmem:[#allocation2 + $0xf0] sm:$0xff]
      %v1790 = vld [vmem:[#allocation2 + $0xf8] sm:$0xff]
      %v1791 = vld [vmem:[#allocation2 + $0x100] sm:$0xff]
      %s1792 = scalar_lea.vmem %s6, 4
      %v1793 = vld [vmem:[%s1792] sm:$0xf]
      %v1795 = vsel %vm514, %v1760, 0
      %v1798 = vsel %vm514, %v1761, 0
      %v1801 = vsel %vm514, %v1762, 0
      %v1804 = vsel %vm514, %v1763, 0
      %v1807 = vsel %vm514, %v1764, 0
      %v1810 = vsel %vm514, %v1765, 0
      %v1813 = vsel %vm514, %v1766, 0
      %v1816 = vsel %vm514, %v1767, 0
      %v1819 = vsel %vm514, %v1768, 0
      %v1822 = vsel %vm514, %v1769, 0
      %v1825 = vsel %vm514, %v1770, 0
      %v1828 = vsel %vm514, %v1771, 0
      %v1831 = vsel %vm514, %v1772, 0
      %v1834 = vsel %vm514, %v1773, 0
      %v1837 = vsel %vm514, %v1774, 0
      %v1840 = vsel %vm514, %v1775, 0
      %v1843 = vsel %vm514, %v1776, 0
      %v1846 = vsel %vm514, %v1777, 0
      %v1849 = vsel %vm514, %v1778, 0
      %v1852 = vsel %vm514, %v1779, 0
      %v1855 = vsel %vm514, %v1780, 0
      %v1858 = vsel %vm514, %v1781, 0
      %v1861 = vsel %vm514, %v1782, 0
      %v1864 = vsel %vm514, %v1783, 0
      %v1867 = vsel %vm514, %v1784, 0
      %v1870 = vsel %vm514, %v1785, 0
      %v1873 = vsel %vm514, %v1786, 0
      %v1876 = vsel %vm514, %v1787, 0
      %v1879 = vsel %vm514, %v1788, 0
      %v1882 = vsel %vm514, %v1789, 0
      %v1885 = vsel %vm514, %v1790, 0
      %v1888 = vsel %vm514, %v1791, 0
      %v1891 = vsel %vm536, %v1793, 0
      %1893 = vmatprep.subr.mxu0 0.0
      %1894 = vmatpush1.msra.mxu0 %v1891
      %1895 = vmatprep.subr.mxu0 0.0
      %1896 = vmatpush1.msra.mxu0 0.0
      %1897 = vmatprep.subr.mxu0 0.0
      %1898 = vmatpush1.msra.mxu0 0.0
      %1899 = vmatprep.subr.mxu0 0.0
      %1900 = vmatpush1.msra.mxu0 0.0
      %1901 = vmatprep.subr.mxu0 0.0
      %1902 = vmatpush1.msra.mxu0 0.0
      %1903 = vmatprep.subr.mxu0 0.0
      %1904 = vmatpush1.msra.mxu0 0.0
      %1905 = vmatprep.subr.mxu0 0.0
      %1906 = vmatpush1.msra.mxu0 0.0
      %1907 = vmatprep.subr.mxu0 0.0
      %1908 = vmatpush1.msra.mxu0 0.0
      %1909 = vmatprep.subr.mxu0 0.0
      %1910 = vmatpush1.msra.mxu0 0.0
      %1911 = vmatprep.subr.mxu0 0.0
      %1912 = vmatpush1.msra.mxu0 0.0
      %1913 = vmatprep.subr.mxu0 0.0
      %1914 = vmatpush1.msra.mxu0 0.0
      %1915 = vmatprep.subr.mxu0 0.0
      %1916 = vmatpush1.msra.mxu0 0.0
      %1917 = vmatprep.subr.mxu0 0.0
      %1918 = vmatpush1.msra.mxu0 0.0
      %1919 = vmatprep.subr.mxu0 0.0
      %1920 = vmatpush1.msra.mxu0 0.0
      %1921 = vmatprep.subr.mxu0 0.0
      %1922 = vmatpush1.msra.mxu0 0.0
      %1923 = vmatprep.subr.mxu0 0.0
      %1924 = vmatpush1.msra.mxu0 0.0
      %1925 = vmatprep.subr.mxu0 0.0
      %1926 = vmatpush1.msra.mxu0 0.0
      %1927 = vmatprep.subr.mxu0 0.0
      %1928 = vmatpush1.msra.mxu0 0.0
      %1929 = vmatprep.subr.mxu0 0.0
      %1930 = vmatpush1.msra.mxu0 0.0
      %1931 = vmatprep.subr.mxu0 0.0
      %1932 = vmatpush1.msra.mxu0 0.0
      %1933 = vmatprep.subr.mxu0 0.0
      %1934 = vmatpush1.msra.mxu0 0.0
      %1935 = vmatprep.subr.mxu0 0.0
      %1936 = vmatpush1.msra.mxu0 0.0
      %1937 = vmatprep.subr.mxu0 0.0
      %1938 = vmatpush1.msra.mxu0 0.0
      %1939 = vmatprep.subr.mxu0 0.0
      %1940 = vmatpush1.msra.mxu0 0.0
      %1941 = vmatprep.subr.mxu0 0.0
      %1942 = vmatpush1.msra.mxu0 0.0
      %1943 = vmatprep.subr.mxu0 0.0
      %1944 = vmatpush1.msra.mxu0 0.0
      %1945 = vmatprep.subr.mxu0 0.0
      %1946 = vmatpush1.msra.mxu0 0.0
      %1947 = vmatprep.subr.mxu0 0.0
      %1948 = vmatpush1.msra.mxu0 0.0
      %1949 = vmatprep.subr.mxu0 0.0
      %1950 = vmatpush1.msra.mxu0 0.0
      %1951 = vmatprep.subr.mxu0 0.0
      %1952 = vmatpush1.msra.mxu0 0.0
      %1953 = vmatprep.subr.mxu0 0.0
      %1954 = vmatpush1.msra.mxu0 0.0
      %1955 = vmatprep.subr.mxu0 0.0
      %1956 = vmatpush1.msra.mxu0 0.0
      %1957 = vmatprep.mubr.f32.mxu0 0.0
      %1958 = vmatmul.mubr.f32.gmra.mrb[0].mxu0 %v1795
      %v1959 = vpop.f32.mrb[0].mxu0
      %v1960 = vadd.f32 0.0, %v1959
      %v1961 = vpop.f32.mrb[0].mxu0
      %1962 = vmatprep.mubr.f32.mxu0 0.0
      %1963 = vmatmul.mubr.f32.gmra.mrb[0].mxu0 %v1798
      %v1964 = vpop.f32.mrb[0].mxu0
      %v1965 = vadd.f32 0.0, %v1964
      %v1966 = vpop.f32.mrb[0].mxu0
      %1967 = vmatprep.mubr.f32.mxu0 0.0
      %1968 = vmatmul.mubr.f32.gmra.mrb[0].mxu0 %v1801
      %v1969 = vpop.f32.mrb[0].mxu0
      %v1970 = vadd.f32 0.0, %v1969
      %v1971 = vpop.f32.mrb[0].mxu0
      %1972 = vmatprep.mubr.f32.mxu0 0.0
      %1973 = vmatmul.mubr.f32.gmra.mrb[0].mxu0 %v1804
      %v1974 = vpop.f32.mrb[0].mxu0
      %v1975 = vadd.f32 0.0, %v1974
      %v1976 = vpop.f32.mrb[0].mxu0
      %1977 = vmatprep.mubr.f32.mxu0 0.0
      %1978 = vmatmul.mubr.f32.gmra.mrb[0].mxu0 %v1807
      %v1979 = vpop.f32.mrb[0].mxu0
      %v1980 = vadd.f32 0.0, %v1979
      %v1981 = vpop.f32.mrb[0].mxu0
      %1982 = vmatprep.mubr.f32.mxu0 0.0
      %1983 = vmatmul.mubr.f32.gmra.mrb[0].mxu0 %v1810
      %v1984 = vpop.f32.mrb[0].mxu0
      %v1985 = vadd.f32 0.0, %v1984
      %v1986 = vpop.f32.mrb[0].mxu0
      %1987 = vmatprep.mubr.f32.mxu0 0.0
      %1988 = vmatmul.mubr.f32.gmra.mrb[0].mxu0 %v1813
      %v1989 = vpop.f32.mrb[0].mxu0
      %v1990 = vadd.f32 0.0, %v1989
      %v1991 = vpop.f32.mrb[0].mxu0
      %1992 = vmatprep.mubr.f32.mxu0 0.0
      %1993 = vmatmul.mubr.f32.gmra.mrb[0].mxu0 %v1816
      %v1994 = vpop.f32.mrb[0].mxu0
      %v1995 = vadd.f32 0.0, %v1994
      %v1996 = vpop.f32.mrb[0].mxu0
      %1997 = vmatprep.mubr.f32.mxu0 0.0
      %1998 = vmatmul.mubr.f32.gmra.mrb[0].mxu0 %v1819
      %v1999 = vpop.f32.mrb[0].mxu0
      %v2000 = vadd.f32 0.0, %v1999
      %v2001 = vpop.f32.mrb[0].mxu0
      %2002 = vmatprep.mubr.f32.mxu0 0.0
      %2003 = vmatmul.mubr.f32.gmra.mrb[0].mxu0 %v1822
      %v2004 = vpop.f32.mrb[0].mxu0
      %v2005 = vadd.f32 0.0, %v2004
      %v2006 = vpop.f32.mrb[0].mxu0
      %2007 = vmatprep.mubr.f32.mxu0 0.0
      %2008 = vmatmul.mubr.f32.gmra.mrb[0].mxu0 %v1825
      %v2009 = vpop.f32.mrb[0].mxu0
      %v2010 = vadd.f32 0.0, %v2009
      %v2011 = vpop.f32.mrb[0].mxu0
      %2012 = vmatprep.mubr.f32.mxu0 0.0
      %2013 = vmatmul.mubr.f32.gmra.mrb[0].mxu0 %v1828
      %v2014 = vpop.f32.mrb[0].mxu0
      %v2015 = vadd.f32 0.0, %v2014
      %v2016 = vpop.f32.mrb[0].mxu0
      %2017 = vmatprep.mubr.f32.mxu0 0.0
      %2018 = vmatmul.mubr.f32.gmra.mrb[0].mxu0 %v1831
      %v2019 = vpop.f32.mrb[0].mxu0
      %v2020 = vadd.f32 0.0, %v2019
      %v2021 = vpop.f32.mrb[0].mxu0
      %2022 = vmatprep.mubr.f32.mxu0 0.0
      %2023 = vmatmul.mubr.f32.gmra.mrb[0].mxu0 %v1834
      %v2024 = vpop.f32.mrb[0].mxu0
      %v2025 = vadd.f32 0.0, %v2024
      %v2026 = vpop.f32.mrb[0].mxu0
      %2027 = vmatprep.mubr.f32.mxu0 0.0
      %2028 = vmatmul.mubr.f32.gmra.mrb[0].mxu0 %v1837
      %v2029 = vpop.f32.mrb[0].mxu0
      %v2030 = vadd.f32 0.0, %v2029
      %v2031 = vpop.f32.mrb[0].mxu0
      %2032 = vmatprep.mubr.f32.mxu0 0.0
      %2033 = vmatmul.mubr.f32.gmra.mrb[0].mxu0 %v1840
      %v2034 = vpop.f32.mrb[0].mxu0
      %v2035 = vadd.f32 0.0, %v2034
      %v2036 = vpop.f32.mrb[0].mxu0
      %2037 = vmatprep.mubr.f32.mxu0 0.0
      %2038 = vmatmul.mubr.f32.gmra.mrb[0].mxu0 %v1843
      %v2039 = vpop.f32.mrb[0].mxu0
      %v2040 = vadd.f32 0.0, %v2039
      %v2041 = vpop.f32.mrb[0].mxu0
      %2042 = vmatprep.mubr.f32.mxu0 0.0
      %2043 = vmatmul.mubr.f32.gmra.mrb[0].mxu0 %v1846
      %v2044 = vpop.f32.mrb[0].mxu0
      %v2045 = vadd.f32 0.0, %v2044
      %v2046 = vpop.f32.mrb[0].mxu0
      %2047 = vmatprep.mubr.f32.mxu0 0.0
      %2048 = vmatmul.mubr.f32.gmra.mrb[0].mxu0 %v1849
      %v2049 = vpop.f32.mrb[0].mxu0
      %v2050 = vadd.f32 0.0, %v2049
      %v2051 = vpop.f32.mrb[0].mxu0
      %2052 = vmatprep.mubr.f32.mxu0 0.0
      %2053 = vmatmul.mubr.f32.gmra.mrb[0].mxu0 %v1852
      %v2054 = vpop.f32.mrb[0].mxu0
      %v2055 = vadd.f32 0.0, %v2054
      %v2056 = vpop.f32.mrb[0].mxu0
      %2057 = vmatprep.mubr.f32.mxu0 0.0
      %2058 = vmatmul.mubr.f32.gmra.mrb[0].mxu0 %v1855
      %v2059 = vpop.f32.mrb[0].mxu0
      %v2060 = vadd.f32 0.0, %v2059
      %v2061 = vpop.f32.mrb[0].mxu0
      %2062 = vmatprep.mubr.f32.mxu0 0.0
      %2063 = vmatmul.mubr.f32.gmra.mrb[0].mxu0 %v1858
      %v2064 = vpop.f32.mrb[0].mxu0
      %v2065 = vadd.f32 0.0, %v2064
      %v2066 = vpop.f32.mrb[0].mxu0
      %2067 = vmatprep.mubr.f32.mxu0 0.0
      %2068 = vmatmul.mubr.f32.gmra.mrb[0].mxu0 %v1861
      %v2069 = vpop.f32.mrb[0].mxu0
      %v2070 = vadd.f32 0.0, %v2069
      %v2071 = vpop.f32.mrb[0].mxu0
      %2072 = vmatprep.mubr.f32.mxu0 0.0
      %2073 = vmatmul.mubr.f32.gmra.mrb[0].mxu0 %v1864
      %v2074 = vpop.f32.mrb[0].mxu0
      %v2075 = vadd.f32 0.0, %v2074
      %v2076 = vpop.f32.mrb[0].mxu0
      %2077 = vmatprep.mubr.f32.mxu0 0.0
      %2078 = vmatmul.mubr.f32.gmra.mrb[0].mxu0 %v1867
      %v2079 = vpop.f32.mrb[0].mxu0
      %v2080 = vadd.f32 0.0, %v2079
      %v2081 = vpop.f32.mrb[0].mxu0
      %2082 = vmatprep.mubr.f32.mxu0 0.0
      %2083 = vmatmul.mubr.f32.gmra.mrb[0].mxu0 %v1870
      %v2084 = vpop.f32.mrb[0].mxu0
      %v2085 = vadd.f32 0.0, %v2084
      %v2086 = vpop.f32.mrb[0].mxu0
      %2087 = vmatprep.mubr.f32.mxu0 0.0
      %2088 = vmatmul.mubr.f32.gmra.mrb[0].mxu0 %v1873
      %v2089 = vpop.f32.mrb[0].mxu0
      %v2090 = vadd.f32 0.0, %v2089
      %v2091 = vpop.f32.mrb[0].mxu0
      %2092 = vmatprep.mubr.f32.mxu0 0.0
      %2093 = vmatmul.mubr.f32.gmra.mrb[0].mxu0 %v1876
      %v2094 = vpop.f32.mrb[0].mxu0
      %v2095 = vadd.f32 0.0, %v2094
      %v2096 = vpop.f32.mrb[0].mxu0
      %2097 = vmatprep.mubr.f32.mxu0 0.0
      %2098 = vmatmul.mubr.f32.gmra.mrb[0].mxu0 %v1879
      %v2099 = vpop.f32.mrb[0].mxu0
      %v2100 = vadd.f32 0.0, %v2099
      %v2101 = vpop.f32.mrb[0].mxu0
      %2102 = vmatprep.mubr.f32.mxu0 0.0
      %2103 = vmatmul.mubr.f32.gmra.mrb[0].mxu0 %v1882
      %v2104 = vpop.f32.mrb[0].mxu0
      %v2105 = vadd.f32 0.0, %v2104
      %v2106 = vpop.f32.mrb[0].mxu0
      %2107 = vmatprep.mubr.f32.mxu0 0.0
      %2108 = vmatmul.mubr.f32.gmra.mrb[0].mxu0 %v1885
      %v2109 = vpop.f32.mrb[0].mxu0
      %v2110 = vadd.f32 0.0, %v2109
      %v2111 = vpop.f32.mrb[0].mxu0
      %2112 = vmatprep.mubr.f32.mxu0 0.0
      %2113 = vmatmul.mubr.f32.gmra.mrb[0].mxu0 %v1888
      %v2114 = vpop.f32.mrb[0].mxu0
      %v2115 = vadd.f32 0.0, %v2114
      %v2116 = vpop.f32.mrb[0].mxu0
      %2117 = vdwg.mxu0
      %v2118 = vadd.f32 %v1602, %v1960
      %v2119 = vadd.f32 %v1607, %v1965
      %v2120 = vadd.f32 %v1612, %v1970
      %v2121 = vadd.f32 %v1617, %v1975
      %v2122 = vadd.f32 %v1622, %v1980
      %v2123 = vadd.f32 %v1627, %v1985
      %v2124 = vadd.f32 %v1632, %v1990
      %v2125 = vadd.f32 %v1637, %v1995
      %v2126 = vadd.f32 %v1642, %v2000
      %v2127 = vadd.f32 %v1647, %v2005
      %v2128 = vadd.f32 %v1652, %v2010
      %v2129 = vadd.f32 %v1657, %v2015
      %v2130 = vadd.f32 %v1662, %v2020
      %v2131 = vadd.f32 %v1667, %v2025
      %v2132 = vadd.f32 %v1672, %v2030
      %v2133 = vadd.f32 %v1677, %v2035
      %v2134 = vadd.f32 %v1682, %v2040
      %v2135 = vadd.f32 %v1687, %v2045
      %v2136 = vadd.f32 %v1692, %v2050
      %v2137 = vadd.f32 %v1697, %v2055
      %v2138 = vadd.f32 %v1702, %v2060
      %v2139 = vadd.f32 %v1707, %v2065
      %v2140 = vadd.f32 %v1712, %v2070
      %v2141 = vadd.f32 %v1717, %v2075
      %v2142 = vadd.f32 %v1722, %v2080
      %v2143 = vadd.f32 %v1727, %v2085
      %v2144 = vadd.f32 %v1732, %v2090
      %v2145 = vadd.f32 %v1737, %v2095
      %v2146 = vadd.f32 %v1742, %v2100
      %v2147 = vadd.f32 %v1747, %v2105
      %v2148 = vadd.f32 %v1752, %v2110
      %v2149 = vadd.f32 %v1757, %v2115
      %s2150 = scalar_lea.vmem %s7, 32
      %v2151 = vld [vmem:[%s2150] sm:$0xff]
      %v2152 = vld [vmem:[%s2150 + $0x8] sm:$0xff]
      %v2153 = vld [vmem:[%s2150 + $0x10] sm:$0xff]
      %v2154 = vld [vmem:[%s2150 + $0x18] sm:$0xff]
      %2155 = vmatprep.subr.mxu0 0.0
      %2156 = vmatpush1.msra.mxu0 %v2151
      %2157 = vmatprep.subr.mxu0 0.0
      %2158 = vmatpush1.msra.mxu0 %v2152
      %2159 = vmatprep.subr.mxu0 0.0
      %2160 = vmatpush1.msra.mxu0 %v2153
      %2161 = vmatprep.subr.mxu0 0.0
      %2162 = vmatpush1.msra.mxu0 %v2154
      %2163 = vmatprep.subr.mxu0 0.0
      %2164 = vmatpush1.msra.mxu0 0.0
      %2165 = vmatprep.subr.mxu0 0.0
      %2166 = vmatpush1.msra.mxu0 0.0
      %2167 = vmatprep.subr.mxu0 0.0
      %2168 = vmatpush1.msra.mxu0 0.0
      %2169 = vmatprep.subr.mxu0 0.0
      %2170 = vmatpush1.msra.mxu0 0.0
      %2171 = vmatprep.subr.mxu0 0.0
      %2172 = vmatpush1.msra.mxu0 0.0
      %2173 = vmatprep.subr.mxu0 0.0
      %2174 = vmatpush1.msra.mxu0 0.0
      %2175 = vmatprep.subr.mxu0 0.0
      %2176 = vmatpush1.msra.mxu0 0.0
      %2177 = vmatprep.subr.mxu0 0.0
      %2178 = vmatpush1.msra.mxu0 0.0
      %2179 = vmatprep.subr.mxu0 0.0
      %2180 = vmatpush1.msra.mxu0 0.0
      %2181 = vmatprep.subr.mxu0 0.0
      %2182 = vmatpush1.msra.mxu0 0.0
      %2183 = vmatprep.subr.mxu0 0.0
      %2184 = vmatpush1.msra.mxu0 0.0
      %2185 = vmatprep.subr.mxu0 0.0
      %2186 = vmatpush1.msra.mxu0 0.0
      %2187 = vmatprep.subr.mxu0 0.0
      %2188 = vmatpush1.msra.mxu0 0.0
      %2189 = vmatprep.subr.mxu0 0.0
      %2190 = vmatpush1.msra.mxu0 0.0
      %2191 = vmatprep.subr.mxu0 0.0
      %2192 = vmatpush1.msra.mxu0 0.0
      %2193 = vmatprep.subr.mxu0 0.0
      %2194 = vmatpush1.msra.mxu0 0.0
      %2195 = vmatprep.subr.mxu0 0.0
      %2196 = vmatpush1.msra.mxu0 0.0
      %2197 = vmatprep.subr.mxu0 0.0
      %2198 = vmatpush1.msra.mxu0 0.0
      %2199 = vmatprep.subr.mxu0 0.0
      %2200 = vmatpush1.msra.mxu0 0.0
      %2201 = vmatprep.subr.mxu0 0.0
      %2202 = vmatpush1.msra.mxu0 0.0
      %2203 = vmatprep.subr.mxu0 0.0
      %2204 = vmatpush1.msra.mxu0 0.0
      %2205 = vmatprep.subr.mxu0 0.0
      %2206 = vmatpush1.msra.mxu0 0.0
      %2207 = vmatprep.subr.mxu0 0.0
      %2208 = vmatpush1.msra.mxu0 0.0
      %2209 = vmatprep.subr.mxu0 0.0
      %2210 = vmatpush1.msra.mxu0 0.0
      %2211 = vmatprep.subr.mxu0 0.0
      %2212 = vmatpush1.msra.mxu0 0.0
      %2213 = vmatprep.subr.mxu0 0.0
      %2214 = vmatpush1.msra.mxu0 0.0
      %2215 = vmatprep.subr.mxu0 0.0
      %2216 = vmatpush1.msra.mxu0 0.0
      %2217 = vmatprep.subr.mxu0 0.0
      %2218 = vmatpush1.msra.mxu0 0.0
      %2219 = vmatprep.mubr.f32.mxu0 0.0
      %2220 = vmatmul.mubr.f32.gmra.mrb[0].mxu0 %v962
      %v2221 = vpop.f32.mrb[0].mxu0
      %v2222 = vadd.f32 0.0, %v2221
      %v2223 = vpop.f32.mrb[0].mxu0
      %2224 = vmatprep.mubr.f32.mxu0 0.0
      %2225 = vmatmul.mubr.f32.gmra.mrb[0].mxu0 %v965
      %v2226 = vpop.f32.mrb[0].mxu0
      %v2227 = vadd.f32 0.0, %v2226
      %v2228 = vpop.f32.mrb[0].mxu0
      %2229 = vmatprep.mubr.f32.mxu0 0.0
      %2230 = vmatmul.mubr.f32.gmra.mrb[0].mxu0 %v968
      %v2231 = vpop.f32.mrb[0].mxu0
      %v2232 = vadd.f32 0.0, %v2231
      %v2233 = vpop.f32.mrb[0].mxu0
      %2234 = vmatprep.mubr.f32.mxu0 0.0
      %2235 = vmatmul.mubr.f32.gmra.mrb[0].mxu0 %v971
      %v2236 = vpop.f32.mrb[0].mxu0
      %v2237 = vadd.f32 0.0, %v2236
      %v2238 = vpop.f32.mrb[0].mxu0
      %2239 = vmatprep.mubr.f32.mxu0 0.0
      %2240 = vmatmul.mubr.f32.gmra.mrb[0].mxu0 %v974
      %v2241 = vpop.f32.mrb[0].mxu0
      %v2242 = vadd.f32 0.0, %v2241
      %v2243 = vpop.f32.mrb[0].mxu0
      %2244 = vmatprep.mubr.f32.mxu0 0.0
      %2245 = vmatmul.mubr.f32.gmra.mrb[0].mxu0 %v977
      %v2246 = vpop.f32.mrb[0].mxu0
      %v2247 = vadd.f32 0.0, %v2246
      %v2248 = vpop.f32.mrb[0].mxu0
      %2249 = vmatprep.mubr.f32.mxu0 0.0
      %2250 = vmatmul.mubr.f32.gmra.mrb[0].mxu0 %v980
      %v2251 = vpop.f32.mrb[0].mxu0
      %v2252 = vadd.f32 0.0, %v2251
      %v2253 = vpop.f32.mrb[0].mxu0
      %2254 = vdwg.mxu0
      %s2255 = scalar_lea.vmem %s5, 256
      %v2256 = vld [vmem:[%s2255] sm:$0xff]
      %v2257 = vld [vmem:[%s2255 + $0x8] sm:$0xff]
      %v2258 = vld [vmem:[%s2255 + $0x10] sm:$0xff]
      %v2259 = vld [vmem:[%s2255 + $0x18] sm:$0xff]
      %v2260 = vld [vmem:[%s2255 + $0x20] sm:$0xff]
      %v2261 = vld [vmem:[%s2255 + $0x28] sm:$0xff]
      %v2262 = vld [vmem:[%s2255 + $0x30] sm:$0xff]
      %v2263 = vld [vmem:[%s2255 + $0x38] sm:$0xff]
      %v2264 = vld [vmem:[%s2255 + $0x40] sm:$0xff]
      %v2265 = vld [vmem:[%s2255 + $0x48] sm:$0xff]
      %v2266 = vld [vmem:[%s2255 + $0x50] sm:$0xff]
      %v2267 = vld [vmem:[%s2255 + $0x58] sm:$0xff]
      %v2268 = vld [vmem:[%s2255 + $0x60] sm:$0xff]
      %v2269 = vld [vmem:[%s2255 + $0x68] sm:$0xff]
      %v2270 = vld [vmem:[%s2255 + $0x70] sm:$0xff]
      %v2271 = vld [vmem:[%s2255 + $0x78] sm:$0xff]
      %v2272 = vld [vmem:[%s2255 + $0x80] sm:$0xff]
      %v2273 = vld [vmem:[%s2255 + $0x88] sm:$0xff]
      %v2274 = vld [vmem:[%s2255 + $0x90] sm:$0xff]
      %v2275 = vld [vmem:[%s2255 + $0x98] sm:$0xff]
      %v2276 = vld [vmem:[%s2255 + $0xa0] sm:$0xff]
      %v2277 = vld [vmem:[%s2255 + $0xa8] sm:$0xff]
      %v2278 = vld [vmem:[%s2255 + $0xb0] sm:$0xff]
      %v2279 = vld [vmem:[%s2255 + $0xb8] sm:$0xff]
      %v2280 = vld [vmem:[%s2255 + $0xc0] sm:$0xff]
      %v2281 = vld [vmem:[%s2255 + $0xc8] sm:$0xff]
      %v2282 = vld [vmem:[%s2255 + $0xd0] sm:$0xff]
      %v2283 = vld [vmem:[%s2255 + $0xd8] sm:$0xff]
      %v2284 = vld [vmem:[%s2255 + $0xe0] sm:$0xff]
      %v2285 = vld [vmem:[%s2255 + $0xe8] sm:$0xff]
      %v2286 = vld [vmem:[%s2255 + $0xf0] sm:$0xff]
      %v2287 = vld [vmem:[%s2255 + $0xf8] sm:$0xff]
      %v2289 = vsel %vm1114, %v2256, 0
      %v2292 = vsel %vm1114, %v2257, 0
      %v2295 = vsel %vm1114, %v2258, 0
      %v2298 = vsel %vm1114, %v2259, 0
      %v2301 = vsel %vm1114, %v2260, 0
      %v2304 = vsel %vm1114, %v2261, 0
      %v2307 = vsel %vm1114, %v2262, 0
      %v2310 = vsel %vm1114, %v2263, 0
      %v2313 = vsel %vm1114, %v2264, 0
      %v2316 = vsel %vm1114, %v2265, 0
      %v2319 = vsel %vm1114, %v2266, 0
      %v2322 = vsel %vm1114, %v2267, 0
      %v2325 = vsel %vm1114, %v2268, 0
      %v2328 = vsel %vm1114, %v2269, 0
      %v2331 = vsel %vm1114, %v2270, 0
      %v2334 = vsel %vm1114, %v2271, 0
      %v2337 = vsel %vm1114, %v2272, 0
      %v2340 = vsel %vm1114, %v2273, 0
      %v2343 = vsel %vm1114, %v2274, 0
      %v2346 = vsel %vm1114, %v2275, 0
      %v2349 = vsel %vm1114, %v2276, 0
      %v2352 = vsel %vm1114, %v2277, 0
      %v2355 = vsel %vm1114, %v2278, 0
      %v2358 = vsel %vm1114, %v2279, 0
      %v2361 = vsel %vm1114, %v2280, 0
      %v2364 = vsel %vm1114, %v2281, 0
      %v2367 = vsel %vm1114, %v2282, 0
      %v2370 = vsel %vm1114, %v2283, 0
      %v2373 = vsel %vm1114, %v2284, 0
      %v2376 = vsel %vm1114, %v2285, 0
      %v2379 = vsel %vm1114, %v2286, 0
      %v2382 = vsel %vm1114, %v2287, 0
      %2384 = vmatprep.subr.mxu0 0.0
      %2385 = vmatpush1.msra.mxu0 %v2222
      %2386 = vmatprep.subr.mxu0 0.0
      %2387 = vmatpush1.msra.mxu0 %v2227
      %2388 = vmatprep.subr.mxu0 0.0
      %2389 = vmatpush1.msra.mxu0 %v2232
      %2390 = vmatprep.subr.mxu0 0.0
      %2391 = vmatpush1.msra.mxu0 %v2237
      %2392 = vmatprep.subr.mxu0 0.0
      %2393 = vmatpush1.msra.mxu0 %v2242
      %2394 = vmatprep.subr.mxu0 0.0
      %2395 = vmatpush1.msra.mxu0 %v2247
      %2396 = vmatprep.subr.mxu0 0.0
      %2397 = vmatpush1.msra.mxu0 %v2252
      %2398 = vmatprep.subr.mxu0 0.0
      %2399 = vmatpush1.msra.mxu0 0.0
      %2400 = vmatprep.subr.mxu0 0.0
      %2401 = vmatpush1.msra.mxu0 0.0
      %2402 = vmatprep.subr.mxu0 0.0
      %2403 = vmatpush1.msra.mxu0 0.0
      %2404 = vmatprep.subr.mxu0 0.0
      %2405 = vmatpush1.msra.mxu0 0.0
      %2406 = vmatprep.subr.mxu0 0.0
      %2407 = vmatpush1.msra.mxu0 0.0
      %2408 = vmatprep.subr.mxu0 0.0
      %2409 = vmatpush1.msra.mxu0 0.0
      %2410 = vmatprep.subr.mxu0 0.0
      %2411 = vmatpush1.msra.mxu0 0.0
      %2412 = vmatprep.subr.mxu0 0.0
      %2413 = vmatpush1.msra.mxu0 0.0
      %2414 = vmatprep.subr.mxu0 0.0
      %2415 = vmatpush1.msra.mxu0 0.0
      %2416 = vmatprep.subr.mxu0 0.0
      %2417 = vmatpush1.msra.mxu0 0.0
      %2418 = vmatprep.subr.mxu0 0.0
      %2419 = vmatpush1.msra.mxu0 0.0
      %2420 = vmatprep.subr.mxu0 0.0
      %2421 = vmatpush1.msra.mxu0 0.0
      %2422 = vmatprep.subr.mxu0 0.0
      %2423 = vmatpush1.msra.mxu0 0.0
      %2424 = vmatprep.subr.mxu0 0.0
      %2425 = vmatpush1.msra.mxu0 0.0
      %2426 = vmatprep.subr.mxu0 0.0
      %2427 = vmatpush1.msra.mxu0 0.0
      %2428 = vmatprep.subr.mxu0 0.0
      %2429 = vmatpush1.msra.mxu0 0.0
      %2430 = vmatprep.subr.mxu0 0.0
      %2431 = vmatpush1.msra.mxu0 0.0
      %2432 = vmatprep.subr.mxu0 0.0
      %2433 = vmatpush1.msra.mxu0 0.0
      %2434 = vmatprep.subr.mxu0 0.0
      %2435 = vmatpush1.msra.mxu0 0.0
      %2436 = vmatprep.subr.mxu0 0.0
      %2437 = vmatpush1.msra.mxu0 0.0
      %2438 = vmatprep.subr.mxu0 0.0
      %2439 = vmatpush1.msra.mxu0 0.0
      %2440 = vmatprep.subr.mxu0 0.0
      %2441 = vmatpush1.msra.mxu0 0.0
      %2442 = vmatprep.subr.mxu0 0.0
      %2443 = vmatpush1.msra.mxu0 0.0
      %2444 = vmatprep.subr.mxu0 0.0
      %2445 = vmatpush1.msra.mxu0 0.0
      %2446 = vmatprep.subr.mxu0 0.0
      %2447 = vmatpush1.msra.mxu0 0.0
      %2448 = vmatprep.mubr.f32.mxu0 0.0
      %2449 = vmatmul.mubr.f32.gmra.mrb[0].mxu0 %v2289
      %v2450 = vpop.f32.mrb[0].mxu0
      %v2451 = vadd.f32 0.0, %v2450
      %v2452 = vpop.f32.mrb[0].mxu0
      %2453 = vmatprep.mubr.f32.mxu0 0.0
      %2454 = vmatmul.mubr.f32.gmra.mrb[0].mxu0 %v2292
      %v2455 = vpop.f32.mrb[0].mxu0
      %v2456 = vadd.f32 0.0, %v2455
      %v2457 = vpop.f32.mrb[0].mxu0
      %2458 = vmatprep.mubr.f32.mxu0 0.0
      %2459 = vmatmul.mubr.f32.gmra.mrb[0].mxu0 %v2295
      %v2460 = vpop.f32.mrb[0].mxu0
      %v2461 = vadd.f32 0.0, %v2460
      %v2462 = vpop.f32.mrb[0].mxu0
      %2463 = vmatprep.mubr.f32.mxu0 0.0
      %2464 = vmatmul.mubr.f32.gmra.mrb[0].mxu0 %v2298
      %v2465 = vpop.f32.mrb[0].mxu0
      %v2466 = vadd.f32 0.0, %v2465
      %v2467 = vpop.f32.mrb[0].mxu0
      %2468 = vmatprep.mubr.f32.mxu0 0.0
      %2469 = vmatmul.mubr.f32.gmra.mrb[0].mxu0 %v2301
      %v2470 = vpop.f32.mrb[0].mxu0
      %v2471 = vadd.f32 0.0, %v2470
      %v2472 = vpop.f32.mrb[0].mxu0
      %2473 = vmatprep.mubr.f32.mxu0 0.0
      %2474 = vmatmul.mubr.f32.gmra.mrb[0].mxu0 %v2304
      %v2475 = vpop.f32.mrb[0].mxu0
      %v2476 = vadd.f32 0.0, %v2475
      %v2477 = vpop.f32.mrb[0].mxu0
      %2478 = vmatprep.mubr.f32.mxu0 0.0
      %2479 = vmatmul.mubr.f32.gmra.mrb[0].mxu0 %v2307
      %v2480 = vpop.f32.mrb[0].mxu0
      %v2481 = vadd.f32 0.0, %v2480
      %v2482 = vpop.f32.mrb[0].mxu0
      %2483 = vmatprep.mubr.f32.mxu0 0.0
      %2484 = vmatmul.mubr.f32.gmra.mrb[0].mxu0 %v2310
      %v2485 = vpop.f32.mrb[0].mxu0
      %v2486 = vadd.f32 0.0, %v2485
      %v2487 = vpop.f32.mrb[0].mxu0
      %2488 = vmatprep.mubr.f32.mxu0 0.0
      %2489 = vmatmul.mubr.f32.gmra.mrb[0].mxu0 %v2313
      %v2490 = vpop.f32.mrb[0].mxu0
      %v2491 = vadd.f32 0.0, %v2490
      %v2492 = vpop.f32.mrb[0].mxu0
      %2493 = vmatprep.mubr.f32.mxu0 0.0
      %2494 = vmatmul.mubr.f32.gmra.mrb[0].mxu0 %v2316
      %v2495 = vpop.f32.mrb[0].mxu0
      %v2496 = vadd.f32 0.0, %v2495
      %v2497 = vpop.f32.mrb[0].mxu0
      %2498 = vmatprep.mubr.f32.mxu0 0.0
      %2499 = vmatmul.mubr.f32.gmra.mrb[0].mxu0 %v2319
      %v2500 = vpop.f32.mrb[0].mxu0
      %v2501 = vadd.f32 0.0, %v2500
      %v2502 = vpop.f32.mrb[0].mxu0
      %2503 = vmatprep.mubr.f32.mxu0 0.0
      %2504 = vmatmul.mubr.f32.gmra.mrb[0].mxu0 %v2322
      %v2505 = vpop.f32.mrb[0].mxu0
      %v2506 = vadd.f32 0.0, %v2505
      %v2507 = vpop.f32.mrb[0].mxu0
      %2508 = vmatprep.mubr.f32.mxu0 0.0
      %2509 = vmatmul.mubr.f32.gmra.mrb[0].mxu0 %v2325
      %v2510 = vpop.f32.mrb[0].mxu0
      %v2511 = vadd.f32 0.0, %v2510
      %v2512 = vpop.f32.mrb[0].mxu0
      %2513 = vmatprep.mubr.f32.mxu0 0.0
      %2514 = vmatmul.mubr.f32.gmra.mrb[0].mxu0 %v2328
      %v2515 = vpop.f32.mrb[0].mxu0
      %v2516 = vadd.f32 0.0, %v2515
      %v2517 = vpop.f32.mrb[0].mxu0
      %2518 = vmatprep.mubr.f32.mxu0 0.0
      %2519 = vmatmul.mubr.f32.gmra.mrb[0].mxu0 %v2331
      %v2520 = vpop.f32.mrb[0].mxu0
      %v2521 = vadd.f32 0.0, %v2520
      %v2522 = vpop.f32.mrb[0].mxu0
      %2523 = vmatprep.mubr.f32.mxu0 0.0
      %2524 = vmatmul.mubr.f32.gmra.mrb[0].mxu0 %v2334
      %v2525 = vpop.f32.mrb[0].mxu0
      %v2526 = vadd.f32 0.0, %v2525
      %v2527 = vpop.f32.mrb[0].mxu0
      %2528 = vmatprep.mubr.f32.mxu0 0.0
      %2529 = vmatmul.mubr.f32.gmra.mrb[0].mxu0 %v2337
      %v2530 = vpop.f32.mrb[0].mxu0
      %v2531 = vadd.f32 0.0, %v2530
      %v2532 = vpop.f32.mrb[0].mxu0
      %2533 = vmatprep.mubr.f32.mxu0 0.0
      %2534 = vmatmul.mubr.f32.gmra.mrb[0].mxu0 %v2340
      %v2535 = vpop.f32.mrb[0].mxu0
      %v2536 = vadd.f32 0.0, %v2535
      %v2537 = vpop.f32.mrb[0].mxu0
      %2538 = vmatprep.mubr.f32.mxu0 0.0
      %2539 = vmatmul.mubr.f32.gmra.mrb[0].mxu0 %v2343
      %v2540 = vpop.f32.mrb[0].mxu0
      %v2541 = vadd.f32 0.0, %v2540
      %v2542 = vpop.f32.mrb[0].mxu0
      %2543 = vmatprep.mubr.f32.mxu0 0.0
      %2544 = vmatmul.mubr.f32.gmra.mrb[0].mxu0 %v2346
      %v2545 = vpop.f32.mrb[0].mxu0
      %v2546 = vadd.f32 0.0, %v2545
      %v2547 = vpop.f32.mrb[0].mxu0
      %2548 = vmatprep.mubr.f32.mxu0 0.0
      %2549 = vmatmul.mubr.f32.gmra.mrb[0].mxu0 %v2349
      %v2550 = vpop.f32.mrb[0].mxu0
      %v2551 = vadd.f32 0.0, %v2550
      %v2552 = vpop.f32.mrb[0].mxu0
      %2553 = vmatprep.mubr.f32.mxu0 0.0
      %2554 = vmatmul.mubr.f32.gmra.mrb[0].mxu0 %v2352
      %v2555 = vpop.f32.mrb[0].mxu0
      %v2556 = vadd.f32 0.0, %v2555
      %v2557 = vpop.f32.mrb[0].mxu0
      %2558 = vmatprep.mubr.f32.mxu0 0.0
      %2559 = vmatmul.mubr.f32.gmra.mrb[0].mxu0 %v2355
      %v2560 = vpop.f32.mrb[0].mxu0
      %v2561 = vadd.f32 0.0, %v2560
      %v2562 = vpop.f32.mrb[0].mxu0
      %2563 = vmatprep.mubr.f32.mxu0 0.0
      %2564 = vmatmul.mubr.f32.gmra.mrb[0].mxu0 %v2358
      %v2565 = vpop.f32.mrb[0].mxu0
      %v2566 = vadd.f32 0.0, %v2565
      %v2567 = vpop.f32.mrb[0].mxu0
      %2568 = vmatprep.mubr.f32.mxu0 0.0
      %2569 = vmatmul.mubr.f32.gmra.mrb[0].mxu0 %v2361
      %v2570 = vpop.f32.mrb[0].mxu0
      %v2571 = vadd.f32 0.0, %v2570
      %v2572 = vpop.f32.mrb[0].mxu0
      %2573 = vmatprep.mubr.f32.mxu0 0.0
      %2574 = vmatmul.mubr.f32.gmra.mrb[0].mxu0 %v2364
      %v2575 = vpop.f32.mrb[0].mxu0
      %v2576 = vadd.f32 0.0, %v2575
      %v2577 = vpop.f32.mrb[0].mxu0
      %2578 = vmatprep.mubr.f32.mxu0 0.0
      %2579 = vmatmul.mubr.f32.gmra.mrb[0].mxu0 %v2367
      %v2580 = vpop.f32.mrb[0].mxu0
      %v2581 = vadd.f32 0.0, %v2580
      %v2582 = vpop.f32.mrb[0].mxu0
      %2583 = vmatprep.mubr.f32.mxu0 0.0
      %2584 = vmatmul.mubr.f32.gmra.mrb[0].mxu0 %v2370
      %v2585 = vpop.f32.mrb[0].mxu0
      %v2586 = vadd.f32 0.0, %v2585
      %v2587 = vpop.f32.mrb[0].mxu0
      %2588 = vmatprep.mubr.f32.mxu0 0.0
      %2589 = vmatmul.mubr.f32.gmra.mrb[0].mxu0 %v2373
      %v2590 = vpop.f32.mrb[0].mxu0
      %v2591 = vadd.f32 0.0, %v2590
      %v2592 = vpop.f32.mrb[0].mxu0
      %2593 = vmatprep.mubr.f32.mxu0 0.0
      %2594 = vmatmul.mubr.f32.gmra.mrb[0].mxu0 %v2376
      %v2595 = vpop.f32.mrb[0].mxu0
      %v2596 = vadd.f32 0.0, %v2595
      %v2597 = vpop.f32.mrb[0].mxu0
      %2598 = vmatprep.mubr.f32.mxu0 0.0
      %2599 = vmatmul.mubr.f32.gmra.mrb[0].mxu0 %v2379
      %v2600 = vpop.f32.mrb[0].mxu0
      %v2601 = vadd.f32 0.0, %v2600
      %v2602 = vpop.f32.mrb[0].mxu0
      %2603 = vmatprep.mubr.f32.mxu0 0.0
      %2604 = vmatmul.mubr.f32.gmra.mrb[0].mxu0 %v2382
      %v2605 = vpop.f32.mrb[0].mxu0
      %v2606 = vadd.f32 0.0, %v2605
      %v2607 = vpop.f32.mrb[0].mxu0
      %2608 = vdwg.mxu0
      %v2609 = vadd.f32 %v2118, %v2451
      %v2610 = vadd.f32 %v2119, %v2456
      %v2611 = vadd.f32 %v2120, %v2461
      %v2612 = vadd.f32 %v2121, %v2466
      %v2613 = vadd.f32 %v2122, %v2471
      %v2614 = vadd.f32 %v2123, %v2476
      %v2615 = vadd.f32 %v2124, %v2481
      %v2616 = vadd.f32 %v2125, %v2486
      %v2617 = vadd.f32 %v2126, %v2491
      %v2618 = vadd.f32 %v2127, %v2496
      %v2619 = vadd.f32 %v2128, %v2501
      %v2620 = vadd.f32 %v2129, %v2506
      %v2621 = vadd.f32 %v2130, %v2511
      %v2622 = vadd.f32 %v2131, %v2516
      %v2623 = vadd.f32 %v2132, %v2521
      %v2624 = vadd.f32 %v2133, %v2526
      %v2625 = vadd.f32 %v2134, %v2531
      %v2626 = vadd.f32 %v2135, %v2536
      %v2627 = vadd.f32 %v2136, %v2541
      %v2628 = vadd.f32 %v2137, %v2546
      %v2629 = vadd.f32 %v2138, %v2551
      %v2630 = vadd.f32 %v2139, %v2556
      %v2631 = vadd.f32 %v2140, %v2561
      %v2632 = vadd.f32 %v2141, %v2566
      %v2633 = vadd.f32 %v2142, %v2571
      %v2634 = vadd.f32 %v2143, %v2576
      %v2635 = vadd.f32 %v2144, %v2581
      %v2636 = vadd.f32 %v2145, %v2586
      %v2637 = vadd.f32 %v2146, %v2591
      %v2638 = vadd.f32 %v2147, %v2596
      %v2639 = vadd.f32 %v2148, %v2601
      %v2640 = vadd.f32 %v2149, %v2606
      %v2641 = vld [vmem:[#allocation2 + $0x9] sm:$0xff]
      %v2642 = vld [vmem:[#allocation2 + $0x11] sm:$0xff]
      %v2643 = vld [vmem:[#allocation2 + $0x19] sm:$0xff]
      %v2644 = vld [vmem:[#allocation2 + $0x21] sm:$0xff]
      %v2645 = vld [vmem:[#allocation2 + $0x29] sm:$0xff]
      %v2646 = vld [vmem:[#allocation2 + $0x31] sm:$0xff]
      %v2647 = vld [vmem:[#allocation2 + $0x39] sm:$0xff]
      %v2648 = vld [vmem:[#allocation2 + $0x41] sm:$0xff]
      %v2649 = vld [vmem:[#allocation2 + $0x49] sm:$0xff]
      %v2650 = vld [vmem:[#allocation2 + $0x51] sm:$0xff]
      %v2651 = vld [vmem:[#allocation2 + $0x59] sm:$0xff]
      %v2652 = vld [vmem:[#allocation2 + $0x61] sm:$0xff]
      %v2653 = vld [vmem:[#allocation2 + $0x69] sm:$0xff]
      %v2654 = vld [vmem:[#allocation2 + $0x71] sm:$0xff]
      %v2655 = vld [vmem:[#allocation2 + $0x79] sm:$0xff]
      %v2656 = vld [vmem:[#allocation2 + $0x81] sm:$0xff]
      %v2657 = vld [vmem:[#allocation2 + $0x89] sm:$0xff]
      %v2658 = vld [vmem:[#allocation2 + $0x91] sm:$0xff]
      %v2659 = vld [vmem:[#allocation2 + $0x99] sm:$0xff]
      %v2660 = vld [vmem:[#allocation2 + $0xa1] sm:$0xff]
      %v2661 = vld [vmem:[#allocation2 + $0xa9] sm:$0xff]
      %v2662 = vld [vmem:[#allocation2 + $0xb1] sm:$0xff]
      %v2663 = vld [vmem:[#allocation2 + $0xb9] sm:$0xff]
      %v2664 = vld [vmem:[#allocation2 + $0xc1] sm:$0xff]
      %v2665 = vld [vmem:[#allocation2 + $0xc9] sm:$0xff]
      %v2666 = vld [vmem:[#allocation2 + $0xd1] sm:$0xff]
      %v2667 = vld [vmem:[#allocation2 + $0xd9] sm:$0xff]
      %v2668 = vld [vmem:[#allocation2 + $0xe1] sm:$0xff]
      %v2669 = vld [vmem:[#allocation2 + $0xe9] sm:$0xff]
      %v2670 = vld [vmem:[#allocation2 + $0xf1] sm:$0xff]
      %v2671 = vld [vmem:[#allocation2 + $0xf9] sm:$0xff]
      %v2672 = vld [vmem:[#allocation2 + $0x101] sm:$0xff]
      %s2673 = scalar_lea.vmem %s8, 512
      %v2674 = vld [vmem:[%s2673] sm:$0xff]
      %v2675 = vld [vmem:[%s2673 + $0x8] sm:$0xff]
      %v2676 = vld [vmem:[%s2673 + $0x10] sm:$0xff]
      %v2677 = vld [vmem:[%s2673 + $0x18] sm:$0xff]
      %v2678 = vld [vmem:[%s2673 + $0x20] sm:$0xff]
      %v2679 = vld [vmem:[%s2673 + $0x28] sm:$0xff]
      %v2680 = vld [vmem:[%s2673 + $0x30] sm:$0xff]
      %v2681 = vld [vmem:[%s2673 + $0x38] sm:$0xff]
      %v2682 = vld [vmem:[%s2673 + $0x40] sm:$0xff]
      %v2683 = vld [vmem:[%s2673 + $0x48] sm:$0xff]
      %v2684 = vld [vmem:[%s2673 + $0x50] sm:$0xff]
      %v2685 = vld [vmem:[%s2673 + $0x58] sm:$0xff]
      %v2686 = vld [vmem:[%s2673 + $0x60] sm:$0xff]
      %v2687 = vld [vmem:[%s2673 + $0x68] sm:$0xff]
      %v2688 = vld [vmem:[%s2673 + $0x70] sm:$0xff]
      %v2689 = vld [vmem:[%s2673 + $0x78] sm:$0xff]
      %v2690 = vld [vmem:[%s2673 + $0x80] sm:$0xff]
      %v2691 = vld [vmem:[%s2673 + $0x88] sm:$0xff]
      %v2692 = vld [vmem:[%s2673 + $0x90] sm:$0xff]
      %v2693 = vld [vmem:[%s2673 + $0x98] sm:$0xff]
      %v2694 = vld [vmem:[%s2673 + $0xa0] sm:$0xff]
      %v2695 = vld [vmem:[%s2673 + $0xa8] sm:$0xff]
      %v2696 = vld [vmem:[%s2673 + $0xb0] sm:$0xff]
      %v2697 = vld [vmem:[%s2673 + $0xb8] sm:$0xff]
      %v2698 = vld [vmem:[%s2673 + $0xc0] sm:$0xff]
      %v2699 = vld [vmem:[%s2673 + $0xc8] sm:$0xff]
      %v2700 = vld [vmem:[%s2673 + $0xd0] sm:$0xff]
      %v2701 = vld [vmem:[%s2673 + $0xd8] sm:$0xff]
      %v2702 = vld [vmem:[%s2673 + $0xe0] sm:$0xff]
      %v2703 = vld [vmem:[%s2673 + $0xe8] sm:$0xff]
      %v2704 = vld [vmem:[%s2673 + $0xf0] sm:$0xff]
      %v2705 = vld [vmem:[%s2673 + $0xf8] sm:$0xff]
      %2707 = vset.pattern.permute.xlu0 0
      %2708 = vperm.xlu0 %2707, %v2674
      %v2709 = vpop.permute.xlu0 %2708
      %2712 = vset.pattern.permute.xlu0 0
      %2713 = vperm.xlu0 %2712, %v2675
      %v2714 = vpop.permute.xlu0 %2713
      %2717 = vset.pattern.permute.xlu0 0
      %2718 = vperm.xlu0 %2717, %v2676
      %v2719 = vpop.permute.xlu0 %2718
      %2722 = vset.pattern.permute.xlu0 0
      %2723 = vperm.xlu0 %2722, %v2677
      %v2724 = vpop.permute.xlu0 %2723
      %2727 = vset.pattern.permute.xlu0 0
      %2728 = vperm.xlu0 %2727, %v2678
      %v2729 = vpop.permute.xlu0 %2728
      %2732 = vset.pattern.permute.xlu0 0
      %2733 = vperm.xlu0 %2732, %v2679
      %v2734 = vpop.permute.xlu0 %2733
      %2737 = vset.pattern.permute.xlu0 0
      %2738 = vperm.xlu0 %2737, %v2680
      %v2739 = vpop.permute.xlu0 %2738
      %2742 = vset.pattern.permute.xlu0 0
      %2743 = vperm.xlu0 %2742, %v2681
      %v2744 = vpop.permute.xlu0 %2743
      %2747 = vset.pattern.permute.xlu0 0
      %2748 = vperm.xlu0 %2747, %v2682
      %v2749 = vpop.permute.xlu0 %2748
      %2752 = vset.pattern.permute.xlu0 0
      %2753 = vperm.xlu0 %2752, %v2683
      %v2754 = vpop.permute.xlu0 %2753
      %2757 = vset.pattern.permute.xlu0 0
      %2758 = vperm.xlu0 %2757, %v2684
      %v2759 = vpop.permute.xlu0 %2758
      %2762 = vset.pattern.permute.xlu0 0
      %2763 = vperm.xlu0 %2762, %v2685
      %v2764 = vpop.permute.xlu0 %2763
      %2767 = vset.pattern.permute.xlu0 0
      %2768 = vperm.xlu0 %2767, %v2686
      %v2769 = vpop.permute.xlu0 %2768
      %2772 = vset.pattern.permute.xlu0 0
      %2773 = vperm.xlu0 %2772, %v2687
      %v2774 = vpop.permute.xlu0 %2773
      %2777 = vset.pattern.permute.xlu0 0
      %2778 = vperm.xlu0 %2777, %v2688
      %v2779 = vpop.permute.xlu0 %2778
      %2782 = vset.pattern.permute.xlu0 0
      %2783 = vperm.xlu0 %2782, %v2689
      %v2784 = vpop.permute.xlu0 %2783
      %2787 = vset.pattern.permute.xlu0 0
      %2788 = vperm.xlu0 %2787, %v2690
      %v2789 = vpop.permute.xlu0 %2788
      %2792 = vset.pattern.permute.xlu0 0
      %2793 = vperm.xlu0 %2792, %v2691
      %v2794 = vpop.permute.xlu0 %2793
      %2797 = vset.pattern.permute.xlu0 0
      %2798 = vperm.xlu0 %2797, %v2692
      %v2799 = vpop.permute.xlu0 %2798
      %2802 = vset.pattern.permute.xlu0 0
      %2803 = vperm.xlu0 %2802, %v2693
      %v2804 = vpop.permute.xlu0 %2803
      %2807 = vset.pattern.permute.xlu0 0
      %2808 = vperm.xlu0 %2807, %v2694
      %v2809 = vpop.permute.xlu0 %2808
      %2812 = vset.pattern.permute.xlu0 0
      %2813 = vperm.xlu0 %2812, %v2695
      %v2814 = vpop.permute.xlu0 %2813
      %2817 = vset.pattern.permute.xlu0 0
      %2818 = vperm.xlu0 %2817, %v2696
      %v2819 = vpop.permute.xlu0 %2818
      %2822 = vset.pattern.permute.xlu0 0
      %2823 = vperm.xlu0 %2822, %v2697
      %v2824 = vpop.permute.xlu0 %2823
      %2827 = vset.pattern.permute.xlu0 0
      %2828 = vperm.xlu0 %2827, %v2698
      %v2829 = vpop.permute.xlu0 %2828
      %2832 = vset.pattern.permute.xlu0 0
      %2833 = vperm.xlu0 %2832, %v2699
      %v2834 = vpop.permute.xlu0 %2833
      %2837 = vset.pattern.permute.xlu0 0
      %2838 = vperm.xlu0 %2837, %v2700
      %v2839 = vpop.permute.xlu0 %2838
      %2842 = vset.pattern.permute.xlu0 0
      %2843 = vperm.xlu0 %2842, %v2701
      %v2844 = vpop.permute.xlu0 %2843
      %2847 = vset.pattern.permute.xlu0 0
      %2848 = vperm.xlu0 %2847, %v2702
      %v2849 = vpop.permute.xlu0 %2848
      %2852 = vset.pattern.permute.xlu0 0
      %2853 = vperm.xlu0 %2852, %v2703
      %v2854 = vpop.permute.xlu0 %2853
      %2857 = vset.pattern.permute.xlu0 0
      %2858 = vperm.xlu0 %2857, %v2704
      %v2859 = vpop.permute.xlu0 %2858
      %2862 = vset.pattern.permute.xlu0 0
      %2863 = vperm.xlu0 %2862, %v2705
      %v2864 = vpop.permute.xlu0 %2863
      %v2866 = vmul.f32 %v2641, %v2709
      %v2867 = vmul.f32 %v2642, %v2714
      %v2868 = vmul.f32 %v2643, %v2719
      %v2869 = vmul.f32 %v2644, %v2724
      %v2870 = vmul.f32 %v2645, %v2729
      %v2871 = vmul.f32 %v2646, %v2734
      %v2872 = vmul.f32 %v2647, %v2739
      %v2873 = vmul.f32 %v2648, %v2744
      %v2874 = vmul.f32 %v2649, %v2749
      %v2875 = vmul.f32 %v2650, %v2754
      %v2876 = vmul.f32 %v2651, %v2759
      %v2877 = vmul.f32 %v2652, %v2764
      %v2878 = vmul.f32 %v2653, %v2769
      %v2879 = vmul.f32 %v2654, %v2774
      %v2880 = vmul.f32 %v2655, %v2779
      %v2881 = vmul.f32 %v2656, %v2784
      %v2882 = vmul.f32 %v2657, %v2789
      %v2883 = vmul.f32 %v2658, %v2794
      %v2884 = vmul.f32 %v2659, %v2799
      %v2885 = vmul.f32 %v2660, %v2804
      %v2886 = vmul.f32 %v2661, %v2809
      %v2887 = vmul.f32 %v2662, %v2814
      %v2888 = vmul.f32 %v2663, %v2819
      %v2889 = vmul.f32 %v2664, %v2824
      %v2890 = vmul.f32 %v2665, %v2829
      %v2891 = vmul.f32 %v2666, %v2834
      %v2892 = vmul.f32 %v2667, %v2839
      %v2893 = vmul.f32 %v2668, %v2844
      %v2894 = vmul.f32 %v2669, %v2849
      %v2895 = vmul.f32 %v2670, %v2854
      %v2896 = vmul.f32 %v2671, %v2859
      %v2897 = vmul.f32 %v2672, %v2864
      %s2898 = scalar_lea.vmem %s6, 8
      %v2899 = vld [vmem:[%s2898] sm:$0xf]
      %v2901 = vsel %vm514, %v2866, 0
      %v2904 = vsel %vm514, %v2867, 0
      %v2907 = vsel %vm514, %v2868, 0
      %v2910 = vsel %vm514, %v2869, 0
      %v2913 = vsel %vm514, %v2870, 0
      %v2916 = vsel %vm514, %v2871, 0
      %v2919 = vsel %vm514, %v2872, 0
      %v2922 = vsel %vm514, %v2873, 0
      %v2925 = vsel %vm514, %v2874, 0
      %v2928 = vsel %vm514, %v2875, 0
      %v2931 = vsel %vm514, %v2876, 0
      %v2934 = vsel %vm514, %v2877, 0
      %v2937 = vsel %vm514, %v2878, 0
      %v2940 = vsel %vm514, %v2879, 0
      %v2943 = vsel %vm514, %v2880, 0
      %v2946 = vsel %vm514, %v2881, 0
      %v2949 = vsel %vm514, %v2882, 0
      %v2952 = vsel %vm514, %v2883, 0
      %v2955 = vsel %vm514, %v2884, 0
      %v2958 = vsel %vm514, %v2885, 0
      %v2961 = vsel %vm514, %v2886, 0
      %v2964 = vsel %vm514, %v2887, 0
      %v2967 = vsel %vm514, %v2888, 0
      %v2970 = vsel %vm514, %v2889, 0
      %v2973 = vsel %vm514, %v2890, 0
      %v2976 = vsel %vm514, %v2891, 0
      %v2979 = vsel %vm514, %v2892, 0
      %v2982 = vsel %vm514, %v2893, 0
      %v2985 = vsel %vm514, %v2894, 0
      %v2988 = vsel %vm514, %v2895, 0
      %v2991 = vsel %vm514, %v2896, 0
      %v2994 = vsel %vm514, %v2897, 0
      %v2997 = vsel %vm536, %v2899, 0
      %2999 = vmatprep.subr.mxu0 0.0
      %3000 = vmatpush1.msra.mxu0 %v2997
      %3001 = vmatprep.subr.mxu0 0.0
      %3002 = vmatpush1.msra.mxu0 0.0
      %3003 = vmatprep.subr.mxu0 0.0
      %3004 = vmatpush1.msra.mxu0 0.0
      %3005 = vmatprep.subr.mxu0 0.0
      %3006 = vmatpush1.msra.mxu0 0.0
      %3007 = vmatprep.subr.mxu0 0.0
      %3008 = vmatpush1.msra.mxu0 0.0
      %3009 = vmatprep.subr.mxu0 0.0
      %3010 = vmatpush1.msra.mxu0 0.0
      %3011 = vmatprep.subr.mxu0 0.0
      %3012 = vmatpush1.msra.mxu0 0.0
      %3013 = vmatprep.subr.mxu0 0.0
      %3014 = vmatpush1.msra.mxu0 0.0
      %3015 = vmatprep.subr.mxu0 0.0
      %3016 = vmatpush1.msra.mxu0 0.0
      %3017 = vmatprep.subr.mxu0 0.0
      %3018 = vmatpush1.msra.mxu0 0.0
      %3019 = vmatprep.subr.mxu0 0.0
      %3020 = vmatpush1.msra.mxu0 0.0
      %3021 = vmatprep.subr.mxu0 0.0
      %3022 = vmatpush1.msra.mxu0 0.0
      %3023 = vmatprep.subr.mxu0 0.0
      %3024 = vmatpush1.msra.mxu0 0.0
      %3025 = vmatprep.subr.mxu0 0.0
      %3026 = vmatpush1.msra.mxu0 0.0
      %3027 = vmatprep.subr.mxu0 0.0
      %3028 = vmatpush1.msra.mxu0 0.0
      %3029 = vmatprep.subr.mxu0 0.0
      %3030 = vmatpush1.msra.mxu0 0.0
      %3031 = vmatprep.subr.mxu0 0.0
      %3032 = vmatpush1.msra.mxu0 0.0
      %3033 = vmatprep.subr.mxu0 0.0
      %3034 = vmatpush1.msra.mxu0 0.0
      %3035 = vmatprep.subr.mxu0 0.0
      %3036 = vmatpush1.msra.mxu0 0.0
      %3037 = vmatprep.subr.mxu0 0.0
      %3038 = vmatpush1.msra.mxu0 0.0
      %3039 = vmatprep.subr.mxu0 0.0
      %3040 = vmatpush1.msra.mxu0 0.0
      %3041 = vmatprep.subr.mxu0 0.0
      %3042 = vmatpush1.msra.mxu0 0.0
      %3043 = vmatprep.subr.mxu0 0.0
      %3044 = vmatpush1.msra.mxu0 0.0
      %3045 = vmatprep.subr.mxu0 0.0
      %3046 = vmatpush1.msra.mxu0 0.0
      %3047 = vmatprep.subr.mxu0 0.0
      %3048 = vmatpush1.msra.mxu0 0.0
      %3049 = vmatprep.subr.mxu0 0.0
      %3050 = vmatpush1.msra.mxu0 0.0
      %3051 = vmatprep.subr.mxu0 0.0
      %3052 = vmatpush1.msra.mxu0 0.0
      %3053 = vmatprep.subr.mxu0 0.0
      %3054 = vmatpush1.msra.mxu0 0.0
      %3055 = vmatprep.subr.mxu0 0.0
      %3056 = vmatpush1.msra.mxu0 0.0
      %3057 = vmatprep.subr.mxu0 0.0
      %3058 = vmatpush1.msra.mxu0 0.0
      %3059 = vmatprep.subr.mxu0 0.0
      %3060 = vmatpush1.msra.mxu0 0.0
      %3061 = vmatprep.subr.mxu0 0.0
      %3062 = vmatpush1.msra.mxu0 0.0
      %3063 = vmatprep.mubr.f32.mxu0 0.0
      %3064 = vmatmul.mubr.f32.gmra.mrb[0].mxu0 %v2901
      %v3065 = vpop.f32.mrb[0].mxu0
      %v3066 = vadd.f32 0.0, %v3065
      %v3067 = vpop.f32.mrb[0].mxu0
      %3068 = vmatprep.mubr.f32.mxu0 0.0
      %3069 = vmatmul.mubr.f32.gmra.mrb[0].mxu0 %v2904
      %v3070 = vpop.f32.mrb[0].mxu0
      %v3071 = vadd.f32 0.0, %v3070
      %v3072 = vpop.f32.mrb[0].mxu0
      %3073 = vmatprep.mubr.f32.mxu0 0.0
      %3074 = vmatmul.mubr.f32.gmra.mrb[0].mxu0 %v2907
      %v3075 = vpop.f32.mrb[0].mxu0
      %v3076 = vadd.f32 0.0, %v3075
      %v3077 = vpop.f32.mrb[0].mxu0
      %3078 = vmatprep.mubr.f32.mxu0 0.0
      %3079 = vmatmul.mubr.f32.gmra.mrb[0].mxu0 %v2910
      %v3080 = vpop.f32.mrb[0].mxu0
      %v3081 = vadd.f32 0.0, %v3080
      %v3082 = vpop.f32.mrb[0].mxu0
      %3083 = vmatprep.mubr.f32.mxu0 0.0
      %3084 = vmatmul.mubr.f32.gmra.mrb[0].mxu0 %v2913
      %v3085 = vpop.f32.mrb[0].mxu0
      %v3086 = vadd.f32 0.0, %v3085
      %v3087 = vpop.f32.mrb[0].mxu0
      %3088 = vmatprep.mubr.f32.mxu0 0.0
      %3089 = vmatmul.mubr.f32.gmra.mrb[0].mxu0 %v2916
      %v3090 = vpop.f32.mrb[0].mxu0
      %v3091 = vadd.f32 0.0, %v3090
      %v3092 = vpop.f32.mrb[0].mxu0
      %3093 = vmatprep.mubr.f32.mxu0 0.0
      %3094 = vmatmul.mubr.f32.gmra.mrb[0].mxu0 %v2919
      %v3095 = vpop.f32.mrb[0].mxu0
      %v3096 = vadd.f32 0.0, %v3095
      %v3097 = vpop.f32.mrb[0].mxu0
      %3098 = vmatprep.mubr.f32.mxu0 0.0
      %3099 = vmatmul.mubr.f32.gmra.mrb[0].mxu0 %v2922
      %v3100 = vpop.f32.mrb[0].mxu0
      %v3101 = vadd.f32 0.0, %v3100
      %v3102 = vpop.f32.mrb[0].mxu0
      %3103 = vmatprep.mubr.f32.mxu0 0.0
      %3104 = vmatmul.mubr.f32.gmra.mrb[0].mxu0 %v2925
      %v3105 = vpop.f32.mrb[0].mxu0
      %v3106 = vadd.f32 0.0, %v3105
      %v3107 = vpop.f32.mrb[0].mxu0
      %3108 = vmatprep.mubr.f32.mxu0 0.0
      %3109 = vmatmul.mubr.f32.gmra.mrb[0].mxu0 %v2928
      %v3110 = vpop.f32.mrb[0].mxu0
      %v3111 = vadd.f32 0.0, %v3110
      %v3112 = vpop.f32.mrb[0].mxu0
      %3113 = vmatprep.mubr.f32.mxu0 0.0
      %3114 = vmatmul.mubr.f32.gmra.mrb[0].mxu0 %v2931
      %v3115 = vpop.f32.mrb[0].mxu0
      %v3116 = vadd.f32 0.0, %v3115
      %v3117 = vpop.f32.mrb[0].mxu0
      %3118 = vmatprep.mubr.f32.mxu0 0.0
      %3119 = vmatmul.mubr.f32.gmra.mrb[0].mxu0 %v2934
      %v3120 = vpop.f32.mrb[0].mxu0
      %v3121 = vadd.f32 0.0, %v3120
      %v3122 = vpop.f32.mrb[0].mxu0
      %3123 = vmatprep.mubr.f32.mxu0 0.0
      %3124 = vmatmul.mubr.f32.gmra.mrb[0].mxu0 %v2937
      %v3125 = vpop.f32.mrb[0].mxu0
      %v3126 = vadd.f32 0.0, %v3125
      %v3127 = vpop.f32.mrb[0].mxu0
      %3128 = vmatprep.mubr.f32.mxu0 0.0
      %3129 = vmatmul.mubr.f32.gmra.mrb[0].mxu0 %v2940
      %v3130 = vpop.f32.mrb[0].mxu0
      %v3131 = vadd.f32 0.0, %v3130
      %v3132 = vpop.f32.mrb[0].mxu0
      %3133 = vmatprep.mubr.f32.mxu0 0.0
      %3134 = vmatmul.mubr.f32.gmra.mrb[0].mxu0 %v2943
      %v3135 = vpop.f32.mrb[0].mxu0
      %v3136 = vadd.f32 0.0, %v3135
      %v3137 = vpop.f32.mrb[0].mxu0
      %3138 = vmatprep.mubr.f32.mxu0 0.0
      %3139 = vmatmul.mubr.f32.gmra.mrb[0].mxu0 %v2946
      %v3140 = vpop.f32.mrb[0].mxu0
      %v3141 = vadd.f32 0.0, %v3140
      %v3142 = vpop.f32.mrb[0].mxu0
      %3143 = vmatprep.mubr.f32.mxu0 0.0
      %3144 = vmatmul.mubr.f32.gmra.mrb[0].mxu0 %v2949
      %v3145 = vpop.f32.mrb[0].mxu0
      %v3146 = vadd.f32 0.0, %v3145
      %v3147 = vpop.f32.mrb[0].mxu0
      %3148 = vmatprep.mubr.f32.mxu0 0.0
      %3149 = vmatmul.mubr.f32.gmra.mrb[0].mxu0 %v2952
      %v3150 = vpop.f32.mrb[0].mxu0
      %v3151 = vadd.f32 0.0, %v3150
      %v3152 = vpop.f32.mrb[0].mxu0
      %3153 = vmatprep.mubr.f32.mxu0 0.0
      %3154 = vmatmul.mubr.f32.gmra.mrb[0].mxu0 %v2955
      %v3155 = vpop.f32.mrb[0].mxu0
      %v3156 = vadd.f32 0.0, %v3155
      %v3157 = vpop.f32.mrb[0].mxu0
      %3158 = vmatprep.mubr.f32.mxu0 0.0
      %3159 = vmatmul.mubr.f32.gmra.mrb[0].mxu0 %v2958
      %v3160 = vpop.f32.mrb[0].mxu0
      %v3161 = vadd.f32 0.0, %v3160
      %v3162 = vpop.f32.mrb[0].mxu0
      %3163 = vmatprep.mubr.f32.mxu0 0.0
      %3164 = vmatmul.mubr.f32.gmra.mrb[0].mxu0 %v2961
      %v3165 = vpop.f32.mrb[0].mxu0
      %v3166 = vadd.f32 0.0, %v3165
      %v3167 = vpop.f32.mrb[0].mxu0
      %3168 = vmatprep.mubr.f32.mxu0 0.0
      %3169 = vmatmul.mubr.f32.gmra.mrb[0].mxu0 %v2964
      %v3170 = vpop.f32.mrb[0].mxu0
      %v3171 = vadd.f32 0.0, %v3170
      %v3172 = vpop.f32.mrb[0].mxu0
      %3173 = vmatprep.mubr.f32.mxu0 0.0
      %3174 = vmatmul.mubr.f32.gmra.mrb[0].mxu0 %v2967
      %v3175 = vpop.f32.mrb[0].mxu0
      %v3176 = vadd.f32 0.0, %v3175
      %v3177 = vpop.f32.mrb[0].mxu0
      %3178 = vmatprep.mubr.f32.mxu0 0.0
      %3179 = vmatmul.mubr.f32.gmra.mrb[0].mxu0 %v2970
      %v3180 = vpop.f32.mrb[0].mxu0
      %v3181 = vadd.f32 0.0, %v3180
      %v3182 = vpop.f32.mrb[0].mxu0
      %3183 = vmatprep.mubr.f32.mxu0 0.0
      %3184 = vmatmul.mubr.f32.gmra.mrb[0].mxu0 %v2973
      %v3185 = vpop.f32.mrb[0].mxu0
      %v3186 = vadd.f32 0.0, %v3185
      %v3187 = vpop.f32.mrb[0].mxu0
      %3188 = vmatprep.mubr.f32.mxu0 0.0
      %3189 = vmatmul.mubr.f32.gmra.mrb[0].mxu0 %v2976
      %v3190 = vpop.f32.mrb[0].mxu0
      %v3191 = vadd.f32 0.0, %v3190
      %v3192 = vpop.f32.mrb[0].mxu0
      %3193 = vmatprep.mubr.f32.mxu0 0.0
      %3194 = vmatmul.mubr.f32.gmra.mrb[0].mxu0 %v2979
      %v3195 = vpop.f32.mrb[0].mxu0
      %v3196 = vadd.f32 0.0, %v3195
      %v3197 = vpop.f32.mrb[0].mxu0
      %3198 = vmatprep.mubr.f32.mxu0 0.0
      %3199 = vmatmul.mubr.f32.gmra.mrb[0].mxu0 %v2982
      %v3200 = vpop.f32.mrb[0].mxu0
      %v3201 = vadd.f32 0.0, %v3200
      %v3202 = vpop.f32.mrb[0].mxu0
      %3203 = vmatprep.mubr.f32.mxu0 0.0
      %3204 = vmatmul.mubr.f32.gmra.mrb[0].mxu0 %v2985
      %v3205 = vpop.f32.mrb[0].mxu0
      %v3206 = vadd.f32 0.0, %v3205
      %v3207 = vpop.f32.mrb[0].mxu0
      %3208 = vmatprep.mubr.f32.mxu0 0.0
      %3209 = vmatmul.mubr.f32.gmra.mrb[0].mxu0 %v2988
      %v3210 = vpop.f32.mrb[0].mxu0
      %v3211 = vadd.f32 0.0, %v3210
      %v3212 = vpop.f32.mrb[0].mxu0
      %3213 = vmatprep.mubr.f32.mxu0 0.0
      %3214 = vmatmul.mubr.f32.gmra.mrb[0].mxu0 %v2991
      %v3215 = vpop.f32.mrb[0].mxu0
      %v3216 = vadd.f32 0.0, %v3215
      %v3217 = vpop.f32.mrb[0].mxu0
      %3218 = vmatprep.mubr.f32.mxu0 0.0
      %3219 = vmatmul.mubr.f32.gmra.mrb[0].mxu0 %v2994
      %v3220 = vpop.f32.mrb[0].mxu0
      %v3221 = vadd.f32 0.0, %v3220
      %v3222 = vpop.f32.mrb[0].mxu0
      %3223 = vdwg.mxu0
      %v3224 = vadd.f32 %v2609, %v3066
      %v3225 = vadd.f32 %v2610, %v3071
      %v3226 = vadd.f32 %v2611, %v3076
      %v3227 = vadd.f32 %v2612, %v3081
      %v3228 = vadd.f32 %v2613, %v3086
      %v3229 = vadd.f32 %v2614, %v3091
      %v3230 = vadd.f32 %v2615, %v3096
      %v3231 = vadd.f32 %v2616, %v3101
      %v3232 = vadd.f32 %v2617, %v3106
      %v3233 = vadd.f32 %v2618, %v3111
      %v3234 = vadd.f32 %v2619, %v3116
      %v3235 = vadd.f32 %v2620, %v3121
      %v3236 = vadd.f32 %v2621, %v3126
      %v3237 = vadd.f32 %v2622, %v3131
      %v3238 = vadd.f32 %v2623, %v3136
      %v3239 = vadd.f32 %v2624, %v3141
      %v3240 = vadd.f32 %v2625, %v3146
      %v3241 = vadd.f32 %v2626, %v3151
      %v3242 = vadd.f32 %v2627, %v3156
      %v3243 = vadd.f32 %v2628, %v3161
      %v3244 = vadd.f32 %v2629, %v3166
      %v3245 = vadd.f32 %v2630, %v3171
      %v3246 = vadd.f32 %v2631, %v3176
      %v3247 = vadd.f32 %v2632, %v3181
      %v3248 = vadd.f32 %v2633, %v3186
      %v3249 = vadd.f32 %v2634, %v3191
      %v3250 = vadd.f32 %v2635, %v3196
      %v3251 = vadd.f32 %v2636, %v3201
      %v3252 = vadd.f32 %v2637, %v3206
      %v3253 = vadd.f32 %v2638, %v3211
      %v3254 = vadd.f32 %v2639, %v3216
      %v3255 = vadd.f32 %v2640, %v3221
      %s3256 = scalar_lea.vmem %s7, 64
      %v3257 = vld [vmem:[%s3256] sm:$0xff]
      %v3258 = vld [vmem:[%s3256 + $0x8] sm:$0xff]
      %v3259 = vld [vmem:[%s3256 + $0x10] sm:$0xff]
      %v3260 = vld [vmem:[%s3256 + $0x18] sm:$0xff]
      %3261 = vmatprep.subr.mxu0 0.0
      %3262 = vmatpush1.msra.mxu0 %v3257
      %3263 = vmatprep.subr.mxu0 0.0
      %3264 = vmatpush1.msra.mxu0 %v3258
      %3265 = vmatprep.subr.mxu0 0.0
      %3266 = vmatpush1.msra.mxu0 %v3259
      %3267 = vmatprep.subr.mxu0 0.0
      %3268 = vmatpush1.msra.mxu0 %v3260
      %3269 = vmatprep.subr.mxu0 0.0
      %3270 = vmatpush1.msra.mxu0 0.0
      %3271 = vmatprep.subr.mxu0 0.0
      %3272 = vmatpush1.msra.mxu0 0.0
      %3273 = vmatprep.subr.mxu0 0.0
      %3274 = vmatpush1.msra.mxu0 0.0
      %3275 = vmatprep.subr.mxu0 0.0
      %3276 = vmatpush1.msra.mxu0 0.0
      %3277 = vmatprep.subr.mxu0 0.0
      %3278 = vmatpush1.msra.mxu0 0.0
      %3279 = vmatprep.subr.mxu0 0.0
      %3280 = vmatpush1.msra.mxu0 0.0
      %3281 = vmatprep.subr.mxu0 0.0
      %3282 = vmatpush1.msra.mxu0 0.0
      %3283 = vmatprep.subr.mxu0 0.0
      %3284 = vmatpush1.msra.mxu0 0.0
      %3285 = vmatprep.subr.mxu0 0.0
      %3286 = vmatpush1.msra.mxu0 0.0
      %3287 = vmatprep.subr.mxu0 0.0
      %3288 = vmatpush1.msra.mxu0 0.0
      %3289 = vmatprep.subr.mxu0 0.0
      %3290 = vmatpush1.msra.mxu0 0.0
      %3291 = vmatprep.subr.mxu0 0.0
      %3292 = vmatpush1.msra.mxu0 0.0
      %3293 = vmatprep.subr.mxu0 0.0
      %3294 = vmatpush1.msra.mxu0 0.0
      %3295 = vmatprep.subr.mxu0 0.0
      %3296 = vmatpush1.msra.mxu0 0.0
      %3297 = vmatprep.subr.mxu0 0.0
      %3298 = vmatpush1.msra.mxu0 0.0
      %3299 = vmatprep.subr.mxu0 0.0
      %3300 = vmatpush1.msra.mxu0 0.0
      %3301 = vmatprep.subr.mxu0 0.0
      %3302 = vmatpush1.msra.mxu0 0.0
      %3303 = vmatprep.subr.mxu0 0.0
      %3304 = vmatpush1.msra.mxu0 0.0
      %3305 = vmatprep.subr.mxu0 0.0
      %3306 = vmatpush1.msra.mxu0 0.0
      %3307 = vmatprep.subr.mxu0 0.0
      %3308 = vmatpush1.msra.mxu0 0.0
      %3309 = vmatprep.subr.mxu0 0.0
      %3310 = vmatpush1.msra.mxu0 0.0
      %3311 = vmatprep.subr.mxu0 0.0
      %3312 = vmatpush1.msra.mxu0 0.0
      %3313 = vmatprep.subr.mxu0 0.0
      %3314 = vmatpush1.msra.mxu0 0.0
      %3315 = vmatprep.subr.mxu0 0.0
      %3316 = vmatpush1.msra.mxu0 0.0
      %3317 = vmatprep.subr.mxu0 0.0
      %3318 = vmatpush1.msra.mxu0 0.0
      %3319 = vmatprep.subr.mxu0 0.0
      %3320 = vmatpush1.msra.mxu0 0.0
      %3321 = vmatprep.subr.mxu0 0.0
      %3322 = vmatpush1.msra.mxu0 0.0
      %3323 = vmatprep.subr.mxu0 0.0
      %3324 = vmatpush1.msra.mxu0 0.0
      %3325 = vmatprep.mubr.f32.mxu0 0.0
      %3326 = vmatmul.mubr.f32.gmra.mrb[0].mxu0 %v962
      %v3327 = vpop.f32.mrb[0].mxu0
      %v3328 = vadd.f32 0.0, %v3327
      %v3329 = vpop.f32.mrb[0].mxu0
      %3330 = vmatprep.mubr.f32.mxu0 0.0
      %3331 = vmatmul.mubr.f32.gmra.mrb[0].mxu0 %v965
      %v3332 = vpop.f32.mrb[0].mxu0
      %v3333 = vadd.f32 0.0, %v3332
      %v3334 = vpop.f32.mrb[0].mxu0
      %3335 = vmatprep.mubr.f32.mxu0 0.0
      %3336 = vmatmul.mubr.f32.gmra.mrb[0].mxu0 %v968
      %v3337 = vpop.f32.mrb[0].mxu0
      %v3338 = vadd.f32 0.0, %v3337
      %v3339 = vpop.f32.mrb[0].mxu0
      %3340 = vmatprep.mubr.f32.mxu0 0.0
      %3341 = vmatmul.mubr.f32.gmra.mrb[0].mxu0 %v971
      %v3342 = vpop.f32.mrb[0].mxu0
      %v3343 = vadd.f32 0.0, %v3342
      %v3344 = vpop.f32.mrb[0].mxu0
      %3345 = vmatprep.mubr.f32.mxu0 0.0
      %3346 = vmatmul.mubr.f32.gmra.mrb[0].mxu0 %v974
      %v3347 = vpop.f32.mrb[0].mxu0
      %v3348 = vadd.f32 0.0, %v3347
      %v3349 = vpop.f32.mrb[0].mxu0
      %3350 = vmatprep.mubr.f32.mxu0 0.0
      %3351 = vmatmul.mubr.f32.gmra.mrb[0].mxu0 %v977
      %v3352 = vpop.f32.mrb[0].mxu0
      %v3353 = vadd.f32 0.0, %v3352
      %v3354 = vpop.f32.mrb[0].mxu0
      %3355 = vmatprep.mubr.f32.mxu0 0.0
      %3356 = vmatmul.mubr.f32.gmra.mrb[0].mxu0 %v980
      %v3357 = vpop.f32.mrb[0].mxu0
      %v3358 = vadd.f32 0.0, %v3357
      %v3359 = vpop.f32.mrb[0].mxu0
      %3360 = vdwg.mxu0
      %s3361 = scalar_lea.vmem %s5, 512
      %v3362 = vld [vmem:[%s3361] sm:$0xff]
      %v3363 = vld [vmem:[%s3361 + $0x8] sm:$0xff]
      %v3364 = vld [vmem:[%s3361 + $0x10] sm:$0xff]
      %v3365 = vld [vmem:[%s3361 + $0x18] sm:$0xff]
      %v3366 = vld [vmem:[%s3361 + $0x20] sm:$0xff]
      %v3367 = vld [vmem:[%s3361 + $0x28] sm:$0xff]
      %v3368 = vld [vmem:[%s3361 + $0x30] sm:$0xff]
      %v3369 = vld [vmem:[%s3361 + $0x38] sm:$0xff]
      %v3370 = vld [vmem:[%s3361 + $0x40] sm:$0xff]
      %v3371 = vld [vmem:[%s3361 + $0x48] sm:$0xff]
      %v3372 = vld [vmem:[%s3361 + $0x50] sm:$0xff]
      %v3373 = vld [vmem:[%s3361 + $0x58] sm:$0xff]
      %v3374 = vld [vmem:[%s3361 + $0x60] sm:$0xff]
      %v3375 = vld [vmem:[%s3361 + $0x68] sm:$0xff]
      %v3376 = vld [vmem:[%s3361 + $0x70] sm:$0xff]
      %v3377 = vld [vmem:[%s3361 + $0x78] sm:$0xff]
      %v3378 = vld [vmem:[%s3361 + $0x80] sm:$0xff]
      %v3379 = vld [vmem:[%s3361 + $0x88] sm:$0xff]
      %v3380 = vld [vmem:[%s3361 + $0x90] sm:$0xff]
      %v3381 = vld [vmem:[%s3361 + $0x98] sm:$0xff]
      %v3382 = vld [vmem:[%s3361 + $0xa0] sm:$0xff]
      %v3383 = vld [vmem:[%s3361 + $0xa8] sm:$0xff]
      %v3384 = vld [vmem:[%s3361 + $0xb0] sm:$0xff]
      %v3385 = vld [vmem:[%s3361 + $0xb8] sm:$0xff]
      %v3386 = vld [vmem:[%s3361 + $0xc0] sm:$0xff]
      %v3387 = vld [vmem:[%s3361 + $0xc8] sm:$0xff]
      %v3388 = vld [vmem:[%s3361 + $0xd0] sm:$0xff]
      %v3389 = vld [vmem:[%s3361 + $0xd8] sm:$0xff]
      %v3390 = vld [vmem:[%s3361 + $0xe0] sm:$0xff]
      %v3391 = vld [vmem:[%s3361 + $0xe8] sm:$0xff]
      %v3392 = vld [vmem:[%s3361 + $0xf0] sm:$0xff]
      %v3393 = vld [vmem:[%s3361 + $0xf8] sm:$0xff]
      %v3395 = vsel %vm1114, %v3362, 0
      %v3398 = vsel %vm1114, %v3363, 0
      %v3401 = vsel %vm1114, %v3364, 0
      %v3404 = vsel %vm1114, %v3365, 0
      %v3407 = vsel %vm1114, %v3366, 0
      %v3410 = vsel %vm1114, %v3367, 0
      %v3413 = vsel %vm1114, %v3368, 0
      %v3416 = vsel %vm1114, %v3369, 0
      %v3419 = vsel %vm1114, %v3370, 0
      %v3422 = vsel %vm1114, %v3371, 0
      %v3425 = vsel %vm1114, %v3372, 0
      %v3428 = vsel %vm1114, %v3373, 0
      %v3431 = vsel %vm1114, %v3374, 0
      %v3434 = vsel %vm1114, %v3375, 0
      %v3437 = vsel %vm1114, %v3376, 0
      %v3440 = vsel %vm1114, %v3377, 0
      %v3443 = vsel %vm1114, %v3378, 0
      %v3446 = vsel %vm1114, %v3379, 0
      %v3449 = vsel %vm1114, %v3380, 0
      %v3452 = vsel %vm1114, %v3381, 0
      %v3455 = vsel %vm1114, %v3382, 0
      %v3458 = vsel %vm1114, %v3383, 0
      %v3461 = vsel %vm1114, %v3384, 0
      %v3464 = vsel %vm1114, %v3385, 0
      %v3467 = vsel %vm1114, %v3386, 0
      %v3470 = vsel %vm1114, %v3387, 0
      %v3473 = vsel %vm1114, %v3388, 0
      %v3476 = vsel %vm1114, %v3389, 0
      %v3479 = vsel %vm1114, %v3390, 0
      %v3482 = vsel %vm1114, %v3391, 0
      %v3485 = vsel %vm1114, %v3392, 0
      %v3488 = vsel %vm1114, %v3393, 0
      %3490 = vmatprep.subr.mxu0 0.0
      %3491 = vmatpush1.msra.mxu0 %v3328
      %3492 = vmatprep.subr.mxu0 0.0
      %3493 = vmatpush1.msra.mxu0 %v3333
      %3494 = vmatprep.subr.mxu0 0.0
      %3495 = vmatpush1.msra.mxu0 %v3338
      %3496 = vmatprep.subr.mxu0 0.0
      %3497 = vmatpush1.msra.mxu0 %v3343
      %3498 = vmatprep.subr.mxu0 0.0
      %3499 = vmatpush1.msra.mxu0 %v3348
      %3500 = vmatprep.subr.mxu0 0.0
      %3501 = vmatpush1.msra.mxu0 %v3353
      %3502 = vmatprep.subr.mxu0 0.0
      %3503 = vmatpush1.msra.mxu0 %v3358
      %3504 = vmatprep.subr.mxu0 0.0
      %3505 = vmatpush1.msra.mxu0 0.0
      %3506 = vmatprep.subr.mxu0 0.0
      %3507 = vmatpush1.msra.mxu0 0.0
      %3508 = vmatprep.subr.mxu0 0.0
      %3509 = vmatpush1.msra.mxu0 0.0
      %3510 = vmatprep.subr.mxu0 0.0
      %3511 = vmatpush1.msra.mxu0 0.0
      %3512 = vmatprep.subr.mxu0 0.0
      %3513 = vmatpush1.msra.mxu0 0.0
      %3514 = vmatprep.subr.mxu0 0.0
      %3515 = vmatpush1.msra.mxu0 0.0
      %3516 = vmatprep.subr.mxu0 0.0
      %3517 = vmatpush1.msra.mxu0 0.0
      %3518 = vmatprep.subr.mxu0 0.0
      %3519 = vmatpush1.msra.mxu0 0.0
      %3520 = vmatprep.subr.mxu0 0.0
      %3521 = vmatpush1.msra.mxu0 0.0
      %3522 = vmatprep.subr.mxu0 0.0
      %3523 = vmatpush1.msra.mxu0 0.0
      %3524 = vmatprep.subr.mxu0 0.0
      %3525 = vmatpush1.msra.mxu0 0.0
      %3526 = vmatprep.subr.mxu0 0.0
      %3527 = vmatpush1.msra.mxu0 0.0
      %3528 = vmatprep.subr.mxu0 0.0
      %3529 = vmatpush1.msra.mxu0 0.0
      %3530 = vmatprep.subr.mxu0 0.0
      %3531 = vmatpush1.msra.mxu0 0.0
      %3532 = vmatprep.subr.mxu0 0.0
      %3533 = vmatpush1.msra.mxu0 0.0
      %3534 = vmatprep.subr.mxu0 0.0
      %3535 = vmatpush1.msra.mxu0 0.0
      %3536 = vmatprep.subr.mxu0 0.0
      %3537 = vmatpush1.msra.mxu0 0.0
      %3538 = vmatprep.subr.mxu0 0.0
      %3539 = vmatpush1.msra.mxu0 0.0
      %3540 = vmatprep.subr.mxu0 0.0
      %3541 = vmatpush1.msra.mxu0 0.0
      %3542 = vmatprep.subr.mxu0 0.0
      %3543 = vmatpush1.msra.mxu0 0.0
      %3544 = vmatprep.subr.mxu0 0.0
      %3545 = vmatpush1.msra.mxu0 0.0
      %3546 = vmatprep.subr.mxu0 0.0
      %3547 = vmatpush1.msra.mxu0 0.0
      %3548 = vmatprep.subr.mxu0 0.0
      %3549 = vmatpush1.msra.mxu0 0.0
      %3550 = vmatprep.subr.mxu0 0.0
      %3551 = vmatpush1.msra.mxu0 0.0
      %3552 = vmatprep.subr.mxu0 0.0
      %3553 = vmatpush1.msra.mxu0 0.0
      %3554 = vmatprep.mubr.f32.mxu0 0.0
      %3555 = vmatmul.mubr.f32.gmra.mrb[0].mxu0 %v3395
      %v3556 = vpop.f32.mrb[0].mxu0
      %v3557 = vadd.f32 0.0, %v3556
      %v3558 = vpop.f32.mrb[0].mxu0
      %3559 = vmatprep.mubr.f32.mxu0 0.0
      %3560 = vmatmul.mubr.f32.gmra.mrb[0].mxu0 %v3398
      %v3561 = vpop.f32.mrb[0].mxu0
      %v3562 = vadd.f32 0.0, %v3561
      %v3563 = vpop.f32.mrb[0].mxu0
      %3564 = vmatprep.mubr.f32.mxu0 0.0
      %3565 = vmatmul.mubr.f32.gmra.mrb[0].mxu0 %v3401
      %v3566 = vpop.f32.mrb[0].mxu0
      %v3567 = vadd.f32 0.0, %v3566
      %v3568 = vpop.f32.mrb[0].mxu0
      %3569 = vmatprep.mubr.f32.mxu0 0.0
      %3570 = vmatmul.mubr.f32.gmra.mrb[0].mxu0 %v3404
      %v3571 = vpop.f32.mrb[0].mxu0
      %v3572 = vadd.f32 0.0, %v3571
      %v3573 = vpop.f32.mrb[0].mxu0
      %3574 = vmatprep.mubr.f32.mxu0 0.0
      %3575 = vmatmul.mubr.f32.gmra.mrb[0].mxu0 %v3407
      %v3576 = vpop.f32.mrb[0].mxu0
      %v3577 = vadd.f32 0.0, %v3576
      %v3578 = vpop.f32.mrb[0].mxu0
      %3579 = vmatprep.mubr.f32.mxu0 0.0
      %3580 = vmatmul.mubr.f32.gmra.mrb[0].mxu0 %v3410
      %v3581 = vpop.f32.mrb[0].mxu0
      %v3582 = vadd.f32 0.0, %v3581
      %v3583 = vpop.f32.mrb[0].mxu0
      %3584 = vmatprep.mubr.f32.mxu0 0.0
      %3585 = vmatmul.mubr.f32.gmra.mrb[0].mxu0 %v3413
      %v3586 = vpop.f32.mrb[0].mxu0
      %v3587 = vadd.f32 0.0, %v3586
      %v3588 = vpop.f32.mrb[0].mxu0
      %3589 = vmatprep.mubr.f32.mxu0 0.0
      %3590 = vmatmul.mubr.f32.gmra.mrb[0].mxu0 %v3416
      %v3591 = vpop.f32.mrb[0].mxu0
      %v3592 = vadd.f32 0.0, %v3591
      %v3593 = vpop.f32.mrb[0].mxu0
      %3594 = vmatprep.mubr.f32.mxu0 0.0
      %3595 = vmatmul.mubr.f32.gmra.mrb[0].mxu0 %v3419
      %v3596 = vpop.f32.mrb[0].mxu0
      %v3597 = vadd.f32 0.0, %v3596
      %v3598 = vpop.f32.mrb[0].mxu0
      %3599 = vmatprep.mubr.f32.mxu0 0.0
      %3600 = vmatmul.mubr.f32.gmra.mrb[0].mxu0 %v3422
      %v3601 = vpop.f32.mrb[0].mxu0
      %v3602 = vadd.f32 0.0, %v3601
      %v3603 = vpop.f32.mrb[0].mxu0
      %3604 = vmatprep.mubr.f32.mxu0 0.0
      %3605 = vmatmul.mubr.f32.gmra.mrb[0].mxu0 %v3425
      %v3606 = vpop.f32.mrb[0].mxu0
      %v3607 = vadd.f32 0.0, %v3606
      %v3608 = vpop.f32.mrb[0].mxu0
      %3609 = vmatprep.mubr.f32.mxu0 0.0
      %3610 = vmatmul.mubr.f32.gmra.mrb[0].mxu0 %v3428
      %v3611 = vpop.f32.mrb[0].mxu0
      %v3612 = vadd.f32 0.0, %v3611
      %v3613 = vpop.f32.mrb[0].mxu0
      %3614 = vmatprep.mubr.f32.mxu0 0.0
      %3615 = vmatmul.mubr.f32.gmra.mrb[0].mxu0 %v3431
      %v3616 = vpop.f32.mrb[0].mxu0
      %v3617 = vadd.f32 0.0, %v3616
      %v3618 = vpop.f32.mrb[0].mxu0
      %3619 = vmatprep.mubr.f32.mxu0 0.0
      %3620 = vmatmul.mubr.f32.gmra.mrb[0].mxu0 %v3434
      %v3621 = vpop.f32.mrb[0].mxu0
      %v3622 = vadd.f32 0.0, %v3621
      %v3623 = vpop.f32.mrb[0].mxu0
      %3624 = vmatprep.mubr.f32.mxu0 0.0
      %3625 = vmatmul.mubr.f32.gmra.mrb[0].mxu0 %v3437
      %v3626 = vpop.f32.mrb[0].mxu0
      %v3627 = vadd.f32 0.0, %v3626
      %v3628 = vpop.f32.mrb[0].mxu0
      %3629 = vmatprep.mubr.f32.mxu0 0.0
      %3630 = vmatmul.mubr.f32.gmra.mrb[0].mxu0 %v3440
      %v3631 = vpop.f32.mrb[0].mxu0
      %v3632 = vadd.f32 0.0, %v3631
      %v3633 = vpop.f32.mrb[0].mxu0
      %3634 = vmatprep.mubr.f32.mxu0 0.0
      %3635 = vmatmul.mubr.f32.gmra.mrb[0].mxu0 %v3443
      %v3636 = vpop.f32.mrb[0].mxu0
      %v3637 = vadd.f32 0.0, %v3636
      %v3638 = vpop.f32.mrb[0].mxu0
      %3639 = vmatprep.mubr.f32.mxu0 0.0
      %3640 = vmatmul.mubr.f32.gmra.mrb[0].mxu0 %v3446
      %v3641 = vpop.f32.mrb[0].mxu0
      %v3642 = vadd.f32 0.0, %v3641
      %v3643 = vpop.f32.mrb[0].mxu0
      %3644 = vmatprep.mubr.f32.mxu0 0.0
      %3645 = vmatmul.mubr.f32.gmra.mrb[0].mxu0 %v3449
      %v3646 = vpop.f32.mrb[0].mxu0
      %v3647 = vadd.f32 0.0, %v3646
      %v3648 = vpop.f32.mrb[0].mxu0
      %3649 = vmatprep.mubr.f32.mxu0 0.0
      %3650 = vmatmul.mubr.f32.gmra.mrb[0].mxu0 %v3452
      %v3651 = vpop.f32.mrb[0].mxu0
      %v3652 = vadd.f32 0.0, %v3651
      %v3653 = vpop.f32.mrb[0].mxu0
      %3654 = vmatprep.mubr.f32.mxu0 0.0
      %3655 = vmatmul.mubr.f32.gmra.mrb[0].mxu0 %v3455
      %v3656 = vpop.f32.mrb[0].mxu0
      %v3657 = vadd.f32 0.0, %v3656
      %v3658 = vpop.f32.mrb[0].mxu0
      %3659 = vmatprep.mubr.f32.mxu0 0.0
      %3660 = vmatmul.mubr.f32.gmra.mrb[0].mxu0 %v3458
      %v3661 = vpop.f32.mrb[0].mxu0
      %v3662 = vadd.f32 0.0, %v3661
      %v3663 = vpop.f32.mrb[0].mxu0
      %3664 = vmatprep.mubr.f32.mxu0 0.0
      %3665 = vmatmul.mubr.f32.gmra.mrb[0].mxu0 %v3461
      %v3666 = vpop.f32.mrb[0].mxu0
      %v3667 = vadd.f32 0.0, %v3666
      %v3668 = vpop.f32.mrb[0].mxu0
      %3669 = vmatprep.mubr.f32.mxu0 0.0
      %3670 = vmatmul.mubr.f32.gmra.mrb[0].mxu0 %v3464
      %v3671 = vpop.f32.mrb[0].mxu0
      %v3672 = vadd.f32 0.0, %v3671
      %v3673 = vpop.f32.mrb[0].mxu0
      %3674 = vmatprep.mubr.f32.mxu0 0.0
      %3675 = vmatmul.mubr.f32.gmra.mrb[0].mxu0 %v3467
      %v3676 = vpop.f32.mrb[0].mxu0
      %v3677 = vadd.f32 0.0, %v3676
      %v3678 = vpop.f32.mrb[0].mxu0
      %3679 = vmatprep.mubr.f32.mxu0 0.0
      %3680 = vmatmul.mubr.f32.gmra.mrb[0].mxu0 %v3470
      %v3681 = vpop.f32.mrb[0].mxu0
      %v3682 = vadd.f32 0.0, %v3681
      %v3683 = vpop.f32.mrb[0].mxu0
      %3684 = vmatprep.mubr.f32.mxu0 0.0
      %3685 = vmatmul.mubr.f32.gmra.mrb[0].mxu0 %v3473
      %v3686 = vpop.f32.mrb[0].mxu0
      %v3687 = vadd.f32 0.0, %v3686
      %v3688 = vpop.f32.mrb[0].mxu0
      %3689 = vmatprep.mubr.f32.mxu0 0.0
      %3690 = vmatmul.mubr.f32.gmra.mrb[0].mxu0 %v3476
      %v3691 = vpop.f32.mrb[0].mxu0
      %v3692 = vadd.f32 0.0, %v3691
      %v3693 = vpop.f32.mrb[0].mxu0
      %3694 = vmatprep.mubr.f32.mxu0 0.0
      %3695 = vmatmul.mubr.f32.gmra.mrb[0].mxu0 %v3479
      %v3696 = vpop.f32.mrb[0].mxu0
      %v3697 = vadd.f32 0.0, %v3696
      %v3698 = vpop.f32.mrb[0].mxu0
      %3699 = vmatprep.mubr.f32.mxu0 0.0
      %3700 = vmatmul.mubr.f32.gmra.mrb[0].mxu0 %v3482
      %v3701 = vpop.f32.mrb[0].mxu0
      %v3702 = vadd.f32 0.0, %v3701
      %v3703 = vpop.f32.mrb[0].mxu0
      %3704 = vmatprep.mubr.f32.mxu0 0.0
      %3705 = vmatmul.mubr.f32.gmra.mrb[0].mxu0 %v3485
      %v3706 = vpop.f32.mrb[0].mxu0
      %v3707 = vadd.f32 0.0, %v3706
      %v3708 = vpop.f32.mrb[0].mxu0
      %3709 = vmatprep.mubr.f32.mxu0 0.0
      %3710 = vmatmul.mubr.f32.gmra.mrb[0].mxu0 %v3488
      %v3711 = vpop.f32.mrb[0].mxu0
      %v3712 = vadd.f32 0.0, %v3711
      %v3713 = vpop.f32.mrb[0].mxu0
      %3714 = vdwg.mxu0
      %v3715 = vadd.f32 %v3224, %v3557
      %v3716 = vadd.f32 %v3225, %v3562
      %v3717 = vadd.f32 %v3226, %v3567
      %v3718 = vadd.f32 %v3227, %v3572
      %v3719 = vadd.f32 %v3228, %v3577
      %v3720 = vadd.f32 %v3229, %v3582
      %v3721 = vadd.f32 %v3230, %v3587
      %v3722 = vadd.f32 %v3231, %v3592
      %v3723 = vadd.f32 %v3232, %v3597
      %v3724 = vadd.f32 %v3233, %v3602
      %v3725 = vadd.f32 %v3234, %v3607
      %v3726 = vadd.f32 %v3235, %v3612
      %v3727 = vadd.f32 %v3236, %v3617
      %v3728 = vadd.f32 %v3237, %v3622
      %v3729 = vadd.f32 %v3238, %v3627
      %v3730 = vadd.f32 %v3239, %v3632
      %v3731 = vadd.f32 %v3240, %v3637
      %v3732 = vadd.f32 %v3241, %v3642
      %v3733 = vadd.f32 %v3242, %v3647
      %v3734 = vadd.f32 %v3243, %v3652
      %v3735 = vadd.f32 %v3244, %v3657
      %v3736 = vadd.f32 %v3245, %v3662
      %v3737 = vadd.f32 %v3246, %v3667
      %v3738 = vadd.f32 %v3247, %v3672
      %v3739 = vadd.f32 %v3248, %v3677
      %v3740 = vadd.f32 %v3249, %v3682
      %v3741 = vadd.f32 %v3250, %v3687
      %v3742 = vadd.f32 %v3251, %v3692
      %v3743 = vadd.f32 %v3252, %v3697
      %v3744 = vadd.f32 %v3253, %v3702
      %v3745 = vadd.f32 %v3254, %v3707
      %v3746 = vadd.f32 %v3255, %v3712
      %v3747 = vld [vmem:[#allocation2 + $0x17] sm:$0xff]
      %v3748 = vld [vmem:[#allocation2 + $0x1f] sm:$0xff]
      %v3749 = vld [vmem:[#allocation2 + $0x27] sm:$0xff]
      %v3750 = vld [vmem:[#allocation2 + $0x2f] sm:$0xff]
      %v3751 = vld [vmem:[#allocation2 + $0x37] sm:$0xff]
      %v3752 = vld [vmem:[#allocation2 + $0x3f] sm:$0xff]
      %v3753 = vld [vmem:[#allocation2 + $0x47] sm:$0xff]
      %v3754 = vld [vmem:[#allocation2 + $0x4f] sm:$0xff]
      %v3755 = vld [vmem:[#allocation2 + $0x57] sm:$0xff]
      %v3756 = vld [vmem:[#allocation2 + $0x5f] sm:$0xff]
      %v3757 = vld [vmem:[#allocation2 + $0x67] sm:$0xff]
      %v3758 = vld [vmem:[#allocation2 + $0x6f] sm:$0xff]
      %v3759 = vld [vmem:[#allocation2 + $0x77] sm:$0xff]
      %v3760 = vld [vmem:[#allocation2 + $0x7f] sm:$0xff]
      %v3761 = vld [vmem:[#allocation2 + $0x87] sm:$0xff]
      %v3762 = vld [vmem:[#allocation2 + $0x8f] sm:$0xff]
      %v3763 = vld [vmem:[#allocation2 + $0x97] sm:$0xff]
      %v3764 = vld [vmem:[#allocation2 + $0x9f] sm:$0xff]
      %v3765 = vld [vmem:[#allocation2 + $0xa7] sm:$0xff]
      %v3766 = vld [vmem:[#allocation2 + $0xaf] sm:$0xff]
      %v3767 = vld [vmem:[#allocation2 + $0xb7] sm:$0xff]
      %v3768 = vld [vmem:[#allocation2 + $0xbf] sm:$0xff]
      %v3769 = vld [vmem:[#allocation2 + $0xc7] sm:$0xff]
      %v3770 = vld [vmem:[#allocation2 + $0xcf] sm:$0xff]
      %v3771 = vld [vmem:[#allocation2 + $0xd7] sm:$0xff]
      %v3772 = vld [vmem:[#allocation2 + $0xdf] sm:$0xff]
      %v3773 = vld [vmem:[#allocation2 + $0xe7] sm:$0xff]
      %v3774 = vld [vmem:[#allocation2 + $0xef] sm:$0xff]
      %v3775 = vld [vmem:[#allocation2 + $0xf7] sm:$0xff]
      %v3776 = vld [vmem:[#allocation2 + $0xff] sm:$0xff]
      %v3777 = vld [vmem:[#allocation2 + $0x107] sm:$0xff]
      %v3778 = vld [vmem:[#allocation2 + $0x10f] sm:$0xff]
      %v3779 = vmul.f32 %v3747, %v766
      %v3780 = vmul.f32 %v3748, %v771
      %v3781 = vmul.f32 %v3749, %v776
      %v3782 = vmul.f32 %v3750, %v781
      %v3783 = vmul.f32 %v3751, %v786
      %v3784 = vmul.f32 %v3752, %v791
      %v3785 = vmul.f32 %v3753, %v796
      %v3786 = vmul.f32 %v3754, %v801
      %v3787 = vmul.f32 %v3755, %v806
      %v3788 = vmul.f32 %v3756, %v811
      %v3789 = vmul.f32 %v3757, %v816
      %v3790 = vmul.f32 %v3758, %v821
      %v3791 = vmul.f32 %v3759, %v826
      %v3792 = vmul.f32 %v3760, %v831
      %v3793 = vmul.f32 %v3761, %v836
      %v3794 = vmul.f32 %v3762, %v841
      %v3795 = vmul.f32 %v3763, %v846
      %v3796 = vmul.f32 %v3764, %v851
      %v3797 = vmul.f32 %v3765, %v856
      %v3798 = vmul.f32 %v3766, %v861
      %v3799 = vmul.f32 %v3767, %v866
      %v3800 = vmul.f32 %v3768, %v871
      %v3801 = vmul.f32 %v3769, %v876
      %v3802 = vmul.f32 %v3770, %v881
      %v3803 = vmul.f32 %v3771, %v886
      %v3804 = vmul.f32 %v3772, %v891
      %v3805 = vmul.f32 %v3773, %v896
      %v3806 = vmul.f32 %v3774, %v901
      %v3807 = vmul.f32 %v3775, %v906
      %v3808 = vmul.f32 %v3776, %v911
      %v3809 = vmul.f32 %v3777, %v916
      %v3810 = vmul.f32 %v3778, %v921
      %s3811 = scalar_lea.vmem %s6, 12
      %v3812 = vld [vmem:[%s3811] sm:$0xf]
      %v3814 = vsel %vm514, %v3779, 0
      %v3817 = vsel %vm514, %v3780, 0
      %v3820 = vsel %vm514, %v3781, 0
      %v3823 = vsel %vm514, %v3782, 0
      %v3826 = vsel %vm514, %v3783, 0
      %v3829 = vsel %vm514, %v3784, 0
      %v3832 = vsel %vm514, %v3785, 0
      %v3835 = vsel %vm514, %v3786, 0
      %v3838 = vsel %vm514, %v3787, 0
      %v3841 = vsel %vm514, %v3788, 0
      %v3844 = vsel %vm514, %v3789, 0
      %v3847 = vsel %vm514, %v3790, 0
      %v3850 = vsel %vm514, %v3791, 0
      %v3853 = vsel %vm514, %v3792, 0
      %v3856 = vsel %vm514, %v3793, 0
      %v3859 = vsel %vm514, %v3794, 0
      %v3862 = vsel %vm514, %v3795, 0
      %v3865 = vsel %vm514, %v3796, 0
      %v3868 = vsel %vm514, %v3797, 0
      %v3871 = vsel %vm514, %v3798, 0
      %v3874 = vsel %vm514, %v3799, 0
      %v3877 = vsel %vm514, %v3800, 0
      %v3880 = vsel %vm514, %v3801, 0
      %v3883 = vsel %vm514, %v3802, 0
      %v3886 = vsel %vm514, %v3803, 0
      %v3889 = vsel %vm514, %v3804, 0
      %v3892 = vsel %vm514, %v3805, 0
      %v3895 = vsel %vm514, %v3806, 0
      %v3898 = vsel %vm514, %v3807, 0
      %v3901 = vsel %vm514, %v3808, 0
      %v3904 = vsel %vm514, %v3809, 0
      %v3907 = vsel %vm514, %v3810, 0
      %v3910 = vsel %vm536, %v3812, 0
      %3912 = vmatprep.subr.mxu0 0.0
      %3913 = vmatpush1.msra.mxu0 %v3910
      %3914 = vmatprep.subr.mxu0 0.0
      %3915 = vmatpush1.msra.mxu0 0.0
      %3916 = vmatprep.subr.mxu0 0.0
      %3917 = vmatpush1.msra.mxu0 0.0
      %3918 = vmatprep.subr.mxu0 0.0
      %3919 = vmatpush1.msra.mxu0 0.0
      %3920 = vmatprep.subr.mxu0 0.0
      %3921 = vmatpush1.msra.mxu0 0.0
      %3922 = vmatprep.subr.mxu0 0.0
      %3923 = vmatpush1.msra.mxu0 0.0
      %3924 = vmatprep.subr.mxu0 0.0
      %3925 = vmatpush1.msra.mxu0 0.0
      %3926 = vmatprep.subr.mxu0 0.0
      %3927 = vmatpush1.msra.mxu0 0.0
      %3928 = vmatprep.subr.mxu0 0.0
      %3929 = vmatpush1.msra.mxu0 0.0
      %3930 = vmatprep.subr.mxu0 0.0
      %3931 = vmatpush1.msra.mxu0 0.0
      %3932 = vmatprep.subr.mxu0 0.0
      %3933 = vmatpush1.msra.mxu0 0.0
      %3934 = vmatprep.subr.mxu0 0.0
      %3935 = vmatpush1.msra.mxu0 0.0
      %3936 = vmatprep.subr.mxu0 0.0
      %3937 = vmatpush1.msra.mxu0 0.0
      %3938 = vmatprep.subr.mxu0 0.0
      %3939 = vmatpush1.msra.mxu0 0.0
      %3940 = vmatprep.subr.mxu0 0.0
      %3941 = vmatpush1.msra.mxu0 0.0
      %3942 = vmatprep.subr.mxu0 0.0
      %3943 = vmatpush1.msra.mxu0 0.0
      %3944 = vmatprep.subr.mxu0 0.0
      %3945 = vmatpush1.msra.mxu0 0.0
      %3946 = vmatprep.subr.mxu0 0.0
      %3947 = vmatpush1.msra.mxu0 0.0
      %3948 = vmatprep.subr.mxu0 0.0
      %3949 = vmatpush1.msra.mxu0 0.0
      %3950 = vmatprep.subr.mxu0 0.0
      %3951 = vmatpush1.msra.mxu0 0.0
      %3952 = vmatprep.subr.mxu0 0.0
      %3953 = vmatpush1.msra.mxu0 0.0
      %3954 = vmatprep.subr.mxu0 0.0
      %3955 = vmatpush1.msra.mxu0 0.0
      %3956 = vmatprep.subr.mxu0 0.0
      %3957 = vmatpush1.msra.mxu0 0.0
      %3958 = vmatprep.subr.mxu0 0.0
      %3959 = vmatpush1.msra.mxu0 0.0
      %3960 = vmatprep.subr.mxu0 0.0
      %3961 = vmatpush1.msra.mxu0 0.0
      %3962 = vmatprep.subr.mxu0 0.0
      %3963 = vmatpush1.msra.mxu0 0.0
      %3964 = vmatprep.subr.mxu0 0.0
      %3965 = vmatpush1.msra.mxu0 0.0
      %3966 = vmatprep.subr.mxu0 0.0
      %3967 = vmatpush1.msra.mxu0 0.0
      %3968 = vmatprep.subr.mxu0 0.0
      %3969 = vmatpush1.msra.mxu0 0.0
      %3970 = vmatprep.subr.mxu0 0.0
      %3971 = vmatpush1.msra.mxu0 0.0
      %3972 = vmatprep.subr.mxu0 0.0
      %3973 = vmatpush1.msra.mxu0 0.0
      %3974 = vmatprep.subr.mxu0 0.0
      %3975 = vmatpush1.msra.mxu0 0.0
      %3976 = vmatprep.mubr.f32.mxu0 0.0
      %3977 = vmatmul.mubr.f32.gmra.mrb[0].mxu0 %v3814
      %v3978 = vpop.f32.mrb[0].mxu0
      %v3979 = vadd.f32 0.0, %v3978
      %v3980 = vpop.f32.mrb[0].mxu0
      %3981 = vmatprep.mubr.f32.mxu0 0.0
      %3982 = vmatmul.mubr.f32.gmra.mrb[0].mxu0 %v3817
      %v3983 = vpop.f32.mrb[0].mxu0
      %v3984 = vadd.f32 0.0, %v3983
      %v3985 = vpop.f32.mrb[0].mxu0
      %3986 = vmatprep.mubr.f32.mxu0 0.0
      %3987 = vmatmul.mubr.f32.gmra.mrb[0].mxu0 %v3820
      %v3988 = vpop.f32.mrb[0].mxu0
      %v3989 = vadd.f32 0.0, %v3988
      %v3990 = vpop.f32.mrb[0].mxu0
      %3991 = vmatprep.mubr.f32.mxu0 0.0
      %3992 = vmatmul.mubr.f32.gmra.mrb[0].mxu0 %v3823
      %v3993 = vpop.f32.mrb[0].mxu0
      %v3994 = vadd.f32 0.0, %v3993
      %v3995 = vpop.f32.mrb[0].mxu0
      %3996 = vmatprep.mubr.f32.mxu0 0.0
      %3997 = vmatmul.mubr.f32.gmra.mrb[0].mxu0 %v3826
      %v3998 = vpop.f32.mrb[0].mxu0
      %v3999 = vadd.f32 0.0, %v3998
      %v4000 = vpop.f32.mrb[0].mxu0
      %4001 = vmatprep.mubr.f32.mxu0 0.0
      %4002 = vmatmul.mubr.f32.gmra.mrb[0].mxu0 %v3829
      %v4003 = vpop.f32.mrb[0].mxu0
      %v4004 = vadd.f32 0.0, %v4003
      %v4005 = vpop.f32.mrb[0].mxu0
      %4006 = vmatprep.mubr.f32.mxu0 0.0
      %4007 = vmatmul.mubr.f32.gmra.mrb[0].mxu0 %v3832
      %v4008 = vpop.f32.mrb[0].mxu0
      %v4009 = vadd.f32 0.0, %v4008
      %v4010 = vpop.f32.mrb[0].mxu0
      %4011 = vmatprep.mubr.f32.mxu0 0.0
      %4012 = vmatmul.mubr.f32.gmra.mrb[0].mxu0 %v3835
      %v4013 = vpop.f32.mrb[0].mxu0
      %v4014 = vadd.f32 0.0, %v4013
      %v4015 = vpop.f32.mrb[0].mxu0
      %4016 = vmatprep.mubr.f32.mxu0 0.0
      %4017 = vmatmul.mubr.f32.gmra.mrb[0].mxu0 %v3838
      %v4018 = vpop.f32.mrb[0].mxu0
      %v4019 = vadd.f32 0.0, %v4018
      %v4020 = vpop.f32.mrb[0].mxu0
      %4021 = vmatprep.mubr.f32.mxu0 0.0
      %4022 = vmatmul.mubr.f32.gmra.mrb[0].mxu0 %v3841
      %v4023 = vpop.f32.mrb[0].mxu0
      %v4024 = vadd.f32 0.0, %v4023
      %v4025 = vpop.f32.mrb[0].mxu0
      %4026 = vmatprep.mubr.f32.mxu0 0.0
      %4027 = vmatmul.mubr.f32.gmra.mrb[0].mxu0 %v3844
      %v4028 = vpop.f32.mrb[0].mxu0
      %v4029 = vadd.f32 0.0, %v4028
      %v4030 = vpop.f32.mrb[0].mxu0
      %4031 = vmatprep.mubr.f32.mxu0 0.0
      %4032 = vmatmul.mubr.f32.gmra.mrb[0].mxu0 %v3847
      %v4033 = vpop.f32.mrb[0].mxu0
      %v4034 = vadd.f32 0.0, %v4033
      %v4035 = vpop.f32.mrb[0].mxu0
      %4036 = vmatprep.mubr.f32.mxu0 0.0
      %4037 = vmatmul.mubr.f32.gmra.mrb[0].mxu0 %v3850
      %v4038 = vpop.f32.mrb[0].mxu0
      %v4039 = vadd.f32 0.0, %v4038
      %v4040 = vpop.f32.mrb[0].mxu0
      %4041 = vmatprep.mubr.f32.mxu0 0.0
      %4042 = vmatmul.mubr.f32.gmra.mrb[0].mxu0 %v3853
      %v4043 = vpop.f32.mrb[0].mxu0
      %v4044 = vadd.f32 0.0, %v4043
      %v4045 = vpop.f32.mrb[0].mxu0
      %4046 = vmatprep.mubr.f32.mxu0 0.0
      %4047 = vmatmul.mubr.f32.gmra.mrb[0].mxu0 %v3856
      %v4048 = vpop.f32.mrb[0].mxu0
      %v4049 = vadd.f32 0.0, %v4048
      %v4050 = vpop.f32.mrb[0].mxu0
      %4051 = vmatprep.mubr.f32.mxu0 0.0
      %4052 = vmatmul.mubr.f32.gmra.mrb[0].mxu0 %v3859
      %v4053 = vpop.f32.mrb[0].mxu0
      %v4054 = vadd.f32 0.0, %v4053
      %v4055 = vpop.f32.mrb[0].mxu0
      %4056 = vmatprep.mubr.f32.mxu0 0.0
      %4057 = vmatmul.mubr.f32.gmra.mrb[0].mxu0 %v3862
      %v4058 = vpop.f32.mrb[0].mxu0
      %v4059 = vadd.f32 0.0, %v4058
      %v4060 = vpop.f32.mrb[0].mxu0
      %4061 = vmatprep.mubr.f32.mxu0 0.0
      %4062 = vmatmul.mubr.f32.gmra.mrb[0].mxu0 %v3865
      %v4063 = vpop.f32.mrb[0].mxu0
      %v4064 = vadd.f32 0.0, %v4063
      %v4065 = vpop.f32.mrb[0].mxu0
      %4066 = vmatprep.mubr.f32.mxu0 0.0
      %4067 = vmatmul.mubr.f32.gmra.mrb[0].mxu0 %v3868
      %v4068 = vpop.f32.mrb[0].mxu0
      %v4069 = vadd.f32 0.0, %v4068
      %v4070 = vpop.f32.mrb[0].mxu0
      %4071 = vmatprep.mubr.f32.mxu0 0.0
      %4072 = vmatmul.mubr.f32.gmra.mrb[0].mxu0 %v3871
      %v4073 = vpop.f32.mrb[0].mxu0
      %v4074 = vadd.f32 0.0, %v4073
      %v4075 = vpop.f32.mrb[0].mxu0
      %4076 = vmatprep.mubr.f32.mxu0 0.0
      %4077 = vmatmul.mubr.f32.gmra.mrb[0].mxu0 %v3874
      %v4078 = vpop.f32.mrb[0].mxu0
      %v4079 = vadd.f32 0.0, %v4078
      %v4080 = vpop.f32.mrb[0].mxu0
      %4081 = vmatprep.mubr.f32.mxu0 0.0
      %4082 = vmatmul.mubr.f32.gmra.mrb[0].mxu0 %v3877
      %v4083 = vpop.f32.mrb[0].mxu0
      %v4084 = vadd.f32 0.0, %v4083
      %v4085 = vpop.f32.mrb[0].mxu0
      %4086 = vmatprep.mubr.f32.mxu0 0.0
      %4087 = vmatmul.mubr.f32.gmra.mrb[0].mxu0 %v3880
      %v4088 = vpop.f32.mrb[0].mxu0
      %v4089 = vadd.f32 0.0, %v4088
      %v4090 = vpop.f32.mrb[0].mxu0
      %4091 = vmatprep.mubr.f32.mxu0 0.0
      %4092 = vmatmul.mubr.f32.gmra.mrb[0].mxu0 %v3883
      %v4093 = vpop.f32.mrb[0].mxu0
      %v4094 = vadd.f32 0.0, %v4093
      %v4095 = vpop.f32.mrb[0].mxu0
      %4096 = vmatprep.mubr.f32.mxu0 0.0
      %4097 = vmatmul.mubr.f32.gmra.mrb[0].mxu0 %v3886
      %v4098 = vpop.f32.mrb[0].mxu0
      %v4099 = vadd.f32 0.0, %v4098
      %v4100 = vpop.f32.mrb[0].mxu0
      %4101 = vmatprep.mubr.f32.mxu0 0.0
      %4102 = vmatmul.mubr.f32.gmra.mrb[0].mxu0 %v3889
      %v4103 = vpop.f32.mrb[0].mxu0
      %v4104 = vadd.f32 0.0, %v4103
      %v4105 = vpop.f32.mrb[0].mxu0
      %4106 = vmatprep.mubr.f32.mxu0 0.0
      %4107 = vmatmul.mubr.f32.gmra.mrb[0].mxu0 %v3892
      %v4108 = vpop.f32.mrb[0].mxu0
      %v4109 = vadd.f32 0.0, %v4108
      %v4110 = vpop.f32.mrb[0].mxu0
      %4111 = vmatprep.mubr.f32.mxu0 0.0
      %4112 = vmatmul.mubr.f32.gmra.mrb[0].mxu0 %v3895
      %v4113 = vpop.f32.mrb[0].mxu0
      %v4114 = vadd.f32 0.0, %v4113
      %v4115 = vpop.f32.mrb[0].mxu0
      %4116 = vmatprep.mubr.f32.mxu0 0.0
      %4117 = vmatmul.mubr.f32.gmra.mrb[0].mxu0 %v3898
      %v4118 = vpop.f32.mrb[0].mxu0
      %v4119 = vadd.f32 0.0, %v4118
      %v4120 = vpop.f32.mrb[0].mxu0
      %4121 = vmatprep.mubr.f32.mxu0 0.0
      %4122 = vmatmul.mubr.f32.gmra.mrb[0].mxu0 %v3901
      %v4123 = vpop.f32.mrb[0].mxu0
      %v4124 = vadd.f32 0.0, %v4123
      %v4125 = vpop.f32.mrb[0].mxu0
      %4126 = vmatprep.mubr.f32.mxu0 0.0
      %4127 = vmatmul.mubr.f32.gmra.mrb[0].mxu0 %v3904
      %v4128 = vpop.f32.mrb[0].mxu0
      %v4129 = vadd.f32 0.0, %v4128
      %v4130 = vpop.f32.mrb[0].mxu0
      %4131 = vmatprep.mubr.f32.mxu0 0.0
      %4132 = vmatmul.mubr.f32.gmra.mrb[0].mxu0 %v3907
      %v4133 = vpop.f32.mrb[0].mxu0
      %v4134 = vadd.f32 0.0, %v4133
      %v4135 = vpop.f32.mrb[0].mxu0
      %4136 = vdwg.mxu0
      %v4137 = vadd.f32 %v3715, %v3979
      %v4138 = vadd.f32 %v3716, %v3984
      %v4139 = vadd.f32 %v3717, %v3989
      %v4140 = vadd.f32 %v3718, %v3994
      %v4141 = vadd.f32 %v3719, %v3999
      %v4142 = vadd.f32 %v3720, %v4004
      %v4143 = vadd.f32 %v3721, %v4009
      %v4144 = vadd.f32 %v3722, %v4014
      %v4145 = vadd.f32 %v3723, %v4019
      %v4146 = vadd.f32 %v3724, %v4024
      %v4147 = vadd.f32 %v3725, %v4029
      %v4148 = vadd.f32 %v3726, %v4034
      %v4149 = vadd.f32 %v3727, %v4039
      %v4150 = vadd.f32 %v3728, %v4044
      %v4151 = vadd.f32 %v3729, %v4049
      %v4152 = vadd.f32 %v3730, %v4054
      %v4153 = vadd.f32 %v3731, %v4059
      %v4154 = vadd.f32 %v3732, %v4064
      %v4155 = vadd.f32 %v3733, %v4069
      %v4156 = vadd.f32 %v3734, %v4074
      %v4157 = vadd.f32 %v3735, %v4079
      %v4158 = vadd.f32 %v3736, %v4084
      %v4159 = vadd.f32 %v3737, %v4089
      %v4160 = vadd.f32 %v3738, %v4094
      %v4161 = vadd.f32 %v3739, %v4099
      %v4162 = vadd.f32 %v3740, %v4104
      %v4163 = vadd.f32 %v3741, %v4109
      %v4164 = vadd.f32 %v3742, %v4114
      %v4165 = vadd.f32 %v3743, %v4119
      %v4166 = vadd.f32 %v3744, %v4124
      %v4167 = vadd.f32 %v3745, %v4129
      %v4168 = vadd.f32 %v3746, %v4134
      %s4169 = scalar_lea.vmem %s7, 96
      %v4170 = vld [vmem:[%s4169] sm:$0xff]
      %v4171 = vld [vmem:[%s4169 + $0x8] sm:$0xff]
      %v4172 = vld [vmem:[%s4169 + $0x10] sm:$0xff]
      %v4173 = vld [vmem:[%s4169 + $0x18] sm:$0xff]
      %4174 = vmatprep.subr.mxu0 0.0
      %4175 = vmatpush1.msra.mxu0 %v4170
      %4176 = vmatprep.subr.mxu0 0.0
      %4177 = vmatpush1.msra.mxu0 %v4171
      %4178 = vmatprep.subr.mxu0 0.0
      %4179 = vmatpush1.msra.mxu0 %v4172
      %4180 = vmatprep.subr.mxu0 0.0
      %4181 = vmatpush1.msra.mxu0 %v4173
      %4182 = vmatprep.subr.mxu0 0.0
      %4183 = vmatpush1.msra.mxu0 0.0
      %4184 = vmatprep.subr.mxu0 0.0
      %4185 = vmatpush1.msra.mxu0 0.0
      %4186 = vmatprep.subr.mxu0 0.0
      %4187 = vmatpush1.msra.mxu0 0.0
      %4188 = vmatprep.subr.mxu0 0.0
      %4189 = vmatpush1.msra.mxu0 0.0
      %4190 = vmatprep.subr.mxu0 0.0
      %4191 = vmatpush1.msra.mxu0 0.0
      %4192 = vmatprep.subr.mxu0 0.0
      %4193 = vmatpush1.msra.mxu0 0.0
      %4194 = vmatprep.subr.mxu0 0.0
      %4195 = vmatpush1.msra.mxu0 0.0
      %4196 = vmatprep.subr.mxu0 0.0
      %4197 = vmatpush1.msra.mxu0 0.0
      %4198 = vmatprep.subr.mxu0 0.0
      %4199 = vmatpush1.msra.mxu0 0.0
      %4200 = vmatprep.subr.mxu0 0.0
      %4201 = vmatpush1.msra.mxu0 0.0
      %4202 = vmatprep.subr.mxu0 0.0
      %4203 = vmatpush1.msra.mxu0 0.0
      %4204 = vmatprep.subr.mxu0 0.0
      %4205 = vmatpush1.msra.mxu0 0.0
      %4206 = vmatprep.subr.mxu0 0.0
      %4207 = vmatpush1.msra.mxu0 0.0
      %4208 = vmatprep.subr.mxu0 0.0
      %4209 = vmatpush1.msra.mxu0 0.0
      %4210 = vmatprep.subr.mxu0 0.0
      %4211 = vmatpush1.msra.mxu0 0.0
      %4212 = vmatprep.subr.mxu0 0.0
      %4213 = vmatpush1.msra.mxu0 0.0
      %4214 = vmatprep.subr.mxu0 0.0
      %4215 = vmatpush1.msra.mxu0 0.0
      %4216 = vmatprep.subr.mxu0 0.0
      %4217 = vmatpush1.msra.mxu0 0.0
      %4218 = vmatprep.subr.mxu0 0.0
      %4219 = vmatpush1.msra.mxu0 0.0
      %4220 = vmatprep.subr.mxu0 0.0
      %4221 = vmatpush1.msra.mxu0 0.0
      %4222 = vmatprep.subr.mxu0 0.0
      %4223 = vmatpush1.msra.mxu0 0.0
      %4224 = vmatprep.subr.mxu0 0.0
      %4225 = vmatpush1.msra.mxu0 0.0
      %4226 = vmatprep.subr.mxu0 0.0
      %4227 = vmatpush1.msra.mxu0 0.0
      %4228 = vmatprep.subr.mxu0 0.0
      %4229 = vmatpush1.msra.mxu0 0.0
      %4230 = vmatprep.subr.mxu0 0.0
      %4231 = vmatpush1.msra.mxu0 0.0
      %4232 = vmatprep.subr.mxu0 0.0
      %4233 = vmatpush1.msra.mxu0 0.0
      %4234 = vmatprep.subr.mxu0 0.0
      %4235 = vmatpush1.msra.mxu0 0.0
      %4236 = vmatprep.subr.mxu0 0.0
      %4237 = vmatpush1.msra.mxu0 0.0
      %4238 = vmatprep.mubr.f32.mxu0 0.0
      %4239 = vmatmul.mubr.f32.gmra.mrb[0].mxu0 %v962
      %v4240 = vpop.f32.mrb[0].mxu0
      %v4241 = vadd.f32 0.0, %v4240
      %v4242 = vpop.f32.mrb[0].mxu0
      %4243 = vmatprep.mubr.f32.mxu0 0.0
      %4244 = vmatmul.mubr.f32.gmra.mrb[0].mxu0 %v965
      %v4245 = vpop.f32.mrb[0].mxu0
      %v4246 = vadd.f32 0.0, %v4245
      %v4247 = vpop.f32.mrb[0].mxu0
      %4248 = vmatprep.mubr.f32.mxu0 0.0
      %4249 = vmatmul.mubr.f32.gmra.mrb[0].mxu0 %v968
      %v4250 = vpop.f32.mrb[0].mxu0
      %v4251 = vadd.f32 0.0, %v4250
      %v4252 = vpop.f32.mrb[0].mxu0
      %4253 = vmatprep.mubr.f32.mxu0 0.0
      %4254 = vmatmul.mubr.f32.gmra.mrb[0].mxu0 %v971
      %v4255 = vpop.f32.mrb[0].mxu0
      %v4256 = vadd.f32 0.0, %v4255
      %v4257 = vpop.f32.mrb[0].mxu0
      %4258 = vmatprep.mubr.f32.mxu0 0.0
      %4259 = vmatmul.mubr.f32.gmra.mrb[0].mxu0 %v974
      %v4260 = vpop.f32.mrb[0].mxu0
      %v4261 = vadd.f32 0.0, %v4260
      %v4262 = vpop.f32.mrb[0].mxu0
      %4263 = vmatprep.mubr.f32.mxu0 0.0
      %4264 = vmatmul.mubr.f32.gmra.mrb[0].mxu0 %v977
      %v4265 = vpop.f32.mrb[0].mxu0
      %v4266 = vadd.f32 0.0, %v4265
      %v4267 = vpop.f32.mrb[0].mxu0
      %4268 = vmatprep.mubr.f32.mxu0 0.0
      %4269 = vmatmul.mubr.f32.gmra.mrb[0].mxu0 %v980
      %v4270 = vpop.f32.mrb[0].mxu0
      %v4271 = vadd.f32 0.0, %v4270
      %v4272 = vpop.f32.mrb[0].mxu0
      %4273 = vdwg.mxu0
      %s4274 = scalar_lea.vmem %s5, 768
      %v4275 = vld [vmem:[%s4274] sm:$0xff]
      %v4276 = vld [vmem:[%s4274 + $0x8] sm:$0xff]
      %v4277 = vld [vmem:[%s4274 + $0x10] sm:$0xff]
      %v4278 = vld [vmem:[%s4274 + $0x18] sm:$0xff]
      %v4279 = vld [vmem:[%s4274 + $0x20] sm:$0xff]
      %v4280 = vld [vmem:[%s4274 + $0x28] sm:$0xff]
      %v4281 = vld [vmem:[%s4274 + $0x30] sm:$0xff]
      %v4282 = vld [vmem:[%s4274 + $0x38] sm:$0xff]
      %v4283 = vld [vmem:[%s4274 + $0x40] sm:$0xff]
      %v4284 = vld [vmem:[%s4274 + $0x48] sm:$0xff]
      %v4285 = vld [vmem:[%s4274 + $0x50] sm:$0xff]
      %v4286 = vld [vmem:[%s4274 + $0x58] sm:$0xff]
      %v4287 = vld [vmem:[%s4274 + $0x60] sm:$0xff]
      %v4288 = vld [vmem:[%s4274 + $0x68] sm:$0xff]
      %v4289 = vld [vmem:[%s4274 + $0x70] sm:$0xff]
      %v4290 = vld [vmem:[%s4274 + $0x78] sm:$0xff]
      %v4291 = vld [vmem:[%s4274 + $0x80] sm:$0xff]
      %v4292 = vld [vmem:[%s4274 + $0x88] sm:$0xff]
      %v4293 = vld [vmem:[%s4274 + $0x90] sm:$0xff]
      %v4294 = vld [vmem:[%s4274 + $0x98] sm:$0xff]
      %v4295 = vld [vmem:[%s4274 + $0xa0] sm:$0xff]
      %v4296 = vld [vmem:[%s4274 + $0xa8] sm:$0xff]
      %v4297 = vld [vmem:[%s4274 + $0xb0] sm:$0xff]
      %v4298 = vld [vmem:[%s4274 + $0xb8] sm:$0xff]
      %v4299 = vld [vmem:[%s4274 + $0xc0] sm:$0xff]
      %v4300 = vld [vmem:[%s4274 + $0xc8] sm:$0xff]
      %v4301 = vld [vmem:[%s4274 + $0xd0] sm:$0xff]
      %v4302 = vld [vmem:[%s4274 + $0xd8] sm:$0xff]
      %v4303 = vld [vmem:[%s4274 + $0xe0] sm:$0xff]
      %v4304 = vld [vmem:[%s4274 + $0xe8] sm:$0xff]
      %v4305 = vld [vmem:[%s4274 + $0xf0] sm:$0xff]
      %v4306 = vld [vmem:[%s4274 + $0xf8] sm:$0xff]
      %v4308 = vsel %vm1114, %v4275, 0
      %v4311 = vsel %vm1114, %v4276, 0
      %v4314 = vsel %vm1114, %v4277, 0
      %v4317 = vsel %vm1114, %v4278, 0
      %v4320 = vsel %vm1114, %v4279, 0
      %v4323 = vsel %vm1114, %v4280, 0
      %v4326 = vsel %vm1114, %v4281, 0
      %v4329 = vsel %vm1114, %v4282, 0
      %v4332 = vsel %vm1114, %v4283, 0
      %v4335 = vsel %vm1114, %v4284, 0
      %v4338 = vsel %vm1114, %v4285, 0
      %v4341 = vsel %vm1114, %v4286, 0
      %v4344 = vsel %vm1114, %v4287, 0
      %v4347 = vsel %vm1114, %v4288, 0
      %v4350 = vsel %vm1114, %v4289, 0
      %v4353 = vsel %vm1114, %v4290, 0
      %v4356 = vsel %vm1114, %v4291, 0
      %v4359 = vsel %vm1114, %v4292, 0
      %v4362 = vsel %vm1114, %v4293, 0
      %v4365 = vsel %vm1114, %v4294, 0
      %v4368 = vsel %vm1114, %v4295, 0
      %v4371 = vsel %vm1114, %v4296, 0
      %v4374 = vsel %vm1114, %v4297, 0
      %v4377 = vsel %vm1114, %v4298, 0
      %v4380 = vsel %vm1114, %v4299, 0
      %v4383 = vsel %vm1114, %v4300, 0
      %v4386 = vsel %vm1114, %v4301, 0
      %v4389 = vsel %vm1114, %v4302, 0
      %v4392 = vsel %vm1114, %v4303, 0
      %v4395 = vsel %vm1114, %v4304, 0
      %v4398 = vsel %vm1114, %v4305, 0
      %v4401 = vsel %vm1114, %v4306, 0
      %4403 = vmatprep.subr.mxu0 0.0
      %4404 = vmatpush1.msra.mxu0 %v4241
      %4405 = vmatprep.subr.mxu0 0.0
      %4406 = vmatpush1.msra.mxu0 %v4246
      %4407 = vmatprep.subr.mxu0 0.0
      %4408 = vmatpush1.msra.mxu0 %v4251
      %4409 = vmatprep.subr.mxu0 0.0
      %4410 = vmatpush1.msra.mxu0 %v4256
      %4411 = vmatprep.subr.mxu0 0.0
      %4412 = vmatpush1.msra.mxu0 %v4261
      %4413 = vmatprep.subr.mxu0 0.0
      %4414 = vmatpush1.msra.mxu0 %v4266
      %4415 = vmatprep.subr.mxu0 0.0
      %4416 = vmatpush1.msra.mxu0 %v4271
      %4417 = vmatprep.subr.mxu0 0.0
      %4418 = vmatpush1.msra.mxu0 0.0
      %4419 = vmatprep.subr.mxu0 0.0
      %4420 = vmatpush1.msra.mxu0 0.0
      %4421 = vmatprep.subr.mxu0 0.0
      %4422 = vmatpush1.msra.mxu0 0.0
      %4423 = vmatprep.subr.mxu0 0.0
      %4424 = vmatpush1.msra.mxu0 0.0
      %4425 = vmatprep.subr.mxu0 0.0
      %4426 = vmatpush1.msra.mxu0 0.0
      %4427 = vmatprep.subr.mxu0 0.0
      %4428 = vmatpush1.msra.mxu0 0.0
      %4429 = vmatprep.subr.mxu0 0.0
      %4430 = vmatpush1.msra.mxu0 0.0
      %4431 = vmatprep.subr.mxu0 0.0
      %4432 = vmatpush1.msra.mxu0 0.0
      %4433 = vmatprep.subr.mxu0 0.0
      %4434 = vmatpush1.msra.mxu0 0.0
      %4435 = vmatprep.subr.mxu0 0.0
      %4436 = vmatpush1.msra.mxu0 0.0
      %4437 = vmatprep.subr.mxu0 0.0
      %4438 = vmatpush1.msra.mxu0 0.0
      %4439 = vmatprep.subr.mxu0 0.0
      %4440 = vmatpush1.msra.mxu0 0.0
      %4441 = vmatprep.subr.mxu0 0.0
      %4442 = vmatpush1.msra.mxu0 0.0
      %4443 = vmatprep.subr.mxu0 0.0
      %4444 = vmatpush1.msra.mxu0 0.0
      %4445 = vmatprep.subr.mxu0 0.0
      %4446 = vmatpush1.msra.mxu0 0.0
      %4447 = vmatprep.subr.mxu0 0.0
      %4448 = vmatpush1.msra.mxu0 0.0
      %4449 = vmatprep.subr.mxu0 0.0
      %4450 = vmatpush1.msra.mxu0 0.0
      %4451 = vmatprep.subr.mxu0 0.0
      %4452 = vmatpush1.msra.mxu0 0.0
      %4453 = vmatprep.subr.mxu0 0.0
      %4454 = vmatpush1.msra.mxu0 0.0
      %4455 = vmatprep.subr.mxu0 0.0
      %4456 = vmatpush1.msra.mxu0 0.0
      %4457 = vmatprep.subr.mxu0 0.0
      %4458 = vmatpush1.msra.mxu0 0.0
      %4459 = vmatprep.subr.mxu0 0.0
      %4460 = vmatpush1.msra.mxu0 0.0
      %4461 = vmatprep.subr.mxu0 0.0
      %4462 = vmatpush1.msra.mxu0 0.0
      %4463 = vmatprep.subr.mxu0 0.0
      %4464 = vmatpush1.msra.mxu0 0.0
      %4465 = vmatprep.subr.mxu0 0.0
      %4466 = vmatpush1.msra.mxu0 0.0
      %4467 = vmatprep.mubr.f32.mxu0 0.0
      %4468 = vmatmul.mubr.f32.gmra.mrb[0].mxu0 %v4308
      %v4469 = vpop.f32.mrb[0].mxu0
      %v4470 = vadd.f32 0.0, %v4469
      %v4471 = vpop.f32.mrb[0].mxu0
      %4472 = vmatprep.mubr.f32.mxu0 0.0
      %4473 = vmatmul.mubr.f32.gmra.mrb[0].mxu0 %v4311
      %v4474 = vpop.f32.mrb[0].mxu0
      %v4475 = vadd.f32 0.0, %v4474
      %v4476 = vpop.f32.mrb[0].mxu0
      %4477 = vmatprep.mubr.f32.mxu0 0.0
      %4478 = vmatmul.mubr.f32.gmra.mrb[0].mxu0 %v4314
      %v4479 = vpop.f32.mrb[0].mxu0
      %v4480 = vadd.f32 0.0, %v4479
      %v4481 = vpop.f32.mrb[0].mxu0
      %4482 = vmatprep.mubr.f32.mxu0 0.0
      %4483 = vmatmul.mubr.f32.gmra.mrb[0].mxu0 %v4317
      %v4484 = vpop.f32.mrb[0].mxu0
      %v4485 = vadd.f32 0.0, %v4484
      %v4486 = vpop.f32.mrb[0].mxu0
      %4487 = vmatprep.mubr.f32.mxu0 0.0
      %4488 = vmatmul.mubr.f32.gmra.mrb[0].mxu0 %v4320
      %v4489 = vpop.f32.mrb[0].mxu0
      %v4490 = vadd.f32 0.0, %v4489
      %v4491 = vpop.f32.mrb[0].mxu0
      %4492 = vmatprep.mubr.f32.mxu0 0.0
      %4493 = vmatmul.mubr.f32.gmra.mrb[0].mxu0 %v4323
      %v4494 = vpop.f32.mrb[0].mxu0
      %v4495 = vadd.f32 0.0, %v4494
      %v4496 = vpop.f32.mrb[0].mxu0
      %4497 = vmatprep.mubr.f32.mxu0 0.0
      %4498 = vmatmul.mubr.f32.gmra.mrb[0].mxu0 %v4326
      %v4499 = vpop.f32.mrb[0].mxu0
      %v4500 = vadd.f32 0.0, %v4499
      %v4501 = vpop.f32.mrb[0].mxu0
      %4502 = vmatprep.mubr.f32.mxu0 0.0
      %4503 = vmatmul.mubr.f32.gmra.mrb[0].mxu0 %v4329
      %v4504 = vpop.f32.mrb[0].mxu0
      %v4505 = vadd.f32 0.0, %v4504
      %v4506 = vpop.f32.mrb[0].mxu0
      %4507 = vmatprep.mubr.f32.mxu0 0.0
      %4508 = vmatmul.mubr.f32.gmra.mrb[0].mxu0 %v4332
      %v4509 = vpop.f32.mrb[0].mxu0
      %v4510 = vadd.f32 0.0, %v4509
      %v4511 = vpop.f32.mrb[0].mxu0
      %4512 = vmatprep.mubr.f32.mxu0 0.0
      %4513 = vmatmul.mubr.f32.gmra.mrb[0].mxu0 %v4335
      %v4514 = vpop.f32.mrb[0].mxu0
      %v4515 = vadd.f32 0.0, %v4514
      %v4516 = vpop.f32.mrb[0].mxu0
      %4517 = vmatprep.mubr.f32.mxu0 0.0
      %4518 = vmatmul.mubr.f32.gmra.mrb[0].mxu0 %v4338
      %v4519 = vpop.f32.mrb[0].mxu0
      %v4520 = vadd.f32 0.0, %v4519
      %v4521 = vpop.f32.mrb[0].mxu0
      %4522 = vmatprep.mubr.f32.mxu0 0.0
      %4523 = vmatmul.mubr.f32.gmra.mrb[0].mxu0 %v4341
      %v4524 = vpop.f32.mrb[0].mxu0
      %v4525 = vadd.f32 0.0, %v4524
      %v4526 = vpop.f32.mrb[0].mxu0
      %4527 = vmatprep.mubr.f32.mxu0 0.0
      %4528 = vmatmul.mubr.f32.gmra.mrb[0].mxu0 %v4344
      %v4529 = vpop.f32.mrb[0].mxu0
      %v4530 = vadd.f32 0.0, %v4529
      %v4531 = vpop.f32.mrb[0].mxu0
      %4532 = vmatprep.mubr.f32.mxu0 0.0
      %4533 = vmatmul.mubr.f32.gmra.mrb[0].mxu0 %v4347
      %v4534 = vpop.f32.mrb[0].mxu0
      %v4535 = vadd.f32 0.0, %v4534
      %v4536 = vpop.f32.mrb[0].mxu0
      %4537 = vmatprep.mubr.f32.mxu0 0.0
      %4538 = vmatmul.mubr.f32.gmra.mrb[0].mxu0 %v4350
      %v4539 = vpop.f32.mrb[0].mxu0
      %v4540 = vadd.f32 0.0, %v4539
      %v4541 = vpop.f32.mrb[0].mxu0
      %4542 = vmatprep.mubr.f32.mxu0 0.0
      %4543 = vmatmul.mubr.f32.gmra.mrb[0].mxu0 %v4353
      %v4544 = vpop.f32.mrb[0].mxu0
      %v4545 = vadd.f32 0.0, %v4544
      %v4546 = vpop.f32.mrb[0].mxu0
      %4547 = vmatprep.mubr.f32.mxu0 0.0
      %4548 = vmatmul.mubr.f32.gmra.mrb[0].mxu0 %v4356
      %v4549 = vpop.f32.mrb[0].mxu0
      %v4550 = vadd.f32 0.0, %v4549
      %v4551 = vpop.f32.mrb[0].mxu0
      %4552 = vmatprep.mubr.f32.mxu0 0.0
      %4553 = vmatmul.mubr.f32.gmra.mrb[0].mxu0 %v4359
      %v4554 = vpop.f32.mrb[0].mxu0
      %v4555 = vadd.f32 0.0, %v4554
      %v4556 = vpop.f32.mrb[0].mxu0
      %4557 = vmatprep.mubr.f32.mxu0 0.0
      %4558 = vmatmul.mubr.f32.gmra.mrb[0].mxu0 %v4362
      %v4559 = vpop.f32.mrb[0].mxu0
      %v4560 = vadd.f32 0.0, %v4559
      %v4561 = vpop.f32.mrb[0].mxu0
      %4562 = vmatprep.mubr.f32.mxu0 0.0
      %4563 = vmatmul.mubr.f32.gmra.mrb[0].mxu0 %v4365
      %v4564 = vpop.f32.mrb[0].mxu0
      %v4565 = vadd.f32 0.0, %v4564
      %v4566 = vpop.f32.mrb[0].mxu0
      %4567 = vmatprep.mubr.f32.mxu0 0.0
      %4568 = vmatmul.mubr.f32.gmra.mrb[0].mxu0 %v4368
      %v4569 = vpop.f32.mrb[0].mxu0
      %v4570 = vadd.f32 0.0, %v4569
      %v4571 = vpop.f32.mrb[0].mxu0
      %4572 = vmatprep.mubr.f32.mxu0 0.0
      %4573 = vmatmul.mubr.f32.gmra.mrb[0].mxu0 %v4371
      %v4574 = vpop.f32.mrb[0].mxu0
      %v4575 = vadd.f32 0.0, %v4574
      %v4576 = vpop.f32.mrb[0].mxu0
      %4577 = vmatprep.mubr.f32.mxu0 0.0
      %4578 = vmatmul.mubr.f32.gmra.mrb[0].mxu0 %v4374
      %v4579 = vpop.f32.mrb[0].mxu0
      %v4580 = vadd.f32 0.0, %v4579
      %v4581 = vpop.f32.mrb[0].mxu0
      %4582 = vmatprep.mubr.f32.mxu0 0.0
      %4583 = vmatmul.mubr.f32.gmra.mrb[0].mxu0 %v4377
      %v4584 = vpop.f32.mrb[0].mxu0
      %v4585 = vadd.f32 0.0, %v4584
      %v4586 = vpop.f32.mrb[0].mxu0
      %4587 = vmatprep.mubr.f32.mxu0 0.0
      %4588 = vmatmul.mubr.f32.gmra.mrb[0].mxu0 %v4380
      %v4589 = vpop.f32.mrb[0].mxu0
      %v4590 = vadd.f32 0.0, %v4589
      %v4591 = vpop.f32.mrb[0].mxu0
      %4592 = vmatprep.mubr.f32.mxu0 0.0
      %4593 = vmatmul.mubr.f32.gmra.mrb[0].mxu0 %v4383
      %v4594 = vpop.f32.mrb[0].mxu0
      %v4595 = vadd.f32 0.0, %v4594
      %v4596 = vpop.f32.mrb[0].mxu0
      %4597 = vmatprep.mubr.f32.mxu0 0.0
      %4598 = vmatmul.mubr.f32.gmra.mrb[0].mxu0 %v4386
      %v4599 = vpop.f32.mrb[0].mxu0
      %v4600 = vadd.f32 0.0, %v4599
      %v4601 = vpop.f32.mrb[0].mxu0
      %4602 = vmatprep.mubr.f32.mxu0 0.0
      %4603 = vmatmul.mubr.f32.gmra.mrb[0].mxu0 %v4389
      %v4604 = vpop.f32.mrb[0].mxu0
      %v4605 = vadd.f32 0.0, %v4604
      %v4606 = vpop.f32.mrb[0].mxu0
      %4607 = vmatprep.mubr.f32.mxu0 0.0
      %4608 = vmatmul.mubr.f32.gmra.mrb[0].mxu0 %v4392
      %v4609 = vpop.f32.mrb[0].mxu0
      %v4610 = vadd.f32 0.0, %v4609
      %v4611 = vpop.f32.mrb[0].mxu0
      %4612 = vmatprep.mubr.f32.mxu0 0.0
      %4613 = vmatmul.mubr.f32.gmra.mrb[0].mxu0 %v4395
      %v4614 = vpop.f32.mrb[0].mxu0
      %v4615 = vadd.f32 0.0, %v4614
      %v4616 = vpop.f32.mrb[0].mxu0
      %4617 = vmatprep.mubr.f32.mxu0 0.0
      %4618 = vmatmul.mubr.f32.gmra.mrb[0].mxu0 %v4398
      %v4619 = vpop.f32.mrb[0].mxu0
      %v4620 = vadd.f32 0.0, %v4619
      %v4621 = vpop.f32.mrb[0].mxu0
      %4622 = vmatprep.mubr.f32.mxu0 0.0
      %4623 = vmatmul.mubr.f32.gmra.mrb[0].mxu0 %v4401
      %v4624 = vpop.f32.mrb[0].mxu0
      %v4625 = vadd.f32 0.0, %v4624
      %v4626 = vpop.f32.mrb[0].mxu0
      %4627 = vdwg.mxu0
      %v4628 = vadd.f32 %v4137, %v4470
      %v4629 = vadd.f32 %v4138, %v4475
      %v4630 = vadd.f32 %v4139, %v4480
      %v4631 = vadd.f32 %v4140, %v4485
      %v4632 = vadd.f32 %v4141, %v4490
      %v4633 = vadd.f32 %v4142, %v4495
      %v4634 = vadd.f32 %v4143, %v4500
      %v4635 = vadd.f32 %v4144, %v4505
      %v4636 = vadd.f32 %v4145, %v4510
      %v4637 = vadd.f32 %v4146, %v4515
      %v4638 = vadd.f32 %v4147, %v4520
      %v4639 = vadd.f32 %v4148, %v4525
      %v4640 = vadd.f32 %v4149, %v4530
      %v4641 = vadd.f32 %v4150, %v4535
      %v4642 = vadd.f32 %v4151, %v4540
      %v4643 = vadd.f32 %v4152, %v4545
      %v4644 = vadd.f32 %v4153, %v4550
      %v4645 = vadd.f32 %v4154, %v4555
      %v4646 = vadd.f32 %v4155, %v4560
      %v4647 = vadd.f32 %v4156, %v4565
      %v4648 = vadd.f32 %v4157, %v4570
      %v4649 = vadd.f32 %v4158, %v4575
      %v4650 = vadd.f32 %v4159, %v4580
      %v4651 = vadd.f32 %v4160, %v4585
      %v4652 = vadd.f32 %v4161, %v4590
      %v4653 = vadd.f32 %v4162, %v4595
      %v4654 = vadd.f32 %v4163, %v4600
      %v4655 = vadd.f32 %v4164, %v4605
      %v4656 = vadd.f32 %v4165, %v4610
      %v4657 = vadd.f32 %v4166, %v4615
      %v4658 = vadd.f32 %v4167, %v4620
      %v4659 = vadd.f32 %v4168, %v4625
      %v4660 = vld [vmem:[#allocation2 + $0x18] sm:$0xff]
      %v4661 = vld [vmem:[#allocation2 + $0x20] sm:$0xff]
      %v4662 = vld [vmem:[#allocation2 + $0x28] sm:$0xff]
      %v4663 = vld [vmem:[#allocation2 + $0x30] sm:$0xff]
      %v4664 = vld [vmem:[#allocation2 + $0x38] sm:$0xff]
      %v4665 = vld [vmem:[#allocation2 + $0x40] sm:$0xff]
      %v4666 = vld [vmem:[#allocation2 + $0x48] sm:$0xff]
      %v4667 = vld [vmem:[#allocation2 + $0x50] sm:$0xff]
      %v4668 = vld [vmem:[#allocation2 + $0x58] sm:$0xff]
      %v4669 = vld [vmem:[#allocation2 + $0x60] sm:$0xff]
      %v4670 = vld [vmem:[#allocation2 + $0x68] sm:$0xff]
      %v4671 = vld [vmem:[#allocation2 + $0x70] sm:$0xff]
      %v4672 = vld [vmem:[#allocation2 + $0x78] sm:$0xff]
      %v4673 = vld [vmem:[#allocation2 + $0x80] sm:$0xff]
      %v4674 = vld [vmem:[#allocation2 + $0x88] sm:$0xff]
      %v4675 = vld [vmem:[#allocation2 + $0x90] sm:$0xff]
      %v4676 = vld [vmem:[#allocation2 + $0x98] sm:$0xff]
      %v4677 = vld [vmem:[#allocation2 + $0xa0] sm:$0xff]
      %v4678 = vld [vmem:[#allocation2 + $0xa8] sm:$0xff]
      %v4679 = vld [vmem:[#allocation2 + $0xb0] sm:$0xff]
      %v4680 = vld [vmem:[#allocation2 + $0xb8] sm:$0xff]
      %v4681 = vld [vmem:[#allocation2 + $0xc0] sm:$0xff]
      %v4682 = vld [vmem:[#allocation2 + $0xc8] sm:$0xff]
      %v4683 = vld [vmem:[#allocation2 + $0xd0] sm:$0xff]
      %v4684 = vld [vmem:[#allocation2 + $0xd8] sm:$0xff]
      %v4685 = vld [vmem:[#allocation2 + $0xe0] sm:$0xff]
      %v4686 = vld [vmem:[#allocation2 + $0xe8] sm:$0xff]
      %v4687 = vld [vmem:[#allocation2 + $0xf0] sm:$0xff]
      %v4688 = vld [vmem:[#allocation2 + $0xf8] sm:$0xff]
      %v4689 = vld [vmem:[#allocation2 + $0x100] sm:$0xff]
      %v4690 = vld [vmem:[#allocation2 + $0x108] sm:$0xff]
      %v4691 = vld [vmem:[#allocation2 + $0x110] sm:$0xff]
      %s4692 = scalar_lea.vmem %s6, 16
      %v4693 = vld [vmem:[%s4692] sm:$0xf]
      %v4695 = vsel %vm514, %v4660, 0
      %v4698 = vsel %vm514, %v4661, 0
      %v4701 = vsel %vm514, %v4662, 0
      %v4704 = vsel %vm514, %v4663, 0
      %v4707 = vsel %vm514, %v4664, 0
      %v4710 = vsel %vm514, %v4665, 0
      %v4713 = vsel %vm514, %v4666, 0
      %v4716 = vsel %vm514, %v4667, 0
      %v4719 = vsel %vm514, %v4668, 0
      %v4722 = vsel %vm514, %v4669, 0
      %v4725 = vsel %vm514, %v4670, 0
      %v4728 = vsel %vm514, %v4671, 0
      %v4731 = vsel %vm514, %v4672, 0
      %v4734 = vsel %vm514, %v4673, 0
      %v4737 = vsel %vm514, %v4674, 0
      %v4740 = vsel %vm514, %v4675, 0
      %v4743 = vsel %vm514, %v4676, 0
      %v4746 = vsel %vm514, %v4677, 0
      %v4749 = vsel %vm514, %v4678, 0
      %v4752 = vsel %vm514, %v4679, 0
      %v4755 = vsel %vm514, %v4680, 0
      %v4758 = vsel %vm514, %v4681, 0
      %v4761 = vsel %vm514, %v4682, 0
      %v4764 = vsel %vm514, %v4683, 0
      %v4767 = vsel %vm514, %v4684, 0
      %v4770 = vsel %vm514, %v4685, 0
      %v4773 = vsel %vm514, %v4686, 0
      %v4776 = vsel %vm514, %v4687, 0
      %v4779 = vsel %vm514, %v4688, 0
      %v4782 = vsel %vm514, %v4689, 0
      %v4785 = vsel %vm514, %v4690, 0
      %v4788 = vsel %vm514, %v4691, 0
      %v4791 = vsel %vm536, %v4693, 0
      %4793 = vmatprep.subr.mxu0 0.0
      %4794 = vmatpush1.msra.mxu0 %v4791
      %4795 = vmatprep.subr.mxu0 0.0
      %4796 = vmatpush1.msra.mxu0 0.0
      %4797 = vmatprep.subr.mxu0 0.0
      %4798 = vmatpush1.msra.mxu0 0.0
      %4799 = vmatprep.subr.mxu0 0.0
      %4800 = vmatpush1.msra.mxu0 0.0
      %4801 = vmatprep.subr.mxu0 0.0
      %4802 = vmatpush1.msra.mxu0 0.0
      %4803 = vmatprep.subr.mxu0 0.0
      %4804 = vmatpush1.msra.mxu0 0.0
      %4805 = vmatprep.subr.mxu0 0.0
      %4806 = vmatpush1.msra.mxu0 0.0
      %4807 = vmatprep.subr.mxu0 0.0
      %4808 = vmatpush1.msra.mxu0 0.0
      %4809 = vmatprep.subr.mxu0 0.0
      %4810 = vmatpush1.msra.mxu0 0.0
      %4811 = vmatprep.subr.mxu0 0.0
      %4812 = vmatpush1.msra.mxu0 0.0
      %4813 = vmatprep.subr.mxu0 0.0
      %4814 = vmatpush1.msra.mxu0 0.0
      %4815 = vmatprep.subr.mxu0 0.0
      %4816 = vmatpush1.msra.mxu0 0.0
      %4817 = vmatprep.subr.mxu0 0.0
      %4818 = vmatpush1.msra.mxu0 0.0
      %4819 = vmatprep.subr.mxu0 0.0
      %4820 = vmatpush1.msra.mxu0 0.0
      %4821 = vmatprep.subr.mxu0 0.0
      %4822 = vmatpush1.msra.mxu0 0.0
      %4823 = vmatprep.subr.mxu0 0.0
      %4824 = vmatpush1.msra.mxu0 0.0
      %4825 = vmatprep.subr.mxu0 0.0
      %4826 = vmatpush1.msra.mxu0 0.0
      %4827 = vmatprep.subr.mxu0 0.0
      %4828 = vmatpush1.msra.mxu0 0.0
      %4829 = vmatprep.subr.mxu0 0.0
      %4830 = vmatpush1.msra.mxu0 0.0
      %4831 = vmatprep.subr.mxu0 0.0
      %4832 = vmatpush1.msra.mxu0 0.0
      %4833 = vmatprep.subr.mxu0 0.0
      %4834 = vmatpush1.msra.mxu0 0.0
      %4835 = vmatprep.subr.mxu0 0.0
      %4836 = vmatpush1.msra.mxu0 0.0
      %4837 = vmatprep.subr.mxu0 0.0
      %4838 = vmatpush1.msra.mxu0 0.0
      %4839 = vmatprep.subr.mxu0 0.0
      %4840 = vmatpush1.msra.mxu0 0.0
      %4841 = vmatprep.subr.mxu0 0.0
      %4842 = vmatpush1.msra.mxu0 0.0
      %4843 = vmatprep.subr.mxu0 0.0
      %4844 = vmatpush1.msra.mxu0 0.0
      %4845 = vmatprep.subr.mxu0 0.0
      %4846 = vmatpush1.msra.mxu0 0.0
      %4847 = vmatprep.subr.mxu0 0.0
      %4848 = vmatpush1.msra.mxu0 0.0
      %4849 = vmatprep.subr.mxu0 0.0
      %4850 = vmatpush1.msra.mxu0 0.0
      %4851 = vmatprep.subr.mxu0 0.0
      %4852 = vmatpush1.msra.mxu0 0.0
      %4853 = vmatprep.subr.mxu0 0.0
      %4854 = vmatpush1.msra.mxu0 0.0
      %4855 = vmatprep.subr.mxu0 0.0
      %4856 = vmatpush1.msra.mxu0 0.0
      %4857 = vmatprep.mubr.f32.mxu0 0.0
      %4858 = vmatmul.mubr.f32.gmra.mrb[0].mxu0 %v4695
      %v4859 = vpop.f32.mrb[0].mxu0
      %v4860 = vadd.f32 0.0, %v4859
      %v4861 = vpop.f32.mrb[0].mxu0
      %4862 = vmatprep.mubr.f32.mxu0 0.0
      %4863 = vmatmul.mubr.f32.gmra.mrb[0].mxu0 %v4698
      %v4864 = vpop.f32.mrb[0].mxu0
      %v4865 = vadd.f32 0.0, %v4864
      %v4866 = vpop.f32.mrb[0].mxu0
      %4867 = vmatprep.mubr.f32.mxu0 0.0
      %4868 = vmatmul.mubr.f32.gmra.mrb[0].mxu0 %v4701
      %v4869 = vpop.f32.mrb[0].mxu0
      %v4870 = vadd.f32 0.0, %v4869
      %v4871 = vpop.f32.mrb[0].mxu0
      %4872 = vmatprep.mubr.f32.mxu0 0.0
      %4873 = vmatmul.mubr.f32.gmra.mrb[0].mxu0 %v4704
      %v4874 = vpop.f32.mrb[0].mxu0
      %v4875 = vadd.f32 0.0, %v4874
      %v4876 = vpop.f32.mrb[0].mxu0
      %4877 = vmatprep.mubr.f32.mxu0 0.0
      %4878 = vmatmul.mubr.f32.gmra.mrb[0].mxu0 %v4707
      %v4879 = vpop.f32.mrb[0].mxu0
      %v4880 = vadd.f32 0.0, %v4879
      %v4881 = vpop.f32.mrb[0].mxu0
      %4882 = vmatprep.mubr.f32.mxu0 0.0
      %4883 = vmatmul.mubr.f32.gmra.mrb[0].mxu0 %v4710
      %v4884 = vpop.f32.mrb[0].mxu0
      %v4885 = vadd.f32 0.0, %v4884
      %v4886 = vpop.f32.mrb[0].mxu0
      %4887 = vmatprep.mubr.f32.mxu0 0.0
      %4888 = vmatmul.mubr.f32.gmra.mrb[0].mxu0 %v4713
      %v4889 = vpop.f32.mrb[0].mxu0
      %v4890 = vadd.f32 0.0, %v4889
      %v4891 = vpop.f32.mrb[0].mxu0
      %4892 = vmatprep.mubr.f32.mxu0 0.0
      %4893 = vmatmul.mubr.f32.gmra.mrb[0].mxu0 %v4716
      %v4894 = vpop.f32.mrb[0].mxu0
      %v4895 = vadd.f32 0.0, %v4894
      %v4896 = vpop.f32.mrb[0].mxu0
      %4897 = vmatprep.mubr.f32.mxu0 0.0
      %4898 = vmatmul.mubr.f32.gmra.mrb[0].mxu0 %v4719
      %v4899 = vpop.f32.mrb[0].mxu0
      %v4900 = vadd.f32 0.0, %v4899
      %v4901 = vpop.f32.mrb[0].mxu0
      %4902 = vmatprep.mubr.f32.mxu0 0.0
      %4903 = vmatmul.mubr.f32.gmra.mrb[0].mxu0 %v4722
      %v4904 = vpop.f32.mrb[0].mxu0
      %v4905 = vadd.f32 0.0, %v4904
      %v4906 = vpop.f32.mrb[0].mxu0
      %4907 = vmatprep.mubr.f32.mxu0 0.0
      %4908 = vmatmul.mubr.f32.gmra.mrb[0].mxu0 %v4725
      %v4909 = vpop.f32.mrb[0].mxu0
      %v4910 = vadd.f32 0.0, %v4909
      %v4911 = vpop.f32.mrb[0].mxu0
      %4912 = vmatprep.mubr.f32.mxu0 0.0
      %4913 = vmatmul.mubr.f32.gmra.mrb[0].mxu0 %v4728
      %v4914 = vpop.f32.mrb[0].mxu0
      %v4915 = vadd.f32 0.0, %v4914
      %v4916 = vpop.f32.mrb[0].mxu0
      %4917 = vmatprep.mubr.f32.mxu0 0.0
      %4918 = vmatmul.mubr.f32.gmra.mrb[0].mxu0 %v4731
      %v4919 = vpop.f32.mrb[0].mxu0
      %v4920 = vadd.f32 0.0, %v4919
      %v4921 = vpop.f32.mrb[0].mxu0
      %4922 = vmatprep.mubr.f32.mxu0 0.0
      %4923 = vmatmul.mubr.f32.gmra.mrb[0].mxu0 %v4734
      %v4924 = vpop.f32.mrb[0].mxu0
      %v4925 = vadd.f32 0.0, %v4924
      %v4926 = vpop.f32.mrb[0].mxu0
      %4927 = vmatprep.mubr.f32.mxu0 0.0
      %4928 = vmatmul.mubr.f32.gmra.mrb[0].mxu0 %v4737
      %v4929 = vpop.f32.mrb[0].mxu0
      %v4930 = vadd.f32 0.0, %v4929
      %v4931 = vpop.f32.mrb[0].mxu0
      %4932 = vmatprep.mubr.f32.mxu0 0.0
      %4933 = vmatmul.mubr.f32.gmra.mrb[0].mxu0 %v4740
      %v4934 = vpop.f32.mrb[0].mxu0
      %v4935 = vadd.f32 0.0, %v4934
      %v4936 = vpop.f32.mrb[0].mxu0
      %4937 = vmatprep.mubr.f32.mxu0 0.0
      %4938 = vmatmul.mubr.f32.gmra.mrb[0].mxu0 %v4743
      %v4939 = vpop.f32.mrb[0].mxu0
      %v4940 = vadd.f32 0.0, %v4939
      %v4941 = vpop.f32.mrb[0].mxu0
      %4942 = vmatprep.mubr.f32.mxu0 0.0
      %4943 = vmatmul.mubr.f32.gmra.mrb[0].mxu0 %v4746
      %v4944 = vpop.f32.mrb[0].mxu0
      %v4945 = vadd.f32 0.0, %v4944
      %v4946 = vpop.f32.mrb[0].mxu0
      %4947 = vmatprep.mubr.f32.mxu0 0.0
      %4948 = vmatmul.mubr.f32.gmra.mrb[0].mxu0 %v4749
      %v4949 = vpop.f32.mrb[0].mxu0
      %v4950 = vadd.f32 0.0, %v4949
      %v4951 = vpop.f32.mrb[0].mxu0
      %4952 = vmatprep.mubr.f32.mxu0 0.0
      %4953 = vmatmul.mubr.f32.gmra.mrb[0].mxu0 %v4752
      %v4954 = vpop.f32.mrb[0].mxu0
      %v4955 = vadd.f32 0.0, %v4954
      %v4956 = vpop.f32.mrb[0].mxu0
      %4957 = vmatprep.mubr.f32.mxu0 0.0
      %4958 = vmatmul.mubr.f32.gmra.mrb[0].mxu0 %v4755
      %v4959 = vpop.f32.mrb[0].mxu0
      %v4960 = vadd.f32 0.0, %v4959
      %v4961 = vpop.f32.mrb[0].mxu0
      %4962 = vmatprep.mubr.f32.mxu0 0.0
      %4963 = vmatmul.mubr.f32.gmra.mrb[0].mxu0 %v4758
      %v4964 = vpop.f32.mrb[0].mxu0
      %v4965 = vadd.f32 0.0, %v4964
      %v4966 = vpop.f32.mrb[0].mxu0
      %4967 = vmatprep.mubr.f32.mxu0 0.0
      %4968 = vmatmul.mubr.f32.gmra.mrb[0].mxu0 %v4761
      %v4969 = vpop.f32.mrb[0].mxu0
      %v4970 = vadd.f32 0.0, %v4969
      %v4971 = vpop.f32.mrb[0].mxu0
      %4972 = vmatprep.mubr.f32.mxu0 0.0
      %4973 = vmatmul.mubr.f32.gmra.mrb[0].mxu0 %v4764
      %v4974 = vpop.f32.mrb[0].mxu0
      %v4975 = vadd.f32 0.0, %v4974
      %v4976 = vpop.f32.mrb[0].mxu0
      %4977 = vmatprep.mubr.f32.mxu0 0.0
      %4978 = vmatmul.mubr.f32.gmra.mrb[0].mxu0 %v4767
      %v4979 = vpop.f32.mrb[0].mxu0
      %v4980 = vadd.f32 0.0, %v4979
      %v4981 = vpop.f32.mrb[0].mxu0
      %4982 = vmatprep.mubr.f32.mxu0 0.0
      %4983 = vmatmul.mubr.f32.gmra.mrb[0].mxu0 %v4770
      %v4984 = vpop.f32.mrb[0].mxu0
      %v4985 = vadd.f32 0.0, %v4984
      %v4986 = vpop.f32.mrb[0].mxu0
      %4987 = vmatprep.mubr.f32.mxu0 0.0
      %4988 = vmatmul.mubr.f32.gmra.mrb[0].mxu0 %v4773
      %v4989 = vpop.f32.mrb[0].mxu0
      %v4990 = vadd.f32 0.0, %v4989
      %v4991 = vpop.f32.mrb[0].mxu0
      %4992 = vmatprep.mubr.f32.mxu0 0.0
      %4993 = vmatmul.mubr.f32.gmra.mrb[0].mxu0 %v4776
      %v4994 = vpop.f32.mrb[0].mxu0
      %v4995 = vadd.f32 0.0, %v4994
      %v4996 = vpop.f32.mrb[0].mxu0
      %4997 = vmatprep.mubr.f32.mxu0 0.0
      %4998 = vmatmul.mubr.f32.gmra.mrb[0].mxu0 %v4779
      %v4999 = vpop.f32.mrb[0].mxu0
      %v5000 = vadd.f32 0.0, %v4999
      %v5001 = vpop.f32.mrb[0].mxu0
      %5002 = vmatprep.mubr.f32.mxu0 0.0
      %5003 = vmatmul.mubr.f32.gmra.mrb[0].mxu0 %v4782
      %v5004 = vpop.f32.mrb[0].mxu0
      %v5005 = vadd.f32 0.0, %v5004
      %v5006 = vpop.f32.mrb[0].mxu0
      %5007 = vmatprep.mubr.f32.mxu0 0.0
      %5008 = vmatmul.mubr.f32.gmra.mrb[0].mxu0 %v4785
      %v5009 = vpop.f32.mrb[0].mxu0
      %v5010 = vadd.f32 0.0, %v5009
      %v5011 = vpop.f32.mrb[0].mxu0
      %5012 = vmatprep.mubr.f32.mxu0 0.0
      %5013 = vmatmul.mubr.f32.gmra.mrb[0].mxu0 %v4788
      %v5014 = vpop.f32.mrb[0].mxu0
      %v5015 = vadd.f32 0.0, %v5014
      %v5016 = vpop.f32.mrb[0].mxu0
      %5017 = vdwg.mxu0
      %v5018 = vadd.f32 %v4628, %v4860
      %v5019 = vadd.f32 %v4629, %v4865
      %v5020 = vadd.f32 %v4630, %v4870
      %v5021 = vadd.f32 %v4631, %v4875
      %v5022 = vadd.f32 %v4632, %v4880
      %v5023 = vadd.f32 %v4633, %v4885
      %v5024 = vadd.f32 %v4634, %v4890
      %v5025 = vadd.f32 %v4635, %v4895
      %v5026 = vadd.f32 %v4636, %v4900
      %v5027 = vadd.f32 %v4637, %v4905
      %v5028 = vadd.f32 %v4638, %v4910
      %v5029 = vadd.f32 %v4639, %v4915
      %v5030 = vadd.f32 %v4640, %v4920
      %v5031 = vadd.f32 %v4641, %v4925
      %v5032 = vadd.f32 %v4642, %v4930
      %v5033 = vadd.f32 %v4643, %v4935
      %v5034 = vadd.f32 %v4644, %v4940
      %v5035 = vadd.f32 %v4645, %v4945
      %v5036 = vadd.f32 %v4646, %v4950
      %v5037 = vadd.f32 %v4647, %v4955
      %v5038 = vadd.f32 %v4648, %v4960
      %v5039 = vadd.f32 %v4649, %v4965
      %v5040 = vadd.f32 %v4650, %v4970
      %v5041 = vadd.f32 %v4651, %v4975
      %v5042 = vadd.f32 %v4652, %v4980
      %v5043 = vadd.f32 %v4653, %v4985
      %v5044 = vadd.f32 %v4654, %v4990
      %v5045 = vadd.f32 %v4655, %v4995
      %v5046 = vadd.f32 %v4656, %v5000
      %v5047 = vadd.f32 %v4657, %v5005
      %v5048 = vadd.f32 %v4658, %v5010
      %v5049 = vadd.f32 %v4659, %v5015
      %s5050 = scalar_lea.vmem %s7, 128
      %v5051 = vld [vmem:[%s5050] sm:$0xff]
      %v5052 = vld [vmem:[%s5050 + $0x8] sm:$0xff]
      %v5053 = vld [vmem:[%s5050 + $0x10] sm:$0xff]
      %v5054 = vld [vmem:[%s5050 + $0x18] sm:$0xff]
      %5055 = vmatprep.subr.mxu0 0.0
      %5056 = vmatpush1.msra.mxu0 %v5051
      %5057 = vmatprep.subr.mxu0 0.0
      %5058 = vmatpush1.msra.mxu0 %v5052
      %5059 = vmatprep.subr.mxu0 0.0
      %5060 = vmatpush1.msra.mxu0 %v5053
      %5061 = vmatprep.subr.mxu0 0.0
      %5062 = vmatpush1.msra.mxu0 %v5054
      %5063 = vmatprep.subr.mxu0 0.0
      %5064 = vmatpush1.msra.mxu0 0.0
      %5065 = vmatprep.subr.mxu0 0.0
      %5066 = vmatpush1.msra.mxu0 0.0
      %5067 = vmatprep.subr.mxu0 0.0
      %5068 = vmatpush1.msra.mxu0 0.0
      %5069 = vmatprep.subr.mxu0 0.0
      %5070 = vmatpush1.msra.mxu0 0.0
      %5071 = vmatprep.subr.mxu0 0.0
      %5072 = vmatpush1.msra.mxu0 0.0
      %5073 = vmatprep.subr.mxu0 0.0
      %5074 = vmatpush1.msra.mxu0 0.0
      %5075 = vmatprep.subr.mxu0 0.0
      %5076 = vmatpush1.msra.mxu0 0.0
      %5077 = vmatprep.subr.mxu0 0.0
      %5078 = vmatpush1.msra.mxu0 0.0
      %5079 = vmatprep.subr.mxu0 0.0
      %5080 = vmatpush1.msra.mxu0 0.0
      %5081 = vmatprep.subr.mxu0 0.0
      %5082 = vmatpush1.msra.mxu0 0.0
      %5083 = vmatprep.subr.mxu0 0.0
      %5084 = vmatpush1.msra.mxu0 0.0
      %5085 = vmatprep.subr.mxu0 0.0
      %5086 = vmatpush1.msra.mxu0 0.0
      %5087 = vmatprep.subr.mxu0 0.0
      %5088 = vmatpush1.msra.mxu0 0.0
      %5089 = vmatprep.subr.mxu0 0.0
      %5090 = vmatpush1.msra.mxu0 0.0
      %5091 = vmatprep.subr.mxu0 0.0
      %5092 = vmatpush1.msra.mxu0 0.0
      %5093 = vmatprep.subr.mxu0 0.0
      %5094 = vmatpush1.msra.mxu0 0.0
      %5095 = vmatprep.subr.mxu0 0.0
      %5096 = vmatpush1.msra.mxu0 0.0
      %5097 = vmatprep.subr.mxu0 0.0
      %5098 = vmatpush1.msra.mxu0 0.0
      %5099 = vmatprep.subr.mxu0 0.0
      %5100 = vmatpush1.msra.mxu0 0.0
      %5101 = vmatprep.subr.mxu0 0.0
      %5102 = vmatpush1.msra.mxu0 0.0
      %5103 = vmatprep.subr.mxu0 0.0
      %5104 = vmatpush1.msra.mxu0 0.0
      %5105 = vmatprep.subr.mxu0 0.0
      %5106 = vmatpush1.msra.mxu0 0.0
      %5107 = vmatprep.subr.mxu0 0.0
      %5108 = vmatpush1.msra.mxu0 0.0
      %5109 = vmatprep.subr.mxu0 0.0
      %5110 = vmatpush1.msra.mxu0 0.0
      %5111 = vmatprep.subr.mxu0 0.0
      %5112 = vmatpush1.msra.mxu0 0.0
      %5113 = vmatprep.subr.mxu0 0.0
      %5114 = vmatpush1.msra.mxu0 0.0
      %5115 = vmatprep.subr.mxu0 0.0
      %5116 = vmatpush1.msra.mxu0 0.0
      %5117 = vmatprep.subr.mxu0 0.0
      %5118 = vmatpush1.msra.mxu0 0.0
      %5119 = vmatprep.mubr.f32.mxu0 0.0
      %5120 = vmatmul.mubr.f32.gmra.mrb[0].mxu0 %v962
      %v5121 = vpop.f32.mrb[0].mxu0
      %v5122 = vadd.f32 0.0, %v5121
      %v5123 = vpop.f32.mrb[0].mxu0
      %5124 = vmatprep.mubr.f32.mxu0 0.0
      %5125 = vmatmul.mubr.f32.gmra.mrb[0].mxu0 %v965
      %v5126 = vpop.f32.mrb[0].mxu0
      %v5127 = vadd.f32 0.0, %v5126
      %v5128 = vpop.f32.mrb[0].mxu0
      %5129 = vmatprep.mubr.f32.mxu0 0.0
      %5130 = vmatmul.mubr.f32.gmra.mrb[0].mxu0 %v968
      %v5131 = vpop.f32.mrb[0].mxu0
      %v5132 = vadd.f32 0.0, %v5131
      %v5133 = vpop.f32.mrb[0].mxu0
      %5134 = vmatprep.mubr.f32.mxu0 0.0
      %5135 = vmatmul.mubr.f32.gmra.mrb[0].mxu0 %v971
      %v5136 = vpop.f32.mrb[0].mxu0
      %v5137 = vadd.f32 0.0, %v5136
      %v5138 = vpop.f32.mrb[0].mxu0
      %5139 = vmatprep.mubr.f32.mxu0 0.0
      %5140 = vmatmul.mubr.f32.gmra.mrb[0].mxu0 %v974
      %v5141 = vpop.f32.mrb[0].mxu0
      %v5142 = vadd.f32 0.0, %v5141
      %v5143 = vpop.f32.mrb[0].mxu0
      %5144 = vmatprep.mubr.f32.mxu0 0.0
      %5145 = vmatmul.mubr.f32.gmra.mrb[0].mxu0 %v977
      %v5146 = vpop.f32.mrb[0].mxu0
      %v5147 = vadd.f32 0.0, %v5146
      %v5148 = vpop.f32.mrb[0].mxu0
      %5149 = vmatprep.mubr.f32.mxu0 0.0
      %5150 = vmatmul.mubr.f32.gmra.mrb[0].mxu0 %v980
      %v5151 = vpop.f32.mrb[0].mxu0
      %v5152 = vadd.f32 0.0, %v5151
      %v5153 = vpop.f32.mrb[0].mxu0
      %5154 = vdwg.mxu0
      %s5155 = scalar_lea.vmem %s5, 1024
      %v5156 = vld [vmem:[%s5155] sm:$0xff]
      %v5157 = vld [vmem:[%s5155 + $0x8] sm:$0xff]
      %v5158 = vld [vmem:[%s5155 + $0x10] sm:$0xff]
      %v5159 = vld [vmem:[%s5155 + $0x18] sm:$0xff]
      %v5160 = vld [vmem:[%s5155 + $0x20] sm:$0xff]
      %v5161 = vld [vmem:[%s5155 + $0x28] sm:$0xff]
      %v5162 = vld [vmem:[%s5155 + $0x30] sm:$0xff]
      %v5163 = vld [vmem:[%s5155 + $0x38] sm:$0xff]
      %v5164 = vld [vmem:[%s5155 + $0x40] sm:$0xff]
      %v5165 = vld [vmem:[%s5155 + $0x48] sm:$0xff]
      %v5166 = vld [vmem:[%s5155 + $0x50] sm:$0xff]
      %v5167 = vld [vmem:[%s5155 + $0x58] sm:$0xff]
      %v5168 = vld [vmem:[%s5155 + $0x60] sm:$0xff]
      %v5169 = vld [vmem:[%s5155 + $0x68] sm:$0xff]
      %v5170 = vld [vmem:[%s5155 + $0x70] sm:$0xff]
      %v5171 = vld [vmem:[%s5155 + $0x78] sm:$0xff]
      %v5172 = vld [vmem:[%s5155 + $0x80] sm:$0xff]
      %v5173 = vld [vmem:[%s5155 + $0x88] sm:$0xff]
      %v5174 = vld [vmem:[%s5155 + $0x90] sm:$0xff]
      %v5175 = vld [vmem:[%s5155 + $0x98] sm:$0xff]
      %v5176 = vld [vmem:[%s5155 + $0xa0] sm:$0xff]
      %v5177 = vld [vmem:[%s5155 + $0xa8] sm:$0xff]
      %v5178 = vld [vmem:[%s5155 + $0xb0] sm:$0xff]
      %v5179 = vld [vmem:[%s5155 + $0xb8] sm:$0xff]
      %v5180 = vld [vmem:[%s5155 + $0xc0] sm:$0xff]
      %v5181 = vld [vmem:[%s5155 + $0xc8] sm:$0xff]
      %v5182 = vld [vmem:[%s5155 + $0xd0] sm:$0xff]
      %v5183 = vld [vmem:[%s5155 + $0xd8] sm:$0xff]
      %v5184 = vld [vmem:[%s5155 + $0xe0] sm:$0xff]
      %v5185 = vld [vmem:[%s5155 + $0xe8] sm:$0xff]
      %v5186 = vld [vmem:[%s5155 + $0xf0] sm:$0xff]
      %v5187 = vld [vmem:[%s5155 + $0xf8] sm:$0xff]
      %v5189 = vsel %vm1114, %v5156, 0
      %v5192 = vsel %vm1114, %v5157, 0
      %v5195 = vsel %vm1114, %v5158, 0
      %v5198 = vsel %vm1114, %v5159, 0
      %v5201 = vsel %vm1114, %v5160, 0
      %v5204 = vsel %vm1114, %v5161, 0
      %v5207 = vsel %vm1114, %v5162, 0
      %v5210 = vsel %vm1114, %v5163, 0
      %v5213 = vsel %vm1114, %v5164, 0
      %v5216 = vsel %vm1114, %v5165, 0
      %v5219 = vsel %vm1114, %v5166, 0
      %v5222 = vsel %vm1114, %v5167, 0
      %v5225 = vsel %vm1114, %v5168, 0
      %v5228 = vsel %vm1114, %v5169, 0
      %v5231 = vsel %vm1114, %v5170, 0
      %v5234 = vsel %vm1114, %v5171, 0
      %v5237 = vsel %vm1114, %v5172, 0
      %v5240 = vsel %vm1114, %v5173, 0
      %v5243 = vsel %vm1114, %v5174, 0
      %v5246 = vsel %vm1114, %v5175, 0
      %v5249 = vsel %vm1114, %v5176, 0
      %v5252 = vsel %vm1114, %v5177, 0
      %v5255 = vsel %vm1114, %v5178, 0
      %v5258 = vsel %vm1114, %v5179, 0
      %v5261 = vsel %vm1114, %v5180, 0
      %v5264 = vsel %vm1114, %v5181, 0
      %v5267 = vsel %vm1114, %v5182, 0
      %v5270 = vsel %vm1114, %v5183, 0
      %v5273 = vsel %vm1114, %v5184, 0
      %v5276 = vsel %vm1114, %v5185, 0
      %v5279 = vsel %vm1114, %v5186, 0
      %v5282 = vsel %vm1114, %v5187, 0
      %5284 = vmatprep.subr.mxu0 0.0
      %5285 = vmatpush1.msra.mxu0 %v5122
      %5286 = vmatprep.subr.mxu0 0.0
      %5287 = vmatpush1.msra.mxu0 %v5127
      %5288 = vmatprep.subr.mxu0 0.0
      %5289 = vmatpush1.msra.mxu0 %v5132
      %5290 = vmatprep.subr.mxu0 0.0
      %5291 = vmatpush1.msra.mxu0 %v5137
      %5292 = vmatprep.subr.mxu0 0.0
      %5293 = vmatpush1.msra.mxu0 %v5142
      %5294 = vmatprep.subr.mxu0 0.0
      %5295 = vmatpush1.msra.mxu0 %v5147
      %5296 = vmatprep.subr.mxu0 0.0
      %5297 = vmatpush1.msra.mxu0 %v5152
      %5298 = vmatprep.subr.mxu0 0.0
      %5299 = vmatpush1.msra.mxu0 0.0
      %5300 = vmatprep.subr.mxu0 0.0
      %5301 = vmatpush1.msra.mxu0 0.0
      %5302 = vmatprep.subr.mxu0 0.0
      %5303 = vmatpush1.msra.mxu0 0.0
      %5304 = vmatprep.subr.mxu0 0.0
      %5305 = vmatpush1.msra.mxu0 0.0
      %5306 = vmatprep.subr.mxu0 0.0
      %5307 = vmatpush1.msra.mxu0 0.0
      %5308 = vmatprep.subr.mxu0 0.0
      %5309 = vmatpush1.msra.mxu0 0.0
      %5310 = vmatprep.subr.mxu0 0.0
      %5311 = vmatpush1.msra.mxu0 0.0
      %5312 = vmatprep.subr.mxu0 0.0
      %5313 = vmatpush1.msra.mxu0 0.0
      %5314 = vmatprep.subr.mxu0 0.0
      %5315 = vmatpush1.msra.mxu0 0.0
      %5316 = vmatprep.subr.mxu0 0.0
      %5317 = vmatpush1.msra.mxu0 0.0
      %5318 = vmatprep.subr.mxu0 0.0
      %5319 = vmatpush1.msra.mxu0 0.0
      %5320 = vmatprep.subr.mxu0 0.0
      %5321 = vmatpush1.msra.mxu0 0.0
      %5322 = vmatprep.subr.mxu0 0.0
      %5323 = vmatpush1.msra.mxu0 0.0
      %5324 = vmatprep.subr.mxu0 0.0
      %5325 = vmatpush1.msra.mxu0 0.0
      %5326 = vmatprep.subr.mxu0 0.0
      %5327 = vmatpush1.msra.mxu0 0.0
      %5328 = vmatprep.subr.mxu0 0.0
      %5329 = vmatpush1.msra.mxu0 0.0
      %5330 = vmatprep.subr.mxu0 0.0
      %5331 = vmatpush1.msra.mxu0 0.0
      %5332 = vmatprep.subr.mxu0 0.0
      %5333 = vmatpush1.msra.mxu0 0.0
      %5334 = vmatprep.subr.mxu0 0.0
      %5335 = vmatpush1.msra.mxu0 0.0
      %5336 = vmatprep.subr.mxu0 0.0
      %5337 = vmatpush1.msra.mxu0 0.0
      %5338 = vmatprep.subr.mxu0 0.0
      %5339 = vmatpush1.msra.mxu0 0.0
      %5340 = vmatprep.subr.mxu0 0.0
      %5341 = vmatpush1.msra.mxu0 0.0
      %5342 = vmatprep.subr.mxu0 0.0
      %5343 = vmatpush1.msra.mxu0 0.0
      %5344 = vmatprep.subr.mxu0 0.0
      %5345 = vmatpush1.msra.mxu0 0.0
      %5346 = vmatprep.subr.mxu0 0.0
      %5347 = vmatpush1.msra.mxu0 0.0
      %5348 = vmatprep.mubr.f32.mxu0 0.0
      %5349 = vmatmul.mubr.f32.gmra.mrb[0].mxu0 %v5189
      %v5350 = vpop.f32.mrb[0].mxu0
      %v5351 = vadd.f32 0.0, %v5350
      %v5352 = vpop.f32.mrb[0].mxu0
      %5353 = vmatprep.mubr.f32.mxu0 0.0
      %5354 = vmatmul.mubr.f32.gmra.mrb[0].mxu0 %v5192
      %v5355 = vpop.f32.mrb[0].mxu0
      %v5356 = vadd.f32 0.0, %v5355
      %v5357 = vpop.f32.mrb[0].mxu0
      %5358 = vmatprep.mubr.f32.mxu0 0.0
      %5359 = vmatmul.mubr.f32.gmra.mrb[0].mxu0 %v5195
      %v5360 = vpop.f32.mrb[0].mxu0
      %v5361 = vadd.f32 0.0, %v5360
      %v5362 = vpop.f32.mrb[0].mxu0
      %5363 = vmatprep.mubr.f32.mxu0 0.0
      %5364 = vmatmul.mubr.f32.gmra.mrb[0].mxu0 %v5198
      %v5365 = vpop.f32.mrb[0].mxu0
      %v5366 = vadd.f32 0.0, %v5365
      %v5367 = vpop.f32.mrb[0].mxu0
      %5368 = vmatprep.mubr.f32.mxu0 0.0
      %5369 = vmatmul.mubr.f32.gmra.mrb[0].mxu0 %v5201
      %v5370 = vpop.f32.mrb[0].mxu0
      %v5371 = vadd.f32 0.0, %v5370
      %v5372 = vpop.f32.mrb[0].mxu0
      %5373 = vmatprep.mubr.f32.mxu0 0.0
      %5374 = vmatmul.mubr.f32.gmra.mrb[0].mxu0 %v5204
      %v5375 = vpop.f32.mrb[0].mxu0
      %v5376 = vadd.f32 0.0, %v5375
      %v5377 = vpop.f32.mrb[0].mxu0
      %5378 = vmatprep.mubr.f32.mxu0 0.0
      %5379 = vmatmul.mubr.f32.gmra.mrb[0].mxu0 %v5207
      %v5380 = vpop.f32.mrb[0].mxu0
      %v5381 = vadd.f32 0.0, %v5380
      %v5382 = vpop.f32.mrb[0].mxu0
      %5383 = vmatprep.mubr.f32.mxu0 0.0
      %5384 = vmatmul.mubr.f32.gmra.mrb[0].mxu0 %v5210
      %v5385 = vpop.f32.mrb[0].mxu0
      %v5386 = vadd.f32 0.0, %v5385
      %v5387 = vpop.f32.mrb[0].mxu0
      %5388 = vmatprep.mubr.f32.mxu0 0.0
      %5389 = vmatmul.mubr.f32.gmra.mrb[0].mxu0 %v5213
      %v5390 = vpop.f32.mrb[0].mxu0
      %v5391 = vadd.f32 0.0, %v5390
      %v5392 = vpop.f32.mrb[0].mxu0
      %5393 = vmatprep.mubr.f32.mxu0 0.0
      %5394 = vmatmul.mubr.f32.gmra.mrb[0].mxu0 %v5216
      %v5395 = vpop.f32.mrb[0].mxu0
      %v5396 = vadd.f32 0.0, %v5395
      %v5397 = vpop.f32.mrb[0].mxu0
      %5398 = vmatprep.mubr.f32.mxu0 0.0
      %5399 = vmatmul.mubr.f32.gmra.mrb[0].mxu0 %v5219
      %v5400 = vpop.f32.mrb[0].mxu0
      %v5401 = vadd.f32 0.0, %v5400
      %v5402 = vpop.f32.mrb[0].mxu0
      %5403 = vmatprep.mubr.f32.mxu0 0.0
      %5404 = vmatmul.mubr.f32.gmra.mrb[0].mxu0 %v5222
      %v5405 = vpop.f32.mrb[0].mxu0
      %v5406 = vadd.f32 0.0, %v5405
      %v5407 = vpop.f32.mrb[0].mxu0
      %5408 = vmatprep.mubr.f32.mxu0 0.0
      %5409 = vmatmul.mubr.f32.gmra.mrb[0].mxu0 %v5225
      %v5410 = vpop.f32.mrb[0].mxu0
      %v5411 = vadd.f32 0.0, %v5410
      %v5412 = vpop.f32.mrb[0].mxu0
      %5413 = vmatprep.mubr.f32.mxu0 0.0
      %5414 = vmatmul.mubr.f32.gmra.mrb[0].mxu0 %v5228
      %v5415 = vpop.f32.mrb[0].mxu0
      %v5416 = vadd.f32 0.0, %v5415
      %v5417 = vpop.f32.mrb[0].mxu0
      %5418 = vmatprep.mubr.f32.mxu0 0.0
      %5419 = vmatmul.mubr.f32.gmra.mrb[0].mxu0 %v5231
      %v5420 = vpop.f32.mrb[0].mxu0
      %v5421 = vadd.f32 0.0, %v5420
      %v5422 = vpop.f32.mrb[0].mxu0
      %5423 = vmatprep.mubr.f32.mxu0 0.0
      %5424 = vmatmul.mubr.f32.gmra.mrb[0].mxu0 %v5234
      %v5425 = vpop.f32.mrb[0].mxu0
      %v5426 = vadd.f32 0.0, %v5425
      %v5427 = vpop.f32.mrb[0].mxu0
      %5428 = vmatprep.mubr.f32.mxu0 0.0
      %5429 = vmatmul.mubr.f32.gmra.mrb[0].mxu0 %v5237
      %v5430 = vpop.f32.mrb[0].mxu0
      %v5431 = vadd.f32 0.0, %v5430
      %v5432 = vpop.f32.mrb[0].mxu0
      %5433 = vmatprep.mubr.f32.mxu0 0.0
      %5434 = vmatmul.mubr.f32.gmra.mrb[0].mxu0 %v5240
      %v5435 = vpop.f32.mrb[0].mxu0
      %v5436 = vadd.f32 0.0, %v5435
      %v5437 = vpop.f32.mrb[0].mxu0
      %5438 = vmatprep.mubr.f32.mxu0 0.0
      %5439 = vmatmul.mubr.f32.gmra.mrb[0].mxu0 %v5243
      %v5440 = vpop.f32.mrb[0].mxu0
      %v5441 = vadd.f32 0.0, %v5440
      %v5442 = vpop.f32.mrb[0].mxu0
      %5443 = vmatprep.mubr.f32.mxu0 0.0
      %5444 = vmatmul.mubr.f32.gmra.mrb[0].mxu0 %v5246
      %v5445 = vpop.f32.mrb[0].mxu0
      %v5446 = vadd.f32 0.0, %v5445
      %v5447 = vpop.f32.mrb[0].mxu0
      %5448 = vmatprep.mubr.f32.mxu0 0.0
      %5449 = vmatmul.mubr.f32.gmra.mrb[0].mxu0 %v5249
      %v5450 = vpop.f32.mrb[0].mxu0
      %v5451 = vadd.f32 0.0, %v5450
      %v5452 = vpop.f32.mrb[0].mxu0
      %5453 = vmatprep.mubr.f32.mxu0 0.0
      %5454 = vmatmul.mubr.f32.gmra.mrb[0].mxu0 %v5252
      %v5455 = vpop.f32.mrb[0].mxu0
      %v5456 = vadd.f32 0.0, %v5455
      %v5457 = vpop.f32.mrb[0].mxu0
      %5458 = vmatprep.mubr.f32.mxu0 0.0
      %5459 = vmatmul.mubr.f32.gmra.mrb[0].mxu0 %v5255
      %v5460 = vpop.f32.mrb[0].mxu0
      %v5461 = vadd.f32 0.0, %v5460
      %v5462 = vpop.f32.mrb[0].mxu0
      %5463 = vmatprep.mubr.f32.mxu0 0.0
      %5464 = vmatmul.mubr.f32.gmra.mrb[0].mxu0 %v5258
      %v5465 = vpop.f32.mrb[0].mxu0
      %v5466 = vadd.f32 0.0, %v5465
      %v5467 = vpop.f32.mrb[0].mxu0
      %5468 = vmatprep.mubr.f32.mxu0 0.0
      %5469 = vmatmul.mubr.f32.gmra.mrb[0].mxu0 %v5261
      %v5470 = vpop.f32.mrb[0].mxu0
      %v5471 = vadd.f32 0.0, %v5470
      %v5472 = vpop.f32.mrb[0].mxu0
      %5473 = vmatprep.mubr.f32.mxu0 0.0
      %5474 = vmatmul.mubr.f32.gmra.mrb[0].mxu0 %v5264
      %v5475 = vpop.f32.mrb[0].mxu0
      %v5476 = vadd.f32 0.0, %v5475
      %v5477 = vpop.f32.mrb[0].mxu0
      %5478 = vmatprep.mubr.f32.mxu0 0.0
      %5479 = vmatmul.mubr.f32.gmra.mrb[0].mxu0 %v5267
      %v5480 = vpop.f32.mrb[0].mxu0
      %v5481 = vadd.f32 0.0, %v5480
      %v5482 = vpop.f32.mrb[0].mxu0
      %5483 = vmatprep.mubr.f32.mxu0 0.0
      %5484 = vmatmul.mubr.f32.gmra.mrb[0].mxu0 %v5270
      %v5485 = vpop.f32.mrb[0].mxu0
      %v5486 = vadd.f32 0.0, %v5485
      %v5487 = vpop.f32.mrb[0].mxu0
      %5488 = vmatprep.mubr.f32.mxu0 0.0
      %5489 = vmatmul.mubr.f32.gmra.mrb[0].mxu0 %v5273
      %v5490 = vpop.f32.mrb[0].mxu0
      %v5491 = vadd.f32 0.0, %v5490
      %v5492 = vpop.f32.mrb[0].mxu0
      %5493 = vmatprep.mubr.f32.mxu0 0.0
      %5494 = vmatmul.mubr.f32.gmra.mrb[0].mxu0 %v5276
      %v5495 = vpop.f32.mrb[0].mxu0
      %v5496 = vadd.f32 0.0, %v5495
      %v5497 = vpop.f32.mrb[0].mxu0
      %5498 = vmatprep.mubr.f32.mxu0 0.0
      %5499 = vmatmul.mubr.f32.gmra.mrb[0].mxu0 %v5279
      %v5500 = vpop.f32.mrb[0].mxu0
      %v5501 = vadd.f32 0.0, %v5500
      %v5502 = vpop.f32.mrb[0].mxu0
      %5503 = vmatprep.mubr.f32.mxu0 0.0
      %5504 = vmatmul.mubr.f32.gmra.mrb[0].mxu0 %v5282
      %v5505 = vpop.f32.mrb[0].mxu0
      %v5506 = vadd.f32 0.0, %v5505
      %v5507 = vpop.f32.mrb[0].mxu0
      %5508 = vdwg.mxu0
      %v5509 = vadd.f32 %v5018, %v5351
      %v5510 = vadd.f32 %v5019, %v5356
      %v5511 = vadd.f32 %v5020, %v5361
      %v5512 = vadd.f32 %v5021, %v5366
      %v5513 = vadd.f32 %v5022, %v5371
      %v5514 = vadd.f32 %v5023, %v5376
      %v5515 = vadd.f32 %v5024, %v5381
      %v5516 = vadd.f32 %v5025, %v5386
      %v5517 = vadd.f32 %v5026, %v5391
      %v5518 = vadd.f32 %v5027, %v5396
      %v5519 = vadd.f32 %v5028, %v5401
      %v5520 = vadd.f32 %v5029, %v5406
      %v5521 = vadd.f32 %v5030, %v5411
      %v5522 = vadd.f32 %v5031, %v5416
      %v5523 = vadd.f32 %v5032, %v5421
      %v5524 = vadd.f32 %v5033, %v5426
      %v5525 = vadd.f32 %v5034, %v5431
      %v5526 = vadd.f32 %v5035, %v5436
      %v5527 = vadd.f32 %v5036, %v5441
      %v5528 = vadd.f32 %v5037, %v5446
      %v5529 = vadd.f32 %v5038, %v5451
      %v5530 = vadd.f32 %v5039, %v5456
      %v5531 = vadd.f32 %v5040, %v5461
      %v5532 = vadd.f32 %v5041, %v5466
      %v5533 = vadd.f32 %v5042, %v5471
      %v5534 = vadd.f32 %v5043, %v5476
      %v5535 = vadd.f32 %v5044, %v5481
      %v5536 = vadd.f32 %v5045, %v5486
      %v5537 = vadd.f32 %v5046, %v5491
      %v5538 = vadd.f32 %v5047, %v5496
      %v5539 = vadd.f32 %v5048, %v5501
      %v5540 = vadd.f32 %v5049, %v5506
      %v5541 = vld [vmem:[#allocation2 + $0x19] sm:$0xff]
      %v5542 = vld [vmem:[#allocation2 + $0x21] sm:$0xff]
      %v5543 = vld [vmem:[#allocation2 + $0x29] sm:$0xff]
      %v5544 = vld [vmem:[#allocation2 + $0x31] sm:$0xff]
      %v5545 = vld [vmem:[#allocation2 + $0x39] sm:$0xff]
      %v5546 = vld [vmem:[#allocation2 + $0x41] sm:$0xff]
      %v5547 = vld [vmem:[#allocation2 + $0x49] sm:$0xff]
      %v5548 = vld [vmem:[#allocation2 + $0x51] sm:$0xff]
      %v5549 = vld [vmem:[#allocation2 + $0x59] sm:$0xff]
      %v5550 = vld [vmem:[#allocation2 + $0x61] sm:$0xff]
      %v5551 = vld [vmem:[#allocation2 + $0x69] sm:$0xff]
      %v5552 = vld [vmem:[#allocation2 + $0x71] sm:$0xff]
      %v5553 = vld [vmem:[#allocation2 + $0x79] sm:$0xff]
      %v5554 = vld [vmem:[#allocation2 + $0x81] sm:$0xff]
      %v5555 = vld [vmem:[#allocation2 + $0x89] sm:$0xff]
      %v5556 = vld [vmem:[#allocation2 + $0x91] sm:$0xff]
      %v5557 = vld [vmem:[#allocation2 + $0x99] sm:$0xff]
      %v5558 = vld [vmem:[#allocation2 + $0xa1] sm:$0xff]
      %v5559 = vld [vmem:[#allocation2 + $0xa9] sm:$0xff]
      %v5560 = vld [vmem:[#allocation2 + $0xb1] sm:$0xff]
      %v5561 = vld [vmem:[#allocation2 + $0xb9] sm:$0xff]
      %v5562 = vld [vmem:[#allocation2 + $0xc1] sm:$0xff]
      %v5563 = vld [vmem:[#allocation2 + $0xc9] sm:$0xff]
      %v5564 = vld [vmem:[#allocation2 + $0xd1] sm:$0xff]
      %v5565 = vld [vmem:[#allocation2 + $0xd9] sm:$0xff]
      %v5566 = vld [vmem:[#allocation2 + $0xe1] sm:$0xff]
      %v5567 = vld [vmem:[#allocation2 + $0xe9] sm:$0xff]
      %v5568 = vld [vmem:[#allocation2 + $0xf1] sm:$0xff]
      %v5569 = vld [vmem:[#allocation2 + $0xf9] sm:$0xff]
      %v5570 = vld [vmem:[#allocation2 + $0x101] sm:$0xff]
      %v5571 = vld [vmem:[#allocation2 + $0x109] sm:$0xff]
      %v5572 = vld [vmem:[#allocation2 + $0x111] sm:$0xff]
      %v5573 = vmul.f32 %v5541, %v2709
      %v5574 = vmul.f32 %v5542, %v2714
      %v5575 = vmul.f32 %v5543, %v2719
      %v5576 = vmul.f32 %v5544, %v2724
      %v5577 = vmul.f32 %v5545, %v2729
      %v5578 = vmul.f32 %v5546, %v2734
      %v5579 = vmul.f32 %v5547, %v2739
      %v5580 = vmul.f32 %v5548, %v2744
      %v5581 = vmul.f32 %v5549, %v2749
      %v5582 = vmul.f32 %v5550, %v2754
      %v5583 = vmul.f32 %v5551, %v2759
      %v5584 = vmul.f32 %v5552, %v2764
      %v5585 = vmul.f32 %v5553, %v2769
      %v5586 = vmul.f32 %v5554, %v2774
      %v5587 = vmul.f32 %v5555, %v2779
      %v5588 = vmul.f32 %v5556, %v2784
      %v5589 = vmul.f32 %v5557, %v2789
      %v5590 = vmul.f32 %v5558, %v2794
      %v5591 = vmul.f32 %v5559, %v2799
      %v5592 = vmul.f32 %v5560, %v2804
      %v5593 = vmul.f32 %v5561, %v2809
      %v5594 = vmul.f32 %v5562, %v2814
      %v5595 = vmul.f32 %v5563, %v2819
      %v5596 = vmul.f32 %v5564, %v2824
      %v5597 = vmul.f32 %v5565, %v2829
      %v5598 = vmul.f32 %v5566, %v2834
      %v5599 = vmul.f32 %v5567, %v2839
      %v5600 = vmul.f32 %v5568, %v2844
      %v5601 = vmul.f32 %v5569, %v2849
      %v5602 = vmul.f32 %v5570, %v2854
      %v5603 = vmul.f32 %v5571, %v2859
      %v5604 = vmul.f32 %v5572, %v2864
      %s5605 = scalar_lea.vmem %s6, 20
      %v5606 = vld [vmem:[%s5605] sm:$0xf]
      %v5608 = vsel %vm514, %v5573, 0
      %v5611 = vsel %vm514, %v5574, 0
      %v5614 = vsel %vm514, %v5575, 0
      %v5617 = vsel %vm514, %v5576, 0
      %v5620 = vsel %vm514, %v5577, 0
      %v5623 = vsel %vm514, %v5578, 0
      %v5626 = vsel %vm514, %v5579, 0
      %v5629 = vsel %vm514, %v5580, 0
      %v5632 = vsel %vm514, %v5581, 0
      %v5635 = vsel %vm514, %v5582, 0
      %v5638 = vsel %vm514, %v5583, 0
      %v5641 = vsel %vm514, %v5584, 0
      %v5644 = vsel %vm514, %v5585, 0
      %v5647 = vsel %vm514, %v5586, 0
      %v5650 = vsel %vm514, %v5587, 0
      %v5653 = vsel %vm514, %v5588, 0
      %v5656 = vsel %vm514, %v5589, 0
      %v5659 = vsel %vm514, %v5590, 0
      %v5662 = vsel %vm514, %v5591, 0
      %v5665 = vsel %vm514, %v5592, 0
      %v5668 = vsel %vm514, %v5593, 0
      %v5671 = vsel %vm514, %v5594, 0
      %v5674 = vsel %vm514, %v5595, 0
      %v5677 = vsel %vm514, %v5596, 0
      %v5680 = vsel %vm514, %v5597, 0
      %v5683 = vsel %vm514, %v5598, 0
      %v5686 = vsel %vm514, %v5599, 0
      %v5689 = vsel %vm514, %v5600, 0
      %v5692 = vsel %vm514, %v5601, 0
      %v5695 = vsel %vm514, %v5602, 0
      %v5698 = vsel %vm514, %v5603, 0
      %v5701 = vsel %vm514, %v5604, 0
      %v5704 = vsel %vm536, %v5606, 0
      %5706 = vmatprep.subr.mxu0 0.0
      %5707 = vmatpush1.msra.mxu0 %v5704
      %5708 = vmatprep.subr.mxu0 0.0
      %5709 = vmatpush1.msra.mxu0 0.0
      %5710 = vmatprep.subr.mxu0 0.0
      %5711 = vmatpush1.msra.mxu0 0.0
      %5712 = vmatprep.subr.mxu0 0.0
      %5713 = vmatpush1.msra.mxu0 0.0
      %5714 = vmatprep.subr.mxu0 0.0
      %5715 = vmatpush1.msra.mxu0 0.0
      %5716 = vmatprep.subr.mxu0 0.0
      %5717 = vmatpush1.msra.mxu0 0.0
      %5718 = vmatprep.subr.mxu0 0.0
      %5719 = vmatpush1.msra.mxu0 0.0
      %5720 = vmatprep.subr.mxu0 0.0
      %5721 = vmatpush1.msra.mxu0 0.0
      %5722 = vmatprep.subr.mxu0 0.0
      %5723 = vmatpush1.msra.mxu0 0.0
      %5724 = vmatprep.subr.mxu0 0.0
      %5725 = vmatpush1.msra.mxu0 0.0
      %5726 = vmatprep.subr.mxu0 0.0
      %5727 = vmatpush1.msra.mxu0 0.0
      %5728 = vmatprep.subr.mxu0 0.0
      %5729 = vmatpush1.msra.mxu0 0.0
      %5730 = vmatprep.subr.mxu0 0.0
      %5731 = vmatpush1.msra.mxu0 0.0
      %5732 = vmatprep.subr.mxu0 0.0
      %5733 = vmatpush1.msra.mxu0 0.0
      %5734 = vmatprep.subr.mxu0 0.0
      %5735 = vmatpush1.msra.mxu0 0.0
      %5736 = vmatprep.subr.mxu0 0.0
      %5737 = vmatpush1.msra.mxu0 0.0
      %5738 = vmatprep.subr.mxu0 0.0
      %5739 = vmatpush1.msra.mxu0 0.0
      %5740 = vmatprep.subr.mxu0 0.0
      %5741 = vmatpush1.msra.mxu0 0.0
      %5742 = vmatprep.subr.mxu0 0.0
      %5743 = vmatpush1.msra.mxu0 0.0
      %5744 = vmatprep.subr.mxu0 0.0
      %5745 = vmatpush1.msra.mxu0 0.0
      %5746 = vmatprep.subr.mxu0 0.0
      %5747 = vmatpush1.msra.mxu0 0.0
      %5748 = vmatprep.subr.mxu0 0.0
      %5749 = vmatpush1.msra.mxu0 0.0
      %5750 = vmatprep.subr.mxu0 0.0
      %5751 = vmatpush1.msra.mxu0 0.0
      %5752 = vmatprep.subr.mxu0 0.0
      %5753 = vmatpush1.msra.mxu0 0.0
      %5754 = vmatprep.subr.mxu0 0.0
      %5755 = vmatpush1.msra.mxu0 0.0
      %5756 = vmatprep.subr.mxu0 0.0
      %5757 = vmatpush1.msra.mxu0 0.0
      %5758 = vmatprep.subr.mxu0 0.0
      %5759 = vmatpush1.msra.mxu0 0.0
      %5760 = vmatprep.subr.mxu0 0.0
      %5761 = vmatpush1.msra.mxu0 0.0
      %5762 = vmatprep.subr.mxu0 0.0
      %5763 = vmatpush1.msra.mxu0 0.0
      %5764 = vmatprep.subr.mxu0 0.0
      %5765 = vmatpush1.msra.mxu0 0.0
      %5766 = vmatprep.subr.mxu0 0.0
      %5767 = vmatpush1.msra.mxu0 0.0
      %5768 = vmatprep.subr.mxu0 0.0
      %5769 = vmatpush1.msra.mxu0 0.0
      %5770 = vmatprep.mubr.f32.mxu0 0.0
      %5771 = vmatmul.mubr.f32.gmra.mrb[0].mxu0 %v5608
      %v5772 = vpop.f32.mrb[0].mxu0
      %v5773 = vadd.f32 0.0, %v5772
      %v5774 = vpop.f32.mrb[0].mxu0
      %5775 = vmatprep.mubr.f32.mxu0 0.0
      %5776 = vmatmul.mubr.f32.gmra.mrb[0].mxu0 %v5611
      %v5777 = vpop.f32.mrb[0].mxu0
      %v5778 = vadd.f32 0.0, %v5777
      %v5779 = vpop.f32.mrb[0].mxu0
      %5780 = vmatprep.mubr.f32.mxu0 0.0
      %5781 = vmatmul.mubr.f32.gmra.mrb[0].mxu0 %v5614
      %v5782 = vpop.f32.mrb[0].mxu0
      %v5783 = vadd.f32 0.0, %v5782
      %v5784 = vpop.f32.mrb[0].mxu0
      %5785 = vmatprep.mubr.f32.mxu0 0.0
      %5786 = vmatmul.mubr.f32.gmra.mrb[0].mxu0 %v5617
      %v5787 = vpop.f32.mrb[0].mxu0
      %v5788 = vadd.f32 0.0, %v5787
      %v5789 = vpop.f32.mrb[0].mxu0
      %5790 = vmatprep.mubr.f32.mxu0 0.0
      %5791 = vmatmul.mubr.f32.gmra.mrb[0].mxu0 %v5620
      %v5792 = vpop.f32.mrb[0].mxu0
      %v5793 = vadd.f32 0.0, %v5792
      %v5794 = vpop.f32.mrb[0].mxu0
      %5795 = vmatprep.mubr.f32.mxu0 0.0
      %5796 = vmatmul.mubr.f32.gmra.mrb[0].mxu0 %v5623
      %v5797 = vpop.f32.mrb[0].mxu0
      %v5798 = vadd.f32 0.0, %v5797
      %v5799 = vpop.f32.mrb[0].mxu0
      %5800 = vmatprep.mubr.f32.mxu0 0.0
      %5801 = vmatmul.mubr.f32.gmra.mrb[0].mxu0 %v5626
      %v5802 = vpop.f32.mrb[0].mxu0
      %v5803 = vadd.f32 0.0, %v5802
      %v5804 = vpop.f32.mrb[0].mxu0
      %5805 = vmatprep.mubr.f32.mxu0 0.0
      %5806 = vmatmul.mubr.f32.gmra.mrb[0].mxu0 %v5629
      %v5807 = vpop.f32.mrb[0].mxu0
      %v5808 = vadd.f32 0.0, %v5807
      %v5809 = vpop.f32.mrb[0].mxu0
      %5810 = vmatprep.mubr.f32.mxu0 0.0
      %5811 = vmatmul.mubr.f32.gmra.mrb[0].mxu0 %v5632
      %v5812 = vpop.f32.mrb[0].mxu0
      %v5813 = vadd.f32 0.0, %v5812
      %v5814 = vpop.f32.mrb[0].mxu0
      %5815 = vmatprep.mubr.f32.mxu0 0.0
      %5816 = vmatmul.mubr.f32.gmra.mrb[0].mxu0 %v5635
      %v5817 = vpop.f32.mrb[0].mxu0
      %v5818 = vadd.f32 0.0, %v5817
      %v5819 = vpop.f32.mrb[0].mxu0
      %5820 = vmatprep.mubr.f32.mxu0 0.0
      %5821 = vmatmul.mubr.f32.gmra.mrb[0].mxu0 %v5638
      %v5822 = vpop.f32.mrb[0].mxu0
      %v5823 = vadd.f32 0.0, %v5822
      %v5824 = vpop.f32.mrb[0].mxu0
      %5825 = vmatprep.mubr.f32.mxu0 0.0
      %5826 = vmatmul.mubr.f32.gmra.mrb[0].mxu0 %v5641
      %v5827 = vpop.f32.mrb[0].mxu0
      %v5828 = vadd.f32 0.0, %v5827
      %v5829 = vpop.f32.mrb[0].mxu0
      %5830 = vmatprep.mubr.f32.mxu0 0.0
      %5831 = vmatmul.mubr.f32.gmra.mrb[0].mxu0 %v5644
      %v5832 = vpop.f32.mrb[0].mxu0
      %v5833 = vadd.f32 0.0, %v5832
      %v5834 = vpop.f32.mrb[0].mxu0
      %5835 = vmatprep.mubr.f32.mxu0 0.0
      %5836 = vmatmul.mubr.f32.gmra.mrb[0].mxu0 %v5647
      %v5837 = vpop.f32.mrb[0].mxu0
      %v5838 = vadd.f32 0.0, %v5837
      %v5839 = vpop.f32.mrb[0].mxu0
      %5840 = vmatprep.mubr.f32.mxu0 0.0
      %5841 = vmatmul.mubr.f32.gmra.mrb[0].mxu0 %v5650
      %v5842 = vpop.f32.mrb[0].mxu0
      %v5843 = vadd.f32 0.0, %v5842
      %v5844 = vpop.f32.mrb[0].mxu0
      %5845 = vmatprep.mubr.f32.mxu0 0.0
      %5846 = vmatmul.mubr.f32.gmra.mrb[0].mxu0 %v5653
      %v5847 = vpop.f32.mrb[0].mxu0
      %v5848 = vadd.f32 0.0, %v5847
      %v5849 = vpop.f32.mrb[0].mxu0
      %5850 = vmatprep.mubr.f32.mxu0 0.0
      %5851 = vmatmul.mubr.f32.gmra.mrb[0].mxu0 %v5656
      %v5852 = vpop.f32.mrb[0].mxu0
      %v5853 = vadd.f32 0.0, %v5852
      %v5854 = vpop.f32.mrb[0].mxu0
      %5855 = vmatprep.mubr.f32.mxu0 0.0
      %5856 = vmatmul.mubr.f32.gmra.mrb[0].mxu0 %v5659
      %v5857 = vpop.f32.mrb[0].mxu0
      %v5858 = vadd.f32 0.0, %v5857
      %v5859 = vpop.f32.mrb[0].mxu0
      %5860 = vmatprep.mubr.f32.mxu0 0.0
      %5861 = vmatmul.mubr.f32.gmra.mrb[0].mxu0 %v5662
      %v5862 = vpop.f32.mrb[0].mxu0
      %v5863 = vadd.f32 0.0, %v5862
      %v5864 = vpop.f32.mrb[0].mxu0
      %5865 = vmatprep.mubr.f32.mxu0 0.0
      %5866 = vmatmul.mubr.f32.gmra.mrb[0].mxu0 %v5665
      %v5867 = vpop.f32.mrb[0].mxu0
      %v5868 = vadd.f32 0.0, %v5867
      %v5869 = vpop.f32.mrb[0].mxu0
      %5870 = vmatprep.mubr.f32.mxu0 0.0
      %5871 = vmatmul.mubr.f32.gmra.mrb[0].mxu0 %v5668
      %v5872 = vpop.f32.mrb[0].mxu0
      %v5873 = vadd.f32 0.0, %v5872
      %v5874 = vpop.f32.mrb[0].mxu0
      %5875 = vmatprep.mubr.f32.mxu0 0.0
      %5876 = vmatmul.mubr.f32.gmra.mrb[0].mxu0 %v5671
      %v5877 = vpop.f32.mrb[0].mxu0
      %v5878 = vadd.f32 0.0, %v5877
      %v5879 = vpop.f32.mrb[0].mxu0
      %5880 = vmatprep.mubr.f32.mxu0 0.0
      %5881 = vmatmul.mubr.f32.gmra.mrb[0].mxu0 %v5674
      %v5882 = vpop.f32.mrb[0].mxu0
      %v5883 = vadd.f32 0.0, %v5882
      %v5884 = vpop.f32.mrb[0].mxu0
      %5885 = vmatprep.mubr.f32.mxu0 0.0
      %5886 = vmatmul.mubr.f32.gmra.mrb[0].mxu0 %v5677
      %v5887 = vpop.f32.mrb[0].mxu0
      %v5888 = vadd.f32 0.0, %v5887
      %v5889 = vpop.f32.mrb[0].mxu0
      %5890 = vmatprep.mubr.f32.mxu0 0.0
      %5891 = vmatmul.mubr.f32.gmra.mrb[0].mxu0 %v5680
      %v5892 = vpop.f32.mrb[0].mxu0
      %v5893 = vadd.f32 0.0, %v5892
      %v5894 = vpop.f32.mrb[0].mxu0
      %5895 = vmatprep.mubr.f32.mxu0 0.0
      %5896 = vmatmul.mubr.f32.gmra.mrb[0].mxu0 %v5683
      %v5897 = vpop.f32.mrb[0].mxu0
      %v5898 = vadd.f32 0.0, %v5897
      %v5899 = vpop.f32.mrb[0].mxu0
      %5900 = vmatprep.mubr.f32.mxu0 0.0
      %5901 = vmatmul.mubr.f32.gmra.mrb[0].mxu0 %v5686
      %v5902 = vpop.f32.mrb[0].mxu0
      %v5903 = vadd.f32 0.0, %v5902
      %v5904 = vpop.f32.mrb[0].mxu0
      %5905 = vmatprep.mubr.f32.mxu0 0.0
      %5906 = vmatmul.mubr.f32.gmra.mrb[0].mxu0 %v5689
      %v5907 = vpop.f32.mrb[0].mxu0
      %v5908 = vadd.f32 0.0, %v5907
      %v5909 = vpop.f32.mrb[0].mxu0
      %5910 = vmatprep.mubr.f32.mxu0 0.0
      %5911 = vmatmul.mubr.f32.gmra.mrb[0].mxu0 %v5692
      %v5912 = vpop.f32.mrb[0].mxu0
      %v5913 = vadd.f32 0.0, %v5912
      %v5914 = vpop.f32.mrb[0].mxu0
      %5915 = vmatprep.mubr.f32.mxu0 0.0
      %5916 = vmatmul.mubr.f32.gmra.mrb[0].mxu0 %v5695
      %v5917 = vpop.f32.mrb[0].mxu0
      %v5918 = vadd.f32 0.0, %v5917
      %v5919 = vpop.f32.mrb[0].mxu0
      %5920 = vmatprep.mubr.f32.mxu0 0.0
      %5921 = vmatmul.mubr.f32.gmra.mrb[0].mxu0 %v5698
      %v5922 = vpop.f32.mrb[0].mxu0
      %v5923 = vadd.f32 0.0, %v5922
      %v5924 = vpop.f32.mrb[0].mxu0
      %5925 = vmatprep.mubr.f32.mxu0 0.0
      %5926 = vmatmul.mubr.f32.gmra.mrb[0].mxu0 %v5701
      %v5927 = vpop.f32.mrb[0].mxu0
      %v5928 = vadd.f32 0.0, %v5927
      %v5929 = vpop.f32.mrb[0].mxu0
      %5930 = vdwg.mxu0
      %v5931 = vadd.f32 %v5509, %v5773
      %v5932 = vadd.f32 %v5510, %v5778
      %v5933 = vadd.f32 %v5511, %v5783
      %v5934 = vadd.f32 %v5512, %v5788
      %v5935 = vadd.f32 %v5513, %v5793
      %v5936 = vadd.f32 %v5514, %v5798
      %v5937 = vadd.f32 %v5515, %v5803
      %v5938 = vadd.f32 %v5516, %v5808
      %v5939 = vadd.f32 %v5517, %v5813
      %v5940 = vadd.f32 %v5518, %v5818
      %v5941 = vadd.f32 %v5519, %v5823
      %v5942 = vadd.f32 %v5520, %v5828
      %v5943 = vadd.f32 %v5521, %v5833
      %v5944 = vadd.f32 %v5522, %v5838
      %v5945 = vadd.f32 %v5523, %v5843
      %v5946 = vadd.f32 %v5524, %v5848
      %v5947 = vadd.f32 %v5525, %v5853
      %v5948 = vadd.f32 %v5526, %v5858
      %v5949 = vadd.f32 %v5527, %v5863
      %v5950 = vadd.f32 %v5528, %v5868
      %v5951 = vadd.f32 %v5529, %v5873
      %v5952 = vadd.f32 %v5530, %v5878
      %v5953 = vadd.f32 %v5531, %v5883
      %v5954 = vadd.f32 %v5532, %v5888
      %v5955 = vadd.f32 %v5533, %v5893
      %v5956 = vadd.f32 %v5534, %v5898
      %v5957 = vadd.f32 %v5535, %v5903
      %v5958 = vadd.f32 %v5536, %v5908
      %v5959 = vadd.f32 %v5537, %v5913
      %v5960 = vadd.f32 %v5538, %v5918
      %v5961 = vadd.f32 %v5539, %v5923
      %v5962 = vadd.f32 %v5540, %v5928
      %s5963 = scalar_lea.vmem %s7, 160
      %v5964 = vld [vmem:[%s5963] sm:$0xff]
      %v5965 = vld [vmem:[%s5963 + $0x8] sm:$0xff]
      %v5966 = vld [vmem:[%s5963 + $0x10] sm:$0xff]
      %v5967 = vld [vmem:[%s5963 + $0x18] sm:$0xff]
      %5968 = vmatprep.subr.mxu0 0.0
      %5969 = vmatpush1.msra.mxu0 %v5964
      %5970 = vmatprep.subr.mxu0 0.0
      %5971 = vmatpush1.msra.mxu0 %v5965
      %5972 = vmatprep.subr.mxu0 0.0
      %5973 = vmatpush1.msra.mxu0 %v5966
      %5974 = vmatprep.subr.mxu0 0.0
      %5975 = vmatpush1.msra.mxu0 %v5967
      %5976 = vmatprep.subr.mxu0 0.0
      %5977 = vmatpush1.msra.mxu0 0.0
      %5978 = vmatprep.subr.mxu0 0.0
      %5979 = vmatpush1.msra.mxu0 0.0
      %5980 = vmatprep.subr.mxu0 0.0
      %5981 = vmatpush1.msra.mxu0 0.0
      %5982 = vmatprep.subr.mxu0 0.0
      %5983 = vmatpush1.msra.mxu0 0.0
      %5984 = vmatprep.subr.mxu0 0.0
      %5985 = vmatpush1.msra.mxu0 0.0
      %5986 = vmatprep.subr.mxu0 0.0
      %5987 = vmatpush1.msra.mxu0 0.0
      %5988 = vmatprep.subr.mxu0 0.0
      %5989 = vmatpush1.msra.mxu0 0.0
      %5990 = vmatprep.subr.mxu0 0.0
      %5991 = vmatpush1.msra.mxu0 0.0
      %5992 = vmatprep.subr.mxu0 0.0
      %5993 = vmatpush1.msra.mxu0 0.0
      %5994 = vmatprep.subr.mxu0 0.0
      %5995 = vmatpush1.msra.mxu0 0.0
      %5996 = vmatprep.subr.mxu0 0.0
      %5997 = vmatpush1.msra.mxu0 0.0
      %5998 = vmatprep.subr.mxu0 0.0
      %5999 = vmatpush1.msra.mxu0 0.0
      %6000 = vmatprep.subr.mxu0 0.0
      %6001 = vmatpush1.msra.mxu0 0.0
      %6002 = vmatprep.subr.mxu0 0.0
      %6003 = vmatpush1.msra.mxu0 0.0
      %6004 = vmatprep.subr.mxu0 0.0
      %6005 = vmatpush1.msra.mxu0 0.0
      %6006 = vmatprep.subr.mxu0 0.0
      %6007 = vmatpush1.msra.mxu0 0.0
      %6008 = vmatprep.subr.mxu0 0.0
      %6009 = vmatpush1.msra.mxu0 0.0
      %6010 = vmatprep.subr.mxu0 0.0
      %6011 = vmatpush1.msra.mxu0 0.0
      %6012 = vmatprep.subr.mxu0 0.0
      %6013 = vmatpush1.msra.mxu0 0.0
      %6014 = vmatprep.subr.mxu0 0.0
      %6015 = vmatpush1.msra.mxu0 0.0
      %6016 = vmatprep.subr.mxu0 0.0
      %6017 = vmatpush1.msra.mxu0 0.0
      %6018 = vmatprep.subr.mxu0 0.0
      %6019 = vmatpush1.msra.mxu0 0.0
      %6020 = vmatprep.subr.mxu0 0.0
      %6021 = vmatpush1.msra.mxu0 0.0
      %6022 = vmatprep.subr.mxu0 0.0
      %6023 = vmatpush1.msra.mxu0 0.0
      %6024 = vmatprep.subr.mxu0 0.0
      %6025 = vmatpush1.msra.mxu0 0.0
      %6026 = vmatprep.subr.mxu0 0.0
      %6027 = vmatpush1.msra.mxu0 0.0
      %6028 = vmatprep.subr.mxu0 0.0
      %6029 = vmatpush1.msra.mxu0 0.0
      %6030 = vmatprep.subr.mxu0 0.0
      %6031 = vmatpush1.msra.mxu0 0.0
      %6032 = vmatprep.mubr.f32.mxu0 0.0
      %6033 = vmatmul.mubr.f32.gmra.mrb[0].mxu0 %v962
      %v6034 = vpop.f32.mrb[0].mxu0
      %v6035 = vadd.f32 0.0, %v6034
      %v6036 = vpop.f32.mrb[0].mxu0
      %6037 = vmatprep.mubr.f32.mxu0 0.0
      %6038 = vmatmul.mubr.f32.gmra.mrb[0].mxu0 %v965
      %v6039 = vpop.f32.mrb[0].mxu0
      %v6040 = vadd.f32 0.0, %v6039
      %v6041 = vpop.f32.mrb[0].mxu0
      %6042 = vmatprep.mubr.f32.mxu0 0.0
      %6043 = vmatmul.mubr.f32.gmra.mrb[0].mxu0 %v968
      %v6044 = vpop.f32.mrb[0].mxu0
      %v6045 = vadd.f32 0.0, %v6044
      %v6046 = vpop.f32.mrb[0].mxu0
      %6047 = vmatprep.mubr.f32.mxu0 0.0
      %6048 = vmatmul.mubr.f32.gmra.mrb[0].mxu0 %v971
      %v6049 = vpop.f32.mrb[0].mxu0
      %v6050 = vadd.f32 0.0, %v6049
      %v6051 = vpop.f32.mrb[0].mxu0
      %6052 = vmatprep.mubr.f32.mxu0 0.0
      %6053 = vmatmul.mubr.f32.gmra.mrb[0].mxu0 %v974
      %v6054 = vpop.f32.mrb[0].mxu0
      %v6055 = vadd.f32 0.0, %v6054
      %v6056 = vpop.f32.mrb[0].mxu0
      %6057 = vmatprep.mubr.f32.mxu0 0.0
      %6058 = vmatmul.mubr.f32.gmra.mrb[0].mxu0 %v977
      %v6059 = vpop.f32.mrb[0].mxu0
      %v6060 = vadd.f32 0.0, %v6059
      %v6061 = vpop.f32.mrb[0].mxu0
      %6062 = vmatprep.mubr.f32.mxu0 0.0
      %6063 = vmatmul.mubr.f32.gmra.mrb[0].mxu0 %v980
      %v6064 = vpop.f32.mrb[0].mxu0
      %v6065 = vadd.f32 0.0, %v6064
      %v6066 = vpop.f32.mrb[0].mxu0
      %6067 = vdwg.mxu0
      %s6068 = scalar_lea.vmem %s5, 1280
      %v6069 = vld [vmem:[%s6068] sm:$0xff]
      %v6070 = vld [vmem:[%s6068 + $0x8] sm:$0xff]
      %v6071 = vld [vmem:[%s6068 + $0x10] sm:$0xff]
      %v6072 = vld [vmem:[%s6068 + $0x18] sm:$0xff]
      %v6073 = vld [vmem:[%s6068 + $0x20] sm:$0xff]
      %v6074 = vld [vmem:[%s6068 + $0x28] sm:$0xff]
      %v6075 = vld [vmem:[%s6068 + $0x30] sm:$0xff]
      %v6076 = vld [vmem:[%s6068 + $0x38] sm:$0xff]
      %v6077 = vld [vmem:[%s6068 + $0x40] sm:$0xff]
      %v6078 = vld [vmem:[%s6068 + $0x48] sm:$0xff]
      %v6079 = vld [vmem:[%s6068 + $0x50] sm:$0xff]
      %v6080 = vld [vmem:[%s6068 + $0x58] sm:$0xff]
      %v6081 = vld [vmem:[%s6068 + $0x60] sm:$0xff]
      %v6082 = vld [vmem:[%s6068 + $0x68] sm:$0xff]
      %v6083 = vld [vmem:[%s6068 + $0x70] sm:$0xff]
      %v6084 = vld [vmem:[%s6068 + $0x78] sm:$0xff]
      %v6085 = vld [vmem:[%s6068 + $0x80] sm:$0xff]
      %v6086 = vld [vmem:[%s6068 + $0x88] sm:$0xff]
      %v6087 = vld [vmem:[%s6068 + $0x90] sm:$0xff]
      %v6088 = vld [vmem:[%s6068 + $0x98] sm:$0xff]
      %v6089 = vld [vmem:[%s6068 + $0xa0] sm:$0xff]
      %v6090 = vld [vmem:[%s6068 + $0xa8] sm:$0xff]
      %v6091 = vld [vmem:[%s6068 + $0xb0] sm:$0xff]
      %v6092 = vld [vmem:[%s6068 + $0xb8] sm:$0xff]
      %v6093 = vld [vmem:[%s6068 + $0xc0] sm:$0xff]
      %v6094 = vld [vmem:[%s6068 + $0xc8] sm:$0xff]
      %v6095 = vld [vmem:[%s6068 + $0xd0] sm:$0xff]
      %v6096 = vld [vmem:[%s6068 + $0xd8] sm:$0xff]
      %v6097 = vld [vmem:[%s6068 + $0xe0] sm:$0xff]
      %v6098 = vld [vmem:[%s6068 + $0xe8] sm:$0xff]
      %v6099 = vld [vmem:[%s6068 + $0xf0] sm:$0xff]
      %v6100 = vld [vmem:[%s6068 + $0xf8] sm:$0xff]
      %v6102 = vsel %vm1114, %v6069, 0
      %v6105 = vsel %vm1114, %v6070, 0
      %v6108 = vsel %vm1114, %v6071, 0
      %v6111 = vsel %vm1114, %v6072, 0
      %v6114 = vsel %vm1114, %v6073, 0
      %v6117 = vsel %vm1114, %v6074, 0
      %v6120 = vsel %vm1114, %v6075, 0
      %v6123 = vsel %vm1114, %v6076, 0
      %v6126 = vsel %vm1114, %v6077, 0
      %v6129 = vsel %vm1114, %v6078, 0
      %v6132 = vsel %vm1114, %v6079, 0
      %v6135 = vsel %vm1114, %v6080, 0
      %v6138 = vsel %vm1114, %v6081, 0
      %v6141 = vsel %vm1114, %v6082, 0
      %v6144 = vsel %vm1114, %v6083, 0
      %v6147 = vsel %vm1114, %v6084, 0
      %v6150 = vsel %vm1114, %v6085, 0
      %v6153 = vsel %vm1114, %v6086, 0
      %v6156 = vsel %vm1114, %v6087, 0
      %v6159 = vsel %vm1114, %v6088, 0
      %v6162 = vsel %vm1114, %v6089, 0
      %v6165 = vsel %vm1114, %v6090, 0
      %v6168 = vsel %vm1114, %v6091, 0
      %v6171 = vsel %vm1114, %v6092, 0
      %v6174 = vsel %vm1114, %v6093, 0
      %v6177 = vsel %vm1114, %v6094, 0
      %v6180 = vsel %vm1114, %v6095, 0
      %v6183 = vsel %vm1114, %v6096, 0
      %v6186 = vsel %vm1114, %v6097, 0
      %v6189 = vsel %vm1114, %v6098, 0
      %v6192 = vsel %vm1114, %v6099, 0
      %v6195 = vsel %vm1114, %v6100, 0
      %6197 = vmatprep.subr.mxu0 0.0
      %6198 = vmatpush1.msra.mxu0 %v6035
      %6199 = vmatprep.subr.mxu0 0.0
      %6200 = vmatpush1.msra.mxu0 %v6040
      %6201 = vmatprep.subr.mxu0 0.0
      %6202 = vmatpush1.msra.mxu0 %v6045
      %6203 = vmatprep.subr.mxu0 0.0
      %6204 = vmatpush1.msra.mxu0 %v6050
      %6205 = vmatprep.subr.mxu0 0.0
      %6206 = vmatpush1.msra.mxu0 %v6055
      %6207 = vmatprep.subr.mxu0 0.0
      %6208 = vmatpush1.msra.mxu0 %v6060
      %6209 = vmatprep.subr.mxu0 0.0
      %6210 = vmatpush1.msra.mxu0 %v6065
      %6211 = vmatprep.subr.mxu0 0.0
      %6212 = vmatpush1.msra.mxu0 0.0
      %6213 = vmatprep.subr.mxu0 0.0
      %6214 = vmatpush1.msra.mxu0 0.0
      %6215 = vmatprep.subr.mxu0 0.0
      %6216 = vmatpush1.msra.mxu0 0.0
      %6217 = vmatprep.subr.mxu0 0.0
      %6218 = vmatpush1.msra.mxu0 0.0
      %6219 = vmatprep.subr.mxu0 0.0
      %6220 = vmatpush1.msra.mxu0 0.0
      %6221 = vmatprep.subr.mxu0 0.0
      %6222 = vmatpush1.msra.mxu0 0.0
      %6223 = vmatprep.subr.mxu0 0.0
      %6224 = vmatpush1.msra.mxu0 0.0
      %6225 = vmatprep.subr.mxu0 0.0
      %6226 = vmatpush1.msra.mxu0 0.0
      %6227 = vmatprep.subr.mxu0 0.0
      %6228 = vmatpush1.msra.mxu0 0.0
      %6229 = vmatprep.subr.mxu0 0.0
      %6230 = vmatpush1.msra.mxu0 0.0
      %6231 = vmatprep.subr.mxu0 0.0
      %6232 = vmatpush1.msra.mxu0 0.0
      %6233 = vmatprep.subr.mxu0 0.0
      %6234 = vmatpush1.msra.mxu0 0.0
      %6235 = vmatprep.subr.mxu0 0.0
      %6236 = vmatpush1.msra.mxu0 0.0
      %6237 = vmatprep.subr.mxu0 0.0
      %6238 = vmatpush1.msra.mxu0 0.0
      %6239 = vmatprep.subr.mxu0 0.0
      %6240 = vmatpush1.msra.mxu0 0.0
      %6241 = vmatprep.subr.mxu0 0.0
      %6242 = vmatpush1.msra.mxu0 0.0
      %6243 = vmatprep.subr.mxu0 0.0
      %6244 = vmatpush1.msra.mxu0 0.0
      %6245 = vmatprep.subr.mxu0 0.0
      %6246 = vmatpush1.msra.mxu0 0.0
      %6247 = vmatprep.subr.mxu0 0.0
      %6248 = vmatpush1.msra.mxu0 0.0
      %6249 = vmatprep.subr.mxu0 0.0
      %6250 = vmatpush1.msra.mxu0 0.0
      %6251 = vmatprep.subr.mxu0 0.0
      %6252 = vmatpush1.msra.mxu0 0.0
      %6253 = vmatprep.subr.mxu0 0.0
      %6254 = vmatpush1.msra.mxu0 0.0
      %6255 = vmatprep.subr.mxu0 0.0
      %6256 = vmatpush1.msra.mxu0 0.0
      %6257 = vmatprep.subr.mxu0 0.0
      %6258 = vmatpush1.msra.mxu0 0.0
      %6259 = vmatprep.subr.mxu0 0.0
      %6260 = vmatpush1.msra.mxu0 0.0
      %6261 = vmatprep.mubr.f32.mxu0 0.0
      %6262 = vmatmul.mubr.f32.gmra.mrb[0].mxu0 %v6102
      %v6263 = vpop.f32.mrb[0].mxu0
      %v6264 = vadd.f32 0.0, %v6263
      %v6265 = vpop.f32.mrb[0].mxu0
      %6266 = vmatprep.mubr.f32.mxu0 0.0
      %6267 = vmatmul.mubr.f32.gmra.mrb[0].mxu0 %v6105
      %v6268 = vpop.f32.mrb[0].mxu0
      %v6269 = vadd.f32 0.0, %v6268
      %v6270 = vpop.f32.mrb[0].mxu0
      %6271 = vmatprep.mubr.f32.mxu0 0.0
      %6272 = vmatmul.mubr.f32.gmra.mrb[0].mxu0 %v6108
      %v6273 = vpop.f32.mrb[0].mxu0
      %v6274 = vadd.f32 0.0, %v6273
      %v6275 = vpop.f32.mrb[0].mxu0
      %6276 = vmatprep.mubr.f32.mxu0 0.0
      %6277 = vmatmul.mubr.f32.gmra.mrb[0].mxu0 %v6111
      %v6278 = vpop.f32.mrb[0].mxu0
      %v6279 = vadd.f32 0.0, %v6278
      %v6280 = vpop.f32.mrb[0].mxu0
      %6281 = vmatprep.mubr.f32.mxu0 0.0
      %6282 = vmatmul.mubr.f32.gmra.mrb[0].mxu0 %v6114
      %v6283 = vpop.f32.mrb[0].mxu0
      %v6284 = vadd.f32 0.0, %v6283
      %v6285 = vpop.f32.mrb[0].mxu0
      %6286 = vmatprep.mubr.f32.mxu0 0.0
      %6287 = vmatmul.mubr.f32.gmra.mrb[0].mxu0 %v6117
      %v6288 = vpop.f32.mrb[0].mxu0
      %v6289 = vadd.f32 0.0, %v6288
      %v6290 = vpop.f32.mrb[0].mxu0
      %6291 = vmatprep.mubr.f32.mxu0 0.0
      %6292 = vmatmul.mubr.f32.gmra.mrb[0].mxu0 %v6120
      %v6293 = vpop.f32.mrb[0].mxu0
      %v6294 = vadd.f32 0.0, %v6293
      %v6295 = vpop.f32.mrb[0].mxu0
      %6296 = vmatprep.mubr.f32.mxu0 0.0
      %6297 = vmatmul.mubr.f32.gmra.mrb[0].mxu0 %v6123
      %v6298 = vpop.f32.mrb[0].mxu0
      %v6299 = vadd.f32 0.0, %v6298
      %v6300 = vpop.f32.mrb[0].mxu0
      %6301 = vmatprep.mubr.f32.mxu0 0.0
      %6302 = vmatmul.mubr.f32.gmra.mrb[0].mxu0 %v6126
      %v6303 = vpop.f32.mrb[0].mxu0
      %v6304 = vadd.f32 0.0, %v6303
      %v6305 = vpop.f32.mrb[0].mxu0
      %6306 = vmatprep.mubr.f32.mxu0 0.0
      %6307 = vmatmul.mubr.f32.gmra.mrb[0].mxu0 %v6129
      %v6308 = vpop.f32.mrb[0].mxu0
      %v6309 = vadd.f32 0.0, %v6308
      %v6310 = vpop.f32.mrb[0].mxu0
      %6311 = vmatprep.mubr.f32.mxu0 0.0
      %6312 = vmatmul.mubr.f32.gmra.mrb[0].mxu0 %v6132
      %v6313 = vpop.f32.mrb[0].mxu0
      %v6314 = vadd.f32 0.0, %v6313
      %v6315 = vpop.f32.mrb[0].mxu0
      %6316 = vmatprep.mubr.f32.mxu0 0.0
      %6317 = vmatmul.mubr.f32.gmra.mrb[0].mxu0 %v6135
      %v6318 = vpop.f32.mrb[0].mxu0
      %v6319 = vadd.f32 0.0, %v6318
      %v6320 = vpop.f32.mrb[0].mxu0
      %6321 = vmatprep.mubr.f32.mxu0 0.0
      %6322 = vmatmul.mubr.f32.gmra.mrb[0].mxu0 %v6138
      %v6323 = vpop.f32.mrb[0].mxu0
      %v6324 = vadd.f32 0.0, %v6323
      %v6325 = vpop.f32.mrb[0].mxu0
      %6326 = vmatprep.mubr.f32.mxu0 0.0
      %6327 = vmatmul.mubr.f32.gmra.mrb[0].mxu0 %v6141
      %v6328 = vpop.f32.mrb[0].mxu0
      %v6329 = vadd.f32 0.0, %v6328
      %v6330 = vpop.f32.mrb[0].mxu0
      %6331 = vmatprep.mubr.f32.mxu0 0.0
      %6332 = vmatmul.mubr.f32.gmra.mrb[0].mxu0 %v6144
      %v6333 = vpop.f32.mrb[0].mxu0
      %v6334 = vadd.f32 0.0, %v6333
      %v6335 = vpop.f32.mrb[0].mxu0
      %6336 = vmatprep.mubr.f32.mxu0 0.0
      %6337 = vmatmul.mubr.f32.gmra.mrb[0].mxu0 %v6147
      %v6338 = vpop.f32.mrb[0].mxu0
      %v6339 = vadd.f32 0.0, %v6338
      %v6340 = vpop.f32.mrb[0].mxu0
      %6341 = vmatprep.mubr.f32.mxu0 0.0
      %6342 = vmatmul.mubr.f32.gmra.mrb[0].mxu0 %v6150
      %v6343 = vpop.f32.mrb[0].mxu0
      %v6344 = vadd.f32 0.0, %v6343
      %v6345 = vpop.f32.mrb[0].mxu0
      %6346 = vmatprep.mubr.f32.mxu0 0.0
      %6347 = vmatmul.mubr.f32.gmra.mrb[0].mxu0 %v6153
      %v6348 = vpop.f32.mrb[0].mxu0
      %v6349 = vadd.f32 0.0, %v6348
      %v6350 = vpop.f32.mrb[0].mxu0
      %6351 = vmatprep.mubr.f32.mxu0 0.0
      %6352 = vmatmul.mubr.f32.gmra.mrb[0].mxu0 %v6156
      %v6353 = vpop.f32.mrb[0].mxu0
      %v6354 = vadd.f32 0.0, %v6353
      %v6355 = vpop.f32.mrb[0].mxu0
      %6356 = vmatprep.mubr.f32.mxu0 0.0
      %6357 = vmatmul.mubr.f32.gmra.mrb[0].mxu0 %v6159
      %v6358 = vpop.f32.mrb[0].mxu0
      %v6359 = vadd.f32 0.0, %v6358
      %v6360 = vpop.f32.mrb[0].mxu0
      %6361 = vmatprep.mubr.f32.mxu0 0.0
      %6362 = vmatmul.mubr.f32.gmra.mrb[0].mxu0 %v6162
      %v6363 = vpop.f32.mrb[0].mxu0
      %v6364 = vadd.f32 0.0, %v6363
      %v6365 = vpop.f32.mrb[0].mxu0
      %6366 = vmatprep.mubr.f32.mxu0 0.0
      %6367 = vmatmul.mubr.f32.gmra.mrb[0].mxu0 %v6165
      %v6368 = vpop.f32.mrb[0].mxu0
      %v6369 = vadd.f32 0.0, %v6368
      %v6370 = vpop.f32.mrb[0].mxu0
      %6371 = vmatprep.mubr.f32.mxu0 0.0
      %6372 = vmatmul.mubr.f32.gmra.mrb[0].mxu0 %v6168
      %v6373 = vpop.f32.mrb[0].mxu0
      %v6374 = vadd.f32 0.0, %v6373
      %v6375 = vpop.f32.mrb[0].mxu0
      %6376 = vmatprep.mubr.f32.mxu0 0.0
      %6377 = vmatmul.mubr.f32.gmra.mrb[0].mxu0 %v6171
      %v6378 = vpop.f32.mrb[0].mxu0
      %v6379 = vadd.f32 0.0, %v6378
      %v6380 = vpop.f32.mrb[0].mxu0
      %6381 = vmatprep.mubr.f32.mxu0 0.0
      %6382 = vmatmul.mubr.f32.gmra.mrb[0].mxu0 %v6174
      %v6383 = vpop.f32.mrb[0].mxu0
      %v6384 = vadd.f32 0.0, %v6383
      %v6385 = vpop.f32.mrb[0].mxu0
      %6386 = vmatprep.mubr.f32.mxu0 0.0
      %6387 = vmatmul.mubr.f32.gmra.mrb[0].mxu0 %v6177
      %v6388 = vpop.f32.mrb[0].mxu0
      %v6389 = vadd.f32 0.0, %v6388
      %v6390 = vpop.f32.mrb[0].mxu0
      %6391 = vmatprep.mubr.f32.mxu0 0.0
      %6392 = vmatmul.mubr.f32.gmra.mrb[0].mxu0 %v6180
      %v6393 = vpop.f32.mrb[0].mxu0
      %v6394 = vadd.f32 0.0, %v6393
      %v6395 = vpop.f32.mrb[0].mxu0
      %6396 = vmatprep.mubr.f32.mxu0 0.0
      %6397 = vmatmul.mubr.f32.gmra.mrb[0].mxu0 %v6183
      %v6398 = vpop.f32.mrb[0].mxu0
      %v6399 = vadd.f32 0.0, %v6398
      %v6400 = vpop.f32.mrb[0].mxu0
      %6401 = vmatprep.mubr.f32.mxu0 0.0
      %6402 = vmatmul.mubr.f32.gmra.mrb[0].mxu0 %v6186
      %v6403 = vpop.f32.mrb[0].mxu0
      %v6404 = vadd.f32 0.0, %v6403
      %v6405 = vpop.f32.mrb[0].mxu0
      %6406 = vmatprep.mubr.f32.mxu0 0.0
      %6407 = vmatmul.mubr.f32.gmra.mrb[0].mxu0 %v6189
      %v6408 = vpop.f32.mrb[0].mxu0
      %v6409 = vadd.f32 0.0, %v6408
      %v6410 = vpop.f32.mrb[0].mxu0
      %6411 = vmatprep.mubr.f32.mxu0 0.0
      %6412 = vmatmul.mubr.f32.gmra.mrb[0].mxu0 %v6192
      %v6413 = vpop.f32.mrb[0].mxu0
      %v6414 = vadd.f32 0.0, %v6413
      %v6415 = vpop.f32.mrb[0].mxu0
      %6416 = vmatprep.mubr.f32.mxu0 0.0
      %6417 = vmatmul.mubr.f32.gmra.mrb[0].mxu0 %v6195
      %v6418 = vpop.f32.mrb[0].mxu0
      %v6419 = vadd.f32 0.0, %v6418
      %v6420 = vpop.f32.mrb[0].mxu0
      %6421 = vdwg.mxu0
      %v6422 = vadd.f32 %v5931, %v6264
      %v6423 = vadd.f32 %v5932, %v6269
      %v6424 = vadd.f32 %v5933, %v6274
      %v6425 = vadd.f32 %v5934, %v6279
      %v6426 = vadd.f32 %v5935, %v6284
      %v6427 = vadd.f32 %v5936, %v6289
      %v6428 = vadd.f32 %v5937, %v6294
      %v6429 = vadd.f32 %v5938, %v6299
      %v6430 = vadd.f32 %v5939, %v6304
      %v6431 = vadd.f32 %v5940, %v6309
      %v6432 = vadd.f32 %v5941, %v6314
      %v6433 = vadd.f32 %v5942, %v6319
      %v6434 = vadd.f32 %v5943, %v6324
      %v6435 = vadd.f32 %v5944, %v6329
      %v6436 = vadd.f32 %v5945, %v6334
      %v6437 = vadd.f32 %v5946, %v6339
      %v6438 = vadd.f32 %v5947, %v6344
      %v6439 = vadd.f32 %v5948, %v6349
      %v6440 = vadd.f32 %v5949, %v6354
      %v6441 = vadd.f32 %v5950, %v6359
      %v6442 = vadd.f32 %v5951, %v6364
      %v6443 = vadd.f32 %v5952, %v6369
      %v6444 = vadd.f32 %v5953, %v6374
      %v6445 = vadd.f32 %v5954, %v6379
      %v6446 = vadd.f32 %v5955, %v6384
      %v6447 = vadd.f32 %v5956, %v6389
      %v6448 = vadd.f32 %v5957, %v6394
      %v6449 = vadd.f32 %v5958, %v6399
      %v6450 = vadd.f32 %v5959, %v6404
      %v6451 = vadd.f32 %v5960, %v6409
      %v6452 = vadd.f32 %v5961, %v6414
      %v6453 = vadd.f32 %v5962, %v6419
      %v6454 = vld [vmem:[#allocation2 + $0x27] sm:$0xff]
      %v6455 = vld [vmem:[#allocation2 + $0x2f] sm:$0xff]
      %v6456 = vld [vmem:[#allocation2 + $0x37] sm:$0xff]
      %v6457 = vld [vmem:[#allocation2 + $0x3f] sm:$0xff]
      %v6458 = vld [vmem:[#allocation2 + $0x47] sm:$0xff]
      %v6459 = vld [vmem:[#allocation2 + $0x4f] sm:$0xff]
      %v6460 = vld [vmem:[#allocation2 + $0x57] sm:$0xff]
      %v6461 = vld [vmem:[#allocation2 + $0x5f] sm:$0xff]
      %v6462 = vld [vmem:[#allocation2 + $0x67] sm:$0xff]
      %v6463 = vld [vmem:[#allocation2 + $0x6f] sm:$0xff]
      %v6464 = vld [vmem:[#allocation2 + $0x77] sm:$0xff]
      %v6465 = vld [vmem:[#allocation2 + $0x7f] sm:$0xff]
      %v6466 = vld [vmem:[#allocation2 + $0x87] sm:$0xff]
      %v6467 = vld [vmem:[#allocation2 + $0x8f] sm:$0xff]
      %v6468 = vld [vmem:[#allocation2 + $0x97] sm:$0xff]
      %v6469 = vld [vmem:[#allocation2 + $0x9f] sm:$0xff]
      %v6470 = vld [vmem:[#allocation2 + $0xa7] sm:$0xff]
      %v6471 = vld [vmem:[#allocation2 + $0xaf] sm:$0xff]
      %v6472 = vld [vmem:[#allocation2 + $0xb7] sm:$0xff]
      %v6473 = vld [vmem:[#allocation2 + $0xbf] sm:$0xff]
      %v6474 = vld [vmem:[#allocation2 + $0xc7] sm:$0xff]
      %v6475 = vld [vmem:[#allocation2 + $0xcf] sm:$0xff]
      %v6476 = vld [vmem:[#allocation2 + $0xd7] sm:$0xff]
      %v6477 = vld [vmem:[#allocation2 + $0xdf] sm:$0xff]
      %v6478 = vld [vmem:[#allocation2 + $0xe7] sm:$0xff]
      %v6479 = vld [vmem:[#allocation2 + $0xef] sm:$0xff]
      %v6480 = vld [vmem:[#allocation2 + $0xf7] sm:$0xff]
      %v6481 = vld [vmem:[#allocation2 + $0xff] sm:$0xff]
      %v6482 = vld [vmem:[#allocation2 + $0x107] sm:$0xff]
      %v6483 = vld [vmem:[#allocation2 + $0x10f] sm:$0xff]
      %v6484 = vld [vmem:[#allocation2 + $0x117] sm:$0xff]
      %v6485 = vld [vmem:[#allocation2 + $0x11f] sm:$0xff]
      %v6486 = vmul.f32 %v6454, %v766
      %v6487 = vmul.f32 %v6455, %v771
      %v6488 = vmul.f32 %v6456, %v776
      %v6489 = vmul.f32 %v6457, %v781
      %v6490 = vmul.f32 %v6458, %v786
      %v6491 = vmul.f32 %v6459, %v791
      %v6492 = vmul.f32 %v6460, %v796
      %v6493 = vmul.f32 %v6461, %v801
      %v6494 = vmul.f32 %v6462, %v806
      %v6495 = vmul.f32 %v6463, %v811
      %v6496 = vmul.f32 %v6464, %v816
      %v6497 = vmul.f32 %v6465, %v821
      %v6498 = vmul.f32 %v6466, %v826
      %v6499 = vmul.f32 %v6467, %v831
      %v6500 = vmul.f32 %v6468, %v836
      %v6501 = vmul.f32 %v6469, %v841
      %v6502 = vmul.f32 %v6470, %v846
      %v6503 = vmul.f32 %v6471, %v851
      %v6504 = vmul.f32 %v6472, %v856
      %v6505 = vmul.f32 %v6473, %v861
      %v6506 = vmul.f32 %v6474, %v866
      %v6507 = vmul.f32 %v6475, %v871
      %v6508 = vmul.f32 %v6476, %v876
      %v6509 = vmul.f32 %v6477, %v881
      %v6510 = vmul.f32 %v6478, %v886
      %v6511 = vmul.f32 %v6479, %v891
      %v6512 = vmul.f32 %v6480, %v896
      %v6513 = vmul.f32 %v6481, %v901
      %v6514 = vmul.f32 %v6482, %v906
      %v6515 = vmul.f32 %v6483, %v911
      %v6516 = vmul.f32 %v6484, %v916
      %v6517 = vmul.f32 %v6485, %v921
      %s6518 = scalar_lea.vmem %s6, 24
      %v6519 = vld [vmem:[%s6518] sm:$0xf]
      %v6521 = vsel %vm514, %v6486, 0
      %v6524 = vsel %vm514, %v6487, 0
      %v6527 = vsel %vm514, %v6488, 0
      %v6530 = vsel %vm514, %v6489, 0
      %v6533 = vsel %vm514, %v6490, 0
      %v6536 = vsel %vm514, %v6491, 0
      %v6539 = vsel %vm514, %v6492, 0
      %v6542 = vsel %vm514, %v6493, 0
      %v6545 = vsel %vm514, %v6494, 0
      %v6548 = vsel %vm514, %v6495, 0
      %v6551 = vsel %vm514, %v6496, 0
      %v6554 = vsel %vm514, %v6497, 0
      %v6557 = vsel %vm514, %v6498, 0
      %v6560 = vsel %vm514, %v6499, 0
      %v6563 = vsel %vm514, %v6500, 0
      %v6566 = vsel %vm514, %v6501, 0
      %v6569 = vsel %vm514, %v6502, 0
      %v6572 = vsel %vm514, %v6503, 0
      %v6575 = vsel %vm514, %v6504, 0
      %v6578 = vsel %vm514, %v6505, 0
      %v6581 = vsel %vm514, %v6506, 0
      %v6584 = vsel %vm514, %v6507, 0
      %v6587 = vsel %vm514, %v6508, 0
      %v6590 = vsel %vm514, %v6509, 0
      %v6593 = vsel %vm514, %v6510, 0
      %v6596 = vsel %vm514, %v6511, 0
      %v6599 = vsel %vm514, %v6512, 0
      %v6602 = vsel %vm514, %v6513, 0
      %v6605 = vsel %vm514, %v6514, 0
      %v6608 = vsel %vm514, %v6515, 0
      %v6611 = vsel %vm514, %v6516, 0
      %v6614 = vsel %vm514, %v6517, 0
      %v6617 = vsel %vm536, %v6519, 0
      %6619 = vmatprep.subr.mxu0 0.0
      %6620 = vmatpush1.msra.mxu0 %v6617
      %6621 = vmatprep.subr.mxu0 0.0
      %6622 = vmatpush1.msra.mxu0 0.0
      %6623 = vmatprep.subr.mxu0 0.0
      %6624 = vmatpush1.msra.mxu0 0.0
      %6625 = vmatprep.subr.mxu0 0.0
      %6626 = vmatpush1.msra.mxu0 0.0
      %6627 = vmatprep.subr.mxu0 0.0
      %6628 = vmatpush1.msra.mxu0 0.0
      %6629 = vmatprep.subr.mxu0 0.0
      %6630 = vmatpush1.msra.mxu0 0.0
      %6631 = vmatprep.subr.mxu0 0.0
      %6632 = vmatpush1.msra.mxu0 0.0
      %6633 = vmatprep.subr.mxu0 0.0
      %6634 = vmatpush1.msra.mxu0 0.0
      %6635 = vmatprep.subr.mxu0 0.0
      %6636 = vmatpush1.msra.mxu0 0.0
      %6637 = vmatprep.subr.mxu0 0.0
      %6638 = vmatpush1.msra.mxu0 0.0
      %6639 = vmatprep.subr.mxu0 0.0
      %6640 = vmatpush1.msra.mxu0 0.0
      %6641 = vmatprep.subr.mxu0 0.0
      %6642 = vmatpush1.msra.mxu0 0.0
      %6643 = vmatprep.subr.mxu0 0.0
      %6644 = vmatpush1.msra.mxu0 0.0
      %6645 = vmatprep.subr.mxu0 0.0
      %6646 = vmatpush1.msra.mxu0 0.0
      %6647 = vmatprep.subr.mxu0 0.0
      %6648 = vmatpush1.msra.mxu0 0.0
      %6649 = vmatprep.subr.mxu0 0.0
      %6650 = vmatpush1.msra.mxu0 0.0
      %6651 = vmatprep.subr.mxu0 0.0
      %6652 = vmatpush1.msra.mxu0 0.0
      %6653 = vmatprep.subr.mxu0 0.0
      %6654 = vmatpush1.msra.mxu0 0.0
      %6655 = vmatprep.subr.mxu0 0.0
      %6656 = vmatpush1.msra.mxu0 0.0
      %6657 = vmatprep.subr.mxu0 0.0
      %6658 = vmatpush1.msra.mxu0 0.0
      %6659 = vmatprep.subr.mxu0 0.0
      %6660 = vmatpush1.msra.mxu0 0.0
      %6661 = vmatprep.subr.mxu0 0.0
      %6662 = vmatpush1.msra.mxu0 0.0
      %6663 = vmatprep.subr.mxu0 0.0
      %6664 = vmatpush1.msra.mxu0 0.0
      %6665 = vmatprep.subr.mxu0 0.0
      %6666 = vmatpush1.msra.mxu0 0.0
      %6667 = vmatprep.subr.mxu0 0.0
      %6668 = vmatpush1.msra.mxu0 0.0
      %6669 = vmatprep.subr.mxu0 0.0
      %6670 = vmatpush1.msra.mxu0 0.0
      %6671 = vmatprep.subr.mxu0 0.0
      %6672 = vmatpush1.msra.mxu0 0.0
      %6673 = vmatprep.subr.mxu0 0.0
      %6674 = vmatpush1.msra.mxu0 0.0
      %6675 = vmatprep.subr.mxu0 0.0
      %6676 = vmatpush1.msra.mxu0 0.0
      %6677 = vmatprep.subr.mxu0 0.0
      %6678 = vmatpush1.msra.mxu0 0.0
      %6679 = vmatprep.subr.mxu0 0.0
      %6680 = vmatpush1.msra.mxu0 0.0
      %6681 = vmatprep.subr.mxu0 0.0
      %6682 = vmatpush1.msra.mxu0 0.0
      %6683 = vmatprep.mubr.f32.mxu0 0.0
      %6684 = vmatmul.mubr.f32.gmra.mrb[0].mxu0 %v6521
      %v6685 = vpop.f32.mrb[0].mxu0
      %v6686 = vadd.f32 0.0, %v6685
      %v6687 = vpop.f32.mrb[0].mxu0
      %6688 = vmatprep.mubr.f32.mxu0 0.0
      %6689 = vmatmul.mubr.f32.gmra.mrb[0].mxu0 %v6524
      %v6690 = vpop.f32.mrb[0].mxu0
      %v6691 = vadd.f32 0.0, %v6690
      %v6692 = vpop.f32.mrb[0].mxu0
      %6693 = vmatprep.mubr.f32.mxu0 0.0
      %6694 = vmatmul.mubr.f32.gmra.mrb[0].mxu0 %v6527
      %v6695 = vpop.f32.mrb[0].mxu0
      %v6696 = vadd.f32 0.0, %v6695
      %v6697 = vpop.f32.mrb[0].mxu0
      %6698 = vmatprep.mubr.f32.mxu0 0.0
      %6699 = vmatmul.mubr.f32.gmra.mrb[0].mxu0 %v6530
      %v6700 = vpop.f32.mrb[0].mxu0
      %v6701 = vadd.f32 0.0, %v6700
      %v6702 = vpop.f32.mrb[0].mxu0
      %6703 = vmatprep.mubr.f32.mxu0 0.0
      %6704 = vmatmul.mubr.f32.gmra.mrb[0].mxu0 %v6533
      %v6705 = vpop.f32.mrb[0].mxu0
      %v6706 = vadd.f32 0.0, %v6705
      %v6707 = vpop.f32.mrb[0].mxu0
      %6708 = vmatprep.mubr.f32.mxu0 0.0
      %6709 = vmatmul.mubr.f32.gmra.mrb[0].mxu0 %v6536
      %v6710 = vpop.f32.mrb[0].mxu0
      %v6711 = vadd.f32 0.0, %v6710
      %v6712 = vpop.f32.mrb[0].mxu0
      %6713 = vmatprep.mubr.f32.mxu0 0.0
      %6714 = vmatmul.mubr.f32.gmra.mrb[0].mxu0 %v6539
      %v6715 = vpop.f32.mrb[0].mxu0
      %v6716 = vadd.f32 0.0, %v6715
      %v6717 = vpop.f32.mrb[0].mxu0
      %6718 = vmatprep.mubr.f32.mxu0 0.0
      %6719 = vmatmul.mubr.f32.gmra.mrb[0].mxu0 %v6542
      %v6720 = vpop.f32.mrb[0].mxu0
      %v6721 = vadd.f32 0.0, %v6720
      %v6722 = vpop.f32.mrb[0].mxu0
      %6723 = vmatprep.mubr.f32.mxu0 0.0
      %6724 = vmatmul.mubr.f32.gmra.mrb[0].mxu0 %v6545
      %v6725 = vpop.f32.mrb[0].mxu0
      %v6726 = vadd.f32 0.0, %v6725
      %v6727 = vpop.f32.mrb[0].mxu0
      %6728 = vmatprep.mubr.f32.mxu0 0.0
      %6729 = vmatmul.mubr.f32.gmra.mrb[0].mxu0 %v6548
      %v6730 = vpop.f32.mrb[0].mxu0
      %v6731 = vadd.f32 0.0, %v6730
      %v6732 = vpop.f32.mrb[0].mxu0
      %6733 = vmatprep.mubr.f32.mxu0 0.0
      %6734 = vmatmul.mubr.f32.gmra.mrb[0].mxu0 %v6551
      %v6735 = vpop.f32.mrb[0].mxu0
      %v6736 = vadd.f32 0.0, %v6735
      %v6737 = vpop.f32.mrb[0].mxu0
      %6738 = vmatprep.mubr.f32.mxu0 0.0
      %6739 = vmatmul.mubr.f32.gmra.mrb[0].mxu0 %v6554
      %v6740 = vpop.f32.mrb[0].mxu0
      %v6741 = vadd.f32 0.0, %v6740
      %v6742 = vpop.f32.mrb[0].mxu0
      %6743 = vmatprep.mubr.f32.mxu0 0.0
      %6744 = vmatmul.mubr.f32.gmra.mrb[0].mxu0 %v6557
      %v6745 = vpop.f32.mrb[0].mxu0
      %v6746 = vadd.f32 0.0, %v6745
      %v6747 = vpop.f32.mrb[0].mxu0
      %6748 = vmatprep.mubr.f32.mxu0 0.0
      %6749 = vmatmul.mubr.f32.gmra.mrb[0].mxu0 %v6560
      %v6750 = vpop.f32.mrb[0].mxu0
      %v6751 = vadd.f32 0.0, %v6750
      %v6752 = vpop.f32.mrb[0].mxu0
      %6753 = vmatprep.mubr.f32.mxu0 0.0
      %6754 = vmatmul.mubr.f32.gmra.mrb[0].mxu0 %v6563
      %v6755 = vpop.f32.mrb[0].mxu0
      %v6756 = vadd.f32 0.0, %v6755
      %v6757 = vpop.f32.mrb[0].mxu0
      %6758 = vmatprep.mubr.f32.mxu0 0.0
      %6759 = vmatmul.mubr.f32.gmra.mrb[0].mxu0 %v6566
      %v6760 = vpop.f32.mrb[0].mxu0
      %v6761 = vadd.f32 0.0, %v6760
      %v6762 = vpop.f32.mrb[0].mxu0
      %6763 = vmatprep.mubr.f32.mxu0 0.0
      %6764 = vmatmul.mubr.f32.gmra.mrb[0].mxu0 %v6569
      %v6765 = vpop.f32.mrb[0].mxu0
      %v6766 = vadd.f32 0.0, %v6765
      %v6767 = vpop.f32.mrb[0].mxu0
      %6768 = vmatprep.mubr.f32.mxu0 0.0
      %6769 = vmatmul.mubr.f32.gmra.mrb[0].mxu0 %v6572
      %v6770 = vpop.f32.mrb[0].mxu0
      %v6771 = vadd.f32 0.0, %v6770
      %v6772 = vpop.f32.mrb[0].mxu0
      %6773 = vmatprep.mubr.f32.mxu0 0.0
      %6774 = vmatmul.mubr.f32.gmra.mrb[0].mxu0 %v6575
      %v6775 = vpop.f32.mrb[0].mxu0
      %v6776 = vadd.f32 0.0, %v6775
      %v6777 = vpop.f32.mrb[0].mxu0
      %6778 = vmatprep.mubr.f32.mxu0 0.0
      %6779 = vmatmul.mubr.f32.gmra.mrb[0].mxu0 %v6578
      %v6780 = vpop.f32.mrb[0].mxu0
      %v6781 = vadd.f32 0.0, %v6780
      %v6782 = vpop.f32.mrb[0].mxu0
      %6783 = vmatprep.mubr.f32.mxu0 0.0
      %6784 = vmatmul.mubr.f32.gmra.mrb[0].mxu0 %v6581
      %v6785 = vpop.f32.mrb[0].mxu0
      %v6786 = vadd.f32 0.0, %v6785
      %v6787 = vpop.f32.mrb[0].mxu0
      %6788 = vmatprep.mubr.f32.mxu0 0.0
      %6789 = vmatmul.mubr.f32.gmra.mrb[0].mxu0 %v6584
      %v6790 = vpop.f32.mrb[0].mxu0
      %v6791 = vadd.f32 0.0, %v6790
      %v6792 = vpop.f32.mrb[0].mxu0
      %6793 = vmatprep.mubr.f32.mxu0 0.0
      %6794 = vmatmul.mubr.f32.gmra.mrb[0].mxu0 %v6587
      %v6795 = vpop.f32.mrb[0].mxu0
      %v6796 = vadd.f32 0.0, %v6795
      %v6797 = vpop.f32.mrb[0].mxu0
      %6798 = vmatprep.mubr.f32.mxu0 0.0
      %6799 = vmatmul.mubr.f32.gmra.mrb[0].mxu0 %v6590
      %v6800 = vpop.f32.mrb[0].mxu0
      %v6801 = vadd.f32 0.0, %v6800
      %v6802 = vpop.f32.mrb[0].mxu0
      %6803 = vmatprep.mubr.f32.mxu0 0.0
      %6804 = vmatmul.mubr.f32.gmra.mrb[0].mxu0 %v6593
      %v6805 = vpop.f32.mrb[0].mxu0
      %v6806 = vadd.f32 0.0, %v6805
      %v6807 = vpop.f32.mrb[0].mxu0
      %6808 = vmatprep.mubr.f32.mxu0 0.0
      %6809 = vmatmul.mubr.f32.gmra.mrb[0].mxu0 %v6596
      %v6810 = vpop.f32.mrb[0].mxu0
      %v6811 = vadd.f32 0.0, %v6810
      %v6812 = vpop.f32.mrb[0].mxu0
      %6813 = vmatprep.mubr.f32.mxu0 0.0
      %6814 = vmatmul.mubr.f32.gmra.mrb[0].mxu0 %v6599
      %v6815 = vpop.f32.mrb[0].mxu0
      %v6816 = vadd.f32 0.0, %v6815
      %v6817 = vpop.f32.mrb[0].mxu0
      %6818 = vmatprep.mubr.f32.mxu0 0.0
      %6819 = vmatmul.mubr.f32.gmra.mrb[0].mxu0 %v6602
      %v6820 = vpop.f32.mrb[0].mxu0
      %v6821 = vadd.f32 0.0, %v6820
      %v6822 = vpop.f32.mrb[0].mxu0
      %6823 = vmatprep.mubr.f32.mxu0 0.0
      %6824 = vmatmul.mubr.f32.gmra.mrb[0].mxu0 %v6605
      %v6825 = vpop.f32.mrb[0].mxu0
      %v6826 = vadd.f32 0.0, %v6825
      %v6827 = vpop.f32.mrb[0].mxu0
      %6828 = vmatprep.mubr.f32.mxu0 0.0
      %6829 = vmatmul.mubr.f32.gmra.mrb[0].mxu0 %v6608
      %v6830 = vpop.f32.mrb[0].mxu0
      %v6831 = vadd.f32 0.0, %v6830
      %v6832 = vpop.f32.mrb[0].mxu0
      %6833 = vmatprep.mubr.f32.mxu0 0.0
      %6834 = vmatmul.mubr.f32.gmra.mrb[0].mxu0 %v6611
      %v6835 = vpop.f32.mrb[0].mxu0
      %v6836 = vadd.f32 0.0, %v6835
      %v6837 = vpop.f32.mrb[0].mxu0
      %6838 = vmatprep.mubr.f32.mxu0 0.0
      %6839 = vmatmul.mubr.f32.gmra.mrb[0].mxu0 %v6614
      %v6840 = vpop.f32.mrb[0].mxu0
      %v6841 = vadd.f32 0.0, %v6840
      %v6842 = vpop.f32.mrb[0].mxu0
      %6843 = vdwg.mxu0
      %v6844 = vadd.f32 %v6422, %v6686
      %v6845 = vadd.f32 %v6423, %v6691
      %v6846 = vadd.f32 %v6424, %v6696
      %v6847 = vadd.f32 %v6425, %v6701
      %v6848 = vadd.f32 %v6426, %v6706
      %v6849 = vadd.f32 %v6427, %v6711
      %v6850 = vadd.f32 %v6428, %v6716
      %v6851 = vadd.f32 %v6429, %v6721
      %v6852 = vadd.f32 %v6430, %v6726
      %v6853 = vadd.f32 %v6431, %v6731
      %v6854 = vadd.f32 %v6432, %v6736
      %v6855 = vadd.f32 %v6433, %v6741
      %v6856 = vadd.f32 %v6434, %v6746
      %v6857 = vadd.f32 %v6435, %v6751
      %v6858 = vadd.f32 %v6436, %v6756
      %v6859 = vadd.f32 %v6437, %v6761
      %v6860 = vadd.f32 %v6438, %v6766
      %v6861 = vadd.f32 %v6439, %v6771
      %v6862 = vadd.f32 %v6440, %v6776
      %v6863 = vadd.f32 %v6441, %v6781
      %v6864 = vadd.f32 %v6442, %v6786
      %v6865 = vadd.f32 %v6443, %v6791
      %v6866 = vadd.f32 %v6444, %v6796
      %v6867 = vadd.f32 %v6445, %v6801
      %v6868 = vadd.f32 %v6446, %v6806
      %v6869 = vadd.f32 %v6447, %v6811
      %v6870 = vadd.f32 %v6448, %v6816
      %v6871 = vadd.f32 %v6449, %v6821
      %v6872 = vadd.f32 %v6450, %v6826
      %v6873 = vadd.f32 %v6451, %v6831
      %v6874 = vadd.f32 %v6452, %v6836
      %v6875 = vadd.f32 %v6453, %v6841
      %s6876 = scalar_lea.vmem %s7, 192
      %v6877 = vld [vmem:[%s6876] sm:$0xff]
      %v6878 = vld [vmem:[%s6876 + $0x8] sm:$0xff]
      %v6879 = vld [vmem:[%s6876 + $0x10] sm:$0xff]
      %v6880 = vld [vmem:[%s6876 + $0x18] sm:$0xff]
      %6881 = vmatprep.subr.mxu0 0.0
      %6882 = vmatpush1.msra.mxu0 %v6877
      %6883 = vmatprep.subr.mxu0 0.0
      %6884 = vmatpush1.msra.mxu0 %v6878
      %6885 = vmatprep.subr.mxu0 0.0
      %6886 = vmatpush1.msra.mxu0 %v6879
      %6887 = vmatprep.subr.mxu0 0.0
      %6888 = vmatpush1.msra.mxu0 %v6880
      %6889 = vmatprep.subr.mxu0 0.0
      %6890 = vmatpush1.msra.mxu0 0.0
      %6891 = vmatprep.subr.mxu0 0.0
      %6892 = vmatpush1.msra.mxu0 0.0
      %6893 = vmatprep.subr.mxu0 0.0
      %6894 = vmatpush1.msra.mxu0 0.0
      %6895 = vmatprep.subr.mxu0 0.0
      %6896 = vmatpush1.msra.mxu0 0.0
      %6897 = vmatprep.subr.mxu0 0.0
      %6898 = vmatpush1.msra.mxu0 0.0
      %6899 = vmatprep.subr.mxu0 0.0
      %6900 = vmatpush1.msra.mxu0 0.0
      %6901 = vmatprep.subr.mxu0 0.0
      %6902 = vmatpush1.msra.mxu0 0.0
      %6903 = vmatprep.subr.mxu0 0.0
      %6904 = vmatpush1.msra.mxu0 0.0
      %6905 = vmatprep.subr.mxu0 0.0
      %6906 = vmatpush1.msra.mxu0 0.0
      %6907 = vmatprep.subr.mxu0 0.0
      %6908 = vmatpush1.msra.mxu0 0.0
      %6909 = vmatprep.subr.mxu0 0.0
      %6910 = vmatpush1.msra.mxu0 0.0
      %6911 = vmatprep.subr.mxu0 0.0
      %6912 = vmatpush1.msra.mxu0 0.0
      %6913 = vmatprep.subr.mxu0 0.0
      %6914 = vmatpush1.msra.mxu0 0.0
      %6915 = vmatprep.subr.mxu0 0.0
      %6916 = vmatpush1.msra.mxu0 0.0
      %6917 = vmatprep.subr.mxu0 0.0
      %6918 = vmatpush1.msra.mxu0 0.0
      %6919 = vmatprep.subr.mxu0 0.0
      %6920 = vmatpush1.msra.mxu0 0.0
      %6921 = vmatprep.subr.mxu0 0.0
      %6922 = vmatpush1.msra.mxu0 0.0
      %6923 = vmatprep.subr.mxu0 0.0
      %6924 = vmatpush1.msra.mxu0 0.0
      %6925 = vmatprep.subr.mxu0 0.0
      %6926 = vmatpush1.msra.mxu0 0.0
      %6927 = vmatprep.subr.mxu0 0.0
      %6928 = vmatpush1.msra.mxu0 0.0
      %6929 = vmatprep.subr.mxu0 0.0
      %6930 = vmatpush1.msra.mxu0 0.0
      %6931 = vmatprep.subr.mxu0 0.0
      %6932 = vmatpush1.msra.mxu0 0.0
      %6933 = vmatprep.subr.mxu0 0.0
      %6934 = vmatpush1.msra.mxu0 0.0
      %6935 = vmatprep.subr.mxu0 0.0
      %6936 = vmatpush1.msra.mxu0 0.0
      %6937 = vmatprep.subr.mxu0 0.0
      %6938 = vmatpush1.msra.mxu0 0.0
      %6939 = vmatprep.subr.mxu0 0.0
      %6940 = vmatpush1.msra.mxu0 0.0
      %6941 = vmatprep.subr.mxu0 0.0
      %6942 = vmatpush1.msra.mxu0 0.0
      %6943 = vmatprep.subr.mxu0 0.0
      %6944 = vmatpush1.msra.mxu0 0.0
      %6945 = vmatprep.mubr.f32.mxu0 0.0
      %6946 = vmatmul.mubr.f32.gmra.mrb[0].mxu0 %v962
      %v6947 = vpop.f32.mrb[0].mxu0
      %v6948 = vadd.f32 0.0, %v6947
      %v6949 = vpop.f32.mrb[0].mxu0
      %6950 = vmatprep.mubr.f32.mxu0 0.0
      %6951 = vmatmul.mubr.f32.gmra.mrb[0].mxu0 %v965
      %v6952 = vpop.f32.mrb[0].mxu0
      %v6953 = vadd.f32 0.0, %v6952
      %v6954 = vpop.f32.mrb[0].mxu0
      %6955 = vmatprep.mubr.f32.mxu0 0.0
      %6956 = vmatmul.mubr.f32.gmra.mrb[0].mxu0 %v968
      %v6957 = vpop.f32.mrb[0].mxu0
      %v6958 = vadd.f32 0.0, %v6957
      %v6959 = vpop.f32.mrb[0].mxu0
      %6960 = vmatprep.mubr.f32.mxu0 0.0
      %6961 = vmatmul.mubr.f32.gmra.mrb[0].mxu0 %v971
      %v6962 = vpop.f32.mrb[0].mxu0
      %v6963 = vadd.f32 0.0, %v6962
      %v6964 = vpop.f32.mrb[0].mxu0
      %6965 = vmatprep.mubr.f32.mxu0 0.0
      %6966 = vmatmul.mubr.f32.gmra.mrb[0].mxu0 %v974
      %v6967 = vpop.f32.mrb[0].mxu0
      %v6968 = vadd.f32 0.0, %v6967
      %v6969 = vpop.f32.mrb[0].mxu0
      %6970 = vmatprep.mubr.f32.mxu0 0.0
      %6971 = vmatmul.mubr.f32.gmra.mrb[0].mxu0 %v977
      %v6972 = vpop.f32.mrb[0].mxu0
      %v6973 = vadd.f32 0.0, %v6972
      %v6974 = vpop.f32.mrb[0].mxu0
      %6975 = vmatprep.mubr.f32.mxu0 0.0
      %6976 = vmatmul.mubr.f32.gmra.mrb[0].mxu0 %v980
      %v6977 = vpop.f32.mrb[0].mxu0
      %v6978 = vadd.f32 0.0, %v6977
      %v6979 = vpop.f32.mrb[0].mxu0
      %6980 = vdwg.mxu0
      %s6981 = scalar_lea.vmem %s5, 1536
      %v6982 = vld [vmem:[%s6981] sm:$0xff]
      %v6983 = vld [vmem:[%s6981 + $0x8] sm:$0xff]
      %v6984 = vld [vmem:[%s6981 + $0x10] sm:$0xff]
      %v6985 = vld [vmem:[%s6981 + $0x18] sm:$0xff]
      %v6986 = vld [vmem:[%s6981 + $0x20] sm:$0xff]
      %v6987 = vld [vmem:[%s6981 + $0x28] sm:$0xff]
      %v6988 = vld [vmem:[%s6981 + $0x30] sm:$0xff]
      %v6989 = vld [vmem:[%s6981 + $0x38] sm:$0xff]
      %v6990 = vld [vmem:[%s6981 + $0x40] sm:$0xff]
      %v6991 = vld [vmem:[%s6981 + $0x48] sm:$0xff]
      %v6992 = vld [vmem:[%s6981 + $0x50] sm:$0xff]
      %v6993 = vld [vmem:[%s6981 + $0x58] sm:$0xff]
      %v6994 = vld [vmem:[%s6981 + $0x60] sm:$0xff]
      %v6995 = vld [vmem:[%s6981 + $0x68] sm:$0xff]
      %v6996 = vld [vmem:[%s6981 + $0x70] sm:$0xff]
      %v6997 = vld [vmem:[%s6981 + $0x78] sm:$0xff]
      %v6998 = vld [vmem:[%s6981 + $0x80] sm:$0xff]
      %v6999 = vld [vmem:[%s6981 + $0x88] sm:$0xff]
      %v7000 = vld [vmem:[%s6981 + $0x90] sm:$0xff]
      %v7001 = vld [vmem:[%s6981 + $0x98] sm:$0xff]
      %v7002 = vld [vmem:[%s6981 + $0xa0] sm:$0xff]
      %v7003 = vld [vmem:[%s6981 + $0xa8] sm:$0xff]
      %v7004 = vld [vmem:[%s6981 + $0xb0] sm:$0xff]
      %v7005 = vld [vmem:[%s6981 + $0xb8] sm:$0xff]
      %v7006 = vld [vmem:[%s6981 + $0xc0] sm:$0xff]
      %v7007 = vld [vmem:[%s6981 + $0xc8] sm:$0xff]
      %v7008 = vld [vmem:[%s6981 + $0xd0] sm:$0xff]
      %v7009 = vld [vmem:[%s6981 + $0xd8] sm:$0xff]
      %v7010 = vld [vmem:[%s6981 + $0xe0] sm:$0xff]
      %v7011 = vld [vmem:[%s6981 + $0xe8] sm:$0xff]
      %v7012 = vld [vmem:[%s6981 + $0xf0] sm:$0xff]
      %v7013 = vld [vmem:[%s6981 + $0xf8] sm:$0xff]
      %v7015 = vsel %vm1114, %v6982, 0
      %v7018 = vsel %vm1114, %v6983, 0
      %v7021 = vsel %vm1114, %v6984, 0
      %v7024 = vsel %vm1114, %v6985, 0
      %v7027 = vsel %vm1114, %v6986, 0
      %v7030 = vsel %vm1114, %v6987, 0
      %v7033 = vsel %vm1114, %v6988, 0
      %v7036 = vsel %vm1114, %v6989, 0
      %v7039 = vsel %vm1114, %v6990, 0
      %v7042 = vsel %vm1114, %v6991, 0
      %v7045 = vsel %vm1114, %v6992, 0
      %v7048 = vsel %vm1114, %v6993, 0
      %v7051 = vsel %vm1114, %v6994, 0
      %v7054 = vsel %vm1114, %v6995, 0
      %v7057 = vsel %vm1114, %v6996, 0
      %v7060 = vsel %vm1114, %v6997, 0
      %v7063 = vsel %vm1114, %v6998, 0
      %v7066 = vsel %vm1114, %v6999, 0
      %v7069 = vsel %vm1114, %v7000, 0
      %v7072 = vsel %vm1114, %v7001, 0
      %v7075 = vsel %vm1114, %v7002, 0
      %v7078 = vsel %vm1114, %v7003, 0
      %v7081 = vsel %vm1114, %v7004, 0
      %v7084 = vsel %vm1114, %v7005, 0
      %v7087 = vsel %vm1114, %v7006, 0
      %v7090 = vsel %vm1114, %v7007, 0
      %v7093 = vsel %vm1114, %v7008, 0
      %v7096 = vsel %vm1114, %v7009, 0
      %v7099 = vsel %vm1114, %v7010, 0
      %v7102 = vsel %vm1114, %v7011, 0
      %v7105 = vsel %vm1114, %v7012, 0
      %v7108 = vsel %vm1114, %v7013, 0
      %7110 = vmatprep.subr.mxu0 0.0
      %7111 = vmatpush1.msra.mxu0 %v6948
      %7112 = vmatprep.subr.mxu0 0.0
      %7113 = vmatpush1.msra.mxu0 %v6953
      %7114 = vmatprep.subr.mxu0 0.0
      %7115 = vmatpush1.msra.mxu0 %v6958
      %7116 = vmatprep.subr.mxu0 0.0
      %7117 = vmatpush1.msra.mxu0 %v6963
      %7118 = vmatprep.subr.mxu0 0.0
      %7119 = vmatpush1.msra.mxu0 %v6968
      %7120 = vmatprep.subr.mxu0 0.0
      %7121 = vmatpush1.msra.mxu0 %v6973
      %7122 = vmatprep.subr.mxu0 0.0
      %7123 = vmatpush1.msra.mxu0 %v6978
      %7124 = vmatprep.subr.mxu0 0.0
      %7125 = vmatpush1.msra.mxu0 0.0
      %7126 = vmatprep.subr.mxu0 0.0
      %7127 = vmatpush1.msra.mxu0 0.0
      %7128 = vmatprep.subr.mxu0 0.0
      %7129 = vmatpush1.msra.mxu0 0.0
      %7130 = vmatprep.subr.mxu0 0.0
      %7131 = vmatpush1.msra.mxu0 0.0
      %7132 = vmatprep.subr.mxu0 0.0
      %7133 = vmatpush1.msra.mxu0 0.0
      %7134 = vmatprep.subr.mxu0 0.0
      %7135 = vmatpush1.msra.mxu0 0.0
      %7136 = vmatprep.subr.mxu0 0.0
      %7137 = vmatpush1.msra.mxu0 0.0
      %7138 = vmatprep.subr.mxu0 0.0
      %7139 = vmatpush1.msra.mxu0 0.0
      %7140 = vmatprep.subr.mxu0 0.0
      %7141 = vmatpush1.msra.mxu0 0.0
      %7142 = vmatprep.subr.mxu0 0.0
      %7143 = vmatpush1.msra.mxu0 0.0
      %7144 = vmatprep.subr.mxu0 0.0
      %7145 = vmatpush1.msra.mxu0 0.0
      %7146 = vmatprep.subr.mxu0 0.0
      %7147 = vmatpush1.msra.mxu0 0.0
      %7148 = vmatprep.subr.mxu0 0.0
      %7149 = vmatpush1.msra.mxu0 0.0
      %7150 = vmatprep.subr.mxu0 0.0
      %7151 = vmatpush1.msra.mxu0 0.0
      %7152 = vmatprep.subr.mxu0 0.0
      %7153 = vmatpush1.msra.mxu0 0.0
      %7154 = vmatprep.subr.mxu0 0.0
      %7155 = vmatpush1.msra.mxu0 0.0
      %7156 = vmatprep.subr.mxu0 0.0
      %7157 = vmatpush1.msra.mxu0 0.0
      %7158 = vmatprep.subr.mxu0 0.0
      %7159 = vmatpush1.msra.mxu0 0.0
      %7160 = vmatprep.subr.mxu0 0.0
      %7161 = vmatpush1.msra.mxu0 0.0
      %7162 = vmatprep.subr.mxu0 0.0
      %7163 = vmatpush1.msra.mxu0 0.0
      %7164 = vmatprep.subr.mxu0 0.0
      %7165 = vmatpush1.msra.mxu0 0.0
      %7166 = vmatprep.subr.mxu0 0.0
      %7167 = vmatpush1.msra.mxu0 0.0
      %7168 = vmatprep.subr.mxu0 0.0
      %7169 = vmatpush1.msra.mxu0 0.0
      %7170 = vmatprep.subr.mxu0 0.0
      %7171 = vmatpush1.msra.mxu0 0.0
      %7172 = vmatprep.subr.mxu0 0.0
      %7173 = vmatpush1.msra.mxu0 0.0
      %7174 = vmatprep.mubr.f32.mxu0 0.0
      %7175 = vmatmul.mubr.f32.gmra.mrb[0].mxu0 %v7015
      %v7176 = vpop.f32.mrb[0].mxu0
      %v7177 = vadd.f32 0.0, %v7176
      %v7178 = vpop.f32.mrb[0].mxu0
      %7179 = vmatprep.mubr.f32.mxu0 0.0
      %7180 = vmatmul.mubr.f32.gmra.mrb[0].mxu0 %v7018
      %v7181 = vpop.f32.mrb[0].mxu0
      %v7182 = vadd.f32 0.0, %v7181
      %v7183 = vpop.f32.mrb[0].mxu0
      %7184 = vmatprep.mubr.f32.mxu0 0.0
      %7185 = vmatmul.mubr.f32.gmra.mrb[0].mxu0 %v7021
      %v7186 = vpop.f32.mrb[0].mxu0
      %v7187 = vadd.f32 0.0, %v7186
      %v7188 = vpop.f32.mrb[0].mxu0
      %7189 = vmatprep.mubr.f32.mxu0 0.0
      %7190 = vmatmul.mubr.f32.gmra.mrb[0].mxu0 %v7024
      %v7191 = vpop.f32.mrb[0].mxu0
      %v7192 = vadd.f32 0.0, %v7191
      %v7193 = vpop.f32.mrb[0].mxu0
      %7194 = vmatprep.mubr.f32.mxu0 0.0
      %7195 = vmatmul.mubr.f32.gmra.mrb[0].mxu0 %v7027
      %v7196 = vpop.f32.mrb[0].mxu0
      %v7197 = vadd.f32 0.0, %v7196
      %v7198 = vpop.f32.mrb[0].mxu0
      %7199 = vmatprep.mubr.f32.mxu0 0.0
      %7200 = vmatmul.mubr.f32.gmra.mrb[0].mxu0 %v7030
      %v7201 = vpop.f32.mrb[0].mxu0
      %v7202 = vadd.f32 0.0, %v7201
      %v7203 = vpop.f32.mrb[0].mxu0
      %7204 = vmatprep.mubr.f32.mxu0 0.0
      %7205 = vmatmul.mubr.f32.gmra.mrb[0].mxu0 %v7033
      %v7206 = vpop.f32.mrb[0].mxu0
      %v7207 = vadd.f32 0.0, %v7206
      %v7208 = vpop.f32.mrb[0].mxu0
      %7209 = vmatprep.mubr.f32.mxu0 0.0
      %7210 = vmatmul.mubr.f32.gmra.mrb[0].mxu0 %v7036
      %v7211 = vpop.f32.mrb[0].mxu0
      %v7212 = vadd.f32 0.0, %v7211
      %v7213 = vpop.f32.mrb[0].mxu0
      %7214 = vmatprep.mubr.f32.mxu0 0.0
      %7215 = vmatmul.mubr.f32.gmra.mrb[0].mxu0 %v7039
      %v7216 = vpop.f32.mrb[0].mxu0
      %v7217 = vadd.f32 0.0, %v7216
      %v7218 = vpop.f32.mrb[0].mxu0
      %7219 = vmatprep.mubr.f32.mxu0 0.0
      %7220 = vmatmul.mubr.f32.gmra.mrb[0].mxu0 %v7042
      %v7221 = vpop.f32.mrb[0].mxu0
      %v7222 = vadd.f32 0.0, %v7221
      %v7223 = vpop.f32.mrb[0].mxu0
      %7224 = vmatprep.mubr.f32.mxu0 0.0
      %7225 = vmatmul.mubr.f32.gmra.mrb[0].mxu0 %v7045
      %v7226 = vpop.f32.mrb[0].mxu0
      %v7227 = vadd.f32 0.0, %v7226
      %v7228 = vpop.f32.mrb[0].mxu0
      %7229 = vmatprep.mubr.f32.mxu0 0.0
      %7230 = vmatmul.mubr.f32.gmra.mrb[0].mxu0 %v7048
      %v7231 = vpop.f32.mrb[0].mxu0
      %v7232 = vadd.f32 0.0, %v7231
      %v7233 = vpop.f32.mrb[0].mxu0
      %7234 = vmatprep.mubr.f32.mxu0 0.0
      %7235 = vmatmul.mubr.f32.gmra.mrb[0].mxu0 %v7051
      %v7236 = vpop.f32.mrb[0].mxu0
      %v7237 = vadd.f32 0.0, %v7236
      %v7238 = vpop.f32.mrb[0].mxu0
      %7239 = vmatprep.mubr.f32.mxu0 0.0
      %7240 = vmatmul.mubr.f32.gmra.mrb[0].mxu0 %v7054
      %v7241 = vpop.f32.mrb[0].mxu0
      %v7242 = vadd.f32 0.0, %v7241
      %v7243 = vpop.f32.mrb[0].mxu0
      %7244 = vmatprep.mubr.f32.mxu0 0.0
      %7245 = vmatmul.mubr.f32.gmra.mrb[0].mxu0 %v7057
      %v7246 = vpop.f32.mrb[0].mxu0
      %v7247 = vadd.f32 0.0, %v7246
      %v7248 = vpop.f32.mrb[0].mxu0
      %7249 = vmatprep.mubr.f32.mxu0 0.0
      %7250 = vmatmul.mubr.f32.gmra.mrb[0].mxu0 %v7060
      %v7251 = vpop.f32.mrb[0].mxu0
      %v7252 = vadd.f32 0.0, %v7251
      %v7253 = vpop.f32.mrb[0].mxu0
      %7254 = vmatprep.mubr.f32.mxu0 0.0
      %7255 = vmatmul.mubr.f32.gmra.mrb[0].mxu0 %v7063
      %v7256 = vpop.f32.mrb[0].mxu0
      %v7257 = vadd.f32 0.0, %v7256
      %v7258 = vpop.f32.mrb[0].mxu0
      %7259 = vmatprep.mubr.f32.mxu0 0.0
      %7260 = vmatmul.mubr.f32.gmra.mrb[0].mxu0 %v7066
      %v7261 = vpop.f32.mrb[0].mxu0
      %v7262 = vadd.f32 0.0, %v7261
      %v7263 = vpop.f32.mrb[0].mxu0
      %7264 = vmatprep.mubr.f32.mxu0 0.0
      %7265 = vmatmul.mubr.f32.gmra.mrb[0].mxu0 %v7069
      %v7266 = vpop.f32.mrb[0].mxu0
      %v7267 = vadd.f32 0.0, %v7266
      %v7268 = vpop.f32.mrb[0].mxu0
      %7269 = vmatprep.mubr.f32.mxu0 0.0
      %7270 = vmatmul.mubr.f32.gmra.mrb[0].mxu0 %v7072
      %v7271 = vpop.f32.mrb[0].mxu0
      %v7272 = vadd.f32 0.0, %v7271
      %v7273 = vpop.f32.mrb[0].mxu0
      %7274 = vmatprep.mubr.f32.mxu0 0.0
      %7275 = vmatmul.mubr.f32.gmra.mrb[0].mxu0 %v7075
      %v7276 = vpop.f32.mrb[0].mxu0
      %v7277 = vadd.f32 0.0, %v7276
      %v7278 = vpop.f32.mrb[0].mxu0
      %7279 = vmatprep.mubr.f32.mxu0 0.0
      %7280 = vmatmul.mubr.f32.gmra.mrb[0].mxu0 %v7078
      %v7281 = vpop.f32.mrb[0].mxu0
      %v7282 = vadd.f32 0.0, %v7281
      %v7283 = vpop.f32.mrb[0].mxu0
      %7284 = vmatprep.mubr.f32.mxu0 0.0
      %7285 = vmatmul.mubr.f32.gmra.mrb[0].mxu0 %v7081
      %v7286 = vpop.f32.mrb[0].mxu0
      %v7287 = vadd.f32 0.0, %v7286
      %v7288 = vpop.f32.mrb[0].mxu0
      %7289 = vmatprep.mubr.f32.mxu0 0.0
      %7290 = vmatmul.mubr.f32.gmra.mrb[0].mxu0 %v7084
      %v7291 = vpop.f32.mrb[0].mxu0
      %v7292 = vadd.f32 0.0, %v7291
      %v7293 = vpop.f32.mrb[0].mxu0
      %7294 = vmatprep.mubr.f32.mxu0 0.0
      %7295 = vmatmul.mubr.f32.gmra.mrb[0].mxu0 %v7087
      %v7296 = vpop.f32.mrb[0].mxu0
      %v7297 = vadd.f32 0.0, %v7296
      %v7298 = vpop.f32.mrb[0].mxu0
      %7299 = vmatprep.mubr.f32.mxu0 0.0
      %7300 = vmatmul.mubr.f32.gmra.mrb[0].mxu0 %v7090
      %v7301 = vpop.f32.mrb[0].mxu0
      %v7302 = vadd.f32 0.0, %v7301
      %v7303 = vpop.f32.mrb[0].mxu0
      %7304 = vmatprep.mubr.f32.mxu0 0.0
      %7305 = vmatmul.mubr.f32.gmra.mrb[0].mxu0 %v7093
      %v7306 = vpop.f32.mrb[0].mxu0
      %v7307 = vadd.f32 0.0, %v7306
      %v7308 = vpop.f32.mrb[0].mxu0
      %7309 = vmatprep.mubr.f32.mxu0 0.0
      %7310 = vmatmul.mubr.f32.gmra.mrb[0].mxu0 %v7096
      %v7311 = vpop.f32.mrb[0].mxu0
      %v7312 = vadd.f32 0.0, %v7311
      %v7313 = vpop.f32.mrb[0].mxu0
      %7314 = vmatprep.mubr.f32.mxu0 0.0
      %7315 = vmatmul.mubr.f32.gmra.mrb[0].mxu0 %v7099
      %v7316 = vpop.f32.mrb[0].mxu0
      %v7317 = vadd.f32 0.0, %v7316
      %v7318 = vpop.f32.mrb[0].mxu0
      %7319 = vmatprep.mubr.f32.mxu0 0.0
      %7320 = vmatmul.mubr.f32.gmra.mrb[0].mxu0 %v7102
      %v7321 = vpop.f32.mrb[0].mxu0
      %v7322 = vadd.f32 0.0, %v7321
      %v7323 = vpop.f32.mrb[0].mxu0
      %7324 = vmatprep.mubr.f32.mxu0 0.0
      %7325 = vmatmul.mubr.f32.gmra.mrb[0].mxu0 %v7105
      %v7326 = vpop.f32.mrb[0].mxu0
      %v7327 = vadd.f32 0.0, %v7326
      %v7328 = vpop.f32.mrb[0].mxu0
      %7329 = vmatprep.mubr.f32.mxu0 0.0
      %7330 = vmatmul.mubr.f32.gmra.mrb[0].mxu0 %v7108
      %v7331 = vpop.f32.mrb[0].mxu0
      %v7332 = vadd.f32 0.0, %v7331
      %v7333 = vpop.f32.mrb[0].mxu0
      %7334 = vdwg.mxu0
      %v7335 = vadd.f32 %v6844, %v7177
      %v7336 = vadd.f32 %v6845, %v7182
      %v7337 = vadd.f32 %v6846, %v7187
      %v7338 = vadd.f32 %v6847, %v7192
      %v7339 = vadd.f32 %v6848, %v7197
      %v7340 = vadd.f32 %v6849, %v7202
      %v7341 = vadd.f32 %v6850, %v7207
      %v7342 = vadd.f32 %v6851, %v7212
      %v7343 = vadd.f32 %v6852, %v7217
      %v7344 = vadd.f32 %v6853, %v7222
      %v7345 = vadd.f32 %v6854, %v7227
      %v7346 = vadd.f32 %v6855, %v7232
      %v7347 = vadd.f32 %v6856, %v7237
      %v7348 = vadd.f32 %v6857, %v7242
      %v7349 = vadd.f32 %v6858, %v7247
      %v7350 = vadd.f32 %v6859, %v7252
      %v7351 = vadd.f32 %v6860, %v7257
      %v7352 = vadd.f32 %v6861, %v7262
      %v7353 = vadd.f32 %v6862, %v7267
      %v7354 = vadd.f32 %v6863, %v7272
      %v7355 = vadd.f32 %v6864, %v7277
      %v7356 = vadd.f32 %v6865, %v7282
      %v7357 = vadd.f32 %v6866, %v7287
      %v7358 = vadd.f32 %v6867, %v7292
      %v7359 = vadd.f32 %v6868, %v7297
      %v7360 = vadd.f32 %v6869, %v7302
      %v7361 = vadd.f32 %v6870, %v7307
      %v7362 = vadd.f32 %v6871, %v7312
      %v7363 = vadd.f32 %v6872, %v7317
      %v7364 = vadd.f32 %v6873, %v7322
      %v7365 = vadd.f32 %v6874, %v7327
      %v7366 = vadd.f32 %v6875, %v7332
      %v7367 = vld [vmem:[#allocation2 + $0x28] sm:$0xff]
      %v7368 = vld [vmem:[#allocation2 + $0x30] sm:$0xff]
      %v7369 = vld [vmem:[#allocation2 + $0x38] sm:$0xff]
      %v7370 = vld [vmem:[#allocation2 + $0x40] sm:$0xff]
      %v7371 = vld [vmem:[#allocation2 + $0x48] sm:$0xff]
      %v7372 = vld [vmem:[#allocation2 + $0x50] sm:$0xff]
      %v7373 = vld [vmem:[#allocation2 + $0x58] sm:$0xff]
      %v7374 = vld [vmem:[#allocation2 + $0x60] sm:$0xff]
      %v7375 = vld [vmem:[#allocation2 + $0x68] sm:$0xff]
      %v7376 = vld [vmem:[#allocation2 + $0x70] sm:$0xff]
      %v7377 = vld [vmem:[#allocation2 + $0x78] sm:$0xff]
      %v7378 = vld [vmem:[#allocation2 + $0x80] sm:$0xff]
      %v7379 = vld [vmem:[#allocation2 + $0x88] sm:$0xff]
      %v7380 = vld [vmem:[#allocation2 + $0x90] sm:$0xff]
      %v7381 = vld [vmem:[#allocation2 + $0x98] sm:$0xff]
      %v7382 = vld [vmem:[#allocation2 + $0xa0] sm:$0xff]
      %v7383 = vld [vmem:[#allocation2 + $0xa8] sm:$0xff]
      %v7384 = vld [vmem:[#allocation2 + $0xb0] sm:$0xff]
      %v7385 = vld [vmem:[#allocation2 + $0xb8] sm:$0xff]
      %v7386 = vld [vmem:[#allocation2 + $0xc0] sm:$0xff]
      %v7387 = vld [vmem:[#allocation2 + $0xc8] sm:$0xff]
      %v7388 = vld [vmem:[#allocation2 + $0xd0] sm:$0xff]
      %v7389 = vld [vmem:[#allocation2 + $0xd8] sm:$0xff]
      %v7390 = vld [vmem:[#allocation2 + $0xe0] sm:$0xff]
      %v7391 = vld [vmem:[#allocation2 + $0xe8] sm:$0xff]
      %v7392 = vld [vmem:[#allocation2 + $0xf0] sm:$0xff]
      %v7393 = vld [vmem:[#allocation2 + $0xf8] sm:$0xff]
      %v7394 = vld [vmem:[#allocation2 + $0x100] sm:$0xff]
      %v7395 = vld [vmem:[#allocation2 + $0x108] sm:$0xff]
      %v7396 = vld [vmem:[#allocation2 + $0x110] sm:$0xff]
      %v7397 = vld [vmem:[#allocation2 + $0x118] sm:$0xff]
      %v7398 = vld [vmem:[#allocation2 + $0x120] sm:$0xff]
      %s7399 = scalar_lea.vmem %s6, 28
      %v7400 = vld [vmem:[%s7399] sm:$0xf]
      %v7402 = vsel %vm514, %v7367, 0
      %v7405 = vsel %vm514, %v7368, 0
      %v7408 = vsel %vm514, %v7369, 0
      %v7411 = vsel %vm514, %v7370, 0
      %v7414 = vsel %vm514, %v7371, 0
      %v7417 = vsel %vm514, %v7372, 0
      %v7420 = vsel %vm514, %v7373, 0
      %v7423 = vsel %vm514, %v7374, 0
      %v7426 = vsel %vm514, %v7375, 0
      %v7429 = vsel %vm514, %v7376, 0
      %v7432 = vsel %vm514, %v7377, 0
      %v7435 = vsel %vm514, %v7378, 0
      %v7438 = vsel %vm514, %v7379, 0
      %v7441 = vsel %vm514, %v7380, 0
      %v7444 = vsel %vm514, %v7381, 0
      %v7447 = vsel %vm514, %v7382, 0
      %v7450 = vsel %vm514, %v7383, 0
      %v7453 = vsel %vm514, %v7384, 0
      %v7456 = vsel %vm514, %v7385, 0
      %v7459 = vsel %vm514, %v7386, 0
      %v7462 = vsel %vm514, %v7387, 0
      %v7465 = vsel %vm514, %v7388, 0
      %v7468 = vsel %vm514, %v7389, 0
      %v7471 = vsel %vm514, %v7390, 0
      %v7474 = vsel %vm514, %v7391, 0
      %v7477 = vsel %vm514, %v7392, 0
      %v7480 = vsel %vm514, %v7393, 0
      %v7483 = vsel %vm514, %v7394, 0
      %v7486 = vsel %vm514, %v7395, 0
      %v7489 = vsel %vm514, %v7396, 0
      %v7492 = vsel %vm514, %v7397, 0
      %v7495 = vsel %vm514, %v7398, 0
      %v7498 = vsel %vm536, %v7400, 0
      %7500 = vmatprep.subr.mxu0 0.0
      %7501 = vmatpush1.msra.mxu0 %v7498
      %7502 = vmatprep.subr.mxu0 0.0
      %7503 = vmatpush1.msra.mxu0 0.0
      %7504 = vmatprep.subr.mxu0 0.0
      %7505 = vmatpush1.msra.mxu0 0.0
      %7506 = vmatprep.subr.mxu0 0.0
      %7507 = vmatpush1.msra.mxu0 0.0
      %7508 = vmatprep.subr.mxu0 0.0
      %7509 = vmatpush1.msra.mxu0 0.0
      %7510 = vmatprep.subr.mxu0 0.0
      %7511 = vmatpush1.msra.mxu0 0.0
      %7512 = vmatprep.subr.mxu0 0.0
      %7513 = vmatpush1.msra.mxu0 0.0
      %7514 = vmatprep.subr.mxu0 0.0
      %7515 = vmatpush1.msra.mxu0 0.0
      %7516 = vmatprep.subr.mxu0 0.0
      %7517 = vmatpush1.msra.mxu0 0.0
      %7518 = vmatprep.subr.mxu0 0.0
      %7519 = vmatpush1.msra.mxu0 0.0
      %7520 = vmatprep.subr.mxu0 0.0
      %7521 = vmatpush1.msra.mxu0 0.0
      %7522 = vmatprep.subr.mxu0 0.0
      %7523 = vmatpush1.msra.mxu0 0.0
      %7524 = vmatprep.subr.mxu0 0.0
      %7525 = vmatpush1.msra.mxu0 0.0
      %7526 = vmatprep.subr.mxu0 0.0
      %7527 = vmatpush1.msra.mxu0 0.0
      %7528 = vmatprep.subr.mxu0 0.0
      %7529 = vmatpush1.msra.mxu0 0.0
      %7530 = vmatprep.subr.mxu0 0.0
      %7531 = vmatpush1.msra.mxu0 0.0
      %7532 = vmatprep.subr.mxu0 0.0
      %7533 = vmatpush1.msra.mxu0 0.0
      %7534 = vmatprep.subr.mxu0 0.0
      %7535 = vmatpush1.msra.mxu0 0.0
      %7536 = vmatprep.subr.mxu0 0.0
      %7537 = vmatpush1.msra.mxu0 0.0
      %7538 = vmatprep.subr.mxu0 0.0
      %7539 = vmatpush1.msra.mxu0 0.0
      %7540 = vmatprep.subr.mxu0 0.0
      %7541 = vmatpush1.msra.mxu0 0.0
      %7542 = vmatprep.subr.mxu0 0.0
      %7543 = vmatpush1.msra.mxu0 0.0
      %7544 = vmatprep.subr.mxu0 0.0
      %7545 = vmatpush1.msra.mxu0 0.0
      %7546 = vmatprep.subr.mxu0 0.0
      %7547 = vmatpush1.msra.mxu0 0.0
      %7548 = vmatprep.subr.mxu0 0.0
      %7549 = vmatpush1.msra.mxu0 0.0
      %7550 = vmatprep.subr.mxu0 0.0
      %7551 = vmatpush1.msra.mxu0 0.0
      %7552 = vmatprep.subr.mxu0 0.0
      %7553 = vmatpush1.msra.mxu0 0.0
      %7554 = vmatprep.subr.mxu0 0.0
      %7555 = vmatpush1.msra.mxu0 0.0
      %7556 = vmatprep.subr.mxu0 0.0
      %7557 = vmatpush1.msra.mxu0 0.0
      %7558 = vmatprep.subr.mxu0 0.0
      %7559 = vmatpush1.msra.mxu0 0.0
      %7560 = vmatprep.subr.mxu0 0.0
      %7561 = vmatpush1.msra.mxu0 0.0
      %7562 = vmatprep.subr.mxu0 0.0
      %7563 = vmatpush1.msra.mxu0 0.0
      %7564 = vmatprep.mubr.f32.mxu0 0.0
      %7565 = vmatmul.mubr.f32.gmra.mrb[0].mxu0 %v7402
      %v7566 = vpop.f32.mrb[0].mxu0
      %v7567 = vadd.f32 0.0, %v7566
      %v7568 = vpop.f32.mrb[0].mxu0
      %7569 = vmatprep.mubr.f32.mxu0 0.0
      %7570 = vmatmul.mubr.f32.gmra.mrb[0].mxu0 %v7405
      %v7571 = vpop.f32.mrb[0].mxu0
      %v7572 = vadd.f32 0.0, %v7571
      %v7573 = vpop.f32.mrb[0].mxu0
      %7574 = vmatprep.mubr.f32.mxu0 0.0
      %7575 = vmatmul.mubr.f32.gmra.mrb[0].mxu0 %v7408
      %v7576 = vpop.f32.mrb[0].mxu0
      %v7577 = vadd.f32 0.0, %v7576
      %v7578 = vpop.f32.mrb[0].mxu0
      %7579 = vmatprep.mubr.f32.mxu0 0.0
      %7580 = vmatmul.mubr.f32.gmra.mrb[0].mxu0 %v7411
      %v7581 = vpop.f32.mrb[0].mxu0
      %v7582 = vadd.f32 0.0, %v7581
      %v7583 = vpop.f32.mrb[0].mxu0
      %7584 = vmatprep.mubr.f32.mxu0 0.0
      %7585 = vmatmul.mubr.f32.gmra.mrb[0].mxu0 %v7414
      %v7586 = vpop.f32.mrb[0].mxu0
      %v7587 = vadd.f32 0.0, %v7586
      %v7588 = vpop.f32.mrb[0].mxu0
      %7589 = vmatprep.mubr.f32.mxu0 0.0
      %7590 = vmatmul.mubr.f32.gmra.mrb[0].mxu0 %v7417
      %v7591 = vpop.f32.mrb[0].mxu0
      %v7592 = vadd.f32 0.0, %v7591
      %v7593 = vpop.f32.mrb[0].mxu0
      %7594 = vmatprep.mubr.f32.mxu0 0.0
      %7595 = vmatmul.mubr.f32.gmra.mrb[0].mxu0 %v7420
      %v7596 = vpop.f32.mrb[0].mxu0
      %v7597 = vadd.f32 0.0, %v7596
      %v7598 = vpop.f32.mrb[0].mxu0
      %7599 = vmatprep.mubr.f32.mxu0 0.0
      %7600 = vmatmul.mubr.f32.gmra.mrb[0].mxu0 %v7423
      %v7601 = vpop.f32.mrb[0].mxu0
      %v7602 = vadd.f32 0.0, %v7601
      %v7603 = vpop.f32.mrb[0].mxu0
      %7604 = vmatprep.mubr.f32.mxu0 0.0
      %7605 = vmatmul.mubr.f32.gmra.mrb[0].mxu0 %v7426
      %v7606 = vpop.f32.mrb[0].mxu0
      %v7607 = vadd.f32 0.0, %v7606
      %v7608 = vpop.f32.mrb[0].mxu0
      %7609 = vmatprep.mubr.f32.mxu0 0.0
      %7610 = vmatmul.mubr.f32.gmra.mrb[0].mxu0 %v7429
      %v7611 = vpop.f32.mrb[0].mxu0
      %v7612 = vadd.f32 0.0, %v7611
      %v7613 = vpop.f32.mrb[0].mxu0
      %7614 = vmatprep.mubr.f32.mxu0 0.0
      %7615 = vmatmul.mubr.f32.gmra.mrb[0].mxu0 %v7432
      %v7616 = vpop.f32.mrb[0].mxu0
      %v7617 = vadd.f32 0.0, %v7616
      %v7618 = vpop.f32.mrb[0].mxu0
      %7619 = vmatprep.mubr.f32.mxu0 0.0
      %7620 = vmatmul.mubr.f32.gmra.mrb[0].mxu0 %v7435
      %v7621 = vpop.f32.mrb[0].mxu0
      %v7622 = vadd.f32 0.0, %v7621
      %v7623 = vpop.f32.mrb[0].mxu0
      %7624 = vmatprep.mubr.f32.mxu0 0.0
      %7625 = vmatmul.mubr.f32.gmra.mrb[0].mxu0 %v7438
      %v7626 = vpop.f32.mrb[0].mxu0
      %v7627 = vadd.f32 0.0, %v7626
      %v7628 = vpop.f32.mrb[0].mxu0
      %7629 = vmatprep.mubr.f32.mxu0 0.0
      %7630 = vmatmul.mubr.f32.gmra.mrb[0].mxu0 %v7441
      %v7631 = vpop.f32.mrb[0].mxu0
      %v7632 = vadd.f32 0.0, %v7631
      %v7633 = vpop.f32.mrb[0].mxu0
      %7634 = vmatprep.mubr.f32.mxu0 0.0
      %7635 = vmatmul.mubr.f32.gmra.mrb[0].mxu0 %v7444
      %v7636 = vpop.f32.mrb[0].mxu0
      %v7637 = vadd.f32 0.0, %v7636
      %v7638 = vpop.f32.mrb[0].mxu0
      %7639 = vmatprep.mubr.f32.mxu0 0.0
      %7640 = vmatmul.mubr.f32.gmra.mrb[0].mxu0 %v7447
      %v7641 = vpop.f32.mrb[0].mxu0
      %v7642 = vadd.f32 0.0, %v7641
      %v7643 = vpop.f32.mrb[0].mxu0
      %7644 = vmatprep.mubr.f32.mxu0 0.0
      %7645 = vmatmul.mubr.f32.gmra.mrb[0].mxu0 %v7450
      %v7646 = vpop.f32.mrb[0].mxu0
      %v7647 = vadd.f32 0.0, %v7646
      %v7648 = vpop.f32.mrb[0].mxu0
      %7649 = vmatprep.mubr.f32.mxu0 0.0
      %7650 = vmatmul.mubr.f32.gmra.mrb[0].mxu0 %v7453
      %v7651 = vpop.f32.mrb[0].mxu0
      %v7652 = vadd.f32 0.0, %v7651
      %v7653 = vpop.f32.mrb[0].mxu0
      %7654 = vmatprep.mubr.f32.mxu0 0.0
      %7655 = vmatmul.mubr.f32.gmra.mrb[0].mxu0 %v7456
      %v7656 = vpop.f32.mrb[0].mxu0
      %v7657 = vadd.f32 0.0, %v7656
      %v7658 = vpop.f32.mrb[0].mxu0
      %7659 = vmatprep.mubr.f32.mxu0 0.0
      %7660 = vmatmul.mubr.f32.gmra.mrb[0].mxu0 %v7459
      %v7661 = vpop.f32.mrb[0].mxu0
      %v7662 = vadd.f32 0.0, %v7661
      %v7663 = vpop.f32.mrb[0].mxu0
      %7664 = vmatprep.mubr.f32.mxu0 0.0
      %7665 = vmatmul.mubr.f32.gmra.mrb[0].mxu0 %v7462
      %v7666 = vpop.f32.mrb[0].mxu0
      %v7667 = vadd.f32 0.0, %v7666
      %v7668 = vpop.f32.mrb[0].mxu0
      %7669 = vmatprep.mubr.f32.mxu0 0.0
      %7670 = vmatmul.mubr.f32.gmra.mrb[0].mxu0 %v7465
      %v7671 = vpop.f32.mrb[0].mxu0
      %v7672 = vadd.f32 0.0, %v7671
      %v7673 = vpop.f32.mrb[0].mxu0
      %7674 = vmatprep.mubr.f32.mxu0 0.0
      %7675 = vmatmul.mubr.f32.gmra.mrb[0].mxu0 %v7468
      %v7676 = vpop.f32.mrb[0].mxu0
      %v7677 = vadd.f32 0.0, %v7676
      %v7678 = vpop.f32.mrb[0].mxu0
      %7679 = vmatprep.mubr.f32.mxu0 0.0
      %7680 = vmatmul.mubr.f32.gmra.mrb[0].mxu0 %v7471
      %v7681 = vpop.f32.mrb[0].mxu0
      %v7682 = vadd.f32 0.0, %v7681
      %v7683 = vpop.f32.mrb[0].mxu0
      %7684 = vmatprep.mubr.f32.mxu0 0.0
      %7685 = vmatmul.mubr.f32.gmra.mrb[0].mxu0 %v7474
      %v7686 = vpop.f32.mrb[0].mxu0
      %v7687 = vadd.f32 0.0, %v7686
      %v7688 = vpop.f32.mrb[0].mxu0
      %7689 = vmatprep.mubr.f32.mxu0 0.0
      %7690 = vmatmul.mubr.f32.gmra.mrb[0].mxu0 %v7477
      %v7691 = vpop.f32.mrb[0].mxu0
      %v7692 = vadd.f32 0.0, %v7691
      %v7693 = vpop.f32.mrb[0].mxu0
      %7694 = vmatprep.mubr.f32.mxu0 0.0
      %7695 = vmatmul.mubr.f32.gmra.mrb[0].mxu0 %v7480
      %v7696 = vpop.f32.mrb[0].mxu0
      %v7697 = vadd.f32 0.0, %v7696
      %v7698 = vpop.f32.mrb[0].mxu0
      %7699 = vmatprep.mubr.f32.mxu0 0.0
      %7700 = vmatmul.mubr.f32.gmra.mrb[0].mxu0 %v7483
      %v7701 = vpop.f32.mrb[0].mxu0
      %v7702 = vadd.f32 0.0, %v7701
      %v7703 = vpop.f32.mrb[0].mxu0
      %7704 = vmatprep.mubr.f32.mxu0 0.0
      %7705 = vmatmul.mubr.f32.gmra.mrb[0].mxu0 %v7486
      %v7706 = vpop.f32.mrb[0].mxu0
      %v7707 = vadd.f32 0.0, %v7706
      %v7708 = vpop.f32.mrb[0].mxu0
      %7709 = vmatprep.mubr.f32.mxu0 0.0
      %7710 = vmatmul.mubr.f32.gmra.mrb[0].mxu0 %v7489
      %v7711 = vpop.f32.mrb[0].mxu0
      %v7712 = vadd.f32 0.0, %v7711
      %v7713 = vpop.f32.mrb[0].mxu0
      %7714 = vmatprep.mubr.f32.mxu0 0.0
      %7715 = vmatmul.mubr.f32.gmra.mrb[0].mxu0 %v7492
      %v7716 = vpop.f32.mrb[0].mxu0
      %v7717 = vadd.f32 0.0, %v7716
      %v7718 = vpop.f32.mrb[0].mxu0
      %7719 = vmatprep.mubr.f32.mxu0 0.0
      %7720 = vmatmul.mubr.f32.gmra.mrb[0].mxu0 %v7495
      %v7721 = vpop.f32.mrb[0].mxu0
      %v7722 = vadd.f32 0.0, %v7721
      %v7723 = vpop.f32.mrb[0].mxu0
      %7724 = vdwg.mxu0
      %v7725 = vadd.f32 %v7335, %v7567
      %v7726 = vadd.f32 %v7336, %v7572
      %v7727 = vadd.f32 %v7337, %v7577
      %v7728 = vadd.f32 %v7338, %v7582
      %v7729 = vadd.f32 %v7339, %v7587
      %v7730 = vadd.f32 %v7340, %v7592
      %v7731 = vadd.f32 %v7341, %v7597
      %v7732 = vadd.f32 %v7342, %v7602
      %v7733 = vadd.f32 %v7343, %v7607
      %v7734 = vadd.f32 %v7344, %v7612
      %v7735 = vadd.f32 %v7345, %v7617
      %v7736 = vadd.f32 %v7346, %v7622
      %v7737 = vadd.f32 %v7347, %v7627
      %v7738 = vadd.f32 %v7348, %v7632
      %v7739 = vadd.f32 %v7349, %v7637
      %v7740 = vadd.f32 %v7350, %v7642
      %v7741 = vadd.f32 %v7351, %v7647
      %v7742 = vadd.f32 %v7352, %v7652
      %v7743 = vadd.f32 %v7353, %v7657
      %v7744 = vadd.f32 %v7354, %v7662
      %v7745 = vadd.f32 %v7355, %v7667
      %v7746 = vadd.f32 %v7356, %v7672
      %v7747 = vadd.f32 %v7357, %v7677
      %v7748 = vadd.f32 %v7358, %v7682
      %v7749 = vadd.f32 %v7359, %v7687
      %v7750 = vadd.f32 %v7360, %v7692
      %v7751 = vadd.f32 %v7361, %v7697
      %v7752 = vadd.f32 %v7362, %v7702
      %v7753 = vadd.f32 %v7363, %v7707
      %v7754 = vadd.f32 %v7364, %v7712
      %v7755 = vadd.f32 %v7365, %v7717
      %v7756 = vadd.f32 %v7366, %v7722
      %s7757 = scalar_lea.vmem %s7, 224
      %v7758 = vld [vmem:[%s7757] sm:$0xff]
      %v7759 = vld [vmem:[%s7757 + $0x8] sm:$0xff]
      %v7760 = vld [vmem:[%s7757 + $0x10] sm:$0xff]
      %v7761 = vld [vmem:[%s7757 + $0x18] sm:$0xff]
      %7762 = vmatprep.subr.mxu0 0.0
      %7763 = vmatpush1.msra.mxu0 %v7758
      %7764 = vmatprep.subr.mxu0 0.0
      %7765 = vmatpush1.msra.mxu0 %v7759
      %7766 = vmatprep.subr.mxu0 0.0
      %7767 = vmatpush1.msra.mxu0 %v7760
      %7768 = vmatprep.subr.mxu0 0.0
      %7769 = vmatpush1.msra.mxu0 %v7761
      %7770 = vmatprep.subr.mxu0 0.0
      %7771 = vmatpush1.msra.mxu0 0.0
      %7772 = vmatprep.subr.mxu0 0.0
      %7773 = vmatpush1.msra.mxu0 0.0
      %7774 = vmatprep.subr.mxu0 0.0
      %7775 = vmatpush1.msra.mxu0 0.0
      %7776 = vmatprep.subr.mxu0 0.0
      %7777 = vmatpush1.msra.mxu0 0.0
      %7778 = vmatprep.subr.mxu0 0.0
      %7779 = vmatpush1.msra.mxu0 0.0
      %7780 = vmatprep.subr.mxu0 0.0
      %7781 = vmatpush1.msra.mxu0 0.0
      %7782 = vmatprep.subr.mxu0 0.0
      %7783 = vmatpush1.msra.mxu0 0.0
      %7784 = vmatprep.subr.mxu0 0.0
      %7785 = vmatpush1.msra.mxu0 0.0
      %7786 = vmatprep.subr.mxu0 0.0
      %7787 = vmatpush1.msra.mxu0 0.0
      %7788 = vmatprep.subr.mxu0 0.0
      %7789 = vmatpush1.msra.mxu0 0.0
      %7790 = vmatprep.subr.mxu0 0.0
      %7791 = vmatpush1.msra.mxu0 0.0
      %7792 = vmatprep.subr.mxu0 0.0
      %7793 = vmatpush1.msra.mxu0 0.0
      %7794 = vmatprep.subr.mxu0 0.0
      %7795 = vmatpush1.msra.mxu0 0.0
      %7796 = vmatprep.subr.mxu0 0.0
      %7797 = vmatpush1.msra.mxu0 0.0
      %7798 = vmatprep.subr.mxu0 0.0
      %7799 = vmatpush1.msra.mxu0 0.0
      %7800 = vmatprep.subr.mxu0 0.0
      %7801 = vmatpush1.msra.mxu0 0.0
      %7802 = vmatprep.subr.mxu0 0.0
      %7803 = vmatpush1.msra.mxu0 0.0
      %7804 = vmatprep.subr.mxu0 0.0
      %7805 = vmatpush1.msra.mxu0 0.0
      %7806 = vmatprep.subr.mxu0 0.0
      %7807 = vmatpush1.msra.mxu0 0.0
      %7808 = vmatprep.subr.mxu0 0.0
      %7809 = vmatpush1.msra.mxu0 0.0
      %7810 = vmatprep.subr.mxu0 0.0
      %7811 = vmatpush1.msra.mxu0 0.0
      %7812 = vmatprep.subr.mxu0 0.0
      %7813 = vmatpush1.msra.mxu0 0.0
      %7814 = vmatprep.subr.mxu0 0.0
      %7815 = vmatpush1.msra.mxu0 0.0
      %7816 = vmatprep.subr.mxu0 0.0
      %7817 = vmatpush1.msra.mxu0 0.0
      %7818 = vmatprep.subr.mxu0 0.0
      %7819 = vmatpush1.msra.mxu0 0.0
      %7820 = vmatprep.subr.mxu0 0.0
      %7821 = vmatpush1.msra.mxu0 0.0
      %7822 = vmatprep.subr.mxu0 0.0
      %7823 = vmatpush1.msra.mxu0 0.0
      %7824 = vmatprep.subr.mxu0 0.0
      %7825 = vmatpush1.msra.mxu0 0.0
      %7826 = vmatprep.mubr.f32.mxu0 0.0
      %7827 = vmatmul.mubr.f32.gmra.mrb[0].mxu0 %v962
      %v7828 = vpop.f32.mrb[0].mxu0
      %v7829 = vadd.f32 0.0, %v7828
      %v7830 = vpop.f32.mrb[0].mxu0
      %7831 = vmatprep.mubr.f32.mxu0 0.0
      %7832 = vmatmul.mubr.f32.gmra.mrb[0].mxu0 %v965
      %v7833 = vpop.f32.mrb[0].mxu0
      %v7834 = vadd.f32 0.0, %v7833
      %v7835 = vpop.f32.mrb[0].mxu0
      %7836 = vmatprep.mubr.f32.mxu0 0.0
      %7837 = vmatmul.mubr.f32.gmra.mrb[0].mxu0 %v968
      %v7838 = vpop.f32.mrb[0].mxu0
      %v7839 = vadd.f32 0.0, %v7838
      %v7840 = vpop.f32.mrb[0].mxu0
      %7841 = vmatprep.mubr.f32.mxu0 0.0
      %7842 = vmatmul.mubr.f32.gmra.mrb[0].mxu0 %v971
      %v7843 = vpop.f32.mrb[0].mxu0
      %v7844 = vadd.f32 0.0, %v7843
      %v7845 = vpop.f32.mrb[0].mxu0
      %7846 = vmatprep.mubr.f32.mxu0 0.0
      %7847 = vmatmul.mubr.f32.gmra.mrb[0].mxu0 %v974
      %v7848 = vpop.f32.mrb[0].mxu0
      %v7849 = vadd.f32 0.0, %v7848
      %v7850 = vpop.f32.mrb[0].mxu0
      %7851 = vmatprep.mubr.f32.mxu0 0.0
      %7852 = vmatmul.mubr.f32.gmra.mrb[0].mxu0 %v977
      %v7853 = vpop.f32.mrb[0].mxu0
      %v7854 = vadd.f32 0.0, %v7853
      %v7855 = vpop.f32.mrb[0].mxu0
      %7856 = vmatprep.mubr.f32.mxu0 0.0
      %7857 = vmatmul.mubr.f32.gmra.mrb[0].mxu0 %v980
      %v7858 = vpop.f32.mrb[0].mxu0
      %v7859 = vadd.f32 0.0, %v7858
      %v7860 = vpop.f32.mrb[0].mxu0
      %7861 = vdwg.mxu0
      %s7862 = scalar_lea.vmem %s5, 1792
      %v7863 = vld [vmem:[%s7862] sm:$0xff]
      %v7864 = vld [vmem:[%s7862 + $0x8] sm:$0xff]
      %v7865 = vld [vmem:[%s7862 + $0x10] sm:$0xff]
      %v7866 = vld [vmem:[%s7862 + $0x18] sm:$0xff]
      %v7867 = vld [vmem:[%s7862 + $0x20] sm:$0xff]
      %v7868 = vld [vmem:[%s7862 + $0x28] sm:$0xff]
      %v7869 = vld [vmem:[%s7862 + $0x30] sm:$0xff]
      %v7870 = vld [vmem:[%s7862 + $0x38] sm:$0xff]
      %v7871 = vld [vmem:[%s7862 + $0x40] sm:$0xff]
      %v7872 = vld [vmem:[%s7862 + $0x48] sm:$0xff]
      %v7873 = vld [vmem:[%s7862 + $0x50] sm:$0xff]
      %v7874 = vld [vmem:[%s7862 + $0x58] sm:$0xff]
      %v7875 = vld [vmem:[%s7862 + $0x60] sm:$0xff]
      %v7876 = vld [vmem:[%s7862 + $0x68] sm:$0xff]
      %v7877 = vld [vmem:[%s7862 + $0x70] sm:$0xff]
      %v7878 = vld [vmem:[%s7862 + $0x78] sm:$0xff]
      %v7879 = vld [vmem:[%s7862 + $0x80] sm:$0xff]
      %v7880 = vld [vmem:[%s7862 + $0x88] sm:$0xff]
      %v7881 = vld [vmem:[%s7862 + $0x90] sm:$0xff]
      %v7882 = vld [vmem:[%s7862 + $0x98] sm:$0xff]
      %v7883 = vld [vmem:[%s7862 + $0xa0] sm:$0xff]
      %v7884 = vld [vmem:[%s7862 + $0xa8] sm:$0xff]
      %v7885 = vld [vmem:[%s7862 + $0xb0] sm:$0xff]
      %v7886 = vld [vmem:[%s7862 + $0xb8] sm:$0xff]
      %v7887 = vld [vmem:[%s7862 + $0xc0] sm:$0xff]
      %v7888 = vld [vmem:[%s7862 + $0xc8] sm:$0xff]
      %v7889 = vld [vmem:[%s7862 + $0xd0] sm:$0xff]
      %v7890 = vld [vmem:[%s7862 + $0xd8] sm:$0xff]
      %v7891 = vld [vmem:[%s7862 + $0xe0] sm:$0xff]
      %v7892 = vld [vmem:[%s7862 + $0xe8] sm:$0xff]
      %v7893 = vld [vmem:[%s7862 + $0xf0] sm:$0xff]
      %v7894 = vld [vmem:[%s7862 + $0xf8] sm:$0xff]
      %v7896 = vsel %vm1114, %v7863, 0
      %v7899 = vsel %vm1114, %v7864, 0
      %v7902 = vsel %vm1114, %v7865, 0
      %v7905 = vsel %vm1114, %v7866, 0
      %v7908 = vsel %vm1114, %v7867, 0
      %v7911 = vsel %vm1114, %v7868, 0
      %v7914 = vsel %vm1114, %v7869, 0
      %v7917 = vsel %vm1114, %v7870, 0
      %v7920 = vsel %vm1114, %v7871, 0
      %v7923 = vsel %vm1114, %v7872, 0
      %v7926 = vsel %vm1114, %v7873, 0
      %v7929 = vsel %vm1114, %v7874, 0
      %v7932 = vsel %vm1114, %v7875, 0
      %v7935 = vsel %vm1114, %v7876, 0
      %v7938 = vsel %vm1114, %v7877, 0
      %v7941 = vsel %vm1114, %v7878, 0
      %v7944 = vsel %vm1114, %v7879, 0
      %v7947 = vsel %vm1114, %v7880, 0
      %v7950 = vsel %vm1114, %v7881, 0
      %v7953 = vsel %vm1114, %v7882, 0
      %v7956 = vsel %vm1114, %v7883, 0
      %v7959 = vsel %vm1114, %v7884, 0
      %v7962 = vsel %vm1114, %v7885, 0
      %v7965 = vsel %vm1114, %v7886, 0
      %v7968 = vsel %vm1114, %v7887, 0
      %v7971 = vsel %vm1114, %v7888, 0
      %v7974 = vsel %vm1114, %v7889, 0
      %v7977 = vsel %vm1114, %v7890, 0
      %v7980 = vsel %vm1114, %v7891, 0
      %v7983 = vsel %vm1114, %v7892, 0
      %v7986 = vsel %vm1114, %v7893, 0
      %v7989 = vsel %vm1114, %v7894, 0
      %7991 = vmatprep.subr.mxu0 0.0
      %7992 = vmatpush1.msra.mxu0 %v7829
      %7993 = vmatprep.subr.mxu0 0.0
      %7994 = vmatpush1.msra.mxu0 %v7834
      %7995 = vmatprep.subr.mxu0 0.0
      %7996 = vmatpush1.msra.mxu0 %v7839
      %7997 = vmatprep.subr.mxu0 0.0
      %7998 = vmatpush1.msra.mxu0 %v7844
      %7999 = vmatprep.subr.mxu0 0.0
      %8000 = vmatpush1.msra.mxu0 %v7849
      %8001 = vmatprep.subr.mxu0 0.0
      %8002 = vmatpush1.msra.mxu0 %v7854
      %8003 = vmatprep.subr.mxu0 0.0
      %8004 = vmatpush1.msra.mxu0 %v7859
      %8005 = vmatprep.subr.mxu0 0.0
      %8006 = vmatpush1.msra.mxu0 0.0
      %8007 = vmatprep.subr.mxu0 0.0
      %8008 = vmatpush1.msra.mxu0 0.0
      %8009 = vmatprep.subr.mxu0 0.0
      %8010 = vmatpush1.msra.mxu0 0.0
      %8011 = vmatprep.subr.mxu0 0.0
      %8012 = vmatpush1.msra.mxu0 0.0
      %8013 = vmatprep.subr.mxu0 0.0
      %8014 = vmatpush1.msra.mxu0 0.0
      %8015 = vmatprep.subr.mxu0 0.0
      %8016 = vmatpush1.msra.mxu0 0.0
      %8017 = vmatprep.subr.mxu0 0.0
      %8018 = vmatpush1.msra.mxu0 0.0
      %8019 = vmatprep.subr.mxu0 0.0
      %8020 = vmatpush1.msra.mxu0 0.0
      %8021 = vmatprep.subr.mxu0 0.0
      %8022 = vmatpush1.msra.mxu0 0.0
      %8023 = vmatprep.subr.mxu0 0.0
      %8024 = vmatpush1.msra.mxu0 0.0
      %8025 = vmatprep.subr.mxu0 0.0
      %8026 = vmatpush1.msra.mxu0 0.0
      %8027 = vmatprep.subr.mxu0 0.0
      %8028 = vmatpush1.msra.mxu0 0.0
      %8029 = vmatprep.subr.mxu0 0.0
      %8030 = vmatpush1.msra.mxu0 0.0
      %8031 = vmatprep.subr.mxu0 0.0
      %8032 = vmatpush1.msra.mxu0 0.0
      %8033 = vmatprep.subr.mxu0 0.0
      %8034 = vmatpush1.msra.mxu0 0.0
      %8035 = vmatprep.subr.mxu0 0.0
      %8036 = vmatpush1.msra.mxu0 0.0
      %8037 = vmatprep.subr.mxu0 0.0
      %8038 = vmatpush1.msra.mxu0 0.0
      %8039 = vmatprep.subr.mxu0 0.0
      %8040 = vmatpush1.msra.mxu0 0.0
      %8041 = vmatprep.subr.mxu0 0.0
      %8042 = vmatpush1.msra.mxu0 0.0
      %8043 = vmatprep.subr.mxu0 0.0
      %8044 = vmatpush1.msra.mxu0 0.0
      %8045 = vmatprep.subr.mxu0 0.0
      %8046 = vmatpush1.msra.mxu0 0.0
      %8047 = vmatprep.subr.mxu0 0.0
      %8048 = vmatpush1.msra.mxu0 0.0
      %8049 = vmatprep.subr.mxu0 0.0
      %8050 = vmatpush1.msra.mxu0 0.0
      %8051 = vmatprep.subr.mxu0 0.0
      %8052 = vmatpush1.msra.mxu0 0.0
      %8053 = vmatprep.subr.mxu0 0.0
      %8054 = vmatpush1.msra.mxu0 0.0
      %8055 = vmatprep.mubr.f32.mxu0 0.0
      %8056 = vmatmul.mubr.f32.gmra.mrb[0].mxu0 %v7896
      %v8057 = vpop.f32.mrb[0].mxu0
      %v8058 = vadd.f32 0.0, %v8057
      %v8059 = vpop.f32.mrb[0].mxu0
      %8060 = vmatprep.mubr.f32.mxu0 0.0
      %8061 = vmatmul.mubr.f32.gmra.mrb[0].mxu0 %v7899
      %v8062 = vpop.f32.mrb[0].mxu0
      %v8063 = vadd.f32 0.0, %v8062
      %v8064 = vpop.f32.mrb[0].mxu0
      %8065 = vmatprep.mubr.f32.mxu0 0.0
      %8066 = vmatmul.mubr.f32.gmra.mrb[0].mxu0 %v7902
      %v8067 = vpop.f32.mrb[0].mxu0
      %v8068 = vadd.f32 0.0, %v8067
      %v8069 = vpop.f32.mrb[0].mxu0
      %8070 = vmatprep.mubr.f32.mxu0 0.0
      %8071 = vmatmul.mubr.f32.gmra.mrb[0].mxu0 %v7905
      %v8072 = vpop.f32.mrb[0].mxu0
      %v8073 = vadd.f32 0.0, %v8072
      %v8074 = vpop.f32.mrb[0].mxu0
      %8075 = vmatprep.mubr.f32.mxu0 0.0
      %8076 = vmatmul.mubr.f32.gmra.mrb[0].mxu0 %v7908
      %v8077 = vpop.f32.mrb[0].mxu0
      %v8078 = vadd.f32 0.0, %v8077
      %v8079 = vpop.f32.mrb[0].mxu0
      %8080 = vmatprep.mubr.f32.mxu0 0.0
      %8081 = vmatmul.mubr.f32.gmra.mrb[0].mxu0 %v7911
      %v8082 = vpop.f32.mrb[0].mxu0
      %v8083 = vadd.f32 0.0, %v8082
      %v8084 = vpop.f32.mrb[0].mxu0
      %8085 = vmatprep.mubr.f32.mxu0 0.0
      %8086 = vmatmul.mubr.f32.gmra.mrb[0].mxu0 %v7914
      %v8087 = vpop.f32.mrb[0].mxu0
      %v8088 = vadd.f32 0.0, %v8087
      %v8089 = vpop.f32.mrb[0].mxu0
      %8090 = vmatprep.mubr.f32.mxu0 0.0
      %8091 = vmatmul.mubr.f32.gmra.mrb[0].mxu0 %v7917
      %v8092 = vpop.f32.mrb[0].mxu0
      %v8093 = vadd.f32 0.0, %v8092
      %v8094 = vpop.f32.mrb[0].mxu0
      %8095 = vmatprep.mubr.f32.mxu0 0.0
      %8096 = vmatmul.mubr.f32.gmra.mrb[0].mxu0 %v7920
      %v8097 = vpop.f32.mrb[0].mxu0
      %v8098 = vadd.f32 0.0, %v8097
      %v8099 = vpop.f32.mrb[0].mxu0
      %8100 = vmatprep.mubr.f32.mxu0 0.0
      %8101 = vmatmul.mubr.f32.gmra.mrb[0].mxu0 %v7923
      %v8102 = vpop.f32.mrb[0].mxu0
      %v8103 = vadd.f32 0.0, %v8102
      %v8104 = vpop.f32.mrb[0].mxu0
      %8105 = vmatprep.mubr.f32.mxu0 0.0
      %8106 = vmatmul.mubr.f32.gmra.mrb[0].mxu0 %v7926
      %v8107 = vpop.f32.mrb[0].mxu0
      %v8108 = vadd.f32 0.0, %v8107
      %v8109 = vpop.f32.mrb[0].mxu0
      %8110 = vmatprep.mubr.f32.mxu0 0.0
      %8111 = vmatmul.mubr.f32.gmra.mrb[0].mxu0 %v7929
      %v8112 = vpop.f32.mrb[0].mxu0
      %v8113 = vadd.f32 0.0, %v8112
      %v8114 = vpop.f32.mrb[0].mxu0
      %8115 = vmatprep.mubr.f32.mxu0 0.0
      %8116 = vmatmul.mubr.f32.gmra.mrb[0].mxu0 %v7932
      %v8117 = vpop.f32.mrb[0].mxu0
      %v8118 = vadd.f32 0.0, %v8117
      %v8119 = vpop.f32.mrb[0].mxu0
      %8120 = vmatprep.mubr.f32.mxu0 0.0
      %8121 = vmatmul.mubr.f32.gmra.mrb[0].mxu0 %v7935
      %v8122 = vpop.f32.mrb[0].mxu0
      %v8123 = vadd.f32 0.0, %v8122
      %v8124 = vpop.f32.mrb[0].mxu0
      %8125 = vmatprep.mubr.f32.mxu0 0.0
      %8126 = vmatmul.mubr.f32.gmra.mrb[0].mxu0 %v7938
      %v8127 = vpop.f32.mrb[0].mxu0
      %v8128 = vadd.f32 0.0, %v8127
      %v8129 = vpop.f32.mrb[0].mxu0
      %8130 = vmatprep.mubr.f32.mxu0 0.0
      %8131 = vmatmul.mubr.f32.gmra.mrb[0].mxu0 %v7941
      %v8132 = vpop.f32.mrb[0].mxu0
      %v8133 = vadd.f32 0.0, %v8132
      %v8134 = vpop.f32.mrb[0].mxu0
      %8135 = vmatprep.mubr.f32.mxu0 0.0
      %8136 = vmatmul.mubr.f32.gmra.mrb[0].mxu0 %v7944
      %v8137 = vpop.f32.mrb[0].mxu0
      %v8138 = vadd.f32 0.0, %v8137
      %v8139 = vpop.f32.mrb[0].mxu0
      %8140 = vmatprep.mubr.f32.mxu0 0.0
      %8141 = vmatmul.mubr.f32.gmra.mrb[0].mxu0 %v7947
      %v8142 = vpop.f32.mrb[0].mxu0
      %v8143 = vadd.f32 0.0, %v8142
      %v8144 = vpop.f32.mrb[0].mxu0
      %8145 = vmatprep.mubr.f32.mxu0 0.0
      %8146 = vmatmul.mubr.f32.gmra.mrb[0].mxu0 %v7950
      %v8147 = vpop.f32.mrb[0].mxu0
      %v8148 = vadd.f32 0.0, %v8147
      %v8149 = vpop.f32.mrb[0].mxu0
      %8150 = vmatprep.mubr.f32.mxu0 0.0
      %8151 = vmatmul.mubr.f32.gmra.mrb[0].mxu0 %v7953
      %v8152 = vpop.f32.mrb[0].mxu0
      %v8153 = vadd.f32 0.0, %v8152
      %v8154 = vpop.f32.mrb[0].mxu0
      %8155 = vmatprep.mubr.f32.mxu0 0.0
      %8156 = vmatmul.mubr.f32.gmra.mrb[0].mxu0 %v7956
      %v8157 = vpop.f32.mrb[0].mxu0
      %v8158 = vadd.f32 0.0, %v8157
      %v8159 = vpop.f32.mrb[0].mxu0
      %8160 = vmatprep.mubr.f32.mxu0 0.0
      %8161 = vmatmul.mubr.f32.gmra.mrb[0].mxu0 %v7959
      %v8162 = vpop.f32.mrb[0].mxu0
      %v8163 = vadd.f32 0.0, %v8162
      %v8164 = vpop.f32.mrb[0].mxu0
      %8165 = vmatprep.mubr.f32.mxu0 0.0
      %8166 = vmatmul.mubr.f32.gmra.mrb[0].mxu0 %v7962
      %v8167 = vpop.f32.mrb[0].mxu0
      %v8168 = vadd.f32 0.0, %v8167
      %v8169 = vpop.f32.mrb[0].mxu0
      %8170 = vmatprep.mubr.f32.mxu0 0.0
      %8171 = vmatmul.mubr.f32.gmra.mrb[0].mxu0 %v7965
      %v8172 = vpop.f32.mrb[0].mxu0
      %v8173 = vadd.f32 0.0, %v8172
      %v8174 = vpop.f32.mrb[0].mxu0
      %8175 = vmatprep.mubr.f32.mxu0 0.0
      %8176 = vmatmul.mubr.f32.gmra.mrb[0].mxu0 %v7968
      %v8177 = vpop.f32.mrb[0].mxu0
      %v8178 = vadd.f32 0.0, %v8177
      %v8179 = vpop.f32.mrb[0].mxu0
      %8180 = vmatprep.mubr.f32.mxu0 0.0
      %8181 = vmatmul.mubr.f32.gmra.mrb[0].mxu0 %v7971
      %v8182 = vpop.f32.mrb[0].mxu0
      %v8183 = vadd.f32 0.0, %v8182
      %v8184 = vpop.f32.mrb[0].mxu0
      %8185 = vmatprep.mubr.f32.mxu0 0.0
      %8186 = vmatmul.mubr.f32.gmra.mrb[0].mxu0 %v7974
      %v8187 = vpop.f32.mrb[0].mxu0
      %v8188 = vadd.f32 0.0, %v8187
      %v8189 = vpop.f32.mrb[0].mxu0
      %8190 = vmatprep.mubr.f32.mxu0 0.0
      %8191 = vmatmul.mubr.f32.gmra.mrb[0].mxu0 %v7977
      %v8192 = vpop.f32.mrb[0].mxu0
      %v8193 = vadd.f32 0.0, %v8192
      %v8194 = vpop.f32.mrb[0].mxu0
      %8195 = vmatprep.mubr.f32.mxu0 0.0
      %8196 = vmatmul.mubr.f32.gmra.mrb[0].mxu0 %v7980
      %v8197 = vpop.f32.mrb[0].mxu0
      %v8198 = vadd.f32 0.0, %v8197
      %v8199 = vpop.f32.mrb[0].mxu0
      %8200 = vmatprep.mubr.f32.mxu0 0.0
      %8201 = vmatmul.mubr.f32.gmra.mrb[0].mxu0 %v7983
      %v8202 = vpop.f32.mrb[0].mxu0
      %v8203 = vadd.f32 0.0, %v8202
      %v8204 = vpop.f32.mrb[0].mxu0
      %8205 = vmatprep.mubr.f32.mxu0 0.0
      %8206 = vmatmul.mubr.f32.gmra.mrb[0].mxu0 %v7986
      %v8207 = vpop.f32.mrb[0].mxu0
      %v8208 = vadd.f32 0.0, %v8207
      %v8209 = vpop.f32.mrb[0].mxu0
      %8210 = vmatprep.mubr.f32.mxu0 0.0
      %8211 = vmatmul.mubr.f32.gmra.mrb[0].mxu0 %v7989
      %v8212 = vpop.f32.mrb[0].mxu0
      %v8213 = vadd.f32 0.0, %v8212
      %v8214 = vpop.f32.mrb[0].mxu0
      %8215 = vdwg.mxu0
      %v8216 = vadd.f32 %v7725, %v8058
      %v8217 = vadd.f32 %v7726, %v8063
      %v8218 = vadd.f32 %v7727, %v8068
      %v8219 = vadd.f32 %v7728, %v8073
      %v8220 = vadd.f32 %v7729, %v8078
      %v8221 = vadd.f32 %v7730, %v8083
      %v8222 = vadd.f32 %v7731, %v8088
      %v8223 = vadd.f32 %v7732, %v8093
      %v8224 = vadd.f32 %v7733, %v8098
      %v8225 = vadd.f32 %v7734, %v8103
      %v8226 = vadd.f32 %v7735, %v8108
      %v8227 = vadd.f32 %v7736, %v8113
      %v8228 = vadd.f32 %v7737, %v8118
      %v8229 = vadd.f32 %v7738, %v8123
      %v8230 = vadd.f32 %v7739, %v8128
      %v8231 = vadd.f32 %v7740, %v8133
      %v8232 = vadd.f32 %v7741, %v8138
      %v8233 = vadd.f32 %v7742, %v8143
      %v8234 = vadd.f32 %v7743, %v8148
      %v8235 = vadd.f32 %v7744, %v8153
      %v8236 = vadd.f32 %v7745, %v8158
      %v8237 = vadd.f32 %v7746, %v8163
      %v8238 = vadd.f32 %v7747, %v8168
      %v8239 = vadd.f32 %v7748, %v8173
      %v8240 = vadd.f32 %v7749, %v8178
      %v8241 = vadd.f32 %v7750, %v8183
      %v8242 = vadd.f32 %v7751, %v8188
      %v8243 = vadd.f32 %v7752, %v8193
      %v8244 = vadd.f32 %v7753, %v8198
      %v8245 = vadd.f32 %v7754, %v8203
      %v8246 = vadd.f32 %v7755, %v8208
      %v8247 = vadd.f32 %v7756, %v8213
      %v8248 = vld [vmem:[#allocation2 + $0x29] sm:$0xff]
      %v8249 = vld [vmem:[#allocation2 + $0x31] sm:$0xff]
      %v8250 = vld [vmem:[#allocation2 + $0x39] sm:$0xff]
      %v8251 = vld [vmem:[#allocation2 + $0x41] sm:$0xff]
      %v8252 = vld [vmem:[#allocation2 + $0x49] sm:$0xff]
      %v8253 = vld [vmem:[#allocation2 + $0x51] sm:$0xff]
      %v8254 = vld [vmem:[#allocation2 + $0x59] sm:$0xff]
      %v8255 = vld [vmem:[#allocation2 + $0x61] sm:$0xff]
      %v8256 = vld [vmem:[#allocation2 + $0x69] sm:$0xff]
      %v8257 = vld [vmem:[#allocation2 + $0x71] sm:$0xff]
      %v8258 = vld [vmem:[#allocation2 + $0x79] sm:$0xff]
      %v8259 = vld [vmem:[#allocation2 + $0x81] sm:$0xff]
      %v8260 = vld [vmem:[#allocation2 + $0x89] sm:$0xff]
      %v8261 = vld [vmem:[#allocation2 + $0x91] sm:$0xff]
      %v8262 = vld [vmem:[#allocation2 + $0x99] sm:$0xff]
      %v8263 = vld [vmem:[#allocation2 + $0xa1] sm:$0xff]
      %v8264 = vld [vmem:[#allocation2 + $0xa9] sm:$0xff]
      %v8265 = vld [vmem:[#allocation2 + $0xb1] sm:$0xff]
      %v8266 = vld [vmem:[#allocation2 + $0xb9] sm:$0xff]
      %v8267 = vld [vmem:[#allocation2 + $0xc1] sm:$0xff]
      %v8268 = vld [vmem:[#allocation2 + $0xc9] sm:$0xff]
      %v8269 = vld [vmem:[#allocation2 + $0xd1] sm:$0xff]
      %v8270 = vld [vmem:[#allocation2 + $0xd9] sm:$0xff]
      %v8271 = vld [vmem:[#allocation2 + $0xe1] sm:$0xff]
      %v8272 = vld [vmem:[#allocation2 + $0xe9] sm:$0xff]
      %v8273 = vld [vmem:[#allocation2 + $0xf1] sm:$0xff]
      %v8274 = vld [vmem:[#allocation2 + $0xf9] sm:$0xff]
      %v8275 = vld [vmem:[#allocation2 + $0x101] sm:$0xff]
      %v8276 = vld [vmem:[#allocation2 + $0x109] sm:$0xff]
      %v8277 = vld [vmem:[#allocation2 + $0x111] sm:$0xff]
      %v8278 = vld [vmem:[#allocation2 + $0x119] sm:$0xff]
      %v8279 = vld [vmem:[#allocation2 + $0x121] sm:$0xff]
      %v8280 = vmul.f32 %v8248, %v2709
      %v8281 = vmul.f32 %v8249, %v2714
      %v8282 = vmul.f32 %v8250, %v2719
      %v8283 = vmul.f32 %v8251, %v2724
      %v8284 = vmul.f32 %v8252, %v2729
      %v8285 = vmul.f32 %v8253, %v2734
      %v8286 = vmul.f32 %v8254, %v2739
      %v8287 = vmul.f32 %v8255, %v2744
      %v8288 = vmul.f32 %v8256, %v2749
      %v8289 = vmul.f32 %v8257, %v2754
      %v8290 = vmul.f32 %v8258, %v2759
      %v8291 = vmul.f32 %v8259, %v2764
      %v8292 = vmul.f32 %v8260, %v2769
      %v8293 = vmul.f32 %v8261, %v2774
      %v8294 = vmul.f32 %v8262, %v2779
      %v8295 = vmul.f32 %v8263, %v2784
      %v8296 = vmul.f32 %v8264, %v2789
      %v8297 = vmul.f32 %v8265, %v2794
      %v8298 = vmul.f32 %v8266, %v2799
      %v8299 = vmul.f32 %v8267, %v2804
      %v8300 = vmul.f32 %v8268, %v2809
      %v8301 = vmul.f32 %v8269, %v2814
      %v8302 = vmul.f32 %v8270, %v2819
      %v8303 = vmul.f32 %v8271, %v2824
      %v8304 = vmul.f32 %v8272, %v2829
      %v8305 = vmul.f32 %v8273, %v2834
      %v8306 = vmul.f32 %v8274, %v2839
      %v8307 = vmul.f32 %v8275, %v2844
      %v8308 = vmul.f32 %v8276, %v2849
      %v8309 = vmul.f32 %v8277, %v2854
      %v8310 = vmul.f32 %v8278, %v2859
      %v8311 = vmul.f32 %v8279, %v2864
      %s8312 = scalar_lea.vmem %s6, 32
      %v8313 = vld [vmem:[%s8312] sm:$0xf]
      %v8315 = vsel %vm514, %v8280, 0
      %v8318 = vsel %vm514, %v8281, 0
      %v8321 = vsel %vm514, %v8282, 0
      %v8324 = vsel %vm514, %v8283, 0
      %v8327 = vsel %vm514, %v8284, 0
      %v8330 = vsel %vm514, %v8285, 0
      %v8333 = vsel %vm514, %v8286, 0
      %v8336 = vsel %vm514, %v8287, 0
      %v8339 = vsel %vm514, %v8288, 0
      %v8342 = vsel %vm514, %v8289, 0
      %v8345 = vsel %vm514, %v8290, 0
      %v8348 = vsel %vm514, %v8291, 0
      %v8351 = vsel %vm514, %v8292, 0
      %v8354 = vsel %vm514, %v8293, 0
      %v8357 = vsel %vm514, %v8294, 0
      %v8360 = vsel %vm514, %v8295, 0
      %v8363 = vsel %vm514, %v8296, 0
      %v8366 = vsel %vm514, %v8297, 0
      %v8369 = vsel %vm514, %v8298, 0
      %v8372 = vsel %vm514, %v8299, 0
      %v8375 = vsel %vm514, %v8300, 0
      %v8378 = vsel %vm514, %v8301, 0
      %v8381 = vsel %vm514, %v8302, 0
      %v8384 = vsel %vm514, %v8303, 0
      %v8387 = vsel %vm514, %v8304, 0
      %v8390 = vsel %vm514, %v8305, 0
      %v8393 = vsel %vm514, %v8306, 0
      %v8396 = vsel %vm514, %v8307, 0
      %v8399 = vsel %vm514, %v8308, 0
      %v8402 = vsel %vm514, %v8309, 0
      %v8405 = vsel %vm514, %v8310, 0
      %v8408 = vsel %vm514, %v8311, 0
      %v8411 = vsel %vm536, %v8313, 0
      %8413 = vmatprep.subr.mxu0 0.0
      %8414 = vmatpush1.msra.mxu0 %v8411
      %8415 = vmatprep.subr.mxu0 0.0
      %8416 = vmatpush1.msra.mxu0 0.0
      %8417 = vmatprep.subr.mxu0 0.0
      %8418 = vmatpush1.msra.mxu0 0.0
      %8419 = vmatprep.subr.mxu0 0.0
      %8420 = vmatpush1.msra.mxu0 0.0
      %8421 = vmatprep.subr.mxu0 0.0
      %8422 = vmatpush1.msra.mxu0 0.0
      %8423 = vmatprep.subr.mxu0 0.0
      %8424 = vmatpush1.msra.mxu0 0.0
      %8425 = vmatprep.subr.mxu0 0.0
      %8426 = vmatpush1.msra.mxu0 0.0
      %8427 = vmatprep.subr.mxu0 0.0
      %8428 = vmatpush1.msra.mxu0 0.0
      %8429 = vmatprep.subr.mxu0 0.0
      %8430 = vmatpush1.msra.mxu0 0.0
      %8431 = vmatprep.subr.mxu0 0.0
      %8432 = vmatpush1.msra.mxu0 0.0
      %8433 = vmatprep.subr.mxu0 0.0
      %8434 = vmatpush1.msra.mxu0 0.0
      %8435 = vmatprep.subr.mxu0 0.0
      %8436 = vmatpush1.msra.mxu0 0.0
      %8437 = vmatprep.subr.mxu0 0.0
      %8438 = vmatpush1.msra.mxu0 0.0
      %8439 = vmatprep.subr.mxu0 0.0
      %8440 = vmatpush1.msra.mxu0 0.0
      %8441 = vmatprep.subr.mxu0 0.0
      %8442 = vmatpush1.msra.mxu0 0.0
      %8443 = vmatprep.subr.mxu0 0.0
      %8444 = vmatpush1.msra.mxu0 0.0
      %8445 = vmatprep.subr.mxu0 0.0
      %8446 = vmatpush1.msra.mxu0 0.0
      %8447 = vmatprep.subr.mxu0 0.0
      %8448 = vmatpush1.msra.mxu0 0.0
      %8449 = vmatprep.subr.mxu0 0.0
      %8450 = vmatpush1.msra.mxu0 0.0
      %8451 = vmatprep.subr.mxu0 0.0
      %8452 = vmatpush1.msra.mxu0 0.0
      %8453 = vmatprep.subr.mxu0 0.0
      %8454 = vmatpush1.msra.mxu0 0.0
      %8455 = vmatprep.subr.mxu0 0.0
      %8456 = vmatpush1.msra.mxu0 0.0
      %8457 = vmatprep.subr.mxu0 0.0
      %8458 = vmatpush1.msra.mxu0 0.0
      %8459 = vmatprep.subr.mxu0 0.0
      %8460 = vmatpush1.msra.mxu0 0.0
      %8461 = vmatprep.subr.mxu0 0.0
      %8462 = vmatpush1.msra.mxu0 0.0
      %8463 = vmatprep.subr.mxu0 0.0
      %8464 = vmatpush1.msra.mxu0 0.0
      %8465 = vmatprep.subr.mxu0 0.0
      %8466 = vmatpush1.msra.mxu0 0.0
      %8467 = vmatprep.subr.mxu0 0.0
      %8468 = vmatpush1.msra.mxu0 0.0
      %8469 = vmatprep.subr.mxu0 0.0
      %8470 = vmatpush1.msra.mxu0 0.0
      %8471 = vmatprep.subr.mxu0 0.0
      %8472 = vmatpush1.msra.mxu0 0.0
      %8473 = vmatprep.subr.mxu0 0.0
      %8474 = vmatpush1.msra.mxu0 0.0
      %8475 = vmatprep.subr.mxu0 0.0
      %8476 = vmatpush1.msra.mxu0 0.0
      %8477 = vmatprep.mubr.f32.mxu0 0.0
      %8478 = vmatmul.mubr.f32.gmra.mrb[0].mxu0 %v8315
      %v8479 = vpop.f32.mrb[0].mxu0
      %v8480 = vadd.f32 0.0, %v8479
      %v8481 = vpop.f32.mrb[0].mxu0
      %8482 = vmatprep.mubr.f32.mxu0 0.0
      %8483 = vmatmul.mubr.f32.gmra.mrb[0].mxu0 %v8318
      %v8484 = vpop.f32.mrb[0].mxu0
      %v8485 = vadd.f32 0.0, %v8484
      %v8486 = vpop.f32.mrb[0].mxu0
      %8487 = vmatprep.mubr.f32.mxu0 0.0
      %8488 = vmatmul.mubr.f32.gmra.mrb[0].mxu0 %v8321
      %v8489 = vpop.f32.mrb[0].mxu0
      %v8490 = vadd.f32 0.0, %v8489
      %v8491 = vpop.f32.mrb[0].mxu0
      %8492 = vmatprep.mubr.f32.mxu0 0.0
      %8493 = vmatmul.mubr.f32.gmra.mrb[0].mxu0 %v8324
      %v8494 = vpop.f32.mrb[0].mxu0
      %v8495 = vadd.f32 0.0, %v8494
      %v8496 = vpop.f32.mrb[0].mxu0
      %8497 = vmatprep.mubr.f32.mxu0 0.0
      %8498 = vmatmul.mubr.f32.gmra.mrb[0].mxu0 %v8327
      %v8499 = vpop.f32.mrb[0].mxu0
      %v8500 = vadd.f32 0.0, %v8499
      %v8501 = vpop.f32.mrb[0].mxu0
      %8502 = vmatprep.mubr.f32.mxu0 0.0
      %8503 = vmatmul.mubr.f32.gmra.mrb[0].mxu0 %v8330
      %v8504 = vpop.f32.mrb[0].mxu0
      %v8505 = vadd.f32 0.0, %v8504
      %v8506 = vpop.f32.mrb[0].mxu0
      %8507 = vmatprep.mubr.f32.mxu0 0.0
      %8508 = vmatmul.mubr.f32.gmra.mrb[0].mxu0 %v8333
      %v8509 = vpop.f32.mrb[0].mxu0
      %v8510 = vadd.f32 0.0, %v8509
      %v8511 = vpop.f32.mrb[0].mxu0
      %8512 = vmatprep.mubr.f32.mxu0 0.0
      %8513 = vmatmul.mubr.f32.gmra.mrb[0].mxu0 %v8336
      %v8514 = vpop.f32.mrb[0].mxu0
      %v8515 = vadd.f32 0.0, %v8514
      %v8516 = vpop.f32.mrb[0].mxu0
      %8517 = vmatprep.mubr.f32.mxu0 0.0
      %8518 = vmatmul.mubr.f32.gmra.mrb[0].mxu0 %v8339
      %v8519 = vpop.f32.mrb[0].mxu0
      %v8520 = vadd.f32 0.0, %v8519
      %v8521 = vpop.f32.mrb[0].mxu0
      %8522 = vmatprep.mubr.f32.mxu0 0.0
      %8523 = vmatmul.mubr.f32.gmra.mrb[0].mxu0 %v8342
      %v8524 = vpop.f32.mrb[0].mxu0
      %v8525 = vadd.f32 0.0, %v8524
      %v8526 = vpop.f32.mrb[0].mxu0
      %8527 = vmatprep.mubr.f32.mxu0 0.0
      %8528 = vmatmul.mubr.f32.gmra.mrb[0].mxu0 %v8345
      %v8529 = vpop.f32.mrb[0].mxu0
      %v8530 = vadd.f32 0.0, %v8529
      %v8531 = vpop.f32.mrb[0].mxu0
      %8532 = vmatprep.mubr.f32.mxu0 0.0
      %8533 = vmatmul.mubr.f32.gmra.mrb[0].mxu0 %v8348
      %v8534 = vpop.f32.mrb[0].mxu0
      %v8535 = vadd.f32 0.0, %v8534
      %v8536 = vpop.f32.mrb[0].mxu0
      %8537 = vmatprep.mubr.f32.mxu0 0.0
      %8538 = vmatmul.mubr.f32.gmra.mrb[0].mxu0 %v8351
      %v8539 = vpop.f32.mrb[0].mxu0
      %v8540 = vadd.f32 0.0, %v8539
      %v8541 = vpop.f32.mrb[0].mxu0
      %8542 = vmatprep.mubr.f32.mxu0 0.0
      %8543 = vmatmul.mubr.f32.gmra.mrb[0].mxu0 %v8354
      %v8544 = vpop.f32.mrb[0].mxu0
      %v8545 = vadd.f32 0.0, %v8544
      %v8546 = vpop.f32.mrb[0].mxu0
      %8547 = vmatprep.mubr.f32.mxu0 0.0
      %8548 = vmatmul.mubr.f32.gmra.mrb[0].mxu0 %v8357
      %v8549 = vpop.f32.mrb[0].mxu0
      %v8550 = vadd.f32 0.0, %v8549
      %v8551 = vpop.f32.mrb[0].mxu0
      %8552 = vmatprep.mubr.f32.mxu0 0.0
      %8553 = vmatmul.mubr.f32.gmra.mrb[0].mxu0 %v8360
      %v8554 = vpop.f32.mrb[0].mxu0
      %v8555 = vadd.f32 0.0, %v8554
      %v8556 = vpop.f32.mrb[0].mxu0
      %8557 = vmatprep.mubr.f32.mxu0 0.0
      %8558 = vmatmul.mubr.f32.gmra.mrb[0].mxu0 %v8363
      %v8559 = vpop.f32.mrb[0].mxu0
      %v8560 = vadd.f32 0.0, %v8559
      %v8561 = vpop.f32.mrb[0].mxu0
      %8562 = vmatprep.mubr.f32.mxu0 0.0
      %8563 = vmatmul.mubr.f32.gmra.mrb[0].mxu0 %v8366
      %v8564 = vpop.f32.mrb[0].mxu0
      %v8565 = vadd.f32 0.0, %v8564
      %v8566 = vpop.f32.mrb[0].mxu0
      %8567 = vmatprep.mubr.f32.mxu0 0.0
      %8568 = vmatmul.mubr.f32.gmra.mrb[0].mxu0 %v8369
      %v8569 = vpop.f32.mrb[0].mxu0
      %v8570 = vadd.f32 0.0, %v8569
      %v8571 = vpop.f32.mrb[0].mxu0
      %8572 = vmatprep.mubr.f32.mxu0 0.0
      %8573 = vmatmul.mubr.f32.gmra.mrb[0].mxu0 %v8372
      %v8574 = vpop.f32.mrb[0].mxu0
      %v8575 = vadd.f32 0.0, %v8574
      %v8576 = vpop.f32.mrb[0].mxu0
      %8577 = vmatprep.mubr.f32.mxu0 0.0
      %8578 = vmatmul.mubr.f32.gmra.mrb[0].mxu0 %v8375
      %v8579 = vpop.f32.mrb[0].mxu0
      %v8580 = vadd.f32 0.0, %v8579
      %v8581 = vpop.f32.mrb[0].mxu0
      %8582 = vmatprep.mubr.f32.mxu0 0.0
      %8583 = vmatmul.mubr.f32.gmra.mrb[0].mxu0 %v8378
      %v8584 = vpop.f32.mrb[0].mxu0
      %v8585 = vadd.f32 0.0, %v8584
      %v8586 = vpop.f32.mrb[0].mxu0
      %8587 = vmatprep.mubr.f32.mxu0 0.0
      %8588 = vmatmul.mubr.f32.gmra.mrb[0].mxu0 %v8381
      %v8589 = vpop.f32.mrb[0].mxu0
      %v8590 = vadd.f32 0.0, %v8589
      %v8591 = vpop.f32.mrb[0].mxu0
      %8592 = vmatprep.mubr.f32.mxu0 0.0
      %8593 = vmatmul.mubr.f32.gmra.mrb[0].mxu0 %v8384
      %v8594 = vpop.f32.mrb[0].mxu0
      %v8595 = vadd.f32 0.0, %v8594
      %v8596 = vpop.f32.mrb[0].mxu0
      %8597 = vmatprep.mubr.f32.mxu0 0.0
      %8598 = vmatmul.mubr.f32.gmra.mrb[0].mxu0 %v8387
      %v8599 = vpop.f32.mrb[0].mxu0
      %v8600 = vadd.f32 0.0, %v8599
      %v8601 = vpop.f32.mrb[0].mxu0
      %8602 = vmatprep.mubr.f32.mxu0 0.0
      %8603 = vmatmul.mubr.f32.gmra.mrb[0].mxu0 %v8390
      %v8604 = vpop.f32.mrb[0].mxu0
      %v8605 = vadd.f32 0.0, %v8604
      %v8606 = vpop.f32.mrb[0].mxu0
      %8607 = vmatprep.mubr.f32.mxu0 0.0
      %8608 = vmatmul.mubr.f32.gmra.mrb[0].mxu0 %v8393
      %v8609 = vpop.f32.mrb[0].mxu0
      %v8610 = vadd.f32 0.0, %v8609
      %v8611 = vpop.f32.mrb[0].mxu0
      %8612 = vmatprep.mubr.f32.mxu0 0.0
      %8613 = vmatmul.mubr.f32.gmra.mrb[0].mxu0 %v8396
      %v8614 = vpop.f32.mrb[0].mxu0
      %v8615 = vadd.f32 0.0, %v8614
      %v8616 = vpop.f32.mrb[0].mxu0
      %8617 = vmatprep.mubr.f32.mxu0 0.0
      %8618 = vmatmul.mubr.f32.gmra.mrb[0].mxu0 %v8399
      %v8619 = vpop.f32.mrb[0].mxu0
      %v8620 = vadd.f32 0.0, %v8619
      %v8621 = vpop.f32.mrb[0].mxu0
      %8622 = vmatprep.mubr.f32.mxu0 0.0
      %8623 = vmatmul.mubr.f32.gmra.mrb[0].mxu0 %v8402
      %v8624 = vpop.f32.mrb[0].mxu0
      %v8625 = vadd.f32 0.0, %v8624
      %v8626 = vpop.f32.mrb[0].mxu0
      %8627 = vmatprep.mubr.f32.mxu0 0.0
      %8628 = vmatmul.mubr.f32.gmra.mrb[0].mxu0 %v8405
      %v8629 = vpop.f32.mrb[0].mxu0
      %v8630 = vadd.f32 0.0, %v8629
      %v8631 = vpop.f32.mrb[0].mxu0
      %8632 = vmatprep.mubr.f32.mxu0 0.0
      %8633 = vmatmul.mubr.f32.gmra.mrb[0].mxu0 %v8408
      %v8634 = vpop.f32.mrb[0].mxu0
      %v8635 = vadd.f32 0.0, %v8634
      %v8636 = vpop.f32.mrb[0].mxu0
      %8637 = vdwg.mxu0
      %v8638 = vadd.f32 %v8216, %v8480
      %v8639 = vadd.f32 %v8217, %v8485
      %v8640 = vadd.f32 %v8218, %v8490
      %v8641 = vadd.f32 %v8219, %v8495
      %v8642 = vadd.f32 %v8220, %v8500
      %v8643 = vadd.f32 %v8221, %v8505
      %v8644 = vadd.f32 %v8222, %v8510
      %v8645 = vadd.f32 %v8223, %v8515
      %v8646 = vadd.f32 %v8224, %v8520
      %v8647 = vadd.f32 %v8225, %v8525
      %v8648 = vadd.f32 %v8226, %v8530
      %v8649 = vadd.f32 %v8227, %v8535
      %v8650 = vadd.f32 %v8228, %v8540
      %v8651 = vadd.f32 %v8229, %v8545
      %v8652 = vadd.f32 %v8230, %v8550
      %v8653 = vadd.f32 %v8231, %v8555
      %v8654 = vadd.f32 %v8232, %v8560
      %v8655 = vadd.f32 %v8233, %v8565
      %v8656 = vadd.f32 %v8234, %v8570
      %v8657 = vadd.f32 %v8235, %v8575
      %v8658 = vadd.f32 %v8236, %v8580
      %v8659 = vadd.f32 %v8237, %v8585
      %v8660 = vadd.f32 %v8238, %v8590
      %v8661 = vadd.f32 %v8239, %v8595
      %v8662 = vadd.f32 %v8240, %v8600
      %v8663 = vadd.f32 %v8241, %v8605
      %v8664 = vadd.f32 %v8242, %v8610
      %v8665 = vadd.f32 %v8243, %v8615
      %v8666 = vadd.f32 %v8244, %v8620
      %v8667 = vadd.f32 %v8245, %v8625
      %v8668 = vadd.f32 %v8246, %v8630
      %v8669 = vadd.f32 %v8247, %v8635
      %s8670 = scalar_lea.vmem %s7, 256
      %v8671 = vld [vmem:[%s8670] sm:$0xff]
      %v8672 = vld [vmem:[%s8670 + $0x8] sm:$0xff]
      %v8673 = vld [vmem:[%s8670 + $0x10] sm:$0xff]
      %v8674 = vld [vmem:[%s8670 + $0x18] sm:$0xff]
      %8675 = vmatprep.subr.mxu0 0.0
      %8676 = vmatpush1.msra.mxu0 %v8671
      %8677 = vmatprep.subr.mxu0 0.0
      %8678 = vmatpush1.msra.mxu0 %v8672
      %8679 = vmatprep.subr.mxu0 0.0
      %8680 = vmatpush1.msra.mxu0 %v8673
      %8681 = vmatprep.subr.mxu0 0.0
      %8682 = vmatpush1.msra.mxu0 %v8674
      %8683 = vmatprep.subr.mxu0 0.0
      %8684 = vmatpush1.msra.mxu0 0.0
      %8685 = vmatprep.subr.mxu0 0.0
      %8686 = vmatpush1.msra.mxu0 0.0
      %8687 = vmatprep.subr.mxu0 0.0
      %8688 = vmatpush1.msra.mxu0 0.0
      %8689 = vmatprep.subr.mxu0 0.0
      %8690 = vmatpush1.msra.mxu0 0.0
      %8691 = vmatprep.subr.mxu0 0.0
      %8692 = vmatpush1.msra.mxu0 0.0
      %8693 = vmatprep.subr.mxu0 0.0
      %8694 = vmatpush1.msra.mxu0 0.0
      %8695 = vmatprep.subr.mxu0 0.0
      %8696 = vmatpush1.msra.mxu0 0.0
      %8697 = vmatprep.subr.mxu0 0.0
      %8698 = vmatpush1.msra.mxu0 0.0
      %8699 = vmatprep.subr.mxu0 0.0
      %8700 = vmatpush1.msra.mxu0 0.0
      %8701 = vmatprep.subr.mxu0 0.0
      %8702 = vmatpush1.msra.mxu0 0.0
      %8703 = vmatprep.subr.mxu0 0.0
      %8704 = vmatpush1.msra.mxu0 0.0
      %8705 = vmatprep.subr.mxu0 0.0
      %8706 = vmatpush1.msra.mxu0 0.0
      %8707 = vmatprep.subr.mxu0 0.0
      %8708 = vmatpush1.msra.mxu0 0.0
      %8709 = vmatprep.subr.mxu0 0.0
      %8710 = vmatpush1.msra.mxu0 0.0
      %8711 = vmatprep.subr.mxu0 0.0
      %8712 = vmatpush1.msra.mxu0 0.0
      %8713 = vmatprep.subr.mxu0 0.0
      %8714 = vmatpush1.msra.mxu0 0.0
      %8715 = vmatprep.subr.mxu0 0.0
      %8716 = vmatpush1.msra.mxu0 0.0
      %8717 = vmatprep.subr.mxu0 0.0
      %8718 = vmatpush1.msra.mxu0 0.0
      %8719 = vmatprep.subr.mxu0 0.0
      %8720 = vmatpush1.msra.mxu0 0.0
      %8721 = vmatprep.subr.mxu0 0.0
      %8722 = vmatpush1.msra.mxu0 0.0
      %8723 = vmatprep.subr.mxu0 0.0
      %8724 = vmatpush1.msra.mxu0 0.0
      %8725 = vmatprep.subr.mxu0 0.0
      %8726 = vmatpush1.msra.mxu0 0.0
      %8727 = vmatprep.subr.mxu0 0.0
      %8728 = vmatpush1.msra.mxu0 0.0
      %8729 = vmatprep.subr.mxu0 0.0
      %8730 = vmatpush1.msra.mxu0 0.0
      %8731 = vmatprep.subr.mxu0 0.0
      %8732 = vmatpush1.msra.mxu0 0.0
      %8733 = vmatprep.subr.mxu0 0.0
      %8734 = vmatpush1.msra.mxu0 0.0
      %8735 = vmatprep.subr.mxu0 0.0
      %8736 = vmatpush1.msra.mxu0 0.0
      %8737 = vmatprep.subr.mxu0 0.0
      %8738 = vmatpush1.msra.mxu0 0.0
      %8739 = vmatprep.mubr.f32.mxu0 0.0
      %8740 = vmatmul.mubr.f32.gmra.mrb[0].mxu0 %v962
      %v8741 = vpop.f32.mrb[0].mxu0
      %v8742 = vadd.f32 0.0, %v8741
      %v8743 = vpop.f32.mrb[0].mxu0
      %8744 = vmatprep.mubr.f32.mxu0 0.0
      %8745 = vmatmul.mubr.f32.gmra.mrb[0].mxu0 %v965
      %v8746 = vpop.f32.mrb[0].mxu0
      %v8747 = vadd.f32 0.0, %v8746
      %v8748 = vpop.f32.mrb[0].mxu0
      %8749 = vmatprep.mubr.f32.mxu0 0.0
      %8750 = vmatmul.mubr.f32.gmra.mrb[0].mxu0 %v968
      %v8751 = vpop.f32.mrb[0].mxu0
      %v8752 = vadd.f32 0.0, %v8751
      %v8753 = vpop.f32.mrb[0].mxu0
      %8754 = vmatprep.mubr.f32.mxu0 0.0
      %8755 = vmatmul.mubr.f32.gmra.mrb[0].mxu0 %v971
      %v8756 = vpop.f32.mrb[0].mxu0
      %v8757 = vadd.f32 0.0, %v8756
      %v8758 = vpop.f32.mrb[0].mxu0
      %8759 = vmatprep.mubr.f32.mxu0 0.0
      %8760 = vmatmul.mubr.f32.gmra.mrb[0].mxu0 %v974
      %v8761 = vpop.f32.mrb[0].mxu0
      %v8762 = vadd.f32 0.0, %v8761
      %v8763 = vpop.f32.mrb[0].mxu0
      %8764 = vmatprep.mubr.f32.mxu0 0.0
      %8765 = vmatmul.mubr.f32.gmra.mrb[0].mxu0 %v977
      %v8766 = vpop.f32.mrb[0].mxu0
      %v8767 = vadd.f32 0.0, %v8766
      %v8768 = vpop.f32.mrb[0].mxu0
      %8769 = vmatprep.mubr.f32.mxu0 0.0
      %8770 = vmatmul.mubr.f32.gmra.mrb[0].mxu0 %v980
      %v8771 = vpop.f32.mrb[0].mxu0
      %v8772 = vadd.f32 0.0, %v8771
      %v8773 = vpop.f32.mrb[0].mxu0
      %8774 = vdwg.mxu0
      %s8775 = scalar_lea.vmem %s5, 2048
      %v8776 = vld [vmem:[%s8775] sm:$0xff]
      %v8777 = vld [vmem:[%s8775 + $0x8] sm:$0xff]
      %v8778 = vld [vmem:[%s8775 + $0x10] sm:$0xff]
      %v8779 = vld [vmem:[%s8775 + $0x18] sm:$0xff]
      %v8780 = vld [vmem:[%s8775 + $0x20] sm:$0xff]
      %v8781 = vld [vmem:[%s8775 + $0x28] sm:$0xff]
      %v8782 = vld [vmem:[%s8775 + $0x30] sm:$0xff]
      %v8783 = vld [vmem:[%s8775 + $0x38] sm:$0xff]
      %v8784 = vld [vmem:[%s8775 + $0x40] sm:$0xff]
      %v8785 = vld [vmem:[%s8775 + $0x48] sm:$0xff]
      %v8786 = vld [vmem:[%s8775 + $0x50] sm:$0xff]
      %v8787 = vld [vmem:[%s8775 + $0x58] sm:$0xff]
      %v8788 = vld [vmem:[%s8775 + $0x60] sm:$0xff]
      %v8789 = vld [vmem:[%s8775 + $0x68] sm:$0xff]
      %v8790 = vld [vmem:[%s8775 + $0x70] sm:$0xff]
      %v8791 = vld [vmem:[%s8775 + $0x78] sm:$0xff]
      %v8792 = vld [vmem:[%s8775 + $0x80] sm:$0xff]
      %v8793 = vld [vmem:[%s8775 + $0x88] sm:$0xff]
      %v8794 = vld [vmem:[%s8775 + $0x90] sm:$0xff]
      %v8795 = vld [vmem:[%s8775 + $0x98] sm:$0xff]
      %v8796 = vld [vmem:[%s8775 + $0xa0] sm:$0xff]
      %v8797 = vld [vmem:[%s8775 + $0xa8] sm:$0xff]
      %v8798 = vld [vmem:[%s8775 + $0xb0] sm:$0xff]
      %v8799 = vld [vmem:[%s8775 + $0xb8] sm:$0xff]
      %v8800 = vld [vmem:[%s8775 + $0xc0] sm:$0xff]
      %v8801 = vld [vmem:[%s8775 + $0xc8] sm:$0xff]
      %v8802 = vld [vmem:[%s8775 + $0xd0] sm:$0xff]
      %v8803 = vld [vmem:[%s8775 + $0xd8] sm:$0xff]
      %v8804 = vld [vmem:[%s8775 + $0xe0] sm:$0xff]
      %v8805 = vld [vmem:[%s8775 + $0xe8] sm:$0xff]
      %v8806 = vld [vmem:[%s8775 + $0xf0] sm:$0xff]
      %v8807 = vld [vmem:[%s8775 + $0xf8] sm:$0xff]
      %v8809 = vsel %vm1114, %v8776, 0
      %v8812 = vsel %vm1114, %v8777, 0
      %v8815 = vsel %vm1114, %v8778, 0
      %v8818 = vsel %vm1114, %v8779, 0
      %v8821 = vsel %vm1114, %v8780, 0
      %v8824 = vsel %vm1114, %v8781, 0
      %v8827 = vsel %vm1114, %v8782, 0
      %v8830 = vsel %vm1114, %v8783, 0
      %v8833 = vsel %vm1114, %v8784, 0
      %v8836 = vsel %vm1114, %v8785, 0
      %v8839 = vsel %vm1114, %v8786, 0
      %v8842 = vsel %vm1114, %v8787, 0
      %v8845 = vsel %vm1114, %v8788, 0
      %v8848 = vsel %vm1114, %v8789, 0
      %v8851 = vsel %vm1114, %v8790, 0
      %v8854 = vsel %vm1114, %v8791, 0
      %v8857 = vsel %vm1114, %v8792, 0
      %v8860 = vsel %vm1114, %v8793, 0
      %v8863 = vsel %vm1114, %v8794, 0
      %v8866 = vsel %vm1114, %v8795, 0
      %v8869 = vsel %vm1114, %v8796, 0
      %v8872 = vsel %vm1114, %v8797, 0
      %v8875 = vsel %vm1114, %v8798, 0
      %v8878 = vsel %vm1114, %v8799, 0
      %v8881 = vsel %vm1114, %v8800, 0
      %v8884 = vsel %vm1114, %v8801, 0
      %v8887 = vsel %vm1114, %v8802, 0
      %v8890 = vsel %vm1114, %v8803, 0
      %v8893 = vsel %vm1114, %v8804, 0
      %v8896 = vsel %vm1114, %v8805, 0
      %v8899 = vsel %vm1114, %v8806, 0
      %v8902 = vsel %vm1114, %v8807, 0
      %8904 = vmatprep.subr.mxu0 0.0
      %8905 = vmatpush1.msra.mxu0 %v8742
      %8906 = vmatprep.subr.mxu0 0.0
      %8907 = vmatpush1.msra.mxu0 %v8747
      %8908 = vmatprep.subr.mxu0 0.0
      %8909 = vmatpush1.msra.mxu0 %v8752
      %8910 = vmatprep.subr.mxu0 0.0
      %8911 = vmatpush1.msra.mxu0 %v8757
      %8912 = vmatprep.subr.mxu0 0.0
      %8913 = vmatpush1.msra.mxu0 %v8762
      %8914 = vmatprep.subr.mxu0 0.0
      %8915 = vmatpush1.msra.mxu0 %v8767
      %8916 = vmatprep.subr.mxu0 0.0
      %8917 = vmatpush1.msra.mxu0 %v8772
      %8918 = vmatprep.subr.mxu0 0.0
      %8919 = vmatpush1.msra.mxu0 0.0
      %8920 = vmatprep.subr.mxu0 0.0
      %8921 = vmatpush1.msra.mxu0 0.0
      %8922 = vmatprep.subr.mxu0 0.0
      %8923 = vmatpush1.msra.mxu0 0.0
      %8924 = vmatprep.subr.mxu0 0.0
      %8925 = vmatpush1.msra.mxu0 0.0
      %8926 = vmatprep.subr.mxu0 0.0
      %8927 = vmatpush1.msra.mxu0 0.0
      %8928 = vmatprep.subr.mxu0 0.0
      %8929 = vmatpush1.msra.mxu0 0.0
      %8930 = vmatprep.subr.mxu0 0.0
      %8931 = vmatpush1.msra.mxu0 0.0
      %8932 = vmatprep.subr.mxu0 0.0
      %8933 = vmatpush1.msra.mxu0 0.0
      %8934 = vmatprep.subr.mxu0 0.0
      %8935 = vmatpush1.msra.mxu0 0.0
      %8936 = vmatprep.subr.mxu0 0.0
      %8937 = vmatpush1.msra.mxu0 0.0
      %8938 = vmatprep.subr.mxu0 0.0
      %8939 = vmatpush1.msra.mxu0 0.0
      %8940 = vmatprep.subr.mxu0 0.0
      %8941 = vmatpush1.msra.mxu0 0.0
      %8942 = vmatprep.subr.mxu0 0.0
      %8943 = vmatpush1.msra.mxu0 0.0
      %8944 = vmatprep.subr.mxu0 0.0
      %8945 = vmatpush1.msra.mxu0 0.0
      %8946 = vmatprep.subr.mxu0 0.0
      %8947 = vmatpush1.msra.mxu0 0.0
      %8948 = vmatprep.subr.mxu0 0.0
      %8949 = vmatpush1.msra.mxu0 0.0
      %8950 = vmatprep.subr.mxu0 0.0
      %8951 = vmatpush1.msra.mxu0 0.0
      %8952 = vmatprep.subr.mxu0 0.0
      %8953 = vmatpush1.msra.mxu0 0.0
      %8954 = vmatprep.subr.mxu0 0.0
      %8955 = vmatpush1.msra.mxu0 0.0
      %8956 = vmatprep.subr.mxu0 0.0
      %8957 = vmatpush1.msra.mxu0 0.0
      %8958 = vmatprep.subr.mxu0 0.0
      %8959 = vmatpush1.msra.mxu0 0.0
      %8960 = vmatprep.subr.mxu0 0.0
      %8961 = vmatpush1.msra.mxu0 0.0
      %8962 = vmatprep.subr.mxu0 0.0
      %8963 = vmatpush1.msra.mxu0 0.0
      %8964 = vmatprep.subr.mxu0 0.0
      %8965 = vmatpush1.msra.mxu0 0.0
      %8966 = vmatprep.subr.mxu0 0.0
      %8967 = vmatpush1.msra.mxu0 0.0
      %8968 = vmatprep.mubr.f32.mxu0 0.0
      %8969 = vmatmul.mubr.f32.gmra.mrb[0].mxu0 %v8809
      %v8970 = vpop.f32.mrb[0].mxu0
      %v8971 = vadd.f32 0.0, %v8970
      %v8972 = vpop.f32.mrb[0].mxu0
      %8973 = vmatprep.mubr.f32.mxu0 0.0
      %8974 = vmatmul.mubr.f32.gmra.mrb[0].mxu0 %v8812
      %v8975 = vpop.f32.mrb[0].mxu0
      %v8976 = vadd.f32 0.0, %v8975
      %v8977 = vpop.f32.mrb[0].mxu0
      %8978 = vmatprep.mubr.f32.mxu0 0.0
      %8979 = vmatmul.mubr.f32.gmra.mrb[0].mxu0 %v8815
      %v8980 = vpop.f32.mrb[0].mxu0
      %v8981 = vadd.f32 0.0, %v8980
      %v8982 = vpop.f32.mrb[0].mxu0
      %8983 = vmatprep.mubr.f32.mxu0 0.0
      %8984 = vmatmul.mubr.f32.gmra.mrb[0].mxu0 %v8818
      %v8985 = vpop.f32.mrb[0].mxu0
      %v8986 = vadd.f32 0.0, %v8985
      %v8987 = vpop.f32.mrb[0].mxu0
      %8988 = vmatprep.mubr.f32.mxu0 0.0
      %8989 = vmatmul.mubr.f32.gmra.mrb[0].mxu0 %v8821
      %v8990 = vpop.f32.mrb[0].mxu0
      %v8991 = vadd.f32 0.0, %v8990
      %v8992 = vpop.f32.mrb[0].mxu0
      %8993 = vmatprep.mubr.f32.mxu0 0.0
      %8994 = vmatmul.mubr.f32.gmra.mrb[0].mxu0 %v8824
      %v8995 = vpop.f32.mrb[0].mxu0
      %v8996 = vadd.f32 0.0, %v8995
      %v8997 = vpop.f32.mrb[0].mxu0
      %8998 = vmatprep.mubr.f32.mxu0 0.0
      %8999 = vmatmul.mubr.f32.gmra.mrb[0].mxu0 %v8827
      %v9000 = vpop.f32.mrb[0].mxu0
      %v9001 = vadd.f32 0.0, %v9000
      %v9002 = vpop.f32.mrb[0].mxu0
      %9003 = vmatprep.mubr.f32.mxu0 0.0
      %9004 = vmatmul.mubr.f32.gmra.mrb[0].mxu0 %v8830
      %v9005 = vpop.f32.mrb[0].mxu0
      %v9006 = vadd.f32 0.0, %v9005
      %v9007 = vpop.f32.mrb[0].mxu0
      %9008 = vmatprep.mubr.f32.mxu0 0.0
      %9009 = vmatmul.mubr.f32.gmra.mrb[0].mxu0 %v8833
      %v9010 = vpop.f32.mrb[0].mxu0
      %v9011 = vadd.f32 0.0, %v9010
      %v9012 = vpop.f32.mrb[0].mxu0
      %9013 = vmatprep.mubr.f32.mxu0 0.0
      %9014 = vmatmul.mubr.f32.gmra.mrb[0].mxu0 %v8836
      %v9015 = vpop.f32.mrb[0].mxu0
      %v9016 = vadd.f32 0.0, %v9015
      %v9017 = vpop.f32.mrb[0].mxu0
      %9018 = vmatprep.mubr.f32.mxu0 0.0
      %9019 = vmatmul.mubr.f32.gmra.mrb[0].mxu0 %v8839
      %v9020 = vpop.f32.mrb[0].mxu0
      %v9021 = vadd.f32 0.0, %v9020
      %v9022 = vpop.f32.mrb[0].mxu0
      %9023 = vmatprep.mubr.f32.mxu0 0.0
      %9024 = vmatmul.mubr.f32.gmra.mrb[0].mxu0 %v8842
      %v9025 = vpop.f32.mrb[0].mxu0
      %v9026 = vadd.f32 0.0, %v9025
      %v9027 = vpop.f32.mrb[0].mxu0
      %9028 = vmatprep.mubr.f32.mxu0 0.0
      %9029 = vmatmul.mubr.f32.gmra.mrb[0].mxu0 %v8845
      %v9030 = vpop.f32.mrb[0].mxu0
      %v9031 = vadd.f32 0.0, %v9030
      %v9032 = vpop.f32.mrb[0].mxu0
      %9033 = vmatprep.mubr.f32.mxu0 0.0
      %9034 = vmatmul.mubr.f32.gmra.mrb[0].mxu0 %v8848
      %v9035 = vpop.f32.mrb[0].mxu0
      %v9036 = vadd.f32 0.0, %v9035
      %v9037 = vpop.f32.mrb[0].mxu0
      %9038 = vmatprep.mubr.f32.mxu0 0.0
      %9039 = vmatmul.mubr.f32.gmra.mrb[0].mxu0 %v8851
      %v9040 = vpop.f32.mrb[0].mxu0
      %v9041 = vadd.f32 0.0, %v9040
      %v9042 = vpop.f32.mrb[0].mxu0
      %9043 = vmatprep.mubr.f32.mxu0 0.0
      %9044 = vmatmul.mubr.f32.gmra.mrb[0].mxu0 %v8854
      %v9045 = vpop.f32.mrb[0].mxu0
      %v9046 = vadd.f32 0.0, %v9045
      %v9047 = vpop.f32.mrb[0].mxu0
      %9048 = vmatprep.mubr.f32.mxu0 0.0
      %9049 = vmatmul.mubr.f32.gmra.mrb[0].mxu0 %v8857
      %v9050 = vpop.f32.mrb[0].mxu0
      %v9051 = vadd.f32 0.0, %v9050
      %v9052 = vpop.f32.mrb[0].mxu0
      %9053 = vmatprep.mubr.f32.mxu0 0.0
      %9054 = vmatmul.mubr.f32.gmra.mrb[0].mxu0 %v8860
      %v9055 = vpop.f32.mrb[0].mxu0
      %v9056 = vadd.f32 0.0, %v9055
      %v9057 = vpop.f32.mrb[0].mxu0
      %9058 = vmatprep.mubr.f32.mxu0 0.0
      %9059 = vmatmul.mubr.f32.gmra.mrb[0].mxu0 %v8863
      %v9060 = vpop.f32.mrb[0].mxu0
      %v9061 = vadd.f32 0.0, %v9060
      %v9062 = vpop.f32.mrb[0].mxu0
      %9063 = vmatprep.mubr.f32.mxu0 0.0
      %9064 = vmatmul.mubr.f32.gmra.mrb[0].mxu0 %v8866
      %v9065 = vpop.f32.mrb[0].mxu0
      %v9066 = vadd.f32 0.0, %v9065
      %v9067 = vpop.f32.mrb[0].mxu0
      %9068 = vmatprep.mubr.f32.mxu0 0.0
      %9069 = vmatmul.mubr.f32.gmra.mrb[0].mxu0 %v8869
      %v9070 = vpop.f32.mrb[0].mxu0
      %v9071 = vadd.f32 0.0, %v9070
      %v9072 = vpop.f32.mrb[0].mxu0
      %9073 = vmatprep.mubr.f32.mxu0 0.0
      %9074 = vmatmul.mubr.f32.gmra.mrb[0].mxu0 %v8872
      %v9075 = vpop.f32.mrb[0].mxu0
      %v9076 = vadd.f32 0.0, %v9075
      %v9077 = vpop.f32.mrb[0].mxu0
      %9078 = vmatprep.mubr.f32.mxu0 0.0
      %9079 = vmatmul.mubr.f32.gmra.mrb[0].mxu0 %v8875
      %v9080 = vpop.f32.mrb[0].mxu0
      %v9081 = vadd.f32 0.0, %v9080
      %v9082 = vpop.f32.mrb[0].mxu0
      %9083 = vmatprep.mubr.f32.mxu0 0.0
      %9084 = vmatmul.mubr.f32.gmra.mrb[0].mxu0 %v8878
      %v9085 = vpop.f32.mrb[0].mxu0
      %v9086 = vadd.f32 0.0, %v9085
      %v9087 = vpop.f32.mrb[0].mxu0
      %9088 = vmatprep.mubr.f32.mxu0 0.0
      %9089 = vmatmul.mubr.f32.gmra.mrb[0].mxu0 %v8881
      %v9090 = vpop.f32.mrb[0].mxu0
      %v9091 = vadd.f32 0.0, %v9090
      %v9092 = vpop.f32.mrb[0].mxu0
      %9093 = vmatprep.mubr.f32.mxu0 0.0
      %9094 = vmatmul.mubr.f32.gmra.mrb[0].mxu0 %v8884
      %v9095 = vpop.f32.mrb[0].mxu0
      %v9096 = vadd.f32 0.0, %v9095
      %v9097 = vpop.f32.mrb[0].mxu0
      %9098 = vmatprep.mubr.f32.mxu0 0.0
      %9099 = vmatmul.mubr.f32.gmra.mrb[0].mxu0 %v8887
      %v9100 = vpop.f32.mrb[0].mxu0
      %v9101 = vadd.f32 0.0, %v9100
      %v9102 = vpop.f32.mrb[0].mxu0
      %9103 = vmatprep.mubr.f32.mxu0 0.0
      %9104 = vmatmul.mubr.f32.gmra.mrb[0].mxu0 %v8890
      %v9105 = vpop.f32.mrb[0].mxu0
      %v9106 = vadd.f32 0.0, %v9105
      %v9107 = vpop.f32.mrb[0].mxu0
      %9108 = vmatprep.mubr.f32.mxu0 0.0
      %9109 = vmatmul.mubr.f32.gmra.mrb[0].mxu0 %v8893
      %v9110 = vpop.f32.mrb[0].mxu0
      %v9111 = vadd.f32 0.0, %v9110
      %v9112 = vpop.f32.mrb[0].mxu0
      %9113 = vmatprep.mubr.f32.mxu0 0.0
      %9114 = vmatmul.mubr.f32.gmra.mrb[0].mxu0 %v8896
      %v9115 = vpop.f32.mrb[0].mxu0
      %v9116 = vadd.f32 0.0, %v9115
      %v9117 = vpop.f32.mrb[0].mxu0
      %9118 = vmatprep.mubr.f32.mxu0 0.0
      %9119 = vmatmul.mubr.f32.gmra.mrb[0].mxu0 %v8899
      %v9120 = vpop.f32.mrb[0].mxu0
      %v9121 = vadd.f32 0.0, %v9120
      %v9122 = vpop.f32.mrb[0].mxu0
      %9123 = vmatprep.mubr.f32.mxu0 0.0
      %9124 = vmatmul.mubr.f32.gmra.mrb[0].mxu0 %v8902
      %v9125 = vpop.f32.mrb[0].mxu0
      %v9126 = vadd.f32 0.0, %v9125
      %v9127 = vpop.f32.mrb[0].mxu0
      %9128 = vdwg.mxu0
      %v9129 = vadd.f32 %v8638, %v8971
      %v9130 = vadd.f32 %v8639, %v8976
      %v9131 = vadd.f32 %v8640, %v8981
      %v9132 = vadd.f32 %v8641, %v8986
      %v9133 = vadd.f32 %v8642, %v8991
      %v9134 = vadd.f32 %v8643, %v8996
      %v9135 = vadd.f32 %v8644, %v9001
      %v9136 = vadd.f32 %v8645, %v9006
      %v9137 = vadd.f32 %v8646, %v9011
      %v9138 = vadd.f32 %v8647, %v9016
      %v9139 = vadd.f32 %v8648, %v9021
      %v9140 = vadd.f32 %v8649, %v9026
      %v9141 = vadd.f32 %v8650, %v9031
      %v9142 = vadd.f32 %v8651, %v9036
      %v9143 = vadd.f32 %v8652, %v9041
      %v9144 = vadd.f32 %v8653, %v9046
      %v9145 = vadd.f32 %v8654, %v9051
      %v9146 = vadd.f32 %v8655, %v9056
      %v9147 = vadd.f32 %v8656, %v9061
      %v9148 = vadd.f32 %v8657, %v9066
      %v9149 = vadd.f32 %v8658, %v9071
      %v9150 = vadd.f32 %v8659, %v9076
      %v9151 = vadd.f32 %v8660, %v9081
      %v9152 = vadd.f32 %v8661, %v9086
      %v9153 = vadd.f32 %v8662, %v9091
      %v9154 = vadd.f32 %v8663, %v9096
      %v9155 = vadd.f32 %v8664, %v9101
      %v9156 = vadd.f32 %v8665, %v9106
      %v9157 = vadd.f32 %v8666, %v9111
      %v9158 = vadd.f32 %v8667, %v9116
      %v9159 = vadd.f32 %v8668, %v9121
      %v9160 = vadd.f32 %v8669, %v9126
      %v9161 = vld [vmem:[%s9] sm:$0x1]
      %v9163 = vlaneseq
      %v9164 = vshrl.u32 %v9163, 7
      %v9165 = vsub.s32 0, %v9164
      %v9166 = vrot.slane %v9161, %v9165
      %v9168 = vadd.f32 %v9129, %v9166
      %v9169 = vadd.f32 %v9130, %v9166
      %v9170 = vadd.f32 %v9131, %v9166
      %v9171 = vadd.f32 %v9132, %v9166
      %v9172 = vadd.f32 %v9133, %v9166
      %v9173 = vadd.f32 %v9134, %v9166
      %v9174 = vadd.f32 %v9135, %v9166
      %v9175 = vadd.f32 %v9136, %v9166
      %v9176 = vadd.f32 %v9137, %v9166
      %v9177 = vadd.f32 %v9138, %v9166
      %v9178 = vadd.f32 %v9139, %v9166
      %v9179 = vadd.f32 %v9140, %v9166
      %v9180 = vadd.f32 %v9141, %v9166
      %v9181 = vadd.f32 %v9142, %v9166
      %v9182 = vadd.f32 %v9143, %v9166
      %v9183 = vadd.f32 %v9144, %v9166
      %v9184 = vadd.f32 %v9145, %v9166
      %v9185 = vadd.f32 %v9146, %v9166
      %v9186 = vadd.f32 %v9147, %v9166
      %v9187 = vadd.f32 %v9148, %v9166
      %v9188 = vadd.f32 %v9149, %v9166
      %v9189 = vadd.f32 %v9150, %v9166
      %v9190 = vadd.f32 %v9151, %v9166
      %v9191 = vadd.f32 %v9152, %v9166
      %v9192 = vadd.f32 %v9153, %v9166
      %v9193 = vadd.f32 %v9154, %v9166
      %v9194 = vadd.f32 %v9155, %v9166
      %v9195 = vadd.f32 %v9156, %v9166
      %v9196 = vadd.f32 %v9157, %v9166
      %v9197 = vadd.f32 %v9158, %v9166
      %v9198 = vadd.f32 %v9159, %v9166
      %v9199 = vadd.f32 %v9160, %v9166
      %v9200 = vmax.f32 %v9168, 0.0
      %v9201 = vmax.f32 %v9169, 0.0
      %v9202 = vmax.f32 %v9170, 0.0
      %v9203 = vmax.f32 %v9171, 0.0
      %v9204 = vmax.f32 %v9172, 0.0
      %v9205 = vmax.f32 %v9173, 0.0
      %v9206 = vmax.f32 %v9174, 0.0
      %v9207 = vmax.f32 %v9175, 0.0
      %v9208 = vmax.f32 %v9176, 0.0
      %v9209 = vmax.f32 %v9177, 0.0
      %v9210 = vmax.f32 %v9178, 0.0
      %v9211 = vmax.f32 %v9179, 0.0
      %v9212 = vmax.f32 %v9180, 0.0
      %v9213 = vmax.f32 %v9181, 0.0
      %v9214 = vmax.f32 %v9182, 0.0
      %v9215 = vmax.f32 %v9183, 0.0
      %v9216 = vmax.f32 %v9184, 0.0
      %v9217 = vmax.f32 %v9185, 0.0
      %v9218 = vmax.f32 %v9186, 0.0
      %v9219 = vmax.f32 %v9187, 0.0
      %v9220 = vmax.f32 %v9188, 0.0
      %v9221 = vmax.f32 %v9189, 0.0
      %v9222 = vmax.f32 %v9190, 0.0
      %v9223 = vmax.f32 %v9191, 0.0
      %v9224 = vmax.f32 %v9192, 0.0
      %v9225 = vmax.f32 %v9193, 0.0
      %v9226 = vmax.f32 %v9194, 0.0
      %v9227 = vmax.f32 %v9195, 0.0
      %v9228 = vmax.f32 %v9196, 0.0
      %v9229 = vmax.f32 %v9197, 0.0
      %v9230 = vmax.f32 %v9198, 0.0
      %v9231 = vmax.f32 %v9199, 0.0
      %9232 = vst.msk [vmem:[%s359] sm:$0xff] %vm514, %v9200
      %9233 = vst.msk [vmem:[%s359 + $0x8] sm:$0xff] %vm514, %v9201
      %9234 = vst.msk [vmem:[%s359 + $0x10] sm:$0xff] %vm514, %v9202
      %9235 = vst.msk [vmem:[%s359 + $0x18] sm:$0xff] %vm514, %v9203
      %9236 = vst.msk [vmem:[%s359 + $0x20] sm:$0xff] %vm514, %v9204
      %9237 = vst.msk [vmem:[%s359 + $0x28] sm:$0xff] %vm514, %v9205
      %9238 = vst.msk [vmem:[%s359 + $0x30] sm:$0xff] %vm514, %v9206
      %9239 = vst.msk [vmem:[%s359 + $0x38] sm:$0xff] %vm514, %v9207
      %9240 = vst.msk [vmem:[%s359 + $0x40] sm:$0xff] %vm514, %v9208
      %9241 = vst.msk [vmem:[%s359 + $0x48] sm:$0xff] %vm514, %v9209
      %9242 = vst.msk [vmem:[%s359 + $0x50] sm:$0xff] %vm514, %v9210
      %9243 = vst.msk [vmem:[%s359 + $0x58] sm:$0xff] %vm514, %v9211
      %9244 = vst.msk [vmem:[%s359 + $0x60] sm:$0xff] %vm514, %v9212
      %9245 = vst.msk [vmem:[%s359 + $0x68] sm:$0xff] %vm514, %v9213
      %9246 = vst.msk [vmem:[%s359 + $0x70] sm:$0xff] %vm514, %v9214
      %9247 = vst.msk [vmem:[%s359 + $0x78] sm:$0xff] %vm514, %v9215
      %9248 = vst.msk [vmem:[%s359 + $0x80] sm:$0xff] %vm514, %v9216
      %9249 = vst.msk [vmem:[%s359 + $0x88] sm:$0xff] %vm514, %v9217
      %9250 = vst.msk [vmem:[%s359 + $0x90] sm:$0xff] %vm514, %v9218
      %9251 = vst.msk [vmem:[%s359 + $0x98] sm:$0xff] %vm514, %v9219
      %9252 = vst.msk [vmem:[%s359 + $0xa0] sm:$0xff] %vm514, %v9220
      %9253 = vst.msk [vmem:[%s359 + $0xa8] sm:$0xff] %vm514, %v9221
      %9254 = vst.msk [vmem:[%s359 + $0xb0] sm:$0xff] %vm514, %v9222
      %9255 = vst.msk [vmem:[%s359 + $0xb8] sm:$0xff] %vm514, %v9223
      %9256 = vst.msk [vmem:[%s359 + $0xc0] sm:$0xff] %vm514, %v9224
      %9257 = vst.msk [vmem:[%s359 + $0xc8] sm:$0xff] %vm514, %v9225
      %9258 = vst.msk [vmem:[%s359 + $0xd0] sm:$0xff] %vm514, %v9226
      %9259 = vst.msk [vmem:[%s359 + $0xd8] sm:$0xff] %vm514, %v9227
      %9260 = vst.msk [vmem:[%s359 + $0xe0] sm:$0xff] %vm514, %v9228
      %9261 = vst.msk [vmem:[%s359 + $0xe8] sm:$0xff] %vm514, %v9229
      %9262 = vst.msk [vmem:[%s359 + $0xf0] sm:$0xff] %vm514, %v9230
      %9263 = vst.msk [vmem:[%s359 + $0xf8] sm:$0xff] %vm514, %v9231
      %p9264 = scmp.lt.s32.totalorder %s21, 1
      %s9265 = scalar_select %p9264, %s21, 1
      %s9266 = smul.addr %s9265, 32
      %s9267 = smul.addr %s9266, 8
      %s9268 = scalar_lea.vmem %s10, %s9267
      // Predicated region
      $region61: #{tpu_custom_call.1} parent=59 // pred_check
        %p9269 = pneg %p254
      $region62: #{tpu_custom_call.1} parent=59 // pred_check_branch
        %9271 = sbr.rel (%p9269) target = $region64
      $region63: #{tpu_custom_call.1} parent=59 // pred_region
        _
      $region64: #{tpu_custom_call.1} parent=59 // pred_fallthru
        _
    $region60: #{tpu_custom_call.1} parent=5 // pred_fallthru
      _
    %p9272 = scmp.le.s32.totalorder 2, %s16
    // Predicated region
    $region65: #{tpu_custom_call.1} parent=5 // pred_check
      %p9273 = pneg %p9272
    $region66: #{tpu_custom_call.1} parent=5 // pred_check_branch
      %9275 = sbr.rel (%p9273) target = $region68
    $region67: #{tpu_custom_call.1} parent=5 // pred_region
      %s9276 = ssub.s32 %s16, 2
      // Predicated region
      $region69: #{tpu_custom_call.1} parent=67 // pred_check
        %p9277 = pneg %p260
      $region70: #{tpu_custom_call.1} parent=67 // pred_check_branch
        %9279 = sbr.rel (%p9277) target = $region72
      $region71: #{tpu_custom_call.1} parent=67 // pred_region
        %p9280 = scmp.lt.s32.totalorder %s22, 1
        %s9281 = scalar_select %p9280, %s22, 1
        %s9282 = smul.addr %s9281, 32
        %s9283 = smul.addr %s9282, 8
        %s9284 = scalar_lea.vmem %s10, %s9283
      $region72: #{tpu_custom_call.1} parent=67 // pred_fallthru
        _
    $region68: #{tpu_custom_call.1} parent=5 // pred_fallthru
      _
  $region6: #{tpu_custom_call.1} parent=0 // loop_footer
    %s20 = sadd.s32 1, %s16
  $region7: #{tpu_custom_call.1} parent=0 // loop_footer_branch
    %15 = sbr.rel target = $region3
  $region8: #{tpu_custom_call.1} parent=0 // loop_exit
    _

</llo_original>
